<compile_context>
chip_gen: v7x
topology: tpu7x:2x2x1
jax: 0.10.0
libtpu: 0.0.40
codegen_flags: <defaults>
</compile_context>

<pallas_src>
import functools

import numpy as np
import jax
import jax.numpy as jnp
from jax.experimental import pallas as pl
from jax.experimental.pallas import tpu as pltpu


# ---------------------------------------------------------------------------
# Fused BasicBlock kernel (one grid step = B batch elements)
# ---------------------------------------------------------------------------
def _basic_block_kernel(x_ref, w1_ref, s1_ref, h1_ref,
                        w2_ref, s2_ref, h2_ref,
                        caw1_ref, cab1_ref, caw2_ref, cab2_ref,
                        saT_ref, sab_ref,
                        o_ref, xpad, f1pad, ppad, *, cout, downsample):
    B = x_ref.shape[0]
    H2 = f1pad.shape[1] - 2
    W2 = f1pad.shape[2] - 2
    Wp = W2 + 6
    M = B * H2 * W2

    # Zero the pad borders (full memsets, cheap in bf16; see header for why
    # this is not gated on program_id == 0).
    xpad[...] = jnp.zeros_like(xpad)
    f1pad[...] = jnp.zeros_like(f1pad)
    ppad[...] = jnp.zeros_like(ppad)

    # ---------- conv1 (3x3, pad=1) [+ fused 1x1 shortcut] + bn1 + relu ------
    xpad[:, 1:1 + H2, 1:1 + W2, :] = x_ref[...]
    if downsample:
        # x arrives space-to-depth (B, H2, W2, 4*Cin): stride already applied,
        # patches are 4 contiguous slabs -- nothing extracted then discarded.
        slabs = [xpad[:, a:a + H2, b:b + W2, :]
                 for a in range(2) for b in range(2)]
    else:
        # stride 1: classic 9-slab im2col, identity shortcut.
        slabs = [xpad[:, kh:kh + H2, kw:kw + W2, :]
                 for kh in range(3) for kw in range(3)]
    patches = jnp.concatenate(slabs, axis=-1)
    patches = patches.reshape(M, patches.shape[-1])

    y = jnp.dot(patches, w1_ref[...], preferred_element_type=jnp.float32)
    y = y * s1_ref[...] + h1_ref[...]                 # bn1 (+ shortcut bn) folded
    if downsample:
        f1 = jnp.maximum(y[:, :cout], 0.0)
        sc = y[:, cout:].reshape(B, H2, W2, cout)     # fused 1x1 shortcut + bn
    else:
        f1 = jnp.maximum(y, 0.0)
        sc = x_ref[...].astype(jnp.float32)           # identity shortcut

    # ---------- conv2 (3x3, stride 1, pad=1) + bn2 --------------------------
    f1pad[:, 1:1 + H2, 1:1 + W2, :] = f1.reshape(B, H2, W2, cout).astype(f1pad.dtype)
    patches2 = jnp.concatenate(
        [f1pad[:, kh:kh + H2, kw:kw + W2, :] for kh in range(3) for kw in range(3)],
        axis=-1).reshape(M, 9 * cout)
    f2 = jnp.dot(patches2, w2_ref[...], preferred_element_type=jnp.float32)
    f2 = f2 * s2_ref[...] + h2_ref[...]

    # ---------- channel attention (CBAM) ------------------------------------
    f2b = f2.reshape(B, H2 * W2, cout)
    mx = jnp.max(f2b, axis=1)                         # adaptive max pool (B, Cout)
    av = jnp.mean(f2b, axis=1)                        # adaptive avg pool (B, Cout)

    def mlp(v):                                       # tiny contraction: VPU, no MXU push
        h = jnp.sum(v[:, :, None] * caw1_ref[...][None, :, :], axis=1) + cab1_ref[...]
        h = jnp.maximum(h, 0.0)
        return jnp.sum(h[:, :, None] * caw2_ref[...][None, :, :], axis=1) + cab2_ref[...]

    ca = jax.nn.sigmoid(mlp(mx) + mlp(av))            # (B, Cout) channel gate
    f2s = (f2b * ca[:, None, :]).reshape(B, H2, W2, cout)

    # ---------- spatial attention: 7x7 conv as one Toeplitz matmul ----------
    # Channel order matches this PyTorch module: cat([max, mean], dim=1).
    ppad[:, 3:3 + H2, 3:3 + W2] = jnp.max(f2s, axis=-1)
    ppad[:, 3:3 + H2, Wp + 3:Wp + 3 + W2] = jnp.mean(f2s, axis=-1)
    pbig = jnp.concatenate([ppad[:, kh:kh + H2, :] for kh in range(7)],
                           axis=-1).reshape(B * H2, 14 * Wp)
    sa = jax.nn.sigmoid(
        jnp.dot(pbig, saT_ref[...], preferred_element_type=jnp.float32)
        + sab_ref[0])
    sa = sa.reshape(B, H2, W2)                        # spatial gate

    # ---------- gates, shortcut add, relu, lane-dense store -----------------
    out = jnp.maximum(f2s * sa[:, :, :, None] + sc, 0.0)
    o_ref[...] = out.reshape(B, H2, W2 * cout)


# ---------------------------------------------------------------------------
# pallas_call wrapper
# ---------------------------------------------------------------------------
def _full_spec(a):
    nd = a.ndim
    return pl.BlockSpec(a.shape, lambda n: (0,) * nd)


def basic_block_forward(x_nchw, p, *, stride):
    """Fused BasicBlock forward.  x_nchw: (N, Cin, H, W) float32 (PyTorch layout)."""
    N, Cin, H, W = x_nchw.shape
    Cout = p["s2"].shape[-1]
    assert stride in (1, 2)
    assert H % stride == 0 and W % stride == 0
    H2, W2 = H // stride, W // stride
    downsample = stride != 1
    if not downsample:
        assert Cin == Cout, "identity shortcut requires Cin == Cout"

    # Host-side input relayout (fused by XLA with the bf16 cast):
    #   stride 2: space-to-depth -> (N, H2, W2, 4*Cin), channel = (p*2+q)*Cin+ci
    #   stride 1: NCHW -> NHWC
    if downsample:
        xk = x_nchw.reshape(N, Cin, H2, 2, W2, 2)
        xk = jnp.transpose(xk, (0, 2, 4, 3, 5, 1)).reshape(N, H2, W2, 4 * Cin)
    else:
        xk = jnp.transpose(x_nchw, (0, 2, 3, 1))
    xk = xk.astype(jnp.bfloat16)

    # Samples per grid step: target M = B*H2*W2 >= 256 matmul rows, B | N.
    target = max(1, -(-256 // (H2 * W2)))
    B = max(d for d in range(1, N + 1) if N % d == 0 and d <= target)

    weights = [p["w1"], p["s1"], p["h1"], p["w2"], p["s2"], p["h2"],
               p["ca_w1"], p["ca_b1"], p["ca_w2"], p["ca_b2"], p["sa_T"]]
    in_specs = ([pl.BlockSpec((B,) + xk.shape[1:], lambda n: (n, 0, 0, 0))]
                + [_full_spec(a) for a in weights]
                + [pl.BlockSpec(memory_space=pltpu.MemorySpace.SMEM)])

    xpad_shape = ((B, H2 + 1, W2 + 1, 4 * Cin) if downsample
                  else (B, H2 + 2, W2 + 2, Cin))
    kern = functools.partial(_basic_block_kernel, cout=Cout,
                             downsample=downsample)
    out = pl.pallas_call(
        kern,
        out_shape=jax.ShapeDtypeStruct((N, H2, W2 * Cout), jnp.float32),
        grid=(N // B,),
        in_specs=in_specs,
        out_specs=pl.BlockSpec((B, H2, W2 * Cout), lambda n: (n, 0, 0)),
        scratch_shapes=[
            pltpu.VMEM(xpad_shape, jnp.bfloat16),                 # padded conv1 input
            pltpu.VMEM((B, H2 + 2, W2 + 2, Cout), jnp.bfloat16),  # padded conv1 output
            pltpu.VMEM((B, H2 + 6, 2 * (W2 + 6)), jnp.float32),   # padded [max|mean] maps
        ],
        compiler_params=pltpu.CompilerParams(
            dimension_semantics=("parallel",),
            vmem_limit_bytes=32 * 1024 * 1024),
    )(xk, *weights, p["sa_b"])

    out = out.reshape(N, H2, W2, Cout)
    return jnp.transpose(out, (0, 3, 1, 2))                        # NHWC -> NCHW


# ---------------------------------------------------------------------------
# Host-side weight preprocessing + deterministic synthetic parameter init
# ---------------------------------------------------------------------------
def _fold_bn(gamma, beta, mean, var, conv_bias=None, eps=1e-5):
    scale = gamma / jnp.sqrt(var + eps)
    bias = conv_bias if conv_bias is not None else jnp.zeros_like(mean)
    shift = beta + (bias - mean) * scale
    return scale, shift


def _pack_conv1(w1, sc_w=None):
    """Pack the 3x3 conv1 weight (optionally fusing the 1x1 shortcut conv).

    w1: (3, 3, Cin, Cout).  Without sc_w (stride 1): plain im2col layout
    (9*Cin, Cout), row = (kh*3+kw)*Cin + ci.  With sc_w (stride 2): rows follow
    the space-to-depth patch layout used in-kernel,
        row = ((a*2+b)*4 + (p*2+q))*Cin + ci,
    with block offset (a,b) and within-block phase (p,q):
        kh=0 -> (a,p)=(0,1); kh>=1 -> (a,p)=(1,kh-1)   (same for kw -> (b,q)).
    The 1x1 stride-2 shortcut reads x[2i,2j] = block (1,1) phase (0,0) and is
    appended as Cout extra output columns.
    """
    w1 = np.asarray(w1, np.float32)
    cin, cout = w1.shape[2], w1.shape[3]
    if sc_w is None:
        return w1.reshape(9 * cin, cout)
    W = np.zeros((16 * cin, 2 * cout), np.float32)
    for kh in range(3):
        a, ph = (0, 1) if kh == 0 else (1, kh - 1)
        for kw in range(3):
            b, q = (0, 1) if kw == 0 else (1, kw - 1)
            r0 = ((a * 2 + b) * 4 + (ph * 2 + q)) * cin
            W[r0:r0 + cin, :cout] = w1[kh, kw]
    W[12 * cin:13 * cin, cout:] = np.asarray(sc_w, np.float32)
    return W


def _build_sa_toeplitz(w7, w_out):
    """Expand the 7x7x2 spatial-attention conv into a Toeplitz matrix.

    Channel 0 = max map, 1 = mean map (this module's torch.cat([max, mean])).
    With the padded maps stored as rows of width 2*(w_out+6) and the 7
    kh-shifted row blocks concatenated along lanes, `pbig @ T` equals the 7x7
    'same' convolution.
    """
    w7 = np.asarray(w7, np.float32)
    Wp = w_out + 6
    T = np.zeros((7 * 2 * Wp, w_out), np.float32)
    for kh in range(7):
        for c in range(2):
            for kw in range(7):
                for w in range(w_out):
                    T[kh * 2 * Wp + c * Wp + w + kw, w] = w7[kh, kw, c]
    return jnp.asarray(T)


def init_params(key, in_planes, out_planes, stride, w_out):
    ks = iter(jax.random.split(key, 40))
    nrm = lambda shape, s=0.1: jax.random.normal(next(ks), shape, jnp.float32) * s
    uni = lambda shape: jax.random.uniform(next(ks), shape, jnp.float32, 0.5, 1.5)
    hidden = max(out_planes // 16, 1)
    downsample = stride != 1
    p = {}

    # conv1 (3x3, bias) + bn1  [optionally fused with 1x1 shortcut conv + bn]
    w1 = nrm((3, 3, in_planes, out_planes))
    s1, h1 = _fold_bn(1.0 + nrm((out_planes,)), nrm((out_planes,)),
                      nrm((out_planes,)), uni((out_planes,)),
                      conv_bias=nrm((out_planes,)))
    if downsample:
        sc_w = nrm((in_planes, out_planes))                 # 1x1 conv, bias=False
        ssc, hsc = _fold_bn(1.0 + nrm((out_planes,)), nrm((out_planes,)),
                            nrm((out_planes,)), uni((out_planes,)))
        p["w1"] = jnp.asarray(_pack_conv1(w1, sc_w), jnp.bfloat16)
        p["s1"] = jnp.concatenate([s1, ssc])[None, :]
        p["h1"] = jnp.concatenate([h1, hsc])[None, :]
    else:
        p["w1"] = jnp.asarray(_pack_conv1(w1), jnp.bfloat16)
        p["s1"] = s1[None, :]
        p["h1"] = h1[None, :]

    # conv2 (3x3, bias) + bn2 (im2col layout: row = (kh*3+kw)*Cout + c)
    p["w2"] = nrm((9 * out_planes, out_planes)).astype(jnp.bfloat16)
    s2, h2 = _fold_bn(1.0 + nrm((out_planes,)), nrm((out_planes,)),
                      nrm((out_planes,)), uni((out_planes,)),
                      conv_bias=nrm((out_planes,)))
    p["s2"] = s2[None, :]
    p["h2"] = h2[None, :]

    # channel attention shared MLP (Linear C->C//16, ReLU, Linear C//16->C)
    p["ca_w1"] = nrm((out_planes, hidden))
    p["ca_b1"] = nrm((1, hidden))
    p["ca_w2"] = nrm((hidden, out_planes))
    p["ca_b2"] = nrm((1, out_planes))

    # spatial attention: 7x7 conv (2->1, pad=3) + bias, as a Toeplitz matrix
    p["sa_T"] = _build_sa_toeplitz(nrm((7, 7, 2)), w_out)
    p["sa_b"] = nrm((1,))
    return p


# ---------------------------------------------------------------------------
if __name__ == "__main__":
    key = jax.random.PRNGKey(0)
    kx, kp = jax.random.split(key)

    N, Cin, H, W = 8, 16, 16, 16
    Cout, stride = 32, 2                  # channel-attn hidden dim = Cout // 16 = 2
    H2, W2 = H // stride, W // stride

    x = jax.random.normal(kx, (N, Cin, H, W), jnp.float32)   # PyTorch-style NCHW input
    params = init_params(kp, Cin, Cout, stride, W2)

    out = basic_block_forward(x, params, stride=stride)
    jax.block_until_ready(out)
    assert out.shape == (N, Cout, H2, W2), out.shape
    print("KERNEL_OK")
</pallas_src>

<mosaic_0001>
module attributes {stable_mosaic.version = 11 : i64} {
  func.func @_basic_block_kernel(%arg0: i32, %arg1: memref<4x8x8x64xbf16, #tpu.memory_space<vmem>>, %arg2: memref<256x64xbf16, #tpu.memory_space<vmem>>, %arg3: memref<1x64xf32, #tpu.memory_space<vmem>>, %arg4: memref<1x64xf32, #tpu.memory_space<vmem>>, %arg5: memref<288x32xbf16, #tpu.memory_space<vmem>>, %arg6: memref<1x32xf32, #tpu.memory_space<vmem>>, %arg7: memref<1x32xf32, #tpu.memory_space<vmem>>, %arg8: memref<32x2xf32, #tpu.memory_space<vmem>>, %arg9: memref<1x2xf32, #tpu.memory_space<vmem>>, %arg10: memref<2x32xf32, #tpu.memory_space<vmem>>, %arg11: memref<1x32xf32, #tpu.memory_space<vmem>>, %arg12: memref<196x8xf32, #tpu.memory_space<vmem>>, %arg13: memref<1xf32, #tpu.memory_space<smem>>, %arg14: memref<4x8x256xf32, #tpu.memory_space<vmem>>, %arg15: memref<4x9x9x64xbf16, #tpu.memory_space<vmem>>, %arg16: memref<4x10x10x32xbf16, #tpu.memory_space<vmem>>, %arg17: memref<4x14x28xf32, #tpu.memory_space<vmem>>) attributes {dimension_semantics = [#tpu.dimension_semantics<parallel>], iteration_bounds = array<i64: 2>, scalar_prefetch = 0 : i64, scratch_operands = 3 : i64, tpu.core_type = #tpu.core_type<tc>, window_params = [{transform_indices = @transform_0, window_bounds = array<i64: 4, 8, 8, 64>}, {pipeline_mode = #tpu.pipeline_mode<synchronous>, transform_indices = @transform_1, window_bounds = array<i64: 256, 64>}, {pipeline_mode = #tpu.pipeline_mode<synchronous>, transform_indices = @transform_2, window_bounds = array<i64: 1, 64>}, {pipeline_mode = #tpu.pipeline_mode<synchronous>, transform_indices = @transform_3, window_bounds = array<i64: 1, 64>}, {pipeline_mode = #tpu.pipeline_mode<synchronous>, transform_indices = @transform_4, window_bounds = array<i64: 288, 32>}, {pipeline_mode = #tpu.pipeline_mode<synchronous>, transform_indices = @transform_5, window_bounds = array<i64: 1, 32>}, {pipeline_mode = #tpu.pipeline_mode<synchronous>, transform_indices = @transform_6, window_bounds = array<i64: 1, 32>}, {pipeline_mode = #tpu.pipeline_mode<synchronous>, transform_indices = @transform_7, window_bounds = array<i64: 32, 2>}, {pipeline_mode = #tpu.pipeline_mode<synchronous>, transform_indices = @transform_8, window_bounds = array<i64: 1, 2>}, {pipeline_mode = #tpu.pipeline_mode<synchronous>, transform_indices = @transform_9, window_bounds = array<i64: 2, 32>}, {pipeline_mode = #tpu.pipeline_mode<synchronous>, transform_indices = @transform_10, window_bounds = array<i64: 1, 32>}, {pipeline_mode = #tpu.pipeline_mode<synchronous>, transform_indices = @transform_11, window_bounds = array<i64: 196, 8>}, {transform_indices = @transform_12, window_bounds = array<i64: 1>}, {transform_indices = @transform_13, window_bounds = array<i64: 4, 8, 256>}]} {
    %cst = arith.constant 0.000000e+00 : bf16
    %0 = vector.broadcast %cst : bf16 to vector<4x9x9x64xbf16>
    %c0 = arith.constant 0 : index
    %c0_0 = arith.constant 0 : index
    %c0_1 = arith.constant 0 : index
    %c0_2 = arith.constant 0 : index
    %1 = vector.load %arg15[%c0, %c0_0, %c0_1, %c0_2] : memref<4x9x9x64xbf16, #tpu.memory_space<vmem>>, vector<4x9x9x64xbf16>
    tpu.vector_store %arg15[%c0, %c0_0, %c0_1, %c0_2], %0 {strides = array<i32>} : memref<4x9x9x64xbf16, #tpu.memory_space<vmem>>, vector<4x9x9x64xbf16>,
    %cst_3 = arith.constant 0.000000e+00 : bf16
    %2 = vector.broadcast %cst_3 : bf16 to vector<4x10x10x32xbf16>
    %c0_4 = arith.constant 0 : index
    %c0_5 = arith.constant 0 : index
    %c0_6 = arith.constant 0 : index
    %c0_7 = arith.constant 0 : index
    %3 = vector.load %arg16[%c0_4, %c0_5, %c0_6, %c0_7] : memref<4x10x10x32xbf16, #tpu.memory_space<vmem>>, vector<4x10x10x32xbf16>
    tpu.vector_store %arg16[%c0_4, %c0_5, %c0_6, %c0_7], %2 {strides = array<i32>} : memref<4x10x10x32xbf16, #tpu.memory_space<vmem>>, vector<4x10x10x32xbf16>,
    %cst_8 = arith.constant 0.000000e+00 : f32
    %4 = vector.broadcast %cst_8 : f32 to vector<4x14x28xf32>
    %c0_9 = arith.constant 0 : index
    %c0_10 = arith.constant 0 : index
    %c0_11 = arith.constant 0 : index
    %5 = vector.load %arg17[%c0_9, %c0_10, %c0_11] : memref<4x14x28xf32, #tpu.memory_space<vmem>>, vector<4x14x28xf32>
    tpu.vector_store %arg17[%c0_9, %c0_10, %c0_11], %4 {strides = array<i32>} : memref<4x14x28xf32, #tpu.memory_space<vmem>>, vector<4x14x28xf32>,
    %c0_12 = arith.constant 0 : index
    %c0_13 = arith.constant 0 : index
    %c0_14 = arith.constant 0 : index
    %c0_15 = arith.constant 0 : index
    %6 = vector.load %arg1[%c0_12, %c0_13, %c0_14, %c0_15] : memref<4x8x8x64xbf16, #tpu.memory_space<vmem>>, vector<4x8x8x64xbf16>
    %c0_16 = arith.constant 0 : index
    %c1 = arith.constant 1 : index
    %c1_17 = arith.constant 1 : index
    %c0_18 = arith.constant 0 : index
    %7 = vector.load %arg15[%c0_16, %c1, %c1_17, %c0_18] : memref<4x9x9x64xbf16, #tpu.memory_space<vmem>>, vector<4x8x8x64xbf16>
    tpu.vector_store %arg15[%c0_16, %c1, %c1_17, %c0_18], %6 {strides = array<i32>} : memref<4x9x9x64xbf16, #tpu.memory_space<vmem>>, vector<4x8x8x64xbf16>,
    %c0_19 = arith.constant 0 : index
    %c0_20 = arith.constant 0 : index
    %c0_21 = arith.constant 0 : index
    %c0_22 = arith.constant 0 : index
    %8 = vector.load %arg15[%c0_19, %c0_20, %c0_21, %c0_22] : memref<4x9x9x64xbf16, #tpu.memory_space<vmem>>, vector<4x8x8x64xbf16>
    %c0_23 = arith.constant 0 : index
    %c0_24 = arith.constant 0 : index
    %c1_25 = arith.constant 1 : index
    %c0_26 = arith.constant 0 : index
    %9 = vector.load %arg15[%c0_23, %c0_24, %c1_25, %c0_26] : memref<4x9x9x64xbf16, #tpu.memory_space<vmem>>, vector<4x8x8x64xbf16>
    %c0_27 = arith.constant 0 : index
    %c1_28 = arith.constant 1 : index
    %c0_29 = arith.constant 0 : index
    %c0_30 = arith.constant 0 : index
    %10 = vector.load %arg15[%c0_27, %c1_28, %c0_29, %c0_30] : memref<4x9x9x64xbf16, #tpu.memory_space<vmem>>, vector<4x8x8x64xbf16>
    %c0_31 = arith.constant 0 : index
    %c1_32 = arith.constant 1 : index
    %c1_33 = arith.constant 1 : index
    %c0_34 = arith.constant 0 : index
    %11 = vector.load %arg15[%c0_31, %c1_32, %c1_33, %c0_34] : memref<4x9x9x64xbf16, #tpu.memory_space<vmem>>, vector<4x8x8x64xbf16>
    %12 = tpu.concatenate %8, %9, %10, %11 in 3 : vector<4x8x8x64xbf16>, vector<4x8x8x64xbf16>, vector<4x8x8x64xbf16>, vector<4x8x8x64xbf16> -> vector<4x8x8x256xbf16>
    %13 = vector.shape_cast %12 : vector<4x8x8x256xbf16> to vector<256x256xbf16>
    %c0_35 = arith.constant 0 : index
    %c0_36 = arith.constant 0 : index
    %14 = vector.load %arg2[%c0_35, %c0_36] : memref<256x64xbf16, #tpu.memory_space<vmem>>, vector<256x64xbf16>
    %cst_37 = arith.constant dense<0.000000e+00> : vector<256x64xf32>
    %15 = tpu.matmul %13, %14, %cst_37 {dimension_numbers = #tpu.dot_dimension_numbers<[1], [0], [0], [1], [0, 0, 1, 1], [], []>} : vector<256x256xbf16>, vector<256x64xbf16>, vector<256x64xf32> -> vector<256x64xf32>
    %c0_38 = arith.constant 0 : index
    %c0_39 = arith.constant 0 : index
    %16 = vector.load %arg3[%c0_38, %c0_39] : memref<1x64xf32, #tpu.memory_space<vmem>>, vector<1x64xf32>
    %17 = vector.broadcast %16 : vector<1x64xf32> to vector<256x64xf32>
    %18 = arith.mulf %15, %17 : vector<256x64xf32>
    %c0_40 = arith.constant 0 : index
    %c0_41 = arith.constant 0 : index
    %19 = vector.load %arg4[%c0_40, %c0_41] : memref<1x64xf32, #tpu.memory_space<vmem>>, vector<1x64xf32>
    %20 = vector.broadcast %19 : vector<1x64xf32> to vector<256x64xf32>
    %21 = arith.addf %18, %20 : vector<256x64xf32>
    %22 = vector.extract_strided_slice %21 {offsets = [0, 0], sizes = [256, 32], strides = [1, 1]} : vector<256x64xf32> to vector<256x32xf32>
    %cst_42 = arith.constant 0.000000e+00 : f32
    %23 = vector.broadcast %cst_42 : f32 to vector<256x32xf32>
    %24 = arith.maximumf %22, %23 : vector<256x32xf32>
    %25 = vector.extract_strided_slice %21 {offsets = [0, 32], sizes = [256, 32], strides = [1, 1]} : vector<256x64xf32> to vector<256x32xf32>
    %26 = vector.shape_cast %25 : vector<256x32xf32> to vector<4x8x8x32xf32>
    %27 = vector.shape_cast %24 : vector<256x32xf32> to vector<4x8x8x32xf32>
    %28 = arith.truncf %27 : vector<4x8x8x32xf32> to vector<4x8x8x32xbf16>
    %c0_43 = arith.constant 0 : index
    %c1_44 = arith.constant 1 : index
    %c1_45 = arith.constant 1 : index
    %c0_46 = arith.constant 0 : index
    %29 = vector.load %arg16[%c0_43, %c1_44, %c1_45, %c0_46] : memref<4x10x10x32xbf16, #tpu.memory_space<vmem>>, vector<4x8x8x32xbf16>
    tpu.vector_store %arg16[%c0_43, %c1_44, %c1_45, %c0_46], %28 {strides = array<i32>} : memref<4x10x10x32xbf16, #tpu.memory_space<vmem>>, vector<4x8x8x32xbf16>,
    %c0_47 = arith.constant 0 : index
    %c0_48 = arith.constant 0 : index
    %c0_49 = arith.constant 0 : index
    %c0_50 = arith.constant 0 : index
    %30 = vector.load %arg16[%c0_47, %c0_48, %c0_49, %c0_50] : memref<4x10x10x32xbf16, #tpu.memory_space<vmem>>, vector<4x8x8x32xbf16>
    %c0_51 = arith.constant 0 : index
    %c0_52 = arith.constant 0 : index
    %c1_53 = arith.constant 1 : index
    %c0_54 = arith.constant 0 : index
    %31 = vector.load %arg16[%c0_51, %c0_52, %c1_53, %c0_54] : memref<4x10x10x32xbf16, #tpu.memory_space<vmem>>, vector<4x8x8x32xbf16>
    %c0_55 = arith.constant 0 : index
    %c0_56 = arith.constant 0 : index
    %c2 = arith.constant 2 : index
    %c0_57 = arith.constant 0 : index
    %32 = vector.load %arg16[%c0_55, %c0_56, %c2, %c0_57] : memref<4x10x10x32xbf16, #tpu.memory_space<vmem>>, vector<4x8x8x32xbf16>
    %c0_58 = arith.constant 0 : index
    %c1_59 = arith.constant 1 : index
    %c0_60 = arith.constant 0 : index
    %c0_61 = arith.constant 0 : index
    %33 = vector.load %arg16[%c0_58, %c1_59, %c0_60, %c0_61] : memref<4x10x10x32xbf16, #tpu.memory_space<vmem>>, vector<4x8x8x32xbf16>
    %c0_62 = arith.constant 0 : index
    %c1_63 = arith.constant 1 : index
    %c1_64 = arith.constant 1 : index
    %c0_65 = arith.constant 0 : index
    %34 = vector.load %arg16[%c0_62, %c1_63, %c1_64, %c0_65] : memref<4x10x10x32xbf16, #tpu.memory_space<vmem>>, vector<4x8x8x32xbf16>
    %c0_66 = arith.constant 0 : index
    %c1_67 = arith.constant 1 : index
    %c2_68 = arith.constant 2 : index
    %c0_69 = arith.constant 0 : index
    %35 = vector.load %arg16[%c0_66, %c1_67, %c2_68, %c0_69] : memref<4x10x10x32xbf16, #tpu.memory_space<vmem>>, vector<4x8x8x32xbf16>
    %c0_70 = arith.constant 0 : index
    %c2_71 = arith.constant 2 : index
    %c0_72 = arith.constant 0 : index
    %c0_73 = arith.constant 0 : index
    %36 = vector.load %arg16[%c0_70, %c2_71, %c0_72, %c0_73] : memref<4x10x10x32xbf16, #tpu.memory_space<vmem>>, vector<4x8x8x32xbf16>
    %c0_74 = arith.constant 0 : index
    %c2_75 = arith.constant 2 : index
    %c1_76 = arith.constant 1 : index
    %c0_77 = arith.constant 0 : index
    %37 = vector.load %arg16[%c0_74, %c2_75, %c1_76, %c0_77] : memref<4x10x10x32xbf16, #tpu.memory_space<vmem>>, vector<4x8x8x32xbf16>
    %c0_78 = arith.constant 0 : index
    %c2_79 = arith.constant 2 : index
    %c2_80 = arith.constant 2 : index
    %c0_81 = arith.constant 0 : index
    %38 = vector.load %arg16[%c0_78, %c2_79, %c2_80, %c0_81] : memref<4x10x10x32xbf16, #tpu.memory_space<vmem>>, vector<4x8x8x32xbf16>
    %39 = tpu.concatenate %30, %31, %32, %33, %34, %35, %36, %37, %38 in 3 : vector<4x8x8x32xbf16>, vector<4x8x8x32xbf16>, vector<4x8x8x32xbf16>, vector<4x8x8x32xbf16>, vector<4x8x8x32xbf16>, vector<4x8x8x32xbf16>, vector<4x8x8x32xbf16>, vector<4x8x8x32xbf16>, vector<4x8x8x32xbf16> -> vector<4x8x8x288xbf16>
    %40 = vector.shape_cast %39 : vector<4x8x8x288xbf16> to vector<256x288xbf16>
    %c0_82 = arith.constant 0 : index
    %c0_83 = arith.constant 0 : index
    %41 = vector.load %arg5[%c0_82, %c0_83] : memref<288x32xbf16, #tpu.memory_space<vmem>>, vector<288x32xbf16>
    %cst_84 = arith.constant dense<0.000000e+00> : vector<256x32xf32>
    %42 = tpu.matmul %40, %41, %cst_84 {dimension_numbers = #tpu.dot_dimension_numbers<[1], [0], [0], [1], [0, 0, 1, 1], [], []>} : vector<256x288xbf16>, vector<288x32xbf16>, vector<256x32xf32> -> vector<256x32xf32>
    %c0_85 = arith.constant 0 : index
    %c0_86 = arith.constant 0 : index
    %43 = vector.load %arg6[%c0_85, %c0_86] : memref<1x32xf32, #tpu.memory_space<vmem>>, vector<1x32xf32>
    %44 = vector.broadcast %43 : vector<1x32xf32> to vector<256x32xf32>
    %45 = arith.mulf %42, %44 : vector<256x32xf32>
    %c0_87 = arith.constant 0 : index
    %c0_88 = arith.constant 0 : index
    %46 = vector.load %arg7[%c0_87, %c0_88] : memref<1x32xf32, #tpu.memory_space<vmem>>, vector<1x32xf32>
    %47 = vector.broadcast %46 : vector<1x32xf32> to vector<256x32xf32>
    %48 = arith.addf %45, %47 : vector<256x32xf32>
    %49 = vector.shape_cast %48 : vector<256x32xf32> to vector<4x64x32xf32>
    %cst_89 = arith.constant dense<0xFF800000> : vector<4x32xf32>
    %50 = vector.multi_reduction <maximumf>, %49, %cst_89 [1] : vector<4x64x32xf32> to vector<4x32xf32>
    %cst_90 = arith.constant dense<0.000000e+00> : vector<4x32xf32>
    %51 = vector.multi_reduction <add>, %49, %cst_90 [1] : vector<4x64x32xf32> to vector<4x32xf32>
    %cst_91 = arith.constant 6.400000e+01 : f32
    %52 = vector.broadcast %cst_91 : f32 to vector<4x32xf32>
    %53 = arith.divf %51, %52 : vector<4x32xf32>
    %54 = vector.shape_cast %50 : vector<4x32xf32> to vector<4x32x1xf32>
    %c0_92 = arith.constant 0 : index
    %c0_93 = arith.constant 0 : index
    %55 = vector.load %arg8[%c0_92, %c0_93] : memref<32x2xf32, #tpu.memory_space<vmem>>, vector<32x2xf32>
    %56 = vector.shape_cast %55 : vector<32x2xf32> to vector<1x32x2xf32>
    %57 = vector.broadcast %54 : vector<4x32x1xf32> to vector<4x32x2xf32>
    %58 = vector.broadcast %56 : vector<1x32x2xf32> to vector<4x32x2xf32>
    %59 = arith.mulf %57, %58 : vector<4x32x2xf32>
    %cst_94 = arith.constant dense<0.000000e+00> : vector<4x2xf32>
    %60 = vector.multi_reduction <add>, %59, %cst_94 [1] : vector<4x32x2xf32> to vector<4x2xf32>
    %c0_95 = arith.constant 0 : index
    %c0_96 = arith.constant 0 : index
    %61 = vector.load %arg9[%c0_95, %c0_96] : memref<1x2xf32, #tpu.memory_space<vmem>>, vector<1x2xf32>
    %62 = vector.broadcast %61 : vector<1x2xf32> to vector<4x2xf32>
    %63 = arith.addf %60, %62 : vector<4x2xf32>
    %cst_97 = arith.constant 0.000000e+00 : f32
    %64 = vector.broadcast %cst_97 : f32 to vector<4x2xf32>
    %65 = arith.maximumf %63, %64 : vector<4x2xf32>
    %66 = vector.shape_cast %65 : vector<4x2xf32> to vector<4x2x1xf32>
    %c0_98 = arith.constant 0 : index
    %c0_99 = arith.constant 0 : index
    %67 = vector.load %arg10[%c0_98, %c0_99] : memref<2x32xf32, #tpu.memory_space<vmem>>, vector<2x32xf32>
    %68 = vector.shape_cast %67 : vector<2x32xf32> to vector<1x2x32xf32>
    %69 = vector.broadcast %66 : vector<4x2x1xf32> to vector<4x2x32xf32>
    %70 = vector.broadcast %68 : vector<1x2x32xf32> to vector<4x2x32xf32>
    %71 = arith.mulf %69, %70 : vector<4x2x32xf32>
    %cst_100 = arith.constant dense<0.000000e+00> : vector<4x32xf32>
    %72 = vector.multi_reduction <add>, %71, %cst_100 [1] : vector<4x2x32xf32> to vector<4x32xf32>
    %c0_101 = arith.constant 0 : index
    %c0_102 = arith.constant 0 : index
    %73 = vector.load %arg11[%c0_101, %c0_102] : memref<1x32xf32, #tpu.memory_space<vmem>>, vector<1x32xf32>
    %74 = vector.broadcast %73 : vector<1x32xf32> to vector<4x32xf32>
    %75 = arith.addf %72, %74 : vector<4x32xf32>
    %76 = vector.shape_cast %53 : vector<4x32xf32> to vector<4x32x1xf32>
    %c0_103 = arith.constant 0 : index
    %c0_104 = arith.constant 0 : index
    %77 = vector.load %arg8[%c0_103, %c0_104] : memref<32x2xf32, #tpu.memory_space<vmem>>, vector<32x2xf32>
    %78 = vector.shape_cast %77 : vector<32x2xf32> to vector<1x32x2xf32>
    %79 = vector.broadcast %76 : vector<4x32x1xf32> to vector<4x32x2xf32>
    %80 = vector.broadcast %78 : vector<1x32x2xf32> to vector<4x32x2xf32>
    %81 = arith.mulf %79, %80 : vector<4x32x2xf32>
    %cst_105 = arith.constant dense<0.000000e+00> : vector<4x2xf32>
    %82 = vector.multi_reduction <add>, %81, %cst_105 [1] : vector<4x32x2xf32> to vector<4x2xf32>
    %c0_106 = arith.constant 0 : index
    %c0_107 = arith.constant 0 : index
    %83 = vector.load %arg9[%c0_106, %c0_107] : memref<1x2xf32, #tpu.memory_space<vmem>>, vector<1x2xf32>
    %84 = vector.broadcast %83 : vector<1x2xf32> to vector<4x2xf32>
    %85 = arith.addf %82, %84 : vector<4x2xf32>
    %cst_108 = arith.constant 0.000000e+00 : f32
    %86 = vector.broadcast %cst_108 : f32 to vector<4x2xf32>
    %87 = arith.maximumf %85, %86 : vector<4x2xf32>
    %88 = vector.shape_cast %87 : vector<4x2xf32> to vector<4x2x1xf32>
    %c0_109 = arith.constant 0 : index
    %c0_110 = arith.constant 0 : index
    %89 = vector.load %arg10[%c0_109, %c0_110] : memref<2x32xf32, #tpu.memory_space<vmem>>, vector<2x32xf32>
    %90 = vector.shape_cast %89 : vector<2x32xf32> to vector<1x2x32xf32>
    %91 = vector.broadcast %88 : vector<4x2x1xf32> to vector<4x2x32xf32>
    %92 = vector.broadcast %90 : vector<1x2x32xf32> to vector<4x2x32xf32>
    %93 = arith.mulf %91, %92 : vector<4x2x32xf32>
    %cst_111 = arith.constant dense<0.000000e+00> : vector<4x32xf32>
    %94 = vector.multi_reduction <add>, %93, %cst_111 [1] : vector<4x2x32xf32> to vector<4x32xf32>
    %c0_112 = arith.constant 0 : index
    %c0_113 = arith.constant 0 : index
    %95 = vector.load %arg11[%c0_112, %c0_113] : memref<1x32xf32, #tpu.memory_space<vmem>>, vector<1x32xf32>
    %96 = vector.broadcast %95 : vector<1x32xf32> to vector<4x32xf32>
    %97 = arith.addf %94, %96 : vector<4x32xf32>
    %98 = arith.addf %75, %97 : vector<4x32xf32>
    %99 = arith.negf %98 : vector<4x32xf32>
    %100 = math.exp %99 : vector<4x32xf32>
    %cst_114 = arith.constant 1.000000e+00 : f32
    %101 = vector.broadcast %cst_114 : f32 to vector<4x32xf32>
    %102 = arith.addf %101, %100 : vector<4x32xf32>
    %103 = arith.divf %101, %102 : vector<4x32xf32>
    %104 = vector.shape_cast %103 : vector<4x32xf32> to vector<4x1x32xf32>
    %105 = vector.broadcast %104 : vector<4x1x32xf32> to vector<4x64x32xf32>
    %106 = arith.mulf %49, %105 : vector<4x64x32xf32>
    %107 = vector.shape_cast %106 : vector<4x64x32xf32> to vector<4x8x8x32xf32>
    %cst_115 = arith.constant dense<0xFF800000> : vector<4x8x8xf32>
    %108 = vector.multi_reduction <maximumf>, %107, %cst_115 [3] : vector<4x8x8x32xf32> to vector<4x8x8xf32>
    %c0_116 = arith.constant 0 : index
    %c3 = arith.constant 3 : index
    %c3_117 = arith.constant 3 : index
    %109 = vector.load %arg17[%c0_116, %c3, %c3_117] : memref<4x14x28xf32, #tpu.memory_space<vmem>>, vector<4x8x8xf32>
    tpu.vector_store %arg17[%c0_116, %c3, %c3_117], %108 {strides = array<i32>} : memref<4x14x28xf32, #tpu.memory_space<vmem>>, vector<4x8x8xf32>,
    %cst_118 = arith.constant dense<0.000000e+00> : vector<4x8x8xf32>
    %110 = vector.multi_reduction <add>, %107, %cst_118 [3] : vector<4x8x8x32xf32> to vector<4x8x8xf32>
    %cst_119 = arith.constant 3.200000e+01 : f32
    %111 = vector.broadcast %cst_119 : f32 to vector<4x8x8xf32>
    %112 = arith.divf %110, %111 : vector<4x8x8xf32>
    %c0_120 = arith.constant 0 : index
    %c3_121 = arith.constant 3 : index
    %c17 = arith.constant 17 : index
    %113 = vector.load %arg17[%c0_120, %c3_121, %c17] : memref<4x14x28xf32, #tpu.memory_space<vmem>>, vector<4x8x8xf32>
    tpu.vector_store %arg17[%c0_120, %c3_121, %c17], %112 {strides = array<i32>} : memref<4x14x28xf32, #tpu.memory_space<vmem>>, vector<4x8x8xf32>,
    %c0_122 = arith.constant 0 : index
    %c0_123 = arith.constant 0 : index
    %c0_124 = arith.constant 0 : index
    %114 = vector.load %arg17[%c0_122, %c0_123, %c0_124] : memref<4x14x28xf32, #tpu.memory_space<vmem>>, vector<4x8x28xf32>
    %c0_125 = arith.constant 0 : index
    %c1_126 = arith.constant 1 : index
    %c0_127 = arith.constant 0 : index
    %115 = vector.load %arg17[%c0_125, %c1_126, %c0_127] : memref<4x14x28xf32, #tpu.memory_space<vmem>>, vector<4x8x28xf32>
    %c0_128 = arith.constant 0 : index
    %c2_129 = arith.constant 2 : index
    %c0_130 = arith.constant 0 : index
    %116 = vector.load %arg17[%c0_128, %c2_129, %c0_130] : memref<4x14x28xf32, #tpu.memory_space<vmem>>, vector<4x8x28xf32>
    %c0_131 = arith.constant 0 : index
    %c3_132 = arith.constant 3 : index
    %c0_133 = arith.constant 0 : index
    %117 = vector.load %arg17[%c0_131, %c3_132, %c0_133] : memref<4x14x28xf32, #tpu.memory_space<vmem>>, vector<4x8x28xf32>
    %c0_134 = arith.constant 0 : index
    %c4 = arith.constant 4 : index
    %c0_135 = arith.constant 0 : index
    %118 = vector.load %arg17[%c0_134, %c4, %c0_135] : memref<4x14x28xf32, #tpu.memory_space<vmem>>, vector<4x8x28xf32>
    %c0_136 = arith.constant 0 : index
    %c5 = arith.constant 5 : index
    %c0_137 = arith.constant 0 : index
    %119 = vector.load %arg17[%c0_136, %c5, %c0_137] : memref<4x14x28xf32, #tpu.memory_space<vmem>>, vector<4x8x28xf32>
    %c0_138 = arith.constant 0 : index
    %c6 = arith.constant 6 : index
    %c0_139 = arith.constant 0 : index
    %120 = vector.load %arg17[%c0_138, %c6, %c0_139] : memref<4x14x28xf32, #tpu.memory_space<vmem>>, vector<4x8x28xf32>
    %121 = tpu.concatenate %114, %115, %116, %117, %118, %119, %120 in 2 : vector<4x8x28xf32>, vector<4x8x28xf32>, vector<4x8x28xf32>, vector<4x8x28xf32>, vector<4x8x28xf32>, vector<4x8x28xf32>, vector<4x8x28xf32> -> vector<4x8x196xf32>
    %122 = vector.shape_cast %121 : vector<4x8x196xf32> to vector<32x196xf32>
    %c0_140 = arith.constant 0 : index
    %c0_141 = arith.constant 0 : index
    %123 = vector.load %arg12[%c0_140, %c0_141] : memref<196x8xf32, #tpu.memory_space<vmem>>, vector<196x8xf32>
    %cst_142 = arith.constant dense<0.000000e+00> : vector<32x8xf32>
    %124 = tpu.matmul %122, %123, %cst_142 {dimension_numbers = #tpu.dot_dimension_numbers<[1], [0], [0], [1], [0, 0, 1, 1], [], []>} : vector<32x196xf32>, vector<196x8xf32>, vector<32x8xf32> -> vector<32x8xf32>
    %c0_143 = arith.constant 0 : index
    %125 = memref.load %arg13[%c0_143] : memref<1xf32, #tpu.memory_space<smem>>
    %126 = vector.broadcast %125 : f32 to vector<32x8xf32>
    %127 = arith.addf %124, %126 : vector<32x8xf32>
    %128 = arith.negf %127 : vector<32x8xf32>
    %129 = math.exp %128 : vector<32x8xf32>
    %cst_144 = arith.constant 1.000000e+00 : f32
    %130 = vector.broadcast %cst_144 : f32 to vector<32x8xf32>
    %131 = arith.addf %130, %129 : vector<32x8xf32>
    %132 = arith.divf %130, %131 : vector<32x8xf32>
    %133 = vector.shape_cast %132 : vector<32x8xf32> to vector<4x8x8xf32>
    %134 = vector.shape_cast %133 : vector<4x8x8xf32> to vector<4x8x8x1xf32>
    %135 = vector.broadcast %134 : vector<4x8x8x1xf32> to vector<4x8x8x32xf32>
    %136 = arith.mulf %107, %135 : vector<4x8x8x32xf32>
    %137 = arith.addf %136, %26 : vector<4x8x8x32xf32>
    %cst_145 = arith.constant 0.000000e+00 : f32
    %138 = vector.broadcast %cst_145 : f32 to vector<4x8x8x32xf32>
    %139 = arith.maximumf %137, %138 : vector<4x8x8x32xf32>
    %140 = vector.shape_cast %139 : vector<4x8x8x32xf32> to vector<4x8x256xf32>
    %c0_146 = arith.constant 0 : index
    %c0_147 = arith.constant 0 : index
    %c0_148 = arith.constant 0 : index
    %141 = vector.load %arg14[%c0_146, %c0_147, %c0_148] : memref<4x8x256xf32, #tpu.memory_space<vmem>>, vector<4x8x256xf32>
    tpu.vector_store %arg14[%c0_146, %c0_147, %c0_148], %140 {strides = array<i32>} : memref<4x8x256xf32, #tpu.memory_space<vmem>>, vector<4x8x256xf32>,
    return
  }
  func.func @transform_0(%arg0: i32) -> (i32, i32, i32, i32) {
    %c0_i32 = arith.constant 0 : i32
    %c0_i32_0 = arith.constant 0 : i32
    %c0_i32_1 = arith.constant 0 : i32
    %c0_i32_2 = arith.constant 0 : i32
    return %arg0, %c0_i32, %c0_i32_0, %c0_i32_1 : i32, i32, i32, i32
  }
  func.func @transform_1(%arg0: i32) -> (i32, i32) {
    %c0_i32 = arith.constant 0 : i32
    %c0_i32_0 = arith.constant 0 : i32
    %c0_i32_1 = arith.constant 0 : i32
    return %c0_i32, %c0_i32_0 : i32, i32
  }
  func.func @transform_2(%arg0: i32) -> (i32, i32) {
    %c0_i32 = arith.constant 0 : i32
    %c0_i32_0 = arith.constant 0 : i32
    %c0_i32_1 = arith.constant 0 : i32
    return %c0_i32, %c0_i32_0 : i32, i32
  }
  func.func @transform_3(%arg0: i32) -> (i32, i32) {
    %c0_i32 = arith.constant 0 : i32
    %c0_i32_0 = arith.constant 0 : i32
    %c0_i32_1 = arith.constant 0 : i32
    return %c0_i32, %c0_i32_0 : i32, i32
  }
  func.func @transform_4(%arg0: i32) -> (i32, i32) {
    %c0_i32 = arith.constant 0 : i32
    %c0_i32_0 = arith.constant 0 : i32
    %c0_i32_1 = arith.constant 0 : i32
    return %c0_i32, %c0_i32_0 : i32, i32
  }
  func.func @transform_5(%arg0: i32) -> (i32, i32) {
    %c0_i32 = arith.constant 0 : i32
    %c0_i32_0 = arith.constant 0 : i32
    %c0_i32_1 = arith.constant 0 : i32
    return %c0_i32, %c0_i32_0 : i32, i32
  }
  func.func @transform_6(%arg0: i32) -> (i32, i32) {
    %c0_i32 = arith.constant 0 : i32
    %c0_i32_0 = arith.constant 0 : i32
    %c0_i32_1 = arith.constant 0 : i32
    return %c0_i32, %c0_i32_0 : i32, i32
  }
  func.func @transform_7(%arg0: i32) -> (i32, i32) {
    %c0_i32 = arith.constant 0 : i32
    %c0_i32_0 = arith.constant 0 : i32
    %c0_i32_1 = arith.constant 0 : i32
    return %c0_i32, %c0_i32_0 : i32, i32
  }
  func.func @transform_8(%arg0: i32) -> (i32, i32) {
    %c0_i32 = arith.constant 0 : i32
    %c0_i32_0 = arith.constant 0 : i32
    %c0_i32_1 = arith.constant 0 : i32
    return %c0_i32, %c0_i32_0 : i32, i32
  }
  func.func @transform_9(%arg0: i32) -> (i32, i32) {
    %c0_i32 = arith.constant 0 : i32
    %c0_i32_0 = arith.constant 0 : i32
    %c0_i32_1 = arith.constant 0 : i32
    return %c0_i32, %c0_i32_0 : i32, i32
  }
  func.func @transform_10(%arg0: i32) -> (i32, i32) {
    %c0_i32 = arith.constant 0 : i32
    %c0_i32_0 = arith.constant 0 : i32
    %c0_i32_1 = arith.constant 0 : i32
    return %c0_i32, %c0_i32_0 : i32, i32
  }
  func.func @transform_11(%arg0: i32) -> (i32, i32) {
    %c0_i32 = arith.constant 0 : i32
    %c0_i32_0 = arith.constant 0 : i32
    %c0_i32_1 = arith.constant 0 : i32
    return %c0_i32, %c0_i32_0 : i32, i32
  }
  func.func @transform_12(%arg0: i32) -> i32 {
    %c0_i32 = arith.constant 0 : i32
    %c0_i32_0 = arith.constant 0 : i32
    return %c0_i32 : i32
  }
  func.func @transform_13(%arg0: i32) -> (i32, i32, i32) {
    %c0_i32 = arith.constant 0 : i32
    %c0_i32_0 = arith.constant 0 : i32
    %c0_i32_1 = arith.constant 0 : i32
    return %arg0, %c0_i32, %c0_i32_0 : i32, i32, i32
  }
}

</mosaic_0001>

<llo_original>
// kernel: tpu_custom_call.1
$region0: #{tpu_custom_call.1}
  #allocation0 [shape = 'u32[]', space=smem, size = 0x4, offset = 0x4, fixed_abs, tag = 'smem constant byte address 0x4 - core index']
  #allocation1 [shape = 'u32[144,128]{1,0:T(1,128)}', space=vmem, size = 0x12000, scoped, tag = 'internal scratch']
  #allocation2 [shape = 'bf16[4,9,9,64]{3,2,1,0:T(8,128)(2,1)}', space=vmem, size = 0x24000, scoped, tag = 'scratch operand']
  #allocation3 [shape = 'bf16[4,10,10,32]{3,2,1,0:T(8,128)(2,1)}', space=vmem, size = 0x28000, scoped, tag = 'scratch operand']
  #allocation4 [shape = 'f32[4,14,28]{2,1,0:T(8,128)}', space=vmem, size = 0x8000, scoped, tag = 'scratch operand']
  #allocation5 [shape = 'f32[1]{0:T(128)S(6)}', space=smem, size = 0x200, scoped, tag = 'scoped memory for tpu_custom_call.1']
  %s0 = inlined_call_operand.vmem [shape: bf16[8,8,8,64], index: 0, kind: input, shape index: {}]
  %s1 = inlined_call_operand.vmem [shape: bf16[256,64], index: 1, kind: input, shape index: {}]
  %s2 = inlined_call_operand.vmem [shape: f32[1,64], index: 2, kind: input, shape index: {}]
  %s3 = inlined_call_operand.vmem [shape: f32[1,64], index: 3, kind: input, shape index: {}]
  %s4 = inlined_call_operand.vmem [shape: bf16[288,32], index: 4, kind: input, shape index: {}]
  %s5 = inlined_call_operand.vmem [shape: f32[1,32], index: 5, kind: input, shape index: {}]
  %s6 = inlined_call_operand.vmem [shape: f32[1,32], index: 6, kind: input, shape index: {}]
  %s7 = inlined_call_operand.vmem [shape: f32[32,2], index: 7, kind: input, shape index: {}]
  %s8 = inlined_call_operand.vmem [shape: f32[1,2], index: 8, kind: input, shape index: {}]
  %s9 = inlined_call_operand.vmem [shape: f32[2,32], index: 9, kind: input, shape index: {}]
  %s10 = inlined_call_operand.vmem [shape: f32[1,32], index: 10, kind: input, shape index: {}]
  %s11 = inlined_call_operand.vmem [shape: f32[196,8], index: 11, kind: input, shape index: {}]
  %s12 = inlined_call_operand.<no memory space> [shape: f32[1], index: 12, kind: input, shape index: {}]
  %s13 = inlined_call_operand.hbm [shape: f32[8,8,256], index: 13, kind: output, shape index: {}]
  %s14 = sld [smem:[#allocation0]]
  $region85: #{tpu_custom_call.1} parent=0
    _
  %s16 = ssub.s32 1, %s14
  %s17 = scalar_select 0, %s16, %s14
  %18 = sst [smem:[#allocation5]] %s12
  $region1: #{tpu_custom_call.1} parent=0
    #allocation6 [shape = 'u8[65536]{0}', space=vmem, size = 0x10000, scoped, tag = 'output window, operand 0']
    #allocation7 [shape = 's32[2]{0}', space=sflag, size = 0x8, scoped, tag = 'scoped memory for tpu_custom_call.1']
    %19 = vsyncpa [#allocation7], 0
    %s20 = scalar_lea.sflag [#allocation7], 1
    %21 = vsyncpa %s20, 0
    loop: start=0, step=1, limit=4
    $region2: #{tpu_custom_call.1} parent=1 // loop_pre_header
      _
    $region3: #{tpu_custom_call.1} parent=1 // loop_header
      %s23 = sphi 0, %s27
      %p24 = scmp.ge.s32.totalorder %s23, 4
      %s33 = sphi 0, %s35
      %s36 = sphi 0, %s33
      %s37 = sphi 0, %s36
      %s53 = sphi 0, %s37
      %s57 = sphi 0, %s57
      %s59 = sphi 0, %s57
      %s60 = sphi 0, %s59
      %s74 = sphi 0, %s60
      %s78 = sphi 0, %s78
      %s80 = sphi 0, %s78
      %s81 = sphi 0, %s80
      %s95 = sphi 0, %s81
      %s99 = sphi 0, %s99
      %s101 = sphi 0, %s99
      %s102 = sphi 0, %s101
      %s116 = sphi 0, %s102
      %s120 = sphi 0, %s120
      %s122 = sphi 0, %s120
      %s123 = sphi 0, %s122
      %s137 = sphi 0, %s123
      %s141 = sphi 0, %s141
      %s143 = sphi 0, %s141
      %s144 = sphi 0, %s143
      %s158 = sphi 0, %s144
      %s162 = sphi 0, %s162
      %s164 = sphi 0, %s162
      %s165 = sphi 0, %s164
      %s179 = sphi 0, %s165
      %s183 = sphi 0, %s183
      %s185 = sphi 0, %s183
      %s186 = sphi 0, %s185
      %s200 = sphi 0, %s186
      %s204 = sphi 0, %s204
      %s206 = sphi 0, %s204
      %s207 = sphi 0, %s206
      %s221 = sphi 0, %s207
      %s225 = sphi 0, %s225
      %s227 = sphi 0, %s225
      %s228 = sphi 0, %s227
      %s242 = sphi 0, %s228
      %s246 = sphi 0, %s246
      %s248 = sphi 0, %s246
      %s249 = sphi 0, %s248
      %s263 = sphi 0, %s249
      %s267 = sphi 0, %s267
      %s269 = sphi 0, %s267
      %s270 = sphi 0, %s269
      %s284 = sphi 0, %s270
      %s288 = sphi 0, %s288
      %s290 = sphi 0, %s288
      %s291 = sphi 0, %s290
      %s305 = sphi 0, %s291
      %s311 = sphi 0, %s313
      %s314 = sphi 0, %s311
      %s315 = sphi 0, %s314
      %s331 = sphi 0, %s315
    $region4: #{tpu_custom_call.1} parent=1 // loop_header_branch
      %26 = sbr.rel (%p24) target = $region8
    $region5: #{tpu_custom_call.1} parent=1 // loop_body
      %s28 = ssub.s32 %s23, 1
      %s29 = ssub.s32 %s23, 2
      %s30 = sadd.s32 %s23, 1
      %s31 = ssub.s32 %s23, %s30
      %p32 = scmp.eq.s32.totalorder %s31, 0
      %s34 = sadd.s32 %s33, 1
      %s35 = scalar_select %p32, %s33, %s34
      %p38 = pneg %p32
      %p39 = scmp.eq.s32.totalorder %s23, 1
      %p40 = por %p38, %p39
      %p41 = scmp.ne.s32.totalorder %s33, %s36
      %p42 = scmp.eq.s32.totalorder %s23, 0
      %p43 = por %p41, %p42
      %p44 = scmp.ne.s32.totalorder %s33, %s36
      %p45 = scmp.eq.s32.totalorder %s28, 1
      %p46 = por %p44, %p45
      %p47 = scmp.ne.s32.totalorder %s36, %s37
      %p48 = scmp.eq.s32.totalorder %s28, 0
      %p49 = por %p47, %p48
      %p50 = scmp.ne.s32.totalorder %s36, %s37
      %p51 = scmp.eq.s32.totalorder %s29, 1
      %p52 = por %p50, %p51
      %p54 = scmp.ne.s32.totalorder %s37, %s53
      %p55 = scmp.eq.s32.totalorder %s29, 0
      %p56 = por %p54, %p55
      %s58 = sadd.s32 %s57, 1
      %p61 = scmp.eq.s32.totalorder %s23, 1
      %p62 = scmp.ne.s32.totalorder %s57, %s59
      %p63 = scmp.eq.s32.totalorder %s23, 0
      %p64 = por %p62, %p63
      %p65 = scmp.ne.s32.totalorder %s57, %s59
      %p66 = scmp.eq.s32.totalorder %s28, 1
      %p67 = por %p65, %p66
      %p68 = scmp.ne.s32.totalorder %s59, %s60
      %p69 = scmp.eq.s32.totalorder %s28, 0
      %p70 = por %p68, %p69
      %p71 = scmp.ne.s32.totalorder %s59, %s60
      %p72 = scmp.eq.s32.totalorder %s29, 1
      %p73 = por %p71, %p72
      %p75 = scmp.ne.s32.totalorder %s60, %s74
      %p76 = scmp.eq.s32.totalorder %s29, 0
      %p77 = por %p75, %p76
      %s79 = sadd.s32 %s78, 1
      %p82 = scmp.eq.s32.totalorder %s23, 1
      %p83 = scmp.ne.s32.totalorder %s78, %s80
      %p84 = scmp.eq.s32.totalorder %s23, 0
      %p85 = por %p83, %p84
      %p86 = scmp.ne.s32.totalorder %s78, %s80
      %p87 = scmp.eq.s32.totalorder %s28, 1
      %p88 = por %p86, %p87
      %p89 = scmp.ne.s32.totalorder %s80, %s81
      %p90 = scmp.eq.s32.totalorder %s28, 0
      %p91 = por %p89, %p90
      %p92 = scmp.ne.s32.totalorder %s80, %s81
      %p93 = scmp.eq.s32.totalorder %s29, 1
      %p94 = por %p92, %p93
      %p96 = scmp.ne.s32.totalorder %s81, %s95
      %p97 = scmp.eq.s32.totalorder %s29, 0
      %p98 = por %p96, %p97
      %s100 = sadd.s32 %s99, 1
      %p103 = scmp.eq.s32.totalorder %s23, 1
      %p104 = scmp.ne.s32.totalorder %s99, %s101
      %p105 = scmp.eq.s32.totalorder %s23, 0
      %p106 = por %p104, %p105
      %p107 = scmp.ne.s32.totalorder %s99, %s101
      %p108 = scmp.eq.s32.totalorder %s28, 1
      %p109 = por %p107, %p108
      %p110 = scmp.ne.s32.totalorder %s101, %s102
      %p111 = scmp.eq.s32.totalorder %s28, 0
      %p112 = por %p110, %p111
      %p113 = scmp.ne.s32.totalorder %s101, %s102
      %p114 = scmp.eq.s32.totalorder %s29, 1
      %p115 = por %p113, %p114
      %p117 = scmp.ne.s32.totalorder %s102, %s116
      %p118 = scmp.eq.s32.totalorder %s29, 0
      %p119 = por %p117, %p118
      %s121 = sadd.s32 %s120, 1
      %p124 = scmp.eq.s32.totalorder %s23, 1
      %p125 = scmp.ne.s32.totalorder %s120, %s122
      %p126 = scmp.eq.s32.totalorder %s23, 0
      %p127 = por %p125, %p126
      %p128 = scmp.ne.s32.totalorder %s120, %s122
      %p129 = scmp.eq.s32.totalorder %s28, 1
      %p130 = por %p128, %p129
      %p131 = scmp.ne.s32.totalorder %s122, %s123
      %p132 = scmp.eq.s32.totalorder %s28, 0
      %p133 = por %p131, %p132
      %p134 = scmp.ne.s32.totalorder %s122, %s123
      %p135 = scmp.eq.s32.totalorder %s29, 1
      %p136 = por %p134, %p135
      %p138 = scmp.ne.s32.totalorder %s123, %s137
      %p139 = scmp.eq.s32.totalorder %s29, 0
      %p140 = por %p138, %p139
      %s142 = sadd.s32 %s141, 1
      %p145 = scmp.eq.s32.totalorder %s23, 1
      %p146 = scmp.ne.s32.totalorder %s141, %s143
      %p147 = scmp.eq.s32.totalorder %s23, 0
      %p148 = por %p146, %p147
      %p149 = scmp.ne.s32.totalorder %s141, %s143
      %p150 = scmp.eq.s32.totalorder %s28, 1
      %p151 = por %p149, %p150
      %p152 = scmp.ne.s32.totalorder %s143, %s144
      %p153 = scmp.eq.s32.totalorder %s28, 0
      %p154 = por %p152, %p153
      %p155 = scmp.ne.s32.totalorder %s143, %s144
      %p156 = scmp.eq.s32.totalorder %s29, 1
      %p157 = por %p155, %p156
      %p159 = scmp.ne.s32.totalorder %s144, %s158
      %p160 = scmp.eq.s32.totalorder %s29, 0
      %p161 = por %p159, %p160
      %s163 = sadd.s32 %s162, 1
      %p166 = scmp.eq.s32.totalorder %s23, 1
      %p167 = scmp.ne.s32.totalorder %s162, %s164
      %p168 = scmp.eq.s32.totalorder %s23, 0
      %p169 = por %p167, %p168
      %p170 = scmp.ne.s32.totalorder %s162, %s164
      %p171 = scmp.eq.s32.totalorder %s28, 1
      %p172 = por %p170, %p171
      %p173 = scmp.ne.s32.totalorder %s164, %s165
      %p174 = scmp.eq.s32.totalorder %s28, 0
      %p175 = por %p173, %p174
      %p176 = scmp.ne.s32.totalorder %s164, %s165
      %p177 = scmp.eq.s32.totalorder %s29, 1
      %p178 = por %p176, %p177
      %p180 = scmp.ne.s32.totalorder %s165, %s179
      %p181 = scmp.eq.s32.totalorder %s29, 0
      %p182 = por %p180, %p181
      %s184 = sadd.s32 %s183, 1
      %p187 = scmp.eq.s32.totalorder %s23, 1
      %p188 = scmp.ne.s32.totalorder %s183, %s185
      %p189 = scmp.eq.s32.totalorder %s23, 0
      %p190 = por %p188, %p189
      %p191 = scmp.ne.s32.totalorder %s183, %s185
      %p192 = scmp.eq.s32.totalorder %s28, 1
      %p193 = por %p191, %p192
      %p194 = scmp.ne.s32.totalorder %s185, %s186
      %p195 = scmp.eq.s32.totalorder %s28, 0
      %p196 = por %p194, %p195
      %p197 = scmp.ne.s32.totalorder %s185, %s186
      %p198 = scmp.eq.s32.totalorder %s29, 1
      %p199 = por %p197, %p198
      %p201 = scmp.ne.s32.totalorder %s186, %s200
      %p202 = scmp.eq.s32.totalorder %s29, 0
      %p203 = por %p201, %p202
      %s205 = sadd.s32 %s204, 1
      %p208 = scmp.eq.s32.totalorder %s23, 1
      %p209 = scmp.ne.s32.totalorder %s204, %s206
      %p210 = scmp.eq.s32.totalorder %s23, 0
      %p211 = por %p209, %p210
      %p212 = scmp.ne.s32.totalorder %s204, %s206
      %p213 = scmp.eq.s32.totalorder %s28, 1
      %p214 = por %p212, %p213
      %p215 = scmp.ne.s32.totalorder %s206, %s207
      %p216 = scmp.eq.s32.totalorder %s28, 0
      %p217 = por %p215, %p216
      %p218 = scmp.ne.s32.totalorder %s206, %s207
      %p219 = scmp.eq.s32.totalorder %s29, 1
      %p220 = por %p218, %p219
      %p222 = scmp.ne.s32.totalorder %s207, %s221
      %p223 = scmp.eq.s32.totalorder %s29, 0
      %p224 = por %p222, %p223
      %s226 = sadd.s32 %s225, 1
      %p229 = scmp.eq.s32.totalorder %s23, 1
      %p230 = scmp.ne.s32.totalorder %s225, %s227
      %p231 = scmp.eq.s32.totalorder %s23, 0
      %p232 = por %p230, %p231
      %p233 = scmp.ne.s32.totalorder %s225, %s227
      %p234 = scmp.eq.s32.totalorder %s28, 1
      %p235 = por %p233, %p234
      %p236 = scmp.ne.s32.totalorder %s227, %s228
      %p237 = scmp.eq.s32.totalorder %s28, 0
      %p238 = por %p236, %p237
      %p239 = scmp.ne.s32.totalorder %s227, %s228
      %p240 = scmp.eq.s32.totalorder %s29, 1
      %p241 = por %p239, %p240
      %p243 = scmp.ne.s32.totalorder %s228, %s242
      %p244 = scmp.eq.s32.totalorder %s29, 0
      %p245 = por %p243, %p244
      %s247 = sadd.s32 %s246, 1
      %p250 = scmp.eq.s32.totalorder %s23, 1
      %p251 = scmp.ne.s32.totalorder %s246, %s248
      %p252 = scmp.eq.s32.totalorder %s23, 0
      %p253 = por %p251, %p252
      %p254 = scmp.ne.s32.totalorder %s246, %s248
      %p255 = scmp.eq.s32.totalorder %s28, 1
      %p256 = por %p254, %p255
      %p257 = scmp.ne.s32.totalorder %s248, %s249
      %p258 = scmp.eq.s32.totalorder %s28, 0
      %p259 = por %p257, %p258
      %p260 = scmp.ne.s32.totalorder %s248, %s249
      %p261 = scmp.eq.s32.totalorder %s29, 1
      %p262 = por %p260, %p261
      %p264 = scmp.ne.s32.totalorder %s249, %s263
      %p265 = scmp.eq.s32.totalorder %s29, 0
      %p266 = por %p264, %p265
      %s268 = sadd.s32 %s267, 1
      %p271 = scmp.eq.s32.totalorder %s23, 1
      %p272 = scmp.ne.s32.totalorder %s267, %s269
      %p273 = scmp.eq.s32.totalorder %s23, 0
      %p274 = por %p272, %p273
      %p275 = scmp.ne.s32.totalorder %s267, %s269
      %p276 = scmp.eq.s32.totalorder %s28, 1
      %p277 = por %p275, %p276
      %p278 = scmp.ne.s32.totalorder %s269, %s270
      %p279 = scmp.eq.s32.totalorder %s28, 0
      %p280 = por %p278, %p279
      %p281 = scmp.ne.s32.totalorder %s269, %s270
      %p282 = scmp.eq.s32.totalorder %s29, 1
      %p283 = por %p281, %p282
      %p285 = scmp.ne.s32.totalorder %s270, %s284
      %p286 = scmp.eq.s32.totalorder %s29, 0
      %p287 = por %p285, %p286
      %s289 = sadd.s32 %s288, 1
      %p292 = scmp.eq.s32.totalorder %s23, 1
      %p293 = scmp.ne.s32.totalorder %s288, %s290
      %p294 = scmp.eq.s32.totalorder %s23, 0
      %p295 = por %p293, %p294
      %p296 = scmp.ne.s32.totalorder %s288, %s290
      %p297 = scmp.eq.s32.totalorder %s28, 1
      %p298 = por %p296, %p297
      %p299 = scmp.ne.s32.totalorder %s290, %s291
      %p300 = scmp.eq.s32.totalorder %s28, 0
      %p301 = por %p299, %p300
      %p302 = scmp.ne.s32.totalorder %s290, %s291
      %p303 = scmp.eq.s32.totalorder %s29, 1
      %p304 = por %p302, %p303
      %p306 = scmp.ne.s32.totalorder %s291, %s305
      %p307 = scmp.eq.s32.totalorder %s29, 0
      %p308 = por %p306, %p307
      %s309 = ssub.s32 %s23, %s30
      %p310 = scmp.eq.s32.totalorder %s309, 0
      %s312 = sadd.s32 %s311, 1
      %s313 = scalar_select %p310, %s311, %s312
      %p316 = pneg %p310
      %p317 = scmp.eq.s32.totalorder %s23, 1
      %p318 = por %p316, %p317
      %p319 = scmp.ne.s32.totalorder %s311, %s314
      %p320 = scmp.eq.s32.totalorder %s23, 0
      %p321 = por %p319, %p320
      %p322 = scmp.ne.s32.totalorder %s311, %s314
      %p323 = scmp.eq.s32.totalorder %s28, 1
      %p324 = por %p322, %p323
      %p325 = scmp.ne.s32.totalorder %s314, %s315
      %p326 = scmp.eq.s32.totalorder %s28, 0
      %p327 = por %p325, %p326
      %p328 = scmp.ne.s32.totalorder %s314, %s315
      %p329 = scmp.eq.s32.totalorder %s29, 1
      %p330 = por %p328, %p329
      %p332 = scmp.ne.s32.totalorder %s315, %s331
      %p333 = scmp.eq.s32.totalorder %s29, 0
      %p334 = por %p332, %p333
      %p335 = scmp.le.s32.totalorder 1, %s23
      %p336 = scmp.lt.s32.totalorder %s23, 3
      %p337 = pnand %p335, %p336
      %p338 = pneg %p337
      // Predicated region
      $region9: #{tpu_custom_call.1} parent=5 // pred_check
        _
      $region10: #{tpu_custom_call.1} parent=5 // pred_check_branch
        %340 = sbr.rel (%p337) target = $region12
      $region11: #{tpu_custom_call.1} parent=5 // pred_region
        %s341 = ssub.s32 %s23, 1
        // Predicated region
        $region13: #{tpu_custom_call.1} parent=11 // pred_check
          %p342 = pneg %p70
        $region14: #{tpu_custom_call.1} parent=11 // pred_check_branch
          %344 = sbr.rel (%p342) target = $region16
        $region15: #{tpu_custom_call.1} parent=11 // pred_region
          _
        $region16: #{tpu_custom_call.1} parent=11 // pred_fallthru
          _
        // Predicated region
        $region17: #{tpu_custom_call.1} parent=11 // pred_check
          %p345 = pneg %p91
        $region18: #{tpu_custom_call.1} parent=11 // pred_check_branch
          %347 = sbr.rel (%p345) target = $region20
        $region19: #{tpu_custom_call.1} parent=11 // pred_region
          _
        $region20: #{tpu_custom_call.1} parent=11 // pred_fallthru
          _
        // Predicated region
        $region21: #{tpu_custom_call.1} parent=11 // pred_check
          %p348 = pneg %p112
        $region22: #{tpu_custom_call.1} parent=11 // pred_check_branch
          %350 = sbr.rel (%p348) target = $region24
        $region23: #{tpu_custom_call.1} parent=11 // pred_region
          _
        $region24: #{tpu_custom_call.1} parent=11 // pred_fallthru
          _
        // Predicated region
        $region25: #{tpu_custom_call.1} parent=11 // pred_check
          %p351 = pneg %p133
        $region26: #{tpu_custom_call.1} parent=11 // pred_check_branch
          %353 = sbr.rel (%p351) target = $region28
        $region27: #{tpu_custom_call.1} parent=11 // pred_region
          _
        $region28: #{tpu_custom_call.1} parent=11 // pred_fallthru
          _
        // Predicated region
        $region29: #{tpu_custom_call.1} parent=11 // pred_check
          %p354 = pneg %p154
        $region30: #{tpu_custom_call.1} parent=11 // pred_check_branch
          %356 = sbr.rel (%p354) target = $region32
        $region31: #{tpu_custom_call.1} parent=11 // pred_region
          _
        $region32: #{tpu_custom_call.1} parent=11 // pred_fallthru
          _
        // Predicated region
        $region33: #{tpu_custom_call.1} parent=11 // pred_check
          %p357 = pneg %p175
        $region34: #{tpu_custom_call.1} parent=11 // pred_check_branch
          %359 = sbr.rel (%p357) target = $region36
        $region35: #{tpu_custom_call.1} parent=11 // pred_region
          _
        $region36: #{tpu_custom_call.1} parent=11 // pred_fallthru
          _
        // Predicated region
        $region37: #{tpu_custom_call.1} parent=11 // pred_check
          %p360 = pneg %p196
        $region38: #{tpu_custom_call.1} parent=11 // pred_check_branch
          %362 = sbr.rel (%p360) target = $region40
        $region39: #{tpu_custom_call.1} parent=11 // pred_region
          _
        $region40: #{tpu_custom_call.1} parent=11 // pred_fallthru
          _
        // Predicated region
        $region41: #{tpu_custom_call.1} parent=11 // pred_check
          %p363 = pneg %p217
        $region42: #{tpu_custom_call.1} parent=11 // pred_check_branch
          %365 = sbr.rel (%p363) target = $region44
        $region43: #{tpu_custom_call.1} parent=11 // pred_region
          _
        $region44: #{tpu_custom_call.1} parent=11 // pred_fallthru
          _
        // Predicated region
        $region45: #{tpu_custom_call.1} parent=11 // pred_check
          %p366 = pneg %p238
        $region46: #{tpu_custom_call.1} parent=11 // pred_check_branch
          %368 = sbr.rel (%p366) target = $region48
        $region47: #{tpu_custom_call.1} parent=11 // pred_region
          _
        $region48: #{tpu_custom_call.1} parent=11 // pred_fallthru
          _
        // Predicated region
        $region49: #{tpu_custom_call.1} parent=11 // pred_check
          %p369 = pneg %p259
        $region50: #{tpu_custom_call.1} parent=11 // pred_check_branch
          %371 = sbr.rel (%p369) target = $region52
        $region51: #{tpu_custom_call.1} parent=11 // pred_region
          _
        $region52: #{tpu_custom_call.1} parent=11 // pred_fallthru
          _
        // Predicated region
        $region53: #{tpu_custom_call.1} parent=11 // pred_check
          %p372 = pneg %p280
        $region54: #{tpu_custom_call.1} parent=11 // pred_check_branch
          %374 = sbr.rel (%p372) target = $region56
        $region55: #{tpu_custom_call.1} parent=11 // pred_region
          _
        $region56: #{tpu_custom_call.1} parent=11 // pred_fallthru
          _
        // Predicated region
        $region57: #{tpu_custom_call.1} parent=11 // pred_check
          %p375 = pneg %p301
        $region58: #{tpu_custom_call.1} parent=11 // pred_check_branch
          %377 = sbr.rel (%p375) target = $region60
        $region59: #{tpu_custom_call.1} parent=11 // pred_region
          _
        $region60: #{tpu_custom_call.1} parent=11 // pred_fallthru
          _
      $region12: #{tpu_custom_call.1} parent=5 // pred_fallthru
        _
      %p378 = scmp.lt.s32.totalorder %s23, 2
      // Predicated region
      $region61: #{tpu_custom_call.1} parent=5 // pred_check
        %p379 = pneg %p378
      $region62: #{tpu_custom_call.1} parent=5 // pred_check_branch
        %381 = sbr.rel (%p379) target = $region64
      $region63: #{tpu_custom_call.1} parent=5 // pred_region
        // Predicated region
        $region65: #{tpu_custom_call.1} parent=63 // pred_check
          %p382 = pneg %p43
        $region66: #{tpu_custom_call.1} parent=63 // pred_check_branch
          %384 = sbr.rel (%p382) target = $region68
        $region67: #{tpu_custom_call.1} parent=63 // pred_region
          %s385 = smul.u32 4, %s23
          %p386 = scmp.lt.s32.totalorder %s385, 7
          %s387 = scalar_select %p386, %s385, 7
          %s388 = smul.addr %s387, 8
          %s389 = smul.addr %s388, 4
          %s390 = scalar_lea.vmem %s0, %s389
          %s391 = smul.u32 4, %s23
        $region68: #{tpu_custom_call.1} parent=63 // pred_fallthru
          _
      $region64: #{tpu_custom_call.1} parent=5 // pred_fallthru
        _
      %p392 = scmp.le.s32.totalorder 1, %s23
      %p393 = scmp.lt.s32.totalorder %s23, 3
      %p394 = pnand %p392, %p393
      %p395 = pneg %p394
      // Predicated region
      $region69: #{tpu_custom_call.1} parent=5 // pred_check
        _
      $region70: #{tpu_custom_call.1} parent=5 // pred_check_branch
        %397 = sbr.rel (%p394) target = $region72
      $region71: #{tpu_custom_call.1} parent=5 // pred_region
        %s398 = ssub.s32 %s23, 1
        %s399 = smul.u32 4, %s28
        %p400 = scmp.lt.s32.totalorder %s399, 7
        %s401 = scalar_select %p400, %s399, 7
        %s402 = smul.addr %s401, 8
        %s403 = smul.addr %s402, 4
        %s404 = scalar_lea.vmem %s0, %s403
        %p405 = pneg %p49
        %p406 = pneg %p46
        %p407 = pneg %p70
        %p408 = pneg %p67
        %p409 = pneg %p91
        %p410 = pneg %p88
        %p411 = pneg %p112
        %p412 = pneg %p109
        %p413 = pneg %p133
        %p414 = pneg %p130
        %p415 = pneg %p154
        %p416 = pneg %p151
        %p417 = pneg %p175
        %p418 = pneg %p172
        %p419 = pneg %p196
        %p420 = pneg %p193
        %p421 = pneg %p217
        %p422 = pneg %p214
        %p423 = pneg %p238
        %p424 = pneg %p235
        %p425 = pneg %p259
        %p426 = pneg %p256
        %p427 = pneg %p280
        %p428 = pneg %p277
        %p429 = pneg %p301
        %p430 = pneg %p298
        %p431 = pneg %p327
        %p432 = pneg %p324
        %s433 = sand.u32 %s314, 1
        %s434 = scalar_lea.sflag [#allocation7], %s433
        %s435 = sand.u32 %s314, 1
        %s436 = smul.addr %s435, 64
        %s437 = scalar_lea.vmem [#allocation6], %s436
        %s438 = smul.u32 4, %s28
        %p439 = scmp.lt.s32.totalorder %s438, 7
        %s440 = scalar_select %p439, %s438, 7
        %s441 = smul.addr %s440, 8
        %s442 = smul.addr %s441, 4
        %s443 = scalar_lea.vmem %s0, %s442
        %s444 = smul.u32 4, %s28
        %s445 = smul.u32 4, %s28
        %vm447 = vcmask 519168
        %448 = vst.msk [vmem:[#allocation2] sm:$0xf] %vm447, 0
        %vm449 = vcmask 516096
        %vm450 = vsmask.f32 256
        %vm451 = vmand %vm449, %vm450
        %v452 = vld [vmem:[#allocation2 + $0x4] sm:$0x1]
        %v453 = vsel %vm451, 0, %v452
        %454 = vst [vmem:[#allocation2 + $0x4] sm:$0x1] %v453
        %455 = vst.msk [vmem:[#allocation2 + $0x8] sm:$0xf] %vm447, 0
        %v456 = vld [vmem:[#allocation2 + $0xc] sm:$0x1]
        %v457 = vsel %vm451, 0, %v456
        %458 = vst [vmem:[#allocation2 + $0xc] sm:$0x1] %v457
        %459 = vst.msk [vmem:[#allocation2 + $0x10] sm:$0xf] %vm447, 0
        %v460 = vld [vmem:[#allocation2 + $0x14] sm:$0x1]
        %v461 = vsel %vm451, 0, %v460
        %462 = vst [vmem:[#allocation2 + $0x14] sm:$0x1] %v461
        %463 = vst.msk [vmem:[#allocation2 + $0x18] sm:$0xf] %vm447, 0
        %v464 = vld [vmem:[#allocation2 + $0x1c] sm:$0x1]
        %v465 = vsel %vm451, 0, %v464
        %466 = vst [vmem:[#allocation2 + $0x1c] sm:$0x1] %v465
        %467 = vst.msk [vmem:[#allocation2 + $0x20] sm:$0xf] %vm447, 0
        %v468 = vld [vmem:[#allocation2 + $0x24] sm:$0x1]
        %v469 = vsel %vm451, 0, %v468
        %470 = vst [vmem:[#allocation2 + $0x24] sm:$0x1] %v469
        %471 = vst.msk [vmem:[#allocation2 + $0x28] sm:$0xf] %vm447, 0
        %v472 = vld [vmem:[#allocation2 + $0x2c] sm:$0x1]
        %v473 = vsel %vm451, 0, %v472
        %474 = vst [vmem:[#allocation2 + $0x2c] sm:$0x1] %v473
        %475 = vst.msk [vmem:[#allocation2 + $0x30] sm:$0xf] %vm447, 0
        %v476 = vld [vmem:[#allocation2 + $0x34] sm:$0x1]
        %v477 = vsel %vm451, 0, %v476
        %478 = vst [vmem:[#allocation2 + $0x34] sm:$0x1] %v477
        %479 = vst.msk [vmem:[#allocation2 + $0x38] sm:$0xf] %vm447, 0
        %v480 = vld [vmem:[#allocation2 + $0x3c] sm:$0x1]
        %v481 = vsel %vm451, 0, %v480
        %482 = vst [vmem:[#allocation2 + $0x3c] sm:$0x1] %v481
        %483 = vst.msk [vmem:[#allocation2 + $0x40] sm:$0xf] %vm447, 0
        %v484 = vld [vmem:[#allocation2 + $0x44] sm:$0x1]
        %v485 = vsel %vm451, 0, %v484
        %486 = vst [vmem:[#allocation2 + $0x44] sm:$0x1] %v485
        %487 = vst.msk [vmem:[#allocation2 + $0x48] sm:$0xf] %vm447, 0
        %v488 = vld [vmem:[#allocation2 + $0x4c] sm:$0x1]
        %v489 = vsel %vm451, 0, %v488
        %490 = vst [vmem:[#allocation2 + $0x4c] sm:$0x1] %v489
        %491 = vst.msk [vmem:[#allocation2 + $0x50] sm:$0xf] %vm447, 0
        %v492 = vld [vmem:[#allocation2 + $0x54] sm:$0x1]
        %v493 = vsel %vm451, 0, %v492
        %494 = vst [vmem:[#allocation2 + $0x54] sm:$0x1] %v493
        %495 = vst.msk [vmem:[#allocation2 + $0x58] sm:$0xf] %vm447, 0
        %v496 = vld [vmem:[#allocation2 + $0x5c] sm:$0x1]
        %v497 = vsel %vm451, 0, %v496
        %498 = vst [vmem:[#allocation2 + $0x5c] sm:$0x1] %v497
        %499 = vst.msk [vmem:[#allocation2 + $0x60] sm:$0xf] %vm447, 0
        %v500 = vld [vmem:[#allocation2 + $0x64] sm:$0x1]
        %v501 = vsel %vm451, 0, %v500
        %502 = vst [vmem:[#allocation2 + $0x64] sm:$0x1] %v501
        %503 = vst.msk [vmem:[#allocation2 + $0x68] sm:$0xf] %vm447, 0
        %v504 = vld [vmem:[#allocation2 + $0x6c] sm:$0x1]
        %v505 = vsel %vm451, 0, %v504
        %506 = vst [vmem:[#allocation2 + $0x6c] sm:$0x1] %v505
        %507 = vst.msk [vmem:[#allocation2 + $0x70] sm:$0xf] %vm447, 0
        %v508 = vld [vmem:[#allocation2 + $0x74] sm:$0x1]
        %v509 = vsel %vm451, 0, %v508
        %510 = vst [vmem:[#allocation2 + $0x74] sm:$0x1] %v509
        %511 = vst.msk [vmem:[#allocation2 + $0x78] sm:$0xf] %vm447, 0
        %v512 = vld [vmem:[#allocation2 + $0x7c] sm:$0x1]
        %v513 = vsel %vm451, 0, %v512
        %514 = vst [vmem:[#allocation2 + $0x7c] sm:$0x1] %v513
        %515 = vst.msk [vmem:[#allocation2 + $0x80] sm:$0xf] %vm447, 0
        %v516 = vld [vmem:[#allocation2 + $0x84] sm:$0x1]
        %v517 = vsel %vm451, 0, %v516
        %518 = vst [vmem:[#allocation2 + $0x84] sm:$0x1] %v517
        %519 = vst.msk [vmem:[#allocation2 + $0x88] sm:$0xf] %vm447, 0
        %v520 = vld [vmem:[#allocation2 + $0x8c] sm:$0x1]
        %v521 = vsel %vm451, 0, %v520
        %522 = vst [vmem:[#allocation2 + $0x8c] sm:$0x1] %v521
        %523 = vst.msk [vmem:[#allocation2 + $0x90] sm:$0xf] %vm447, 0
        %v524 = vld [vmem:[#allocation2 + $0x94] sm:$0x1]
        %v525 = vsel %vm451, 0, %v524
        %526 = vst [vmem:[#allocation2 + $0x94] sm:$0x1] %v525
        %527 = vst.msk [vmem:[#allocation2 + $0x98] sm:$0xf] %vm447, 0
        %v528 = vld [vmem:[#allocation2 + $0x9c] sm:$0x1]
        %v529 = vsel %vm451, 0, %v528
        %530 = vst [vmem:[#allocation2 + $0x9c] sm:$0x1] %v529
        %531 = vst.msk [vmem:[#allocation2 + $0xa0] sm:$0xf] %vm447, 0
        %v532 = vld [vmem:[#allocation2 + $0xa4] sm:$0x1]
        %v533 = vsel %vm451, 0, %v532
        %534 = vst [vmem:[#allocation2 + $0xa4] sm:$0x1] %v533
        %535 = vst.msk [vmem:[#allocation2 + $0xa8] sm:$0xf] %vm447, 0
        %v536 = vld [vmem:[#allocation2 + $0xac] sm:$0x1]
        %v537 = vsel %vm451, 0, %v536
        %538 = vst [vmem:[#allocation2 + $0xac] sm:$0x1] %v537
        %539 = vst.msk [vmem:[#allocation2 + $0xb0] sm:$0xf] %vm447, 0
        %v540 = vld [vmem:[#allocation2 + $0xb4] sm:$0x1]
        %v541 = vsel %vm451, 0, %v540
        %542 = vst [vmem:[#allocation2 + $0xb4] sm:$0x1] %v541
        %543 = vst.msk [vmem:[#allocation2 + $0xb8] sm:$0xf] %vm447, 0
        %v544 = vld [vmem:[#allocation2 + $0xbc] sm:$0x1]
        %v545 = vsel %vm451, 0, %v544
        %546 = vst [vmem:[#allocation2 + $0xbc] sm:$0x1] %v545
        %547 = vst.msk [vmem:[#allocation2 + $0xc0] sm:$0xf] %vm447, 0
        %v548 = vld [vmem:[#allocation2 + $0xc4] sm:$0x1]
        %v549 = vsel %vm451, 0, %v548
        %550 = vst [vmem:[#allocation2 + $0xc4] sm:$0x1] %v549
        %551 = vst.msk [vmem:[#allocation2 + $0xc8] sm:$0xf] %vm447, 0
        %v552 = vld [vmem:[#allocation2 + $0xcc] sm:$0x1]
        %v553 = vsel %vm451, 0, %v552
        %554 = vst [vmem:[#allocation2 + $0xcc] sm:$0x1] %v553
        %555 = vst.msk [vmem:[#allocation2 + $0xd0] sm:$0xf] %vm447, 0
        %v556 = vld [vmem:[#allocation2 + $0xd4] sm:$0x1]
        %v557 = vsel %vm451, 0, %v556
        %558 = vst [vmem:[#allocation2 + $0xd4] sm:$0x1] %v557
        %559 = vst.msk [vmem:[#allocation2 + $0xd8] sm:$0xf] %vm447, 0
        %v560 = vld [vmem:[#allocation2 + $0xdc] sm:$0x1]
        %v561 = vsel %vm451, 0, %v560
        %562 = vst [vmem:[#allocation2 + $0xdc] sm:$0x1] %v561
        %563 = vst.msk [vmem:[#allocation2 + $0xe0] sm:$0xf] %vm447, 0
        %v564 = vld [vmem:[#allocation2 + $0xe4] sm:$0x1]
        %v565 = vsel %vm451, 0, %v564
        %566 = vst [vmem:[#allocation2 + $0xe4] sm:$0x1] %v565
        %567 = vst.msk [vmem:[#allocation2 + $0xe8] sm:$0xf] %vm447, 0
        %v568 = vld [vmem:[#allocation2 + $0xec] sm:$0x1]
        %v569 = vsel %vm451, 0, %v568
        %570 = vst [vmem:[#allocation2 + $0xec] sm:$0x1] %v569
        %571 = vst.msk [vmem:[#allocation2 + $0xf0] sm:$0xf] %vm447, 0
        %v572 = vld [vmem:[#allocation2 + $0xf4] sm:$0x1]
        %v573 = vsel %vm451, 0, %v572
        %574 = vst [vmem:[#allocation2 + $0xf4] sm:$0x1] %v573
        %575 = vst.msk [vmem:[#allocation2 + $0xf8] sm:$0xf] %vm447, 0
        %v576 = vld [vmem:[#allocation2 + $0xfc] sm:$0x1]
        %v577 = vsel %vm451, 0, %v576
        %578 = vst [vmem:[#allocation2 + $0xfc] sm:$0x1] %v577
        %579 = vst.msk [vmem:[#allocation2 + $0x100] sm:$0xf] %vm447, 0
        %v580 = vld [vmem:[#allocation2 + $0x104] sm:$0x1]
        %v581 = vsel %vm451, 0, %v580
        %582 = vst [vmem:[#allocation2 + $0x104] sm:$0x1] %v581
        %583 = vst.msk [vmem:[#allocation2 + $0x108] sm:$0xf] %vm447, 0
        %v584 = vld [vmem:[#allocation2 + $0x10c] sm:$0x1]
        %v585 = vsel %vm451, 0, %v584
        %586 = vst [vmem:[#allocation2 + $0x10c] sm:$0x1] %v585
        %587 = vst.msk [vmem:[#allocation2 + $0x110] sm:$0xf] %vm447, 0
        %v588 = vld [vmem:[#allocation2 + $0x114] sm:$0x1]
        %v589 = vsel %vm451, 0, %v588
        %590 = vst [vmem:[#allocation2 + $0x114] sm:$0x1] %v589
        %591 = vst.msk [vmem:[#allocation2 + $0x118] sm:$0xf] %vm447, 0
        %v592 = vld [vmem:[#allocation2 + $0x11c] sm:$0x1]
        %v593 = vsel %vm451, 0, %v592
        %594 = vst [vmem:[#allocation2 + $0x11c] sm:$0x1] %v593
        %vm595 = vcmask 257024
        %596 = vst.msk [vmem:[#allocation3] sm:$0xf] %vm595, 0
        %vm597 = vcmask 253952
        %598 = vst.msk [vmem:[#allocation3 + $0x4] sm:$0x1] %vm597, 0
        %599 = vst.msk [vmem:[#allocation3 + $0x8] sm:$0xf] %vm595, 0
        %600 = vst.msk [vmem:[#allocation3 + $0xc] sm:$0x1] %vm597, 0
        %601 = vst.msk [vmem:[#allocation3 + $0x10] sm:$0xf] %vm595, 0
        %602 = vst.msk [vmem:[#allocation3 + $0x14] sm:$0x1] %vm597, 0
        %603 = vst.msk [vmem:[#allocation3 + $0x18] sm:$0xf] %vm595, 0
        %604 = vst.msk [vmem:[#allocation3 + $0x1c] sm:$0x1] %vm597, 0
        %605 = vst.msk [vmem:[#allocation3 + $0x20] sm:$0xf] %vm595, 0
        %606 = vst.msk [vmem:[#allocation3 + $0x24] sm:$0x1] %vm597, 0
        %607 = vst.msk [vmem:[#allocation3 + $0x28] sm:$0xf] %vm595, 0
        %608 = vst.msk [vmem:[#allocation3 + $0x2c] sm:$0x1] %vm597, 0
        %609 = vst.msk [vmem:[#allocation3 + $0x30] sm:$0xf] %vm595, 0
        %610 = vst.msk [vmem:[#allocation3 + $0x34] sm:$0x1] %vm597, 0
        %611 = vst.msk [vmem:[#allocation3 + $0x38] sm:$0xf] %vm595, 0
        %612 = vst.msk [vmem:[#allocation3 + $0x3c] sm:$0x1] %vm597, 0
        %613 = vst.msk [vmem:[#allocation3 + $0x40] sm:$0xf] %vm595, 0
        %614 = vst.msk [vmem:[#allocation3 + $0x44] sm:$0x1] %vm597, 0
        %615 = vst.msk [vmem:[#allocation3 + $0x48] sm:$0xf] %vm595, 0
        %616 = vst.msk [vmem:[#allocation3 + $0x4c] sm:$0x1] %vm597, 0
        %617 = vst.msk [vmem:[#allocation3 + $0x50] sm:$0xf] %vm595, 0
        %618 = vst.msk [vmem:[#allocation3 + $0x54] sm:$0x1] %vm597, 0
        %619 = vst.msk [vmem:[#allocation3 + $0x58] sm:$0xf] %vm595, 0
        %620 = vst.msk [vmem:[#allocation3 + $0x5c] sm:$0x1] %vm597, 0
        %621 = vst.msk [vmem:[#allocation3 + $0x60] sm:$0xf] %vm595, 0
        %622 = vst.msk [vmem:[#allocation3 + $0x64] sm:$0x1] %vm597, 0
        %623 = vst.msk [vmem:[#allocation3 + $0x68] sm:$0xf] %vm595, 0
        %624 = vst.msk [vmem:[#allocation3 + $0x6c] sm:$0x1] %vm597, 0
        %625 = vst.msk [vmem:[#allocation3 + $0x70] sm:$0xf] %vm595, 0
        %626 = vst.msk [vmem:[#allocation3 + $0x74] sm:$0x1] %vm597, 0
        %627 = vst.msk [vmem:[#allocation3 + $0x78] sm:$0xf] %vm595, 0
        %628 = vst.msk [vmem:[#allocation3 + $0x7c] sm:$0x1] %vm597, 0
        %629 = vst.msk [vmem:[#allocation3 + $0x80] sm:$0xf] %vm595, 0
        %630 = vst.msk [vmem:[#allocation3 + $0x84] sm:$0x1] %vm597, 0
        %631 = vst.msk [vmem:[#allocation3 + $0x88] sm:$0xf] %vm595, 0
        %632 = vst.msk [vmem:[#allocation3 + $0x8c] sm:$0x1] %vm597, 0
        %633 = vst.msk [vmem:[#allocation3 + $0x90] sm:$0xf] %vm595, 0
        %634 = vst.msk [vmem:[#allocation3 + $0x94] sm:$0x1] %vm597, 0
        %635 = vst.msk [vmem:[#allocation3 + $0x98] sm:$0xf] %vm595, 0
        %636 = vst.msk [vmem:[#allocation3 + $0x9c] sm:$0x1] %vm597, 0
        %637 = vst.msk [vmem:[#allocation3 + $0xa0] sm:$0xf] %vm595, 0
        %638 = vst.msk [vmem:[#allocation3 + $0xa4] sm:$0x1] %vm597, 0
        %639 = vst.msk [vmem:[#allocation3 + $0xa8] sm:$0xf] %vm595, 0
        %640 = vst.msk [vmem:[#allocation3 + $0xac] sm:$0x1] %vm597, 0
        %641 = vst.msk [vmem:[#allocation3 + $0xb0] sm:$0xf] %vm595, 0
        %642 = vst.msk [vmem:[#allocation3 + $0xb4] sm:$0x1] %vm597, 0
        %643 = vst.msk [vmem:[#allocation3 + $0xb8] sm:$0xf] %vm595, 0
        %644 = vst.msk [vmem:[#allocation3 + $0xbc] sm:$0x1] %vm597, 0
        %645 = vst.msk [vmem:[#allocation3 + $0xc0] sm:$0xf] %vm595, 0
        %646 = vst.msk [vmem:[#allocation3 + $0xc4] sm:$0x1] %vm597, 0
        %647 = vst.msk [vmem:[#allocation3 + $0xc8] sm:$0xf] %vm595, 0
        %648 = vst.msk [vmem:[#allocation3 + $0xcc] sm:$0x1] %vm597, 0
        %649 = vst.msk [vmem:[#allocation3 + $0xd0] sm:$0xf] %vm595, 0
        %650 = vst.msk [vmem:[#allocation3 + $0xd4] sm:$0x1] %vm597, 0
        %651 = vst.msk [vmem:[#allocation3 + $0xd8] sm:$0xf] %vm595, 0
        %652 = vst.msk [vmem:[#allocation3 + $0xdc] sm:$0x1] %vm597, 0
        %653 = vst.msk [vmem:[#allocation3 + $0xe0] sm:$0xf] %vm595, 0
        %654 = vst.msk [vmem:[#allocation3 + $0xe4] sm:$0x1] %vm597, 0
        %655 = vst.msk [vmem:[#allocation3 + $0xe8] sm:$0xf] %vm595, 0
        %656 = vst.msk [vmem:[#allocation3 + $0xec] sm:$0x1] %vm597, 0
        %657 = vst.msk [vmem:[#allocation3 + $0xf0] sm:$0xf] %vm595, 0
        %658 = vst.msk [vmem:[#allocation3 + $0xf4] sm:$0x1] %vm597, 0
        %659 = vst.msk [vmem:[#allocation3 + $0xf8] sm:$0xf] %vm595, 0
        %660 = vst.msk [vmem:[#allocation3 + $0xfc] sm:$0x1] %vm597, 0
        %661 = vst.msk [vmem:[#allocation3 + $0x100] sm:$0xf] %vm595, 0
        %662 = vst.msk [vmem:[#allocation3 + $0x104] sm:$0x1] %vm597, 0
        %663 = vst.msk [vmem:[#allocation3 + $0x108] sm:$0xf] %vm595, 0
        %664 = vst.msk [vmem:[#allocation3 + $0x10c] sm:$0x1] %vm597, 0
        %665 = vst.msk [vmem:[#allocation3 + $0x110] sm:$0xf] %vm595, 0
        %666 = vst.msk [vmem:[#allocation3 + $0x114] sm:$0x1] %vm597, 0
        %667 = vst.msk [vmem:[#allocation3 + $0x118] sm:$0xf] %vm595, 0
        %668 = vst.msk [vmem:[#allocation3 + $0x11c] sm:$0x1] %vm597, 0
        %669 = vst.msk [vmem:[#allocation3 + $0x120] sm:$0xf] %vm595, 0
        %670 = vst.msk [vmem:[#allocation3 + $0x124] sm:$0x1] %vm597, 0
        %671 = vst.msk [vmem:[#allocation3 + $0x128] sm:$0xf] %vm595, 0
        %672 = vst.msk [vmem:[#allocation3 + $0x12c] sm:$0x1] %vm597, 0
        %673 = vst.msk [vmem:[#allocation3 + $0x130] sm:$0xf] %vm595, 0
        %674 = vst.msk [vmem:[#allocation3 + $0x134] sm:$0x1] %vm597, 0
        %675 = vst.msk [vmem:[#allocation3 + $0x138] sm:$0xf] %vm595, 0
        %676 = vst.msk [vmem:[#allocation3 + $0x13c] sm:$0x1] %vm597, 0
        %vm677 = vcmask 228352
        %678 = vst.msk [vmem:[#allocation4] sm:$0xff] %vm677, 0.0
        %vm679 = vcmask 226304
        %680 = vst.msk [vmem:[#allocation4 + $0x8] sm:$0x3f] %vm679, 0.0
        %681 = vst.msk [vmem:[#allocation4 + $0x10] sm:$0xff] %vm677, 0.0
        %682 = vst.msk [vmem:[#allocation4 + $0x18] sm:$0x3f] %vm679, 0.0
        %683 = vst.msk [vmem:[#allocation4 + $0x20] sm:$0xff] %vm677, 0.0
        %684 = vst.msk [vmem:[#allocation4 + $0x28] sm:$0x3f] %vm679, 0.0
        %685 = vst.msk [vmem:[#allocation4 + $0x30] sm:$0xff] %vm677, 0.0
        %686 = vst.msk [vmem:[#allocation4 + $0x38] sm:$0x3f] %vm679, 0.0
        %v687 = vld [vmem:[%s443] sm:$0xf]
        %v688 = vld [vmem:[%s443 + $0x4] sm:$0xf]
        %v689 = vld [vmem:[%s443 + $0x8] sm:$0xf]
        %v690 = vld [vmem:[%s443 + $0xc] sm:$0xf]
        %v691 = vld [vmem:[%s443 + $0x10] sm:$0xf]
        %v692 = vld [vmem:[%s443 + $0x14] sm:$0xf]
        %v693 = vld [vmem:[%s443 + $0x18] sm:$0xf]
        %v694 = vld [vmem:[%s443 + $0x1c] sm:$0xf]
        %v695 = vld [vmem:[%s443 + $0x20] sm:$0xf]
        %v696 = vld [vmem:[%s443 + $0x24] sm:$0xf]
        %v697 = vld [vmem:[%s443 + $0x28] sm:$0xf]
        %v698 = vld [vmem:[%s443 + $0x2c] sm:$0xf]
        %v699 = vld [vmem:[%s443 + $0x30] sm:$0xf]
        %v700 = vld [vmem:[%s443 + $0x34] sm:$0xf]
        %v701 = vld [vmem:[%s443 + $0x38] sm:$0xf]
        %v702 = vld [vmem:[%s443 + $0x3c] sm:$0xf]
        %v703 = vld [vmem:[%s443 + $0x40] sm:$0xf]
        %v704 = vld [vmem:[%s443 + $0x44] sm:$0xf]
        %v705 = vld [vmem:[%s443 + $0x48] sm:$0xf]
        %v706 = vld [vmem:[%s443 + $0x4c] sm:$0xf]
        %v707 = vld [vmem:[%s443 + $0x50] sm:$0xf]
        %v708 = vld [vmem:[%s443 + $0x54] sm:$0xf]
        %v709 = vld [vmem:[%s443 + $0x58] sm:$0xf]
        %v710 = vld [vmem:[%s443 + $0x5c] sm:$0xf]
        %v711 = vld [vmem:[%s443 + $0x60] sm:$0xf]
        %v712 = vld [vmem:[%s443 + $0x64] sm:$0xf]
        %v713 = vld [vmem:[%s443 + $0x68] sm:$0xf]
        %v714 = vld [vmem:[%s443 + $0x6c] sm:$0xf]
        %v715 = vld [vmem:[%s443 + $0x70] sm:$0xf]
        %v716 = vld [vmem:[%s443 + $0x74] sm:$0xf]
        %v717 = vld [vmem:[%s443 + $0x78] sm:$0xf]
        %v718 = vld [vmem:[%s443 + $0x7c] sm:$0xf]
        %v720 = vshrl.u32 %v687, 16
        %v722 = vrot.slane %v720, 7
        %v723 = vshll.u32 %v687, 16
        %v725 = vor.u32 %v722, %v723
        %v726 = vrot.slane %v722, 4
        %v728 = vshrl.u32 %v688, 16
        %v730 = vrot.slane %v728, 7
        %v731 = vshll.u32 %v688, 16
        %v733 = vor.u32 %v730, %v731
        %v734 = vrot.slane %v730, 4
        %v736 = vshrl.u32 %v689, 16
        %v738 = vrot.slane %v736, 7
        %v739 = vshll.u32 %v689, 16
        %v741 = vor.u32 %v738, %v739
        %v742 = vrot.slane %v738, 4
        %v744 = vshrl.u32 %v690, 16
        %v746 = vrot.slane %v744, 7
        %v747 = vshll.u32 %v690, 16
        %v749 = vor.u32 %v746, %v747
        %v750 = vrot.slane %v746, 4
        %v752 = vshrl.u32 %v691, 16
        %v754 = vrot.slane %v752, 7
        %v755 = vshll.u32 %v691, 16
        %v757 = vor.u32 %v754, %v755
        %v758 = vrot.slane %v754, 4
        %v760 = vshrl.u32 %v692, 16
        %v762 = vrot.slane %v760, 7
        %v763 = vshll.u32 %v692, 16
        %v765 = vor.u32 %v762, %v763
        %v766 = vrot.slane %v762, 4
        %v768 = vshrl.u32 %v693, 16
        %v770 = vrot.slane %v768, 7
        %v771 = vshll.u32 %v693, 16
        %v773 = vor.u32 %v770, %v771
        %v774 = vrot.slane %v770, 4
        %v776 = vshrl.u32 %v694, 16
        %v778 = vrot.slane %v776, 7
        %v779 = vshll.u32 %v694, 16
        %v781 = vor.u32 %v778, %v779
        %v782 = vrot.slane %v778, 4
        %v784 = vshrl.u32 %v695, 16
        %v786 = vrot.slane %v784, 7
        %v787 = vshll.u32 %v695, 16
        %v789 = vor.u32 %v786, %v787
        %v790 = vrot.slane %v786, 4
        %v792 = vshrl.u32 %v696, 16
        %v794 = vrot.slane %v792, 7
        %v795 = vshll.u32 %v696, 16
        %v797 = vor.u32 %v794, %v795
        %v798 = vrot.slane %v794, 4
        %v800 = vshrl.u32 %v697, 16
        %v802 = vrot.slane %v800, 7
        %v803 = vshll.u32 %v697, 16
        %v805 = vor.u32 %v802, %v803
        %v806 = vrot.slane %v802, 4
        %v808 = vshrl.u32 %v698, 16
        %v810 = vrot.slane %v808, 7
        %v811 = vshll.u32 %v698, 16
        %v813 = vor.u32 %v810, %v811
        %v814 = vrot.slane %v810, 4
        %v816 = vshrl.u32 %v699, 16
        %v818 = vrot.slane %v816, 7
        %v819 = vshll.u32 %v699, 16
        %v821 = vor.u32 %v818, %v819
        %v822 = vrot.slane %v818, 4
        %v824 = vshrl.u32 %v700, 16
        %v826 = vrot.slane %v824, 7
        %v827 = vshll.u32 %v700, 16
        %v829 = vor.u32 %v826, %v827
        %v830 = vrot.slane %v826, 4
        %v832 = vshrl.u32 %v701, 16
        %v834 = vrot.slane %v832, 7
        %v835 = vshll.u32 %v701, 16
        %v837 = vor.u32 %v834, %v835
        %v838 = vrot.slane %v834, 4
        %v840 = vshrl.u32 %v702, 16
        %v842 = vrot.slane %v840, 7
        %v843 = vshll.u32 %v702, 16
        %v845 = vor.u32 %v842, %v843
        %v846 = vrot.slane %v842, 4
        %v848 = vshrl.u32 %v703, 16
        %v850 = vrot.slane %v848, 7
        %v851 = vshll.u32 %v703, 16
        %v853 = vor.u32 %v850, %v851
        %v854 = vrot.slane %v850, 4
        %v856 = vshrl.u32 %v704, 16
        %v858 = vrot.slane %v856, 7
        %v859 = vshll.u32 %v704, 16
        %v861 = vor.u32 %v858, %v859
        %v862 = vrot.slane %v858, 4
        %v864 = vshrl.u32 %v705, 16
        %v866 = vrot.slane %v864, 7
        %v867 = vshll.u32 %v705, 16
        %v869 = vor.u32 %v866, %v867
        %v870 = vrot.slane %v866, 4
        %v872 = vshrl.u32 %v706, 16
        %v874 = vrot.slane %v872, 7
        %v875 = vshll.u32 %v706, 16
        %v877 = vor.u32 %v874, %v875
        %v878 = vrot.slane %v874, 4
        %v880 = vshrl.u32 %v707, 16
        %v882 = vrot.slane %v880, 7
        %v883 = vshll.u32 %v707, 16
        %v885 = vor.u32 %v882, %v883
        %v886 = vrot.slane %v882, 4
        %v888 = vshrl.u32 %v708, 16
        %v890 = vrot.slane %v888, 7
        %v891 = vshll.u32 %v708, 16
        %v893 = vor.u32 %v890, %v891
        %v894 = vrot.slane %v890, 4
        %v896 = vshrl.u32 %v709, 16
        %v898 = vrot.slane %v896, 7
        %v899 = vshll.u32 %v709, 16
        %v901 = vor.u32 %v898, %v899
        %v902 = vrot.slane %v898, 4
        %v904 = vshrl.u32 %v710, 16
        %v906 = vrot.slane %v904, 7
        %v907 = vshll.u32 %v710, 16
        %v909 = vor.u32 %v906, %v907
        %v910 = vrot.slane %v906, 4
        %v912 = vshrl.u32 %v711, 16
        %v914 = vrot.slane %v912, 7
        %v915 = vshll.u32 %v711, 16
        %v917 = vor.u32 %v914, %v915
        %v918 = vrot.slane %v914, 4
        %v920 = vshrl.u32 %v712, 16
        %v922 = vrot.slane %v920, 7
        %v923 = vshll.u32 %v712, 16
        %v925 = vor.u32 %v922, %v923
        %v926 = vrot.slane %v922, 4
        %v928 = vshrl.u32 %v713, 16
        %v930 = vrot.slane %v928, 7
        %v931 = vshll.u32 %v713, 16
        %v933 = vor.u32 %v930, %v931
        %v934 = vrot.slane %v930, 4
        %v936 = vshrl.u32 %v714, 16
        %v938 = vrot.slane %v936, 7
        %v939 = vshll.u32 %v714, 16
        %v941 = vor.u32 %v938, %v939
        %v942 = vrot.slane %v938, 4
        %v944 = vshrl.u32 %v715, 16
        %v946 = vrot.slane %v944, 7
        %v947 = vshll.u32 %v715, 16
        %v949 = vor.u32 %v946, %v947
        %v950 = vrot.slane %v946, 4
        %v952 = vshrl.u32 %v716, 16
        %v954 = vrot.slane %v952, 7
        %v955 = vshll.u32 %v716, 16
        %v957 = vor.u32 %v954, %v955
        %v958 = vrot.slane %v954, 4
        %v960 = vshrl.u32 %v717, 16
        %v962 = vrot.slane %v960, 7
        %v963 = vshll.u32 %v717, 16
        %v965 = vor.u32 %v962, %v963
        %v966 = vrot.slane %v962, 4
        %v968 = vshrl.u32 %v718, 16
        %v970 = vrot.slane %v968, 7
        %v971 = vshll.u32 %v718, 16
        %v973 = vor.u32 %v970, %v971
        %v974 = vrot.slane %v970, 4
        %s1039 = scalar_lea.vmem [#allocation2], 8
        %vm1040 = vcmask 519168
        %vm1041 = vsmask.f32 7938
        %vm1042 = vmand %vm1040, %vm1041
        %v1043 = vld [vmem:[%s1039] sm:$0xf]
        %v1044 = vsel %vm1042, %v725, %v1043
        %1045 = vst [vmem:[%s1039] sm:$0xf] %v1044
        %v1046 = vld [vmem:[%s1039 + $0x4] sm:$0x1]
        %v1047 = vsel %vm451, %v726, %v1046
        %1048 = vst [vmem:[%s1039 + $0x4] sm:$0x1] %v1047
        %v1049 = vld [vmem:[%s1039 + $0x8] sm:$0xf]
        %v1050 = vsel %vm1042, %v733, %v1049
        %1051 = vst [vmem:[%s1039 + $0x8] sm:$0xf] %v1050
        %v1052 = vld [vmem:[%s1039 + $0xc] sm:$0x1]
        %v1053 = vsel %vm451, %v734, %v1052
        %1054 = vst [vmem:[%s1039 + $0xc] sm:$0x1] %v1053
        %v1055 = vld [vmem:[%s1039 + $0x10] sm:$0xf]
        %v1056 = vsel %vm1042, %v741, %v1055
        %1057 = vst [vmem:[%s1039 + $0x10] sm:$0xf] %v1056
        %v1058 = vld [vmem:[%s1039 + $0x14] sm:$0x1]
        %v1059 = vsel %vm451, %v742, %v1058
        %1060 = vst [vmem:[%s1039 + $0x14] sm:$0x1] %v1059
        %v1061 = vld [vmem:[%s1039 + $0x18] sm:$0xf]
        %v1062 = vsel %vm1042, %v749, %v1061
        %1063 = vst [vmem:[%s1039 + $0x18] sm:$0xf] %v1062
        %v1064 = vld [vmem:[%s1039 + $0x1c] sm:$0x1]
        %v1065 = vsel %vm451, %v750, %v1064
        %1066 = vst [vmem:[%s1039 + $0x1c] sm:$0x1] %v1065
        %v1067 = vld [vmem:[%s1039 + $0x20] sm:$0xf]
        %v1068 = vsel %vm1042, %v757, %v1067
        %1069 = vst [vmem:[%s1039 + $0x20] sm:$0xf] %v1068
        %v1070 = vld [vmem:[%s1039 + $0x24] sm:$0x1]
        %v1071 = vsel %vm451, %v758, %v1070
        %1072 = vst [vmem:[%s1039 + $0x24] sm:$0x1] %v1071
        %v1073 = vld [vmem:[%s1039 + $0x28] sm:$0xf]
        %v1074 = vsel %vm1042, %v765, %v1073
        %1075 = vst [vmem:[%s1039 + $0x28] sm:$0xf] %v1074
        %v1076 = vld [vmem:[%s1039 + $0x2c] sm:$0x1]
        %v1077 = vsel %vm451, %v766, %v1076
        %1078 = vst [vmem:[%s1039 + $0x2c] sm:$0x1] %v1077
        %v1079 = vld [vmem:[%s1039 + $0x30] sm:$0xf]
        %v1080 = vsel %vm1042, %v773, %v1079
        %1081 = vst [vmem:[%s1039 + $0x30] sm:$0xf] %v1080
        %v1082 = vld [vmem:[%s1039 + $0x34] sm:$0x1]
        %v1083 = vsel %vm451, %v774, %v1082
        %1084 = vst [vmem:[%s1039 + $0x34] sm:$0x1] %v1083
        %v1085 = vld [vmem:[%s1039 + $0x38] sm:$0xf]
        %v1086 = vsel %vm1042, %v781, %v1085
        %1087 = vst [vmem:[%s1039 + $0x38] sm:$0xf] %v1086
        %v1088 = vld [vmem:[%s1039 + $0x3c] sm:$0x1]
        %v1089 = vsel %vm451, %v782, %v1088
        %1090 = vst [vmem:[%s1039 + $0x3c] sm:$0x1] %v1089
        %v1091 = vld [vmem:[%s1039 + $0x48] sm:$0xf]
        %v1092 = vsel %vm1042, %v789, %v1091
        %1093 = vst [vmem:[%s1039 + $0x48] sm:$0xf] %v1092
        %v1094 = vld [vmem:[%s1039 + $0x4c] sm:$0x1]
        %v1095 = vsel %vm451, %v790, %v1094
        %1096 = vst [vmem:[%s1039 + $0x4c] sm:$0x1] %v1095
        %v1097 = vld [vmem:[%s1039 + $0x50] sm:$0xf]
        %v1098 = vsel %vm1042, %v797, %v1097
        %1099 = vst [vmem:[%s1039 + $0x50] sm:$0xf] %v1098
        %v1100 = vld [vmem:[%s1039 + $0x54] sm:$0x1]
        %v1101 = vsel %vm451, %v798, %v1100
        %1102 = vst [vmem:[%s1039 + $0x54] sm:$0x1] %v1101
        %v1103 = vld [vmem:[%s1039 + $0x58] sm:$0xf]
        %v1104 = vsel %vm1042, %v805, %v1103
        %1105 = vst [vmem:[%s1039 + $0x58] sm:$0xf] %v1104
        %v1106 = vld [vmem:[%s1039 + $0x5c] sm:$0x1]
        %v1107 = vsel %vm451, %v806, %v1106
        %1108 = vst [vmem:[%s1039 + $0x5c] sm:$0x1] %v1107
        %v1109 = vld [vmem:[%s1039 + $0x60] sm:$0xf]
        %v1110 = vsel %vm1042, %v813, %v1109
        %1111 = vst [vmem:[%s1039 + $0x60] sm:$0xf] %v1110
        %v1112 = vld [vmem:[%s1039 + $0x64] sm:$0x1]
        %v1113 = vsel %vm451, %v814, %v1112
        %1114 = vst [vmem:[%s1039 + $0x64] sm:$0x1] %v1113
        %v1115 = vld [vmem:[%s1039 + $0x68] sm:$0xf]
        %v1116 = vsel %vm1042, %v821, %v1115
        %1117 = vst [vmem:[%s1039 + $0x68] sm:$0xf] %v1116
        %v1118 = vld [vmem:[%s1039 + $0x6c] sm:$0x1]
        %v1119 = vsel %vm451, %v822, %v1118
        %1120 = vst [vmem:[%s1039 + $0x6c] sm:$0x1] %v1119
        %v1121 = vld [vmem:[%s1039 + $0x70] sm:$0xf]
        %v1122 = vsel %vm1042, %v829, %v1121
        %1123 = vst [vmem:[%s1039 + $0x70] sm:$0xf] %v1122
        %v1124 = vld [vmem:[%s1039 + $0x74] sm:$0x1]
        %v1125 = vsel %vm451, %v830, %v1124
        %1126 = vst [vmem:[%s1039 + $0x74] sm:$0x1] %v1125
        %v1127 = vld [vmem:[%s1039 + $0x78] sm:$0xf]
        %v1128 = vsel %vm1042, %v837, %v1127
        %1129 = vst [vmem:[%s1039 + $0x78] sm:$0xf] %v1128
        %v1130 = vld [vmem:[%s1039 + $0x7c] sm:$0x1]
        %v1131 = vsel %vm451, %v838, %v1130
        %1132 = vst [vmem:[%s1039 + $0x7c] sm:$0x1] %v1131
        %v1133 = vld [vmem:[%s1039 + $0x80] sm:$0xf]
        %v1134 = vsel %vm1042, %v845, %v1133
        %1135 = vst [vmem:[%s1039 + $0x80] sm:$0xf] %v1134
        %v1136 = vld [vmem:[%s1039 + $0x84] sm:$0x1]
        %v1137 = vsel %vm451, %v846, %v1136
        %1138 = vst [vmem:[%s1039 + $0x84] sm:$0x1] %v1137
        %v1139 = vld [vmem:[%s1039 + $0x90] sm:$0xf]
        %v1140 = vsel %vm1042, %v853, %v1139
        %1141 = vst [vmem:[%s1039 + $0x90] sm:$0xf] %v1140
        %v1142 = vld [vmem:[%s1039 + $0x94] sm:$0x1]
        %v1143 = vsel %vm451, %v854, %v1142
        %1144 = vst [vmem:[%s1039 + $0x94] sm:$0x1] %v1143
        %v1145 = vld [vmem:[%s1039 + $0x98] sm:$0xf]
        %v1146 = vsel %vm1042, %v861, %v1145
        %1147 = vst [vmem:[%s1039 + $0x98] sm:$0xf] %v1146
        %v1148 = vld [vmem:[%s1039 + $0x9c] sm:$0x1]
        %v1149 = vsel %vm451, %v862, %v1148
        %1150 = vst [vmem:[%s1039 + $0x9c] sm:$0x1] %v1149
        %v1151 = vld [vmem:[%s1039 + $0xa0] sm:$0xf]
        %v1152 = vsel %vm1042, %v869, %v1151
        %1153 = vst [vmem:[%s1039 + $0xa0] sm:$0xf] %v1152
        %v1154 = vld [vmem:[%s1039 + $0xa4] sm:$0x1]
        %v1155 = vsel %vm451, %v870, %v1154
        %1156 = vst [vmem:[%s1039 + $0xa4] sm:$0x1] %v1155
        %v1157 = vld [vmem:[%s1039 + $0xa8] sm:$0xf]
        %v1158 = vsel %vm1042, %v877, %v1157
        %1159 = vst [vmem:[%s1039 + $0xa8] sm:$0xf] %v1158
        %v1160 = vld [vmem:[%s1039 + $0xac] sm:$0x1]
        %v1161 = vsel %vm451, %v878, %v1160
        %1162 = vst [vmem:[%s1039 + $0xac] sm:$0x1] %v1161
        %v1163 = vld [vmem:[%s1039 + $0xb0] sm:$0xf]
        %v1164 = vsel %vm1042, %v885, %v1163
        %1165 = vst [vmem:[%s1039 + $0xb0] sm:$0xf] %v1164
        %v1166 = vld [vmem:[%s1039 + $0xb4] sm:$0x1]
        %v1167 = vsel %vm451, %v886, %v1166
        %1168 = vst [vmem:[%s1039 + $0xb4] sm:$0x1] %v1167
        %v1169 = vld [vmem:[%s1039 + $0xb8] sm:$0xf]
        %v1170 = vsel %vm1042, %v893, %v1169
        %1171 = vst [vmem:[%s1039 + $0xb8] sm:$0xf] %v1170
        %v1172 = vld [vmem:[%s1039 + $0xbc] sm:$0x1]
        %v1173 = vsel %vm451, %v894, %v1172
        %1174 = vst [vmem:[%s1039 + $0xbc] sm:$0x1] %v1173
        %v1175 = vld [vmem:[%s1039 + $0xc0] sm:$0xf]
        %v1176 = vsel %vm1042, %v901, %v1175
        %1177 = vst [vmem:[%s1039 + $0xc0] sm:$0xf] %v1176
        %v1178 = vld [vmem:[%s1039 + $0xc4] sm:$0x1]
        %v1179 = vsel %vm451, %v902, %v1178
        %1180 = vst [vmem:[%s1039 + $0xc4] sm:$0x1] %v1179
        %v1181 = vld [vmem:[%s1039 + $0xc8] sm:$0xf]
        %v1182 = vsel %vm1042, %v909, %v1181
        %1183 = vst [vmem:[%s1039 + $0xc8] sm:$0xf] %v1182
        %v1184 = vld [vmem:[%s1039 + $0xcc] sm:$0x1]
        %v1185 = vsel %vm451, %v910, %v1184
        %1186 = vst [vmem:[%s1039 + $0xcc] sm:$0x1] %v1185
        %v1187 = vld [vmem:[%s1039 + $0xd8] sm:$0xf]
        %v1188 = vsel %vm1042, %v917, %v1187
        %1189 = vst [vmem:[%s1039 + $0xd8] sm:$0xf] %v1188
        %v1190 = vld [vmem:[%s1039 + $0xdc] sm:$0x1]
        %v1191 = vsel %vm451, %v918, %v1190
        %1192 = vst [vmem:[%s1039 + $0xdc] sm:$0x1] %v1191
        %v1193 = vld [vmem:[%s1039 + $0xe0] sm:$0xf]
        %v1194 = vsel %vm1042, %v925, %v1193
        %1195 = vst [vmem:[%s1039 + $0xe0] sm:$0xf] %v1194
        %v1196 = vld [vmem:[%s1039 + $0xe4] sm:$0x1]
        %v1197 = vsel %vm451, %v926, %v1196
        %1198 = vst [vmem:[%s1039 + $0xe4] sm:$0x1] %v1197
        %v1199 = vld [vmem:[%s1039 + $0xe8] sm:$0xf]
        %v1200 = vsel %vm1042, %v933, %v1199
        %1201 = vst [vmem:[%s1039 + $0xe8] sm:$0xf] %v1200
        %v1202 = vld [vmem:[%s1039 + $0xec] sm:$0x1]
        %v1203 = vsel %vm451, %v934, %v1202
        %1204 = vst [vmem:[%s1039 + $0xec] sm:$0x1] %v1203
        %v1205 = vld [vmem:[%s1039 + $0xf0] sm:$0xf]
        %v1206 = vsel %vm1042, %v941, %v1205
        %1207 = vst [vmem:[%s1039 + $0xf0] sm:$0xf] %v1206
        %v1208 = vld [vmem:[%s1039 + $0xf4] sm:$0x1]
        %v1209 = vsel %vm451, %v942, %v1208
        %1210 = vst [vmem:[%s1039 + $0xf4] sm:$0x1] %v1209
        %v1211 = vld [vmem:[%s1039 + $0xf8] sm:$0xf]
        %v1212 = vsel %vm1042, %v949, %v1211
        %1213 = vst [vmem:[%s1039 + $0xf8] sm:$0xf] %v1212
        %v1214 = vld [vmem:[%s1039 + $0xfc] sm:$0x1]
        %v1215 = vsel %vm451, %v950, %v1214
        %1216 = vst [vmem:[%s1039 + $0xfc] sm:$0x1] %v1215
        %v1217 = vld [vmem:[%s1039 + $0x100] sm:$0xf]
        %v1218 = vsel %vm1042, %v957, %v1217
        %1219 = vst [vmem:[%s1039 + $0x100] sm:$0xf] %v1218
        %v1220 = vld [vmem:[%s1039 + $0x104] sm:$0x1]
        %v1221 = vsel %vm451, %v958, %v1220
        %1222 = vst [vmem:[%s1039 + $0x104] sm:$0x1] %v1221
        %v1223 = vld [vmem:[%s1039 + $0x108] sm:$0xf]
        %v1224 = vsel %vm1042, %v965, %v1223
        %1225 = vst [vmem:[%s1039 + $0x108] sm:$0xf] %v1224
        %v1226 = vld [vmem:[%s1039 + $0x10c] sm:$0x1]
        %v1227 = vsel %vm451, %v966, %v1226
        %1228 = vst [vmem:[%s1039 + $0x10c] sm:$0x1] %v1227
        %v1229 = vld [vmem:[%s1039 + $0x110] sm:$0xf]
        %v1230 = vsel %vm1042, %v973, %v1229
        %1231 = vst [vmem:[%s1039 + $0x110] sm:$0xf] %v1230
        %v1232 = vld [vmem:[%s1039 + $0x114] sm:$0x1]
        %v1233 = vsel %vm451, %v974, %v1232
        %1234 = vst [vmem:[%s1039 + $0x114] sm:$0x1] %v1233
        %v1235 = vld [vmem:[#allocation2] sm:$0xf]
        %v1236 = vld [vmem:[#allocation2 + $0x8] sm:$0xf]
        %v1237 = vld [vmem:[#allocation2 + $0x10] sm:$0xf]
        %v1238 = vld [vmem:[#allocation2 + $0x18] sm:$0xf]
        %v1239 = vld [vmem:[#allocation2 + $0x20] sm:$0xf]
        %v1240 = vld [vmem:[#allocation2 + $0x28] sm:$0xf]
        %v1241 = vld [vmem:[#allocation2 + $0x30] sm:$0xf]
        %v1242 = vld [vmem:[#allocation2 + $0x38] sm:$0xf]
        %v1243 = vld [vmem:[#allocation2 + $0x48] sm:$0xf]
        %v1244 = vld [vmem:[#allocation2 + $0x50] sm:$0xf]
        %v1245 = vld [vmem:[#allocation2 + $0x58] sm:$0xf]
        %v1246 = vld [vmem:[#allocation2 + $0x60] sm:$0xf]
        %v1247 = vld [vmem:[#allocation2 + $0x68] sm:$0xf]
        %v1248 = vld [vmem:[#allocation2 + $0x70] sm:$0xf]
        %v1249 = vld [vmem:[#allocation2 + $0x78] sm:$0xf]
        %v1250 = vld [vmem:[#allocation2 + $0x80] sm:$0xf]
        %v1251 = vld [vmem:[#allocation2 + $0x90] sm:$0xf]
        %v1252 = vld [vmem:[#allocation2 + $0x98] sm:$0xf]
        %v1253 = vld [vmem:[#allocation2 + $0xa0] sm:$0xf]
        %v1254 = vld [vmem:[#allocation2 + $0xa8] sm:$0xf]
        %v1255 = vld [vmem:[#allocation2 + $0xb0] sm:$0xf]
        %v1256 = vld [vmem:[#allocation2 + $0xb8] sm:$0xf]
        %v1257 = vld [vmem:[#allocation2 + $0xc0] sm:$0xf]
        %v1258 = vld [vmem:[#allocation2 + $0xc8] sm:$0xf]
        %v1259 = vld [vmem:[#allocation2 + $0xd8] sm:$0xf]
        %v1260 = vld [vmem:[#allocation2 + $0xe0] sm:$0xf]
        %v1261 = vld [vmem:[#allocation2 + $0xe8] sm:$0xf]
        %v1262 = vld [vmem:[#allocation2 + $0xf0] sm:$0xf]
        %v1263 = vld [vmem:[#allocation2 + $0xf8] sm:$0xf]
        %v1264 = vld [vmem:[#allocation2 + $0x100] sm:$0xf]
        %v1265 = vld [vmem:[#allocation2 + $0x108] sm:$0xf]
        %v1266 = vld [vmem:[#allocation2 + $0x110] sm:$0xf]
        %v1267 = vld [vmem:[#allocation2 + $0x4] sm:$0x1]
        %v1268 = vld [vmem:[#allocation2 + $0xc] sm:$0x1]
        %v1269 = vld [vmem:[#allocation2 + $0x14] sm:$0x1]
        %v1270 = vld [vmem:[#allocation2 + $0x1c] sm:$0x1]
        %v1271 = vld [vmem:[#allocation2 + $0x24] sm:$0x1]
        %v1272 = vld [vmem:[#allocation2 + $0x2c] sm:$0x1]
        %v1273 = vld [vmem:[#allocation2 + $0x34] sm:$0x1]
        %v1274 = vld [vmem:[#allocation2 + $0x3c] sm:$0x1]
        %v1275 = vld [vmem:[#allocation2 + $0x4c] sm:$0x1]
        %v1276 = vld [vmem:[#allocation2 + $0x54] sm:$0x1]
        %v1277 = vld [vmem:[#allocation2 + $0x5c] sm:$0x1]
        %v1278 = vld [vmem:[#allocation2 + $0x64] sm:$0x1]
        %v1279 = vld [vmem:[#allocation2 + $0x6c] sm:$0x1]
        %v1280 = vld [vmem:[#allocation2 + $0x74] sm:$0x1]
        %v1281 = vld [vmem:[#allocation2 + $0x7c] sm:$0x1]
        %v1282 = vld [vmem:[#allocation2 + $0x84] sm:$0x1]
        %v1283 = vld [vmem:[#allocation2 + $0x94] sm:$0x1]
        %v1284 = vld [vmem:[#allocation2 + $0x9c] sm:$0x1]
        %v1285 = vld [vmem:[#allocation2 + $0xa4] sm:$0x1]
        %v1286 = vld [vmem:[#allocation2 + $0xac] sm:$0x1]
        %v1287 = vld [vmem:[#allocation2 + $0xb4] sm:$0x1]
        %v1288 = vld [vmem:[#allocation2 + $0xbc] sm:$0x1]
        %v1289 = vld [vmem:[#allocation2 + $0xc4] sm:$0x1]
        %v1290 = vld [vmem:[#allocation2 + $0xcc] sm:$0x1]
        %v1291 = vld [vmem:[#allocation2 + $0xdc] sm:$0x1]
        %v1292 = vld [vmem:[#allocation2 + $0xe4] sm:$0x1]
        %v1293 = vld [vmem:[#allocation2 + $0xec] sm:$0x1]
        %v1294 = vld [vmem:[#allocation2 + $0xf4] sm:$0x1]
        %v1295 = vld [vmem:[#allocation2 + $0xfc] sm:$0x1]
        %v1296 = vld [vmem:[#allocation2 + $0x104] sm:$0x1]
        %v1297 = vld [vmem:[#allocation2 + $0x10c] sm:$0x1]
        %v1298 = vld [vmem:[#allocation2 + $0x114] sm:$0x1]
        %v1299 = vld [vmem:[%s1039] sm:$0xf]
        %v1300 = vld [vmem:[%s1039 + $0x8] sm:$0xf]
        %v1301 = vld [vmem:[%s1039 + $0x10] sm:$0xf]
        %v1302 = vld [vmem:[%s1039 + $0x18] sm:$0xf]
        %v1303 = vld [vmem:[%s1039 + $0x20] sm:$0xf]
        %v1304 = vld [vmem:[%s1039 + $0x28] sm:$0xf]
        %v1305 = vld [vmem:[%s1039 + $0x30] sm:$0xf]
        %v1306 = vld [vmem:[%s1039 + $0x38] sm:$0xf]
        %v1307 = vld [vmem:[%s1039 + $0x48] sm:$0xf]
        %v1308 = vld [vmem:[%s1039 + $0x50] sm:$0xf]
        %v1309 = vld [vmem:[%s1039 + $0x58] sm:$0xf]
        %v1310 = vld [vmem:[%s1039 + $0x60] sm:$0xf]
        %v1311 = vld [vmem:[%s1039 + $0x68] sm:$0xf]
        %v1312 = vld [vmem:[%s1039 + $0x70] sm:$0xf]
        %v1313 = vld [vmem:[%s1039 + $0x78] sm:$0xf]
        %v1314 = vld [vmem:[%s1039 + $0x80] sm:$0xf]
        %v1315 = vld [vmem:[%s1039 + $0x90] sm:$0xf]
        %v1316 = vld [vmem:[%s1039 + $0x98] sm:$0xf]
        %v1317 = vld [vmem:[%s1039 + $0xa0] sm:$0xf]
        %v1318 = vld [vmem:[%s1039 + $0xa8] sm:$0xf]
        %v1319 = vld [vmem:[%s1039 + $0xb0] sm:$0xf]
        %v1320 = vld [vmem:[%s1039 + $0xb8] sm:$0xf]
        %v1321 = vld [vmem:[%s1039 + $0xc0] sm:$0xf]
        %v1322 = vld [vmem:[%s1039 + $0xc8] sm:$0xf]
        %v1323 = vld [vmem:[%s1039 + $0xd8] sm:$0xf]
        %v1324 = vld [vmem:[%s1039 + $0xe0] sm:$0xf]
        %v1325 = vld [vmem:[%s1039 + $0xe8] sm:$0xf]
        %v1326 = vld [vmem:[%s1039 + $0xf0] sm:$0xf]
        %v1327 = vld [vmem:[%s1039 + $0xf8] sm:$0xf]
        %v1328 = vld [vmem:[%s1039 + $0x100] sm:$0xf]
        %v1329 = vld [vmem:[%s1039 + $0x108] sm:$0xf]
        %v1330 = vld [vmem:[%s1039 + $0x110] sm:$0xf]
        %v1331 = vld [vmem:[%s1039 + $0x4] sm:$0x1]
        %v1332 = vld [vmem:[%s1039 + $0xc] sm:$0x1]
        %v1333 = vld [vmem:[%s1039 + $0x14] sm:$0x1]
        %v1334 = vld [vmem:[%s1039 + $0x1c] sm:$0x1]
        %v1335 = vld [vmem:[%s1039 + $0x24] sm:$0x1]
        %v1336 = vld [vmem:[%s1039 + $0x2c] sm:$0x1]
        %v1337 = vld [vmem:[%s1039 + $0x34] sm:$0x1]
        %v1338 = vld [vmem:[%s1039 + $0x3c] sm:$0x1]
        %v1339 = vld [vmem:[%s1039 + $0x4c] sm:$0x1]
        %v1340 = vld [vmem:[%s1039 + $0x54] sm:$0x1]
        %v1341 = vld [vmem:[%s1039 + $0x5c] sm:$0x1]
        %v1342 = vld [vmem:[%s1039 + $0x64] sm:$0x1]
        %v1343 = vld [vmem:[%s1039 + $0x6c] sm:$0x1]
        %v1344 = vld [vmem:[%s1039 + $0x74] sm:$0x1]
        %v1345 = vld [vmem:[%s1039 + $0x7c] sm:$0x1]
        %v1346 = vld [vmem:[%s1039 + $0x84] sm:$0x1]
        %v1347 = vld [vmem:[%s1039 + $0x94] sm:$0x1]
        %v1348 = vld [vmem:[%s1039 + $0x9c] sm:$0x1]
        %v1349 = vld [vmem:[%s1039 + $0xa4] sm:$0x1]
        %v1350 = vld [vmem:[%s1039 + $0xac] sm:$0x1]
        %v1351 = vld [vmem:[%s1039 + $0xb4] sm:$0x1]
        %v1352 = vld [vmem:[%s1039 + $0xbc] sm:$0x1]
        %v1353 = vld [vmem:[%s1039 + $0xc4] sm:$0x1]
        %v1354 = vld [vmem:[%s1039 + $0xcc] sm:$0x1]
        %v1355 = vld [vmem:[%s1039 + $0xdc] sm:$0x1]
        %v1356 = vld [vmem:[%s1039 + $0xe4] sm:$0x1]
        %v1357 = vld [vmem:[%s1039 + $0xec] sm:$0x1]
        %v1358 = vld [vmem:[%s1039 + $0xf4] sm:$0x1]
        %v1359 = vld [vmem:[%s1039 + $0xfc] sm:$0x1]
        %v1360 = vld [vmem:[%s1039 + $0x104] sm:$0x1]
        %v1361 = vld [vmem:[%s1039 + $0x10c] sm:$0x1]
        %v1362 = vld [vmem:[%s1039 + $0x114] sm:$0x1]
        %v1427 = vunpack.c.l.b16 %v1235
        %v1428 = vunpack.c.l.b16 %v1267
        %v1429 = vunpack.c.l.b16 %v1236
        %v1430 = vunpack.c.l.b16 %v1268
        %v1431 = vunpack.c.l.b16 %v1237
        %v1432 = vunpack.c.l.b16 %v1269
        %v1433 = vunpack.c.l.b16 %v1238
        %v1434 = vunpack.c.l.b16 %v1270
        %v1435 = vunpack.c.l.b16 %v1239
        %v1436 = vunpack.c.l.b16 %v1271
        %v1437 = vunpack.c.l.b16 %v1240
        %v1438 = vunpack.c.l.b16 %v1272
        %v1439 = vunpack.c.l.b16 %v1241
        %v1440 = vunpack.c.l.b16 %v1273
        %v1441 = vunpack.c.l.b16 %v1242
        %v1442 = vunpack.c.l.b16 %v1274
        %v1443 = vunpack.c.l.b16 %v1243
        %v1444 = vunpack.c.l.b16 %v1275
        %v1445 = vunpack.c.l.b16 %v1244
        %v1446 = vunpack.c.l.b16 %v1276
        %v1447 = vunpack.c.l.b16 %v1245
        %v1448 = vunpack.c.l.b16 %v1277
        %v1449 = vunpack.c.l.b16 %v1246
        %v1450 = vunpack.c.l.b16 %v1278
        %v1451 = vunpack.c.l.b16 %v1247
        %v1452 = vunpack.c.l.b16 %v1279
        %v1453 = vunpack.c.l.b16 %v1248
        %v1454 = vunpack.c.l.b16 %v1280
        %v1455 = vunpack.c.l.b16 %v1249
        %v1456 = vunpack.c.l.b16 %v1281
        %v1457 = vunpack.c.l.b16 %v1250
        %v1458 = vunpack.c.l.b16 %v1282
        %v1459 = vunpack.c.l.b16 %v1251
        %v1460 = vunpack.c.l.b16 %v1283
        %v1461 = vunpack.c.l.b16 %v1252
        %v1462 = vunpack.c.l.b16 %v1284
        %v1463 = vunpack.c.l.b16 %v1253
        %v1464 = vunpack.c.l.b16 %v1285
        %v1465 = vunpack.c.l.b16 %v1254
        %v1466 = vunpack.c.l.b16 %v1286
        %v1467 = vunpack.c.l.b16 %v1255
        %v1468 = vunpack.c.l.b16 %v1287
        %v1469 = vunpack.c.l.b16 %v1256
        %v1470 = vunpack.c.l.b16 %v1288
        %v1471 = vunpack.c.l.b16 %v1257
        %v1472 = vunpack.c.l.b16 %v1289
        %v1473 = vunpack.c.l.b16 %v1258
        %v1474 = vunpack.c.l.b16 %v1290
        %v1475 = vunpack.c.l.b16 %v1259
        %v1476 = vunpack.c.l.b16 %v1291
        %v1477 = vunpack.c.l.b16 %v1260
        %v1478 = vunpack.c.l.b16 %v1292
        %v1479 = vunpack.c.l.b16 %v1261
        %v1480 = vunpack.c.l.b16 %v1293
        %v1481 = vunpack.c.l.b16 %v1262
        %v1482 = vunpack.c.l.b16 %v1294
        %v1483 = vunpack.c.l.b16 %v1263
        %v1484 = vunpack.c.l.b16 %v1295
        %v1485 = vunpack.c.l.b16 %v1264
        %v1486 = vunpack.c.l.b16 %v1296
        %v1487 = vunpack.c.l.b16 %v1265
        %v1488 = vunpack.c.l.b16 %v1297
        %v1489 = vunpack.c.l.b16 %v1266
        %v1490 = vunpack.c.l.b16 %v1298
        %v1491 = vpack.c.b16 %v1428, %v1427
        %v1492 = vpack.c.b16 %v1430, %v1429
        %v1493 = vpack.c.b16 %v1432, %v1431
        %v1494 = vpack.c.b16 %v1434, %v1433
        %v1495 = vpack.c.b16 %v1436, %v1435
        %v1496 = vpack.c.b16 %v1438, %v1437
        %v1497 = vpack.c.b16 %v1440, %v1439
        %v1498 = vpack.c.b16 %v1442, %v1441
        %v1499 = vpack.c.b16 %v1444, %v1443
        %v1500 = vpack.c.b16 %v1446, %v1445
        %v1501 = vpack.c.b16 %v1448, %v1447
        %v1502 = vpack.c.b16 %v1450, %v1449
        %v1503 = vpack.c.b16 %v1452, %v1451
        %v1504 = vpack.c.b16 %v1454, %v1453
        %v1505 = vpack.c.b16 %v1456, %v1455
        %v1506 = vpack.c.b16 %v1458, %v1457
        %v1507 = vpack.c.b16 %v1460, %v1459
        %v1508 = vpack.c.b16 %v1462, %v1461
        %v1509 = vpack.c.b16 %v1464, %v1463
        %v1510 = vpack.c.b16 %v1466, %v1465
        %v1511 = vpack.c.b16 %v1468, %v1467
        %v1512 = vpack.c.b16 %v1470, %v1469
        %v1513 = vpack.c.b16 %v1472, %v1471
        %v1514 = vpack.c.b16 %v1474, %v1473
        %v1515 = vpack.c.b16 %v1476, %v1475
        %v1516 = vpack.c.b16 %v1478, %v1477
        %v1517 = vpack.c.b16 %v1480, %v1479
        %v1518 = vpack.c.b16 %v1482, %v1481
        %v1519 = vpack.c.b16 %v1484, %v1483
        %v1520 = vpack.c.b16 %v1486, %v1485
        %v1521 = vpack.c.b16 %v1488, %v1487
        %v1522 = vpack.c.b16 %v1490, %v1489
        %v1524 = vshrl.u32 %v1491, 16
        %v1526 = vshll.u32 %v1491, 16
        %v1528 = vrot.slane %v1526, 1
        %v1529 = vor.u32 %v1524, %v1528
        %v1531 = vshrl.u32 %v1492, 16
        %v1533 = vshll.u32 %v1492, 16
        %v1535 = vrot.slane %v1533, 1
        %v1536 = vor.u32 %v1531, %v1535
        %v1538 = vshrl.u32 %v1493, 16
        %v1540 = vshll.u32 %v1493, 16
        %v1542 = vrot.slane %v1540, 1
        %v1543 = vor.u32 %v1538, %v1542
        %v1545 = vshrl.u32 %v1494, 16
        %v1547 = vshll.u32 %v1494, 16
        %v1549 = vrot.slane %v1547, 1
        %v1550 = vor.u32 %v1545, %v1549
        %v1552 = vshrl.u32 %v1495, 16
        %v1554 = vshll.u32 %v1495, 16
        %v1556 = vrot.slane %v1554, 1
        %v1557 = vor.u32 %v1552, %v1556
        %v1559 = vshrl.u32 %v1496, 16
        %v1561 = vshll.u32 %v1496, 16
        %v1563 = vrot.slane %v1561, 1
        %v1564 = vor.u32 %v1559, %v1563
        %v1566 = vshrl.u32 %v1497, 16
        %v1568 = vshll.u32 %v1497, 16
        %v1570 = vrot.slane %v1568, 1
        %v1571 = vor.u32 %v1566, %v1570
        %v1573 = vshrl.u32 %v1498, 16
        %v1575 = vshll.u32 %v1498, 16
        %v1577 = vrot.slane %v1575, 1
        %v1578 = vor.u32 %v1573, %v1577
        %v1580 = vshrl.u32 %v1499, 16
        %v1582 = vshll.u32 %v1499, 16
        %v1584 = vrot.slane %v1582, 1
        %v1585 = vor.u32 %v1580, %v1584
        %v1587 = vshrl.u32 %v1500, 16
        %v1589 = vshll.u32 %v1500, 16
        %v1591 = vrot.slane %v1589, 1
        %v1592 = vor.u32 %v1587, %v1591
        %v1594 = vshrl.u32 %v1501, 16
        %v1596 = vshll.u32 %v1501, 16
        %v1598 = vrot.slane %v1596, 1
        %v1599 = vor.u32 %v1594, %v1598
        %v1601 = vshrl.u32 %v1502, 16
        %v1603 = vshll.u32 %v1502, 16
        %v1605 = vrot.slane %v1603, 1
        %v1606 = vor.u32 %v1601, %v1605
        %v1608 = vshrl.u32 %v1503, 16
        %v1610 = vshll.u32 %v1503, 16
        %v1612 = vrot.slane %v1610, 1
        %v1613 = vor.u32 %v1608, %v1612
        %v1615 = vshrl.u32 %v1504, 16
        %v1617 = vshll.u32 %v1504, 16
        %v1619 = vrot.slane %v1617, 1
        %v1620 = vor.u32 %v1615, %v1619
        %v1622 = vshrl.u32 %v1505, 16
        %v1624 = vshll.u32 %v1505, 16
        %v1626 = vrot.slane %v1624, 1
        %v1627 = vor.u32 %v1622, %v1626
        %v1629 = vshrl.u32 %v1506, 16
        %v1631 = vshll.u32 %v1506, 16
        %v1633 = vrot.slane %v1631, 1
        %v1634 = vor.u32 %v1629, %v1633
        %v1636 = vshrl.u32 %v1507, 16
        %v1638 = vshll.u32 %v1507, 16
        %v1640 = vrot.slane %v1638, 1
        %v1641 = vor.u32 %v1636, %v1640
        %v1643 = vshrl.u32 %v1508, 16
        %v1645 = vshll.u32 %v1508, 16
        %v1647 = vrot.slane %v1645, 1
        %v1648 = vor.u32 %v1643, %v1647
        %v1650 = vshrl.u32 %v1509, 16
        %v1652 = vshll.u32 %v1509, 16
        %v1654 = vrot.slane %v1652, 1
        %v1655 = vor.u32 %v1650, %v1654
        %v1657 = vshrl.u32 %v1510, 16
        %v1659 = vshll.u32 %v1510, 16
        %v1661 = vrot.slane %v1659, 1
        %v1662 = vor.u32 %v1657, %v1661
        %v1664 = vshrl.u32 %v1511, 16
        %v1666 = vshll.u32 %v1511, 16
        %v1668 = vrot.slane %v1666, 1
        %v1669 = vor.u32 %v1664, %v1668
        %v1671 = vshrl.u32 %v1512, 16
        %v1673 = vshll.u32 %v1512, 16
        %v1675 = vrot.slane %v1673, 1
        %v1676 = vor.u32 %v1671, %v1675
        %v1678 = vshrl.u32 %v1513, 16
        %v1680 = vshll.u32 %v1513, 16
        %v1682 = vrot.slane %v1680, 1
        %v1683 = vor.u32 %v1678, %v1682
        %v1685 = vshrl.u32 %v1514, 16
        %v1687 = vshll.u32 %v1514, 16
        %v1689 = vrot.slane %v1687, 1
        %v1690 = vor.u32 %v1685, %v1689
        %v1692 = vshrl.u32 %v1515, 16
        %v1694 = vshll.u32 %v1515, 16
        %v1696 = vrot.slane %v1694, 1
        %v1697 = vor.u32 %v1692, %v1696
        %v1699 = vshrl.u32 %v1516, 16
        %v1701 = vshll.u32 %v1516, 16
        %v1703 = vrot.slane %v1701, 1
        %v1704 = vor.u32 %v1699, %v1703
        %v1706 = vshrl.u32 %v1517, 16
        %v1708 = vshll.u32 %v1517, 16
        %v1710 = vrot.slane %v1708, 1
        %v1711 = vor.u32 %v1706, %v1710
        %v1713 = vshrl.u32 %v1518, 16
        %v1715 = vshll.u32 %v1518, 16
        %v1717 = vrot.slane %v1715, 1
        %v1718 = vor.u32 %v1713, %v1717
        %v1720 = vshrl.u32 %v1519, 16
        %v1722 = vshll.u32 %v1519, 16
        %v1724 = vrot.slane %v1722, 1
        %v1725 = vor.u32 %v1720, %v1724
        %v1727 = vshrl.u32 %v1520, 16
        %v1729 = vshll.u32 %v1520, 16
        %v1731 = vrot.slane %v1729, 1
        %v1732 = vor.u32 %v1727, %v1731
        %v1734 = vshrl.u32 %v1521, 16
        %v1736 = vshll.u32 %v1521, 16
        %v1738 = vrot.slane %v1736, 1
        %v1739 = vor.u32 %v1734, %v1738
        %v1741 = vshrl.u32 %v1522, 16
        %v1743 = vshll.u32 %v1522, 16
        %v1745 = vrot.slane %v1743, 1
        %v1746 = vor.u32 %v1741, %v1745
        %1747 = vrot.lane.b32.xlu0 %v1529, 64
        %v1748 = vpop.permute.xlu0 %1747
        %1749 = vrot.lane.b32.xlu0 %v1536, 64
        %v1750 = vpop.permute.xlu0 %1749
        %1751 = vrot.lane.b32.xlu0 %v1543, 64
        %v1752 = vpop.permute.xlu0 %1751
        %1753 = vrot.lane.b32.xlu0 %v1550, 64
        %v1754 = vpop.permute.xlu0 %1753
        %1755 = vrot.lane.b32.xlu0 %v1557, 64
        %v1756 = vpop.permute.xlu0 %1755
        %1757 = vrot.lane.b32.xlu0 %v1564, 64
        %v1758 = vpop.permute.xlu0 %1757
        %1759 = vrot.lane.b32.xlu0 %v1571, 64
        %v1760 = vpop.permute.xlu0 %1759
        %1761 = vrot.lane.b32.xlu0 %v1578, 64
        %v1762 = vpop.permute.xlu0 %1761
        %1763 = vrot.lane.b32.xlu0 %v1585, 64
        %v1764 = vpop.permute.xlu0 %1763
        %1765 = vrot.lane.b32.xlu0 %v1592, 64
        %v1766 = vpop.permute.xlu0 %1765
        %1767 = vrot.lane.b32.xlu0 %v1599, 64
        %v1768 = vpop.permute.xlu0 %1767
        %1769 = vrot.lane.b32.xlu0 %v1606, 64
        %v1770 = vpop.permute.xlu0 %1769
        %1771 = vrot.lane.b32.xlu0 %v1613, 64
        %v1772 = vpop.permute.xlu0 %1771
        %1773 = vrot.lane.b32.xlu0 %v1620, 64
        %v1774 = vpop.permute.xlu0 %1773
        %1775 = vrot.lane.b32.xlu0 %v1627, 64
        %v1776 = vpop.permute.xlu0 %1775
        %1777 = vrot.lane.b32.xlu0 %v1634, 64
        %v1778 = vpop.permute.xlu0 %1777
        %1779 = vrot.lane.b32.xlu0 %v1641, 64
        %v1780 = vpop.permute.xlu0 %1779
        %1781 = vrot.lane.b32.xlu0 %v1648, 64
        %v1782 = vpop.permute.xlu0 %1781
        %1783 = vrot.lane.b32.xlu0 %v1655, 64
        %v1784 = vpop.permute.xlu0 %1783
        %1785 = vrot.lane.b32.xlu0 %v1662, 64
        %v1786 = vpop.permute.xlu0 %1785
        %1787 = vrot.lane.b32.xlu0 %v1669, 64
        %v1788 = vpop.permute.xlu0 %1787
        %1789 = vrot.lane.b32.xlu0 %v1676, 64
        %v1790 = vpop.permute.xlu0 %1789
        %1791 = vrot.lane.b32.xlu0 %v1683, 64
        %v1792 = vpop.permute.xlu0 %1791
        %1793 = vrot.lane.b32.xlu0 %v1690, 64
        %v1794 = vpop.permute.xlu0 %1793
        %1795 = vrot.lane.b32.xlu0 %v1697, 64
        %v1796 = vpop.permute.xlu0 %1795
        %1797 = vrot.lane.b32.xlu0 %v1704, 64
        %v1798 = vpop.permute.xlu0 %1797
        %1799 = vrot.lane.b32.xlu0 %v1711, 64
        %v1800 = vpop.permute.xlu0 %1799
        %1801 = vrot.lane.b32.xlu0 %v1718, 64
        %v1802 = vpop.permute.xlu0 %1801
        %1803 = vrot.lane.b32.xlu0 %v1725, 64
        %v1804 = vpop.permute.xlu0 %1803
        %1805 = vrot.lane.b32.xlu0 %v1732, 64
        %v1806 = vpop.permute.xlu0 %1805
        %1807 = vrot.lane.b32.xlu0 %v1739, 64
        %v1808 = vpop.permute.xlu0 %1807
        %1809 = vrot.lane.b32.xlu0 %v1746, 64
        %v1810 = vpop.permute.xlu0 %1809
        %v1875 = vunpack.c.l.b16 %v1299
        %v1876 = vunpack.c.l.b16 %v1331
        %v1877 = vunpack.c.l.b16 %v1300
        %v1878 = vunpack.c.l.b16 %v1332
        %v1879 = vunpack.c.l.b16 %v1301
        %v1880 = vunpack.c.l.b16 %v1333
        %v1881 = vunpack.c.l.b16 %v1302
        %v1882 = vunpack.c.l.b16 %v1334
        %v1883 = vunpack.c.l.b16 %v1303
        %v1884 = vunpack.c.l.b16 %v1335
        %v1885 = vunpack.c.l.b16 %v1304
        %v1886 = vunpack.c.l.b16 %v1336
        %v1887 = vunpack.c.l.b16 %v1305
        %v1888 = vunpack.c.l.b16 %v1337
        %v1889 = vunpack.c.l.b16 %v1306
        %v1890 = vunpack.c.l.b16 %v1338
        %v1891 = vunpack.c.l.b16 %v1307
        %v1892 = vunpack.c.l.b16 %v1339
        %v1893 = vunpack.c.l.b16 %v1308
        %v1894 = vunpack.c.l.b16 %v1340
        %v1895 = vunpack.c.l.b16 %v1309
        %v1896 = vunpack.c.l.b16 %v1341
        %v1897 = vunpack.c.l.b16 %v1310
        %v1898 = vunpack.c.l.b16 %v1342
        %v1899 = vunpack.c.l.b16 %v1311
        %v1900 = vunpack.c.l.b16 %v1343
        %v1901 = vunpack.c.l.b16 %v1312
        %v1902 = vunpack.c.l.b16 %v1344
        %v1903 = vunpack.c.l.b16 %v1313
        %v1904 = vunpack.c.l.b16 %v1345
        %v1905 = vunpack.c.l.b16 %v1314
        %v1906 = vunpack.c.l.b16 %v1346
        %v1907 = vunpack.c.l.b16 %v1315
        %v1908 = vunpack.c.l.b16 %v1347
        %v1909 = vunpack.c.l.b16 %v1316
        %v1910 = vunpack.c.l.b16 %v1348
        %v1911 = vunpack.c.l.b16 %v1317
        %v1912 = vunpack.c.l.b16 %v1349
        %v1913 = vunpack.c.l.b16 %v1318
        %v1914 = vunpack.c.l.b16 %v1350
        %v1915 = vunpack.c.l.b16 %v1319
        %v1916 = vunpack.c.l.b16 %v1351
        %v1917 = vunpack.c.l.b16 %v1320
        %v1918 = vunpack.c.l.b16 %v1352
        %v1919 = vunpack.c.l.b16 %v1321
        %v1920 = vunpack.c.l.b16 %v1353
        %v1921 = vunpack.c.l.b16 %v1322
        %v1922 = vunpack.c.l.b16 %v1354
        %v1923 = vunpack.c.l.b16 %v1323
        %v1924 = vunpack.c.l.b16 %v1355
        %v1925 = vunpack.c.l.b16 %v1324
        %v1926 = vunpack.c.l.b16 %v1356
        %v1927 = vunpack.c.l.b16 %v1325
        %v1928 = vunpack.c.l.b16 %v1357
        %v1929 = vunpack.c.l.b16 %v1326
        %v1930 = vunpack.c.l.b16 %v1358
        %v1931 = vunpack.c.l.b16 %v1327
        %v1932 = vunpack.c.l.b16 %v1359
        %v1933 = vunpack.c.l.b16 %v1328
        %v1934 = vunpack.c.l.b16 %v1360
        %v1935 = vunpack.c.l.b16 %v1329
        %v1936 = vunpack.c.l.b16 %v1361
        %v1937 = vunpack.c.l.b16 %v1330
        %v1938 = vunpack.c.l.b16 %v1362
        %v1939 = vpack.c.b16 %v1876, %v1875
        %v1940 = vpack.c.b16 %v1878, %v1877
        %v1941 = vpack.c.b16 %v1880, %v1879
        %v1942 = vpack.c.b16 %v1882, %v1881
        %v1943 = vpack.c.b16 %v1884, %v1883
        %v1944 = vpack.c.b16 %v1886, %v1885
        %v1945 = vpack.c.b16 %v1888, %v1887
        %v1946 = vpack.c.b16 %v1890, %v1889
        %v1947 = vpack.c.b16 %v1892, %v1891
        %v1948 = vpack.c.b16 %v1894, %v1893
        %v1949 = vpack.c.b16 %v1896, %v1895
        %v1950 = vpack.c.b16 %v1898, %v1897
        %v1951 = vpack.c.b16 %v1900, %v1899
        %v1952 = vpack.c.b16 %v1902, %v1901
        %v1953 = vpack.c.b16 %v1904, %v1903
        %v1954 = vpack.c.b16 %v1906, %v1905
        %v1955 = vpack.c.b16 %v1908, %v1907
        %v1956 = vpack.c.b16 %v1910, %v1909
        %v1957 = vpack.c.b16 %v1912, %v1911
        %v1958 = vpack.c.b16 %v1914, %v1913
        %v1959 = vpack.c.b16 %v1916, %v1915
        %v1960 = vpack.c.b16 %v1918, %v1917
        %v1961 = vpack.c.b16 %v1920, %v1919
        %v1962 = vpack.c.b16 %v1922, %v1921
        %v1963 = vpack.c.b16 %v1924, %v1923
        %v1964 = vpack.c.b16 %v1926, %v1925
        %v1965 = vpack.c.b16 %v1928, %v1927
        %v1966 = vpack.c.b16 %v1930, %v1929
        %v1967 = vpack.c.b16 %v1932, %v1931
        %v1968 = vpack.c.b16 %v1934, %v1933
        %v1969 = vpack.c.b16 %v1936, %v1935
        %v1970 = vpack.c.b16 %v1938, %v1937
        %v1972 = vshrl.u32 %v1939, 16
        %v1974 = vshll.u32 %v1939, 16
        %v1976 = vrot.slane %v1974, 1
        %v1977 = vor.u32 %v1972, %v1976
        %v1979 = vshrl.u32 %v1940, 16
        %v1981 = vshll.u32 %v1940, 16
        %v1983 = vrot.slane %v1981, 1
        %v1984 = vor.u32 %v1979, %v1983
        %v1986 = vshrl.u32 %v1941, 16
        %v1988 = vshll.u32 %v1941, 16
        %v1990 = vrot.slane %v1988, 1
        %v1991 = vor.u32 %v1986, %v1990
        %v1993 = vshrl.u32 %v1942, 16
        %v1995 = vshll.u32 %v1942, 16
        %v1997 = vrot.slane %v1995, 1
        %v1998 = vor.u32 %v1993, %v1997
        %v2000 = vshrl.u32 %v1943, 16
        %v2002 = vshll.u32 %v1943, 16
        %v2004 = vrot.slane %v2002, 1
        %v2005 = vor.u32 %v2000, %v2004
        %v2007 = vshrl.u32 %v1944, 16
        %v2009 = vshll.u32 %v1944, 16
        %v2011 = vrot.slane %v2009, 1
        %v2012 = vor.u32 %v2007, %v2011
        %v2014 = vshrl.u32 %v1945, 16
        %v2016 = vshll.u32 %v1945, 16
        %v2018 = vrot.slane %v2016, 1
        %v2019 = vor.u32 %v2014, %v2018
        %v2021 = vshrl.u32 %v1946, 16
        %v2023 = vshll.u32 %v1946, 16
        %v2025 = vrot.slane %v2023, 1
        %v2026 = vor.u32 %v2021, %v2025
        %v2028 = vshrl.u32 %v1947, 16
        %v2030 = vshll.u32 %v1947, 16
        %v2032 = vrot.slane %v2030, 1
        %v2033 = vor.u32 %v2028, %v2032
        %v2035 = vshrl.u32 %v1948, 16
        %v2037 = vshll.u32 %v1948, 16
        %v2039 = vrot.slane %v2037, 1
        %v2040 = vor.u32 %v2035, %v2039
        %v2042 = vshrl.u32 %v1949, 16
        %v2044 = vshll.u32 %v1949, 16
        %v2046 = vrot.slane %v2044, 1
        %v2047 = vor.u32 %v2042, %v2046
        %v2049 = vshrl.u32 %v1950, 16
        %v2051 = vshll.u32 %v1950, 16
        %v2053 = vrot.slane %v2051, 1
        %v2054 = vor.u32 %v2049, %v2053
        %v2056 = vshrl.u32 %v1951, 16
        %v2058 = vshll.u32 %v1951, 16
        %v2060 = vrot.slane %v2058, 1
        %v2061 = vor.u32 %v2056, %v2060
        %v2063 = vshrl.u32 %v1952, 16
        %v2065 = vshll.u32 %v1952, 16
        %v2067 = vrot.slane %v2065, 1
        %v2068 = vor.u32 %v2063, %v2067
        %v2070 = vshrl.u32 %v1953, 16
        %v2072 = vshll.u32 %v1953, 16
        %v2074 = vrot.slane %v2072, 1
        %v2075 = vor.u32 %v2070, %v2074
        %v2077 = vshrl.u32 %v1954, 16
        %v2079 = vshll.u32 %v1954, 16
        %v2081 = vrot.slane %v2079, 1
        %v2082 = vor.u32 %v2077, %v2081
        %v2084 = vshrl.u32 %v1955, 16
        %v2086 = vshll.u32 %v1955, 16
        %v2088 = vrot.slane %v2086, 1
        %v2089 = vor.u32 %v2084, %v2088
        %v2091 = vshrl.u32 %v1956, 16
        %v2093 = vshll.u32 %v1956, 16
        %v2095 = vrot.slane %v2093, 1
        %v2096 = vor.u32 %v2091, %v2095
        %v2098 = vshrl.u32 %v1957, 16
        %v2100 = vshll.u32 %v1957, 16
        %v2102 = vrot.slane %v2100, 1
        %v2103 = vor.u32 %v2098, %v2102
        %v2105 = vshrl.u32 %v1958, 16
        %v2107 = vshll.u32 %v1958, 16
        %v2109 = vrot.slane %v2107, 1
        %v2110 = vor.u32 %v2105, %v2109
        %v2112 = vshrl.u32 %v1959, 16
        %v2114 = vshll.u32 %v1959, 16
        %v2116 = vrot.slane %v2114, 1
        %v2117 = vor.u32 %v2112, %v2116
        %v2119 = vshrl.u32 %v1960, 16
        %v2121 = vshll.u32 %v1960, 16
        %v2123 = vrot.slane %v2121, 1
        %v2124 = vor.u32 %v2119, %v2123
        %v2126 = vshrl.u32 %v1961, 16
        %v2128 = vshll.u32 %v1961, 16
        %v2130 = vrot.slane %v2128, 1
        %v2131 = vor.u32 %v2126, %v2130
        %v2133 = vshrl.u32 %v1962, 16
        %v2135 = vshll.u32 %v1962, 16
        %v2137 = vrot.slane %v2135, 1
        %v2138 = vor.u32 %v2133, %v2137
        %v2140 = vshrl.u32 %v1963, 16
        %v2142 = vshll.u32 %v1963, 16
        %v2144 = vrot.slane %v2142, 1
        %v2145 = vor.u32 %v2140, %v2144
        %v2147 = vshrl.u32 %v1964, 16
        %v2149 = vshll.u32 %v1964, 16
        %v2151 = vrot.slane %v2149, 1
        %v2152 = vor.u32 %v2147, %v2151
        %v2154 = vshrl.u32 %v1965, 16
        %v2156 = vshll.u32 %v1965, 16
        %v2158 = vrot.slane %v2156, 1
        %v2159 = vor.u32 %v2154, %v2158
        %v2161 = vshrl.u32 %v1966, 16
        %v2163 = vshll.u32 %v1966, 16
        %v2165 = vrot.slane %v2163, 1
        %v2166 = vor.u32 %v2161, %v2165
        %v2168 = vshrl.u32 %v1967, 16
        %v2170 = vshll.u32 %v1967, 16
        %v2172 = vrot.slane %v2170, 1
        %v2173 = vor.u32 %v2168, %v2172
        %v2175 = vshrl.u32 %v1968, 16
        %v2177 = vshll.u32 %v1968, 16
        %v2179 = vrot.slane %v2177, 1
        %v2180 = vor.u32 %v2175, %v2179
        %v2182 = vshrl.u32 %v1969, 16
        %v2184 = vshll.u32 %v1969, 16
        %v2186 = vrot.slane %v2184, 1
        %v2187 = vor.u32 %v2182, %v2186
        %v2189 = vshrl.u32 %v1970, 16
        %v2191 = vshll.u32 %v1970, 16
        %v2193 = vrot.slane %v2191, 1
        %v2194 = vor.u32 %v2189, %v2193
        %2195 = vrot.lane.b32.xlu0 %v1977, 64
        %v2196 = vpop.permute.xlu0 %2195
        %2197 = vrot.lane.b32.xlu0 %v1984, 64
        %v2198 = vpop.permute.xlu0 %2197
        %2199 = vrot.lane.b32.xlu0 %v1991, 64
        %v2200 = vpop.permute.xlu0 %2199
        %2201 = vrot.lane.b32.xlu0 %v1998, 64
        %v2202 = vpop.permute.xlu0 %2201
        %2203 = vrot.lane.b32.xlu0 %v2005, 64
        %v2204 = vpop.permute.xlu0 %2203
        %2205 = vrot.lane.b32.xlu0 %v2012, 64
        %v2206 = vpop.permute.xlu0 %2205
        %2207 = vrot.lane.b32.xlu0 %v2019, 64
        %v2208 = vpop.permute.xlu0 %2207
        %2209 = vrot.lane.b32.xlu0 %v2026, 64
        %v2210 = vpop.permute.xlu0 %2209
        %2211 = vrot.lane.b32.xlu0 %v2033, 64
        %v2212 = vpop.permute.xlu0 %2211
        %2213 = vrot.lane.b32.xlu0 %v2040, 64
        %v2214 = vpop.permute.xlu0 %2213
        %2215 = vrot.lane.b32.xlu0 %v2047, 64
        %v2216 = vpop.permute.xlu0 %2215
        %2217 = vrot.lane.b32.xlu0 %v2054, 64
        %v2218 = vpop.permute.xlu0 %2217
        %2219 = vrot.lane.b32.xlu0 %v2061, 64
        %v2220 = vpop.permute.xlu0 %2219
        %2221 = vrot.lane.b32.xlu0 %v2068, 64
        %v2222 = vpop.permute.xlu0 %2221
        %2223 = vrot.lane.b32.xlu0 %v2075, 64
        %v2224 = vpop.permute.xlu0 %2223
        %2225 = vrot.lane.b32.xlu0 %v2082, 64
        %v2226 = vpop.permute.xlu0 %2225
        %2227 = vrot.lane.b32.xlu0 %v2089, 64
        %v2228 = vpop.permute.xlu0 %2227
        %2229 = vrot.lane.b32.xlu0 %v2096, 64
        %v2230 = vpop.permute.xlu0 %2229
        %2231 = vrot.lane.b32.xlu0 %v2103, 64
        %v2232 = vpop.permute.xlu0 %2231
        %2233 = vrot.lane.b32.xlu0 %v2110, 64
        %v2234 = vpop.permute.xlu0 %2233
        %2235 = vrot.lane.b32.xlu0 %v2117, 64
        %v2236 = vpop.permute.xlu0 %2235
        %2237 = vrot.lane.b32.xlu0 %v2124, 64
        %v2238 = vpop.permute.xlu0 %2237
        %2239 = vrot.lane.b32.xlu0 %v2131, 64
        %v2240 = vpop.permute.xlu0 %2239
        %2241 = vrot.lane.b32.xlu0 %v2138, 64
        %v2242 = vpop.permute.xlu0 %2241
        %2243 = vrot.lane.b32.xlu0 %v2145, 64
        %v2244 = vpop.permute.xlu0 %2243
        %2245 = vrot.lane.b32.xlu0 %v2152, 64
        %v2246 = vpop.permute.xlu0 %2245
        %2247 = vrot.lane.b32.xlu0 %v2159, 64
        %v2248 = vpop.permute.xlu0 %2247
        %2249 = vrot.lane.b32.xlu0 %v2166, 64
        %v2250 = vpop.permute.xlu0 %2249
        %2251 = vrot.lane.b32.xlu0 %v2173, 64
        %v2252 = vpop.permute.xlu0 %2251
        %2253 = vrot.lane.b32.xlu0 %v2180, 64
        %v2254 = vpop.permute.xlu0 %2253
        %2255 = vrot.lane.b32.xlu0 %v2187, 64
        %v2256 = vpop.permute.xlu0 %2255
        %2257 = vrot.lane.b32.xlu0 %v2194, 64
        %v2258 = vpop.permute.xlu0 %2257
        %vm2259 = vcmask 523264
        %v2262 = vsel %vm2259, %v1235, %v1748
        %v2265 = vsel %vm2259, %v1236, %v1750
        %v2268 = vsel %vm2259, %v1237, %v1752
        %v2271 = vsel %vm2259, %v1238, %v1754
        %v2274 = vsel %vm2259, %v1239, %v1756
        %v2277 = vsel %vm2259, %v1240, %v1758
        %v2280 = vsel %vm2259, %v1241, %v1760
        %v2283 = vsel %vm2259, %v1242, %v1762
        %v2286 = vsel %vm2259, %v1243, %v1764
        %v2289 = vsel %vm2259, %v1244, %v1766
        %v2292 = vsel %vm2259, %v1245, %v1768
        %v2295 = vsel %vm2259, %v1246, %v1770
        %v2298 = vsel %vm2259, %v1247, %v1772
        %v2301 = vsel %vm2259, %v1248, %v1774
        %v2304 = vsel %vm2259, %v1249, %v1776
        %v2307 = vsel %vm2259, %v1250, %v1778
        %v2310 = vsel %vm2259, %v1251, %v1780
        %v2313 = vsel %vm2259, %v1252, %v1782
        %v2316 = vsel %vm2259, %v1253, %v1784
        %v2319 = vsel %vm2259, %v1254, %v1786
        %v2322 = vsel %vm2259, %v1255, %v1788
        %v2325 = vsel %vm2259, %v1256, %v1790
        %v2328 = vsel %vm2259, %v1257, %v1792
        %v2331 = vsel %vm2259, %v1258, %v1794
        %v2334 = vsel %vm2259, %v1259, %v1796
        %v2337 = vsel %vm2259, %v1260, %v1798
        %v2340 = vsel %vm2259, %v1261, %v1800
        %v2343 = vsel %vm2259, %v1262, %v1802
        %v2346 = vsel %vm2259, %v1263, %v1804
        %v2349 = vsel %vm2259, %v1264, %v1806
        %v2352 = vsel %vm2259, %v1265, %v1808
        %v2355 = vsel %vm2259, %v1266, %v1810
        %v2358 = vsel %vm2259, %v1299, %v2196
        %v2361 = vsel %vm2259, %v1300, %v2198
        %v2364 = vsel %vm2259, %v1301, %v2200
        %v2367 = vsel %vm2259, %v1302, %v2202
        %v2370 = vsel %vm2259, %v1303, %v2204
        %v2373 = vsel %vm2259, %v1304, %v2206
        %v2376 = vsel %vm2259, %v1305, %v2208
        %v2379 = vsel %vm2259, %v1306, %v2210
        %v2382 = vsel %vm2259, %v1307, %v2212
        %v2385 = vsel %vm2259, %v1308, %v2214
        %v2388 = vsel %vm2259, %v1309, %v2216
        %v2391 = vsel %vm2259, %v1310, %v2218
        %v2394 = vsel %vm2259, %v1311, %v2220
        %v2397 = vsel %vm2259, %v1312, %v2222
        %v2400 = vsel %vm2259, %v1313, %v2224
        %v2403 = vsel %vm2259, %v1314, %v2226
        %v2406 = vsel %vm2259, %v1315, %v2228
        %v2409 = vsel %vm2259, %v1316, %v2230
        %v2412 = vsel %vm2259, %v1317, %v2232
        %v2415 = vsel %vm2259, %v1318, %v2234
        %v2418 = vsel %vm2259, %v1319, %v2236
        %v2421 = vsel %vm2259, %v1320, %v2238
        %v2424 = vsel %vm2259, %v1321, %v2240
        %v2427 = vsel %vm2259, %v1322, %v2242
        %v2430 = vsel %vm2259, %v1323, %v2244
        %v2433 = vsel %vm2259, %v1324, %v2246
        %v2436 = vsel %vm2259, %v1325, %v2248
        %v2439 = vsel %vm2259, %v1326, %v2250
        %v2442 = vsel %vm2259, %v1327, %v2252
        %v2445 = vsel %vm2259, %v1328, %v2254
        %v2448 = vsel %vm2259, %v1329, %v2256
        %v2451 = vsel %vm2259, %v1330, %v2258
        %v2516 = vunpack.c.l.b16 %v2262
        %v2517 = vunpack.c.l.b16 %v2358
        %v2518 = vunpack.c.l.b16 %v2265
        %v2519 = vunpack.c.l.b16 %v2361
        %v2520 = vunpack.c.l.b16 %v2268
        %v2521 = vunpack.c.l.b16 %v2364
        %v2522 = vunpack.c.l.b16 %v2271
        %v2523 = vunpack.c.l.b16 %v2367
        %v2524 = vunpack.c.l.b16 %v2274
        %v2525 = vunpack.c.l.b16 %v2370
        %v2526 = vunpack.c.l.b16 %v2277
        %v2527 = vunpack.c.l.b16 %v2373
        %v2528 = vunpack.c.l.b16 %v2280
        %v2529 = vunpack.c.l.b16 %v2376
        %v2530 = vunpack.c.l.b16 %v2283
        %v2531 = vunpack.c.l.b16 %v2379
        %v2532 = vunpack.c.l.b16 %v2286
        %v2533 = vunpack.c.l.b16 %v2382
        %v2534 = vunpack.c.l.b16 %v2289
        %v2535 = vunpack.c.l.b16 %v2385
        %v2536 = vunpack.c.l.b16 %v2292
        %v2537 = vunpack.c.l.b16 %v2388
        %v2538 = vunpack.c.l.b16 %v2295
        %v2539 = vunpack.c.l.b16 %v2391
        %v2540 = vunpack.c.l.b16 %v2298
        %v2541 = vunpack.c.l.b16 %v2394
        %v2542 = vunpack.c.l.b16 %v2301
        %v2543 = vunpack.c.l.b16 %v2397
        %v2544 = vunpack.c.l.b16 %v2304
        %v2545 = vunpack.c.l.b16 %v2400
        %v2546 = vunpack.c.l.b16 %v2307
        %v2547 = vunpack.c.l.b16 %v2403
        %v2548 = vunpack.c.l.b16 %v2310
        %v2549 = vunpack.c.l.b16 %v2406
        %v2550 = vunpack.c.l.b16 %v2313
        %v2551 = vunpack.c.l.b16 %v2409
        %v2552 = vunpack.c.l.b16 %v2316
        %v2553 = vunpack.c.l.b16 %v2412
        %v2554 = vunpack.c.l.b16 %v2319
        %v2555 = vunpack.c.l.b16 %v2415
        %v2556 = vunpack.c.l.b16 %v2322
        %v2557 = vunpack.c.l.b16 %v2418
        %v2558 = vunpack.c.l.b16 %v2325
        %v2559 = vunpack.c.l.b16 %v2421
        %v2560 = vunpack.c.l.b16 %v2328
        %v2561 = vunpack.c.l.b16 %v2424
        %v2562 = vunpack.c.l.b16 %v2331
        %v2563 = vunpack.c.l.b16 %v2427
        %v2564 = vunpack.c.l.b16 %v2334
        %v2565 = vunpack.c.l.b16 %v2430
        %v2566 = vunpack.c.l.b16 %v2337
        %v2567 = vunpack.c.l.b16 %v2433
        %v2568 = vunpack.c.l.b16 %v2340
        %v2569 = vunpack.c.l.b16 %v2436
        %v2570 = vunpack.c.l.b16 %v2343
        %v2571 = vunpack.c.l.b16 %v2439
        %v2572 = vunpack.c.l.b16 %v2346
        %v2573 = vunpack.c.l.b16 %v2442
        %v2574 = vunpack.c.l.b16 %v2349
        %v2575 = vunpack.c.l.b16 %v2445
        %v2576 = vunpack.c.l.b16 %v2352
        %v2577 = vunpack.c.l.b16 %v2448
        %v2578 = vunpack.c.l.b16 %v2355
        %v2579 = vunpack.c.l.b16 %v2451
        %v2580 = vld [vmem:[%s1] sm:$0xf]
        %v2581 = vld [vmem:[%s1 + $0x4] sm:$0xf]
        %v2582 = vld [vmem:[%s1 + $0x8] sm:$0xf]
        %v2583 = vld [vmem:[%s1 + $0xc] sm:$0xf]
        %v2584 = vld [vmem:[%s1 + $0x10] sm:$0xf]
        %v2585 = vld [vmem:[%s1 + $0x14] sm:$0xf]
        %v2586 = vld [vmem:[%s1 + $0x18] sm:$0xf]
        %v2587 = vld [vmem:[%s1 + $0x1c] sm:$0xf]
        %v2588 = vld [vmem:[%s1 + $0x20] sm:$0xf]
        %v2589 = vld [vmem:[%s1 + $0x24] sm:$0xf]
        %v2590 = vld [vmem:[%s1 + $0x28] sm:$0xf]
        %v2591 = vld [vmem:[%s1 + $0x2c] sm:$0xf]
        %v2592 = vld [vmem:[%s1 + $0x30] sm:$0xf]
        %v2593 = vld [vmem:[%s1 + $0x34] sm:$0xf]
        %v2594 = vld [vmem:[%s1 + $0x38] sm:$0xf]
        %v2595 = vld [vmem:[%s1 + $0x3c] sm:$0xf]
        %v2596 = vld [vmem:[%s1 + $0x40] sm:$0xf]
        %v2597 = vld [vmem:[%s1 + $0x44] sm:$0xf]
        %v2598 = vld [vmem:[%s1 + $0x48] sm:$0xf]
        %v2599 = vld [vmem:[%s1 + $0x4c] sm:$0xf]
        %v2600 = vld [vmem:[%s1 + $0x50] sm:$0xf]
        %v2601 = vld [vmem:[%s1 + $0x54] sm:$0xf]
        %v2602 = vld [vmem:[%s1 + $0x58] sm:$0xf]
        %v2603 = vld [vmem:[%s1 + $0x5c] sm:$0xf]
        %v2604 = vld [vmem:[%s1 + $0x60] sm:$0xf]
        %v2605 = vld [vmem:[%s1 + $0x64] sm:$0xf]
        %v2606 = vld [vmem:[%s1 + $0x68] sm:$0xf]
        %v2607 = vld [vmem:[%s1 + $0x6c] sm:$0xf]
        %v2608 = vld [vmem:[%s1 + $0x70] sm:$0xf]
        %v2609 = vld [vmem:[%s1 + $0x74] sm:$0xf]
        %v2610 = vld [vmem:[%s1 + $0x78] sm:$0xf]
        %v2611 = vld [vmem:[%s1 + $0x7c] sm:$0xf]
        %v2612 = vpack.c.b16 %v2518, %v2516
        %v2613 = vpack.c.b16 %v2519, %v2517
        %v2614 = vpack.c.b16 %v2522, %v2520
        %v2615 = vpack.c.b16 %v2523, %v2521
        %v2616 = vpack.c.b16 %v2526, %v2524
        %v2617 = vpack.c.b16 %v2527, %v2525
        %v2618 = vpack.c.b16 %v2530, %v2528
        %v2619 = vpack.c.b16 %v2531, %v2529
        %v2620 = vpack.c.b16 %v2534, %v2532
        %v2621 = vpack.c.b16 %v2535, %v2533
        %v2622 = vpack.c.b16 %v2538, %v2536
        %v2623 = vpack.c.b16 %v2539, %v2537
        %v2624 = vpack.c.b16 %v2542, %v2540
        %v2625 = vpack.c.b16 %v2543, %v2541
        %v2626 = vpack.c.b16 %v2546, %v2544
        %v2627 = vpack.c.b16 %v2547, %v2545
        %v2628 = vpack.c.b16 %v2550, %v2548
        %v2629 = vpack.c.b16 %v2551, %v2549
        %v2630 = vpack.c.b16 %v2554, %v2552
        %v2631 = vpack.c.b16 %v2555, %v2553
        %v2632 = vpack.c.b16 %v2558, %v2556
        %v2633 = vpack.c.b16 %v2559, %v2557
        %v2634 = vpack.c.b16 %v2562, %v2560
        %v2635 = vpack.c.b16 %v2563, %v2561
        %v2636 = vpack.c.b16 %v2566, %v2564
        %v2637 = vpack.c.b16 %v2567, %v2565
        %v2638 = vpack.c.b16 %v2570, %v2568
        %v2639 = vpack.c.b16 %v2571, %v2569
        %v2640 = vpack.c.b16 %v2574, %v2572
        %v2641 = vpack.c.b16 %v2575, %v2573
        %v2642 = vpack.c.b16 %v2578, %v2576
        %v2643 = vpack.c.b16 %v2579, %v2577
        %v2708 = vunpack.c.l.b16 %v2580
        %v2709 = vunpack.c.l.b16 %v2581
        %v2710 = vunpack.c.l.b16 %v2582
        %v2711 = vunpack.c.l.b16 %v2583
        %v2712 = vunpack.c.l.b16 %v2584
        %v2713 = vunpack.c.l.b16 %v2585
        %v2714 = vunpack.c.l.b16 %v2586
        %v2715 = vunpack.c.l.b16 %v2587
        %v2716 = vunpack.c.l.b16 %v2588
        %v2717 = vunpack.c.l.b16 %v2589
        %v2718 = vunpack.c.l.b16 %v2590
        %v2719 = vunpack.c.l.b16 %v2591
        %v2720 = vunpack.c.l.b16 %v2592
        %v2721 = vunpack.c.l.b16 %v2593
        %v2722 = vunpack.c.l.b16 %v2594
        %v2723 = vunpack.c.l.b16 %v2595
        %v2724 = vunpack.c.l.b16 %v2596
        %v2725 = vunpack.c.l.b16 %v2597
        %v2726 = vunpack.c.l.b16 %v2598
        %v2727 = vunpack.c.l.b16 %v2599
        %v2728 = vunpack.c.l.b16 %v2600
        %v2729 = vunpack.c.l.b16 %v2601
        %v2730 = vunpack.c.l.b16 %v2602
        %v2731 = vunpack.c.l.b16 %v2603
        %v2732 = vunpack.c.l.b16 %v2604
        %v2733 = vunpack.c.l.b16 %v2605
        %v2734 = vunpack.c.l.b16 %v2606
        %v2735 = vunpack.c.l.b16 %v2607
        %v2736 = vunpack.c.l.b16 %v2608
        %v2737 = vunpack.c.l.b16 %v2609
        %v2738 = vunpack.c.l.b16 %v2610
        %v2739 = vunpack.c.l.b16 %v2611
        %v2740 = vpack.c.b16 %v2709, %v2708
        %v2741 = vpack.c.b16 %v2711, %v2710
        %v2742 = vpack.c.b16 %v2713, %v2712
        %v2743 = vpack.c.b16 %v2715, %v2714
        %v2744 = vpack.c.b16 %v2717, %v2716
        %v2745 = vpack.c.b16 %v2719, %v2718
        %v2746 = vpack.c.b16 %v2721, %v2720
        %v2747 = vpack.c.b16 %v2723, %v2722
        %v2748 = vpack.c.b16 %v2725, %v2724
        %v2749 = vpack.c.b16 %v2727, %v2726
        %v2750 = vpack.c.b16 %v2729, %v2728
        %v2751 = vpack.c.b16 %v2731, %v2730
        %v2752 = vpack.c.b16 %v2733, %v2732
        %v2753 = vpack.c.b16 %v2735, %v2734
        %v2754 = vpack.c.b16 %v2737, %v2736
        %v2755 = vpack.c.b16 %v2739, %v2738
        %2772 = vmatprep.subr.bf16.mxu0 0
        %2773 = vmatpush1.bf16.msra.mxu0 %v2740
        %2774 = vmatprep.subr.bf16.mxu0 0
        %2775 = vmatpush1.bf16.msra.mxu0 %v2741
        %2776 = vmatprep.subr.bf16.mxu0 0
        %2777 = vmatpush1.bf16.msra.mxu0 %v2742
        %2778 = vmatprep.subr.bf16.mxu0 0
        %2779 = vmatpush1.bf16.msra.mxu0 %v2743
        %2780 = vmatprep.subr.bf16.mxu0 0
        %2781 = vmatpush1.bf16.msra.mxu0 %v2744
        %2782 = vmatprep.subr.bf16.mxu0 0
        %2783 = vmatpush1.bf16.msra.mxu0 %v2745
        %2784 = vmatprep.subr.bf16.mxu0 0
        %2785 = vmatpush1.bf16.msra.mxu0 %v2746
        %2786 = vmatprep.subr.bf16.mxu0 0
        %2787 = vmatpush1.bf16.msra.mxu0 %v2747
        %2788 = vmatprep.subr.bf16.mxu0 0
        %2789 = vmatpush1.bf16.msra.mxu0 %v2748
        %2790 = vmatprep.subr.bf16.mxu0 0
        %2791 = vmatpush1.bf16.msra.mxu0 %v2749
        %2792 = vmatprep.subr.bf16.mxu0 0
        %2793 = vmatpush1.bf16.msra.mxu0 %v2750
        %2794 = vmatprep.subr.bf16.mxu0 0
        %2795 = vmatpush1.bf16.msra.mxu0 %v2751
        %2796 = vmatprep.subr.bf16.mxu0 0
        %2797 = vmatpush1.bf16.msra.mxu0 %v2752
        %2798 = vmatprep.subr.bf16.mxu0 0
        %2799 = vmatpush1.bf16.msra.mxu0 %v2753
        %2800 = vmatprep.subr.bf16.mxu0 0
        %2801 = vmatpush1.bf16.msra.mxu0 %v2754
        %2802 = vmatprep.subr.bf16.mxu0 0
        %2803 = vmatpush1.bf16.msra.mxu0 %v2755
        %2804 = vmatprep.mubr.bf16.mxu0 %v2613
        %2805 = vmatmul.mubr.bf16.gmra.mrb[0].mxu0 %v2612
        %v2806 = vpop.f32.mrb[0].mxu0
        %v2807 = vadd.f32 0.0, %v2806
        %v2808 = vpop.f32.mrb[0].mxu0
        %v2809 = vpop.f32.mrb[0].mxu0
        %v2810 = vadd.f32 0.0, %v2809
        %v2811 = vpop.f32.mrb[0].mxu0
        %2812 = vmatprep.mubr.bf16.mxu0 %v2615
        %2813 = vmatmul.mubr.bf16.gmra.mrb[0].mxu0 %v2614
        %v2814 = vpop.f32.mrb[0].mxu0
        %v2815 = vadd.f32 0.0, %v2814
        %v2816 = vpop.f32.mrb[0].mxu0
        %v2817 = vpop.f32.mrb[0].mxu0
        %v2818 = vadd.f32 0.0, %v2817
        %v2819 = vpop.f32.mrb[0].mxu0
        %2820 = vmatprep.mubr.bf16.mxu0 %v2617
        %2821 = vmatmul.mubr.bf16.gmra.mrb[0].mxu0 %v2616
        %v2822 = vpop.f32.mrb[0].mxu0
        %v2823 = vadd.f32 0.0, %v2822
        %v2824 = vpop.f32.mrb[0].mxu0
        %v2825 = vpop.f32.mrb[0].mxu0
        %v2826 = vadd.f32 0.0, %v2825
        %v2827 = vpop.f32.mrb[0].mxu0
        %2828 = vmatprep.mubr.bf16.mxu0 %v2619
        %2829 = vmatmul.mubr.bf16.gmra.mrb[0].mxu0 %v2618
        %v2830 = vpop.f32.mrb[0].mxu0
        %v2831 = vadd.f32 0.0, %v2830
        %v2832 = vpop.f32.mrb[0].mxu0
        %v2833 = vpop.f32.mrb[0].mxu0
        %v2834 = vadd.f32 0.0, %v2833
        %v2835 = vpop.f32.mrb[0].mxu0
        %2836 = vmatprep.mubr.bf16.mxu0 %v2621
        %2837 = vmatmul.mubr.bf16.gmra.mrb[0].mxu0 %v2620
        %v2838 = vpop.f32.mrb[0].mxu0
        %v2839 = vadd.f32 0.0, %v2838
        %v2840 = vpop.f32.mrb[0].mxu0
        %v2841 = vpop.f32.mrb[0].mxu0
        %v2842 = vadd.f32 0.0, %v2841
        %v2843 = vpop.f32.mrb[0].mxu0
        %2844 = vmatprep.mubr.bf16.mxu0 %v2623
        %2845 = vmatmul.mubr.bf16.gmra.mrb[0].mxu0 %v2622
        %v2846 = vpop.f32.mrb[0].mxu0
        %v2847 = vadd.f32 0.0, %v2846
        %v2848 = vpop.f32.mrb[0].mxu0
        %v2849 = vpop.f32.mrb[0].mxu0
        %v2850 = vadd.f32 0.0, %v2849
        %v2851 = vpop.f32.mrb[0].mxu0
        %2852 = vmatprep.mubr.bf16.mxu0 %v2625
        %2853 = vmatmul.mubr.bf16.gmra.mrb[0].mxu0 %v2624
        %v2854 = vpop.f32.mrb[0].mxu0
        %v2855 = vadd.f32 0.0, %v2854
        %v2856 = vpop.f32.mrb[0].mxu0
        %v2857 = vpop.f32.mrb[0].mxu0
        %v2858 = vadd.f32 0.0, %v2857
        %v2859 = vpop.f32.mrb[0].mxu0
        %2860 = vmatprep.mubr.bf16.mxu0 %v2627
        %2861 = vmatmul.mubr.bf16.gmra.mrb[0].mxu0 %v2626
        %v2862 = vpop.f32.mrb[0].mxu0
        %v2863 = vadd.f32 0.0, %v2862
        %v2864 = vpop.f32.mrb[0].mxu0
        %v2865 = vpop.f32.mrb[0].mxu0
        %v2866 = vadd.f32 0.0, %v2865
        %v2867 = vpop.f32.mrb[0].mxu0
        %2868 = vmatprep.mubr.bf16.mxu0 %v2629
        %2869 = vmatmul.mubr.bf16.gmra.mrb[0].mxu0 %v2628
        %v2870 = vpop.f32.mrb[0].mxu0
        %v2871 = vadd.f32 0.0, %v2870
        %v2872 = vpop.f32.mrb[0].mxu0
        %v2873 = vpop.f32.mrb[0].mxu0
        %v2874 = vadd.f32 0.0, %v2873
        %v2875 = vpop.f32.mrb[0].mxu0
        %2876 = vmatprep.mubr.bf16.mxu0 %v2631
        %2877 = vmatmul.mubr.bf16.gmra.mrb[0].mxu0 %v2630
        %v2878 = vpop.f32.mrb[0].mxu0
        %v2879 = vadd.f32 0.0, %v2878
        %v2880 = vpop.f32.mrb[0].mxu0
        %v2881 = vpop.f32.mrb[0].mxu0
        %v2882 = vadd.f32 0.0, %v2881
        %v2883 = vpop.f32.mrb[0].mxu0
        %2884 = vmatprep.mubr.bf16.mxu0 %v2633
        %2885 = vmatmul.mubr.bf16.gmra.mrb[0].mxu0 %v2632
        %v2886 = vpop.f32.mrb[0].mxu0
        %v2887 = vadd.f32 0.0, %v2886
        %v2888 = vpop.f32.mrb[0].mxu0
        %v2889 = vpop.f32.mrb[0].mxu0
        %v2890 = vadd.f32 0.0, %v2889
        %v2891 = vpop.f32.mrb[0].mxu0
        %2892 = vmatprep.mubr.bf16.mxu0 %v2635
        %2893 = vmatmul.mubr.bf16.gmra.mrb[0].mxu0 %v2634
        %v2894 = vpop.f32.mrb[0].mxu0
        %v2895 = vadd.f32 0.0, %v2894
        %v2896 = vpop.f32.mrb[0].mxu0
        %v2897 = vpop.f32.mrb[0].mxu0
        %v2898 = vadd.f32 0.0, %v2897
        %v2899 = vpop.f32.mrb[0].mxu0
        %2900 = vmatprep.mubr.bf16.mxu0 %v2637
        %2901 = vmatmul.mubr.bf16.gmra.mrb[0].mxu0 %v2636
        %v2902 = vpop.f32.mrb[0].mxu0
        %v2903 = vadd.f32 0.0, %v2902
        %v2904 = vpop.f32.mrb[0].mxu0
        %v2905 = vpop.f32.mrb[0].mxu0
        %v2906 = vadd.f32 0.0, %v2905
        %v2907 = vpop.f32.mrb[0].mxu0
        %2908 = vmatprep.mubr.bf16.mxu0 %v2639
        %2909 = vmatmul.mubr.bf16.gmra.mrb[0].mxu0 %v2638
        %v2910 = vpop.f32.mrb[0].mxu0
        %v2911 = vadd.f32 0.0, %v2910
        %v2912 = vpop.f32.mrb[0].mxu0
        %v2913 = vpop.f32.mrb[0].mxu0
        %v2914 = vadd.f32 0.0, %v2913
        %v2915 = vpop.f32.mrb[0].mxu0
        %2916 = vmatprep.mubr.bf16.mxu0 %v2641
        %2917 = vmatmul.mubr.bf16.gmra.mrb[0].mxu0 %v2640
        %v2918 = vpop.f32.mrb[0].mxu0
        %v2919 = vadd.f32 0.0, %v2918
        %v2920 = vpop.f32.mrb[0].mxu0
        %v2921 = vpop.f32.mrb[0].mxu0
        %v2922 = vadd.f32 0.0, %v2921
        %v2923 = vpop.f32.mrb[0].mxu0
        %2924 = vmatprep.mubr.bf16.mxu0 %v2643
        %2925 = vmatmul.mubr.bf16.gmra.mrb[0].mxu0 %v2642
        %v2926 = vpop.f32.mrb[0].mxu0
        %v2927 = vadd.f32 0.0, %v2926
        %v2928 = vpop.f32.mrb[0].mxu0
        %v2929 = vpop.f32.mrb[0].mxu0
        %v2930 = vadd.f32 0.0, %v2929
        %v2931 = vpop.f32.mrb[0].mxu0
        %2932 = vdwg.mxu0
        %v2933 = vld [vmem:[%s2] sm:$0x1]
        %v2935 = vlaneseq
        %v2936 = vshrl.u32 %v2935, 7
        %v2937 = vsub.s32 0, %v2936
        %v2938 = vrot.slane %v2933, %v2937
        %v2940 = vmul.f32 %v2807, %v2938
        %v2941 = vmul.f32 %v2810, %v2938
        %v2942 = vmul.f32 %v2815, %v2938
        %v2943 = vmul.f32 %v2818, %v2938
        %v2944 = vmul.f32 %v2823, %v2938
        %v2945 = vmul.f32 %v2826, %v2938
        %v2946 = vmul.f32 %v2831, %v2938
        %v2947 = vmul.f32 %v2834, %v2938
        %v2948 = vmul.f32 %v2839, %v2938
        %v2949 = vmul.f32 %v2842, %v2938
        %v2950 = vmul.f32 %v2847, %v2938
        %v2951 = vmul.f32 %v2850, %v2938
        %v2952 = vmul.f32 %v2855, %v2938
        %v2953 = vmul.f32 %v2858, %v2938
        %v2954 = vmul.f32 %v2863, %v2938
        %v2955 = vmul.f32 %v2866, %v2938
        %v2956 = vmul.f32 %v2871, %v2938
        %v2957 = vmul.f32 %v2874, %v2938
        %v2958 = vmul.f32 %v2879, %v2938
        %v2959 = vmul.f32 %v2882, %v2938
        %v2960 = vmul.f32 %v2887, %v2938
        %v2961 = vmul.f32 %v2890, %v2938
        %v2962 = vmul.f32 %v2895, %v2938
        %v2963 = vmul.f32 %v2898, %v2938
        %v2964 = vmul.f32 %v2903, %v2938
        %v2965 = vmul.f32 %v2906, %v2938
        %v2966 = vmul.f32 %v2911, %v2938
        %v2967 = vmul.f32 %v2914, %v2938
        %v2968 = vmul.f32 %v2919, %v2938
        %v2969 = vmul.f32 %v2922, %v2938
        %v2970 = vmul.f32 %v2927, %v2938
        %v2971 = vmul.f32 %v2930, %v2938
        %v2972 = vld [vmem:[%s3] sm:$0x1]
        %v2974 = vlaneseq
        %v2975 = vshrl.u32 %v2974, 7
        %v2976 = vsub.s32 0, %v2975
        %v2977 = vrot.slane %v2972, %v2976
        %v2979 = vadd.f32 %v2940, %v2977
        %v2980 = vadd.f32 %v2941, %v2977
        %v2981 = vadd.f32 %v2942, %v2977
        %v2982 = vadd.f32 %v2943, %v2977
        %v2983 = vadd.f32 %v2944, %v2977
        %v2984 = vadd.f32 %v2945, %v2977
        %v2985 = vadd.f32 %v2946, %v2977
        %v2986 = vadd.f32 %v2947, %v2977
        %v2987 = vadd.f32 %v2948, %v2977
        %v2988 = vadd.f32 %v2949, %v2977
        %v2989 = vadd.f32 %v2950, %v2977
        %v2990 = vadd.f32 %v2951, %v2977
        %v2991 = vadd.f32 %v2952, %v2977
        %v2992 = vadd.f32 %v2953, %v2977
        %v2993 = vadd.f32 %v2954, %v2977
        %v2994 = vadd.f32 %v2955, %v2977
        %v2995 = vadd.f32 %v2956, %v2977
        %v2996 = vadd.f32 %v2957, %v2977
        %v2997 = vadd.f32 %v2958, %v2977
        %v2998 = vadd.f32 %v2959, %v2977
        %v2999 = vadd.f32 %v2960, %v2977
        %v3000 = vadd.f32 %v2961, %v2977
        %v3001 = vadd.f32 %v2962, %v2977
        %v3002 = vadd.f32 %v2963, %v2977
        %v3003 = vadd.f32 %v2964, %v2977
        %v3004 = vadd.f32 %v2965, %v2977
        %v3005 = vadd.f32 %v2966, %v2977
        %v3006 = vadd.f32 %v2967, %v2977
        %v3007 = vadd.f32 %v2968, %v2977
        %v3008 = vadd.f32 %v2969, %v2977
        %v3009 = vadd.f32 %v2970, %v2977
        %v3010 = vadd.f32 %v2971, %v2977
        %v3011 = vmax.f32 %v2979, 0.0
        %v3012 = vmax.f32 %v2980, 0.0
        %v3013 = vmax.f32 %v2981, 0.0
        %v3014 = vmax.f32 %v2982, 0.0
        %v3015 = vmax.f32 %v2983, 0.0
        %v3016 = vmax.f32 %v2984, 0.0
        %v3017 = vmax.f32 %v2985, 0.0
        %v3018 = vmax.f32 %v2986, 0.0
        %v3019 = vmax.f32 %v2987, 0.0
        %v3020 = vmax.f32 %v2988, 0.0
        %v3021 = vmax.f32 %v2989, 0.0
        %v3022 = vmax.f32 %v2990, 0.0
        %v3023 = vmax.f32 %v2991, 0.0
        %v3024 = vmax.f32 %v2992, 0.0
        %v3025 = vmax.f32 %v2993, 0.0
        %v3026 = vmax.f32 %v2994, 0.0
        %v3027 = vmax.f32 %v2995, 0.0
        %v3028 = vmax.f32 %v2996, 0.0
        %v3029 = vmax.f32 %v2997, 0.0
        %v3030 = vmax.f32 %v2998, 0.0
        %v3031 = vmax.f32 %v2999, 0.0
        %v3032 = vmax.f32 %v3000, 0.0
        %v3033 = vmax.f32 %v3001, 0.0
        %v3034 = vmax.f32 %v3002, 0.0
        %v3035 = vmax.f32 %v3003, 0.0
        %v3036 = vmax.f32 %v3004, 0.0
        %v3037 = vmax.f32 %v3005, 0.0
        %v3038 = vmax.f32 %v3006, 0.0
        %v3039 = vmax.f32 %v3007, 0.0
        %v3040 = vmax.f32 %v3008, 0.0
        %v3041 = vmax.f32 %v3009, 0.0
        %v3042 = vmax.f32 %v3010, 0.0
        %v3043 = vpack.c.bf16 %v3011, %v3011
        %v3044 = vpack.c.bf16 %v3012, %v3012
        %v3045 = vpack.c.bf16 %v3013, %v3013
        %v3046 = vpack.c.bf16 %v3014, %v3014
        %v3047 = vpack.c.bf16 %v3015, %v3015
        %v3048 = vpack.c.bf16 %v3016, %v3016
        %v3049 = vpack.c.bf16 %v3017, %v3017
        %v3050 = vpack.c.bf16 %v3018, %v3018
        %v3051 = vpack.c.bf16 %v3019, %v3019
        %v3052 = vpack.c.bf16 %v3020, %v3020
        %v3053 = vpack.c.bf16 %v3021, %v3021
        %v3054 = vpack.c.bf16 %v3022, %v3022
        %v3055 = vpack.c.bf16 %v3023, %v3023
        %v3056 = vpack.c.bf16 %v3024, %v3024
        %v3057 = vpack.c.bf16 %v3025, %v3025
        %v3058 = vpack.c.bf16 %v3026, %v3026
        %v3059 = vpack.c.bf16 %v3027, %v3027
        %v3060 = vpack.c.bf16 %v3028, %v3028
        %v3061 = vpack.c.bf16 %v3029, %v3029
        %v3062 = vpack.c.bf16 %v3030, %v3030
        %v3063 = vpack.c.bf16 %v3031, %v3031
        %v3064 = vpack.c.bf16 %v3032, %v3032
        %v3065 = vpack.c.bf16 %v3033, %v3033
        %v3066 = vpack.c.bf16 %v3034, %v3034
        %v3067 = vpack.c.bf16 %v3035, %v3035
        %v3068 = vpack.c.bf16 %v3036, %v3036
        %v3069 = vpack.c.bf16 %v3037, %v3037
        %v3070 = vpack.c.bf16 %v3038, %v3038
        %v3071 = vpack.c.bf16 %v3039, %v3039
        %v3072 = vpack.c.bf16 %v3040, %v3040
        %v3073 = vpack.c.bf16 %v3041, %v3041
        %v3074 = vpack.c.bf16 %v3042, %v3042
        %v3107 = vunpack.c.l.b16 %v3043
        %v3108 = vunpack.c.l.b16 %v3044
        %v3109 = vunpack.c.l.b16 %v3045
        %v3110 = vunpack.c.l.b16 %v3046
        %v3111 = vunpack.c.l.b16 %v3047
        %v3112 = vunpack.c.l.b16 %v3048
        %v3113 = vunpack.c.l.b16 %v3049
        %v3114 = vunpack.c.l.b16 %v3050
        %v3115 = vunpack.c.l.b16 %v3051
        %v3116 = vunpack.c.l.b16 %v3052
        %v3117 = vunpack.c.l.b16 %v3053
        %v3118 = vunpack.c.l.b16 %v3054
        %v3119 = vunpack.c.l.b16 %v3055
        %v3120 = vunpack.c.l.b16 %v3056
        %v3121 = vunpack.c.l.b16 %v3057
        %v3122 = vunpack.c.l.b16 %v3058
        %v3123 = vunpack.c.l.b16 %v3059
        %v3124 = vunpack.c.l.b16 %v3060
        %v3125 = vunpack.c.l.b16 %v3061
        %v3126 = vunpack.c.l.b16 %v3062
        %v3127 = vunpack.c.l.b16 %v3063
        %v3128 = vunpack.c.l.b16 %v3064
        %v3129 = vunpack.c.l.b16 %v3065
        %v3130 = vunpack.c.l.b16 %v3066
        %v3131 = vunpack.c.l.b16 %v3067
        %v3132 = vunpack.c.l.b16 %v3068
        %v3133 = vunpack.c.l.b16 %v3069
        %v3134 = vunpack.c.l.b16 %v3070
        %v3135 = vunpack.c.l.b16 %v3071
        %v3136 = vunpack.c.l.b16 %v3072
        %v3137 = vunpack.c.l.b16 %v3073
        %v3138 = vunpack.c.l.b16 %v3074
        %v3139 = vpack.c.b16 %v3107, %v3107
        %v3140 = vpack.c.b16 %v3108, %v3108
        %v3141 = vpack.c.b16 %v3109, %v3109
        %v3142 = vpack.c.b16 %v3110, %v3110
        %v3143 = vpack.c.b16 %v3111, %v3111
        %v3144 = vpack.c.b16 %v3112, %v3112
        %v3145 = vpack.c.b16 %v3113, %v3113
        %v3146 = vpack.c.b16 %v3114, %v3114
        %v3147 = vpack.c.b16 %v3115, %v3115
        %v3148 = vpack.c.b16 %v3116, %v3116
        %v3149 = vpack.c.b16 %v3117, %v3117
        %v3150 = vpack.c.b16 %v3118, %v3118
        %v3151 = vpack.c.b16 %v3119, %v3119
        %v3152 = vpack.c.b16 %v3120, %v3120
        %v3153 = vpack.c.b16 %v3121, %v3121
        %v3154 = vpack.c.b16 %v3122, %v3122
        %v3155 = vpack.c.b16 %v3123, %v3123
        %v3156 = vpack.c.b16 %v3124, %v3124
        %v3157 = vpack.c.b16 %v3125, %v3125
        %v3158 = vpack.c.b16 %v3126, %v3126
        %v3159 = vpack.c.b16 %v3127, %v3127
        %v3160 = vpack.c.b16 %v3128, %v3128
        %v3161 = vpack.c.b16 %v3129, %v3129
        %v3162 = vpack.c.b16 %v3130, %v3130
        %v3163 = vpack.c.b16 %v3131, %v3131
        %v3164 = vpack.c.b16 %v3132, %v3132
        %v3165 = vpack.c.b16 %v3133, %v3133
        %v3166 = vpack.c.b16 %v3134, %v3134
        %v3167 = vpack.c.b16 %v3135, %v3135
        %v3168 = vpack.c.b16 %v3136, %v3136
        %v3169 = vpack.c.b16 %v3137, %v3137
        %v3170 = vpack.c.b16 %v3138, %v3138
        %v3172 = vshrl.u32 %v3139, 16
        %v3174 = vrot.slane %v3172, 7
        %v3175 = vshll.u32 %v3139, 16
        %v3177 = vor.u32 %v3174, %v3175
        %v3178 = vrot.slane %v3174, 4
        %v3180 = vshrl.u32 %v3140, 16
        %v3182 = vrot.slane %v3180, 7
        %v3183 = vshll.u32 %v3140, 16
        %v3185 = vor.u32 %v3182, %v3183
        %v3186 = vrot.slane %v3182, 4
        %v3188 = vshrl.u32 %v3141, 16
        %v3190 = vrot.slane %v3188, 7
        %v3191 = vshll.u32 %v3141, 16
        %v3193 = vor.u32 %v3190, %v3191
        %v3194 = vrot.slane %v3190, 4
        %v3196 = vshrl.u32 %v3142, 16
        %v3198 = vrot.slane %v3196, 7
        %v3199 = vshll.u32 %v3142, 16
        %v3201 = vor.u32 %v3198, %v3199
        %v3202 = vrot.slane %v3198, 4
        %v3204 = vshrl.u32 %v3143, 16
        %v3206 = vrot.slane %v3204, 7
        %v3207 = vshll.u32 %v3143, 16
        %v3209 = vor.u32 %v3206, %v3207
        %v3210 = vrot.slane %v3206, 4
        %v3212 = vshrl.u32 %v3144, 16
        %v3214 = vrot.slane %v3212, 7
        %v3215 = vshll.u32 %v3144, 16
        %v3217 = vor.u32 %v3214, %v3215
        %v3218 = vrot.slane %v3214, 4
        %v3220 = vshrl.u32 %v3145, 16
        %v3222 = vrot.slane %v3220, 7
        %v3223 = vshll.u32 %v3145, 16
        %v3225 = vor.u32 %v3222, %v3223
        %v3226 = vrot.slane %v3222, 4
        %v3228 = vshrl.u32 %v3146, 16
        %v3230 = vrot.slane %v3228, 7
        %v3231 = vshll.u32 %v3146, 16
        %v3233 = vor.u32 %v3230, %v3231
        %v3234 = vrot.slane %v3230, 4
        %v3236 = vshrl.u32 %v3147, 16
        %v3238 = vrot.slane %v3236, 7
        %v3239 = vshll.u32 %v3147, 16
        %v3241 = vor.u32 %v3238, %v3239
        %v3242 = vrot.slane %v3238, 4
        %v3244 = vshrl.u32 %v3148, 16
        %v3246 = vrot.slane %v3244, 7
        %v3247 = vshll.u32 %v3148, 16
        %v3249 = vor.u32 %v3246, %v3247
        %v3250 = vrot.slane %v3246, 4
        %v3252 = vshrl.u32 %v3149, 16
        %v3254 = vrot.slane %v3252, 7
        %v3255 = vshll.u32 %v3149, 16
        %v3257 = vor.u32 %v3254, %v3255
        %v3258 = vrot.slane %v3254, 4
        %v3260 = vshrl.u32 %v3150, 16
        %v3262 = vrot.slane %v3260, 7
        %v3263 = vshll.u32 %v3150, 16
        %v3265 = vor.u32 %v3262, %v3263
        %v3266 = vrot.slane %v3262, 4
        %v3268 = vshrl.u32 %v3151, 16
        %v3270 = vrot.slane %v3268, 7
        %v3271 = vshll.u32 %v3151, 16
        %v3273 = vor.u32 %v3270, %v3271
        %v3274 = vrot.slane %v3270, 4
        %v3276 = vshrl.u32 %v3152, 16
        %v3278 = vrot.slane %v3276, 7
        %v3279 = vshll.u32 %v3152, 16
        %v3281 = vor.u32 %v3278, %v3279
        %v3282 = vrot.slane %v3278, 4
        %v3284 = vshrl.u32 %v3153, 16
        %v3286 = vrot.slane %v3284, 7
        %v3287 = vshll.u32 %v3153, 16
        %v3289 = vor.u32 %v3286, %v3287
        %v3290 = vrot.slane %v3286, 4
        %v3292 = vshrl.u32 %v3154, 16
        %v3294 = vrot.slane %v3292, 7
        %v3295 = vshll.u32 %v3154, 16
        %v3297 = vor.u32 %v3294, %v3295
        %v3298 = vrot.slane %v3294, 4
        %v3300 = vshrl.u32 %v3155, 16
        %v3302 = vrot.slane %v3300, 7
        %v3303 = vshll.u32 %v3155, 16
        %v3305 = vor.u32 %v3302, %v3303
        %v3306 = vrot.slane %v3302, 4
        %v3308 = vshrl.u32 %v3156, 16
        %v3310 = vrot.slane %v3308, 7
        %v3311 = vshll.u32 %v3156, 16
        %v3313 = vor.u32 %v3310, %v3311
        %v3314 = vrot.slane %v3310, 4
        %v3316 = vshrl.u32 %v3157, 16
        %v3318 = vrot.slane %v3316, 7
        %v3319 = vshll.u32 %v3157, 16
        %v3321 = vor.u32 %v3318, %v3319
        %v3322 = vrot.slane %v3318, 4
        %v3324 = vshrl.u32 %v3158, 16
        %v3326 = vrot.slane %v3324, 7
        %v3327 = vshll.u32 %v3158, 16
        %v3329 = vor.u32 %v3326, %v3327
        %v3330 = vrot.slane %v3326, 4
        %v3332 = vshrl.u32 %v3159, 16
        %v3334 = vrot.slane %v3332, 7
        %v3335 = vshll.u32 %v3159, 16
        %v3337 = vor.u32 %v3334, %v3335
        %v3338 = vrot.slane %v3334, 4
        %v3340 = vshrl.u32 %v3160, 16
        %v3342 = vrot.slane %v3340, 7
        %v3343 = vshll.u32 %v3160, 16
        %v3345 = vor.u32 %v3342, %v3343
        %v3346 = vrot.slane %v3342, 4
        %v3348 = vshrl.u32 %v3161, 16
        %v3350 = vrot.slane %v3348, 7
        %v3351 = vshll.u32 %v3161, 16
        %v3353 = vor.u32 %v3350, %v3351
        %v3354 = vrot.slane %v3350, 4
        %v3356 = vshrl.u32 %v3162, 16
        %v3358 = vrot.slane %v3356, 7
        %v3359 = vshll.u32 %v3162, 16
        %v3361 = vor.u32 %v3358, %v3359
        %v3362 = vrot.slane %v3358, 4
        %v3364 = vshrl.u32 %v3163, 16
        %v3366 = vrot.slane %v3364, 7
        %v3367 = vshll.u32 %v3163, 16
        %v3369 = vor.u32 %v3366, %v3367
        %v3370 = vrot.slane %v3366, 4
        %v3372 = vshrl.u32 %v3164, 16
        %v3374 = vrot.slane %v3372, 7
        %v3375 = vshll.u32 %v3164, 16
        %v3377 = vor.u32 %v3374, %v3375
        %v3378 = vrot.slane %v3374, 4
        %v3380 = vshrl.u32 %v3165, 16
        %v3382 = vrot.slane %v3380, 7
        %v3383 = vshll.u32 %v3165, 16
        %v3385 = vor.u32 %v3382, %v3383
        %v3386 = vrot.slane %v3382, 4
        %v3388 = vshrl.u32 %v3166, 16
        %v3390 = vrot.slane %v3388, 7
        %v3391 = vshll.u32 %v3166, 16
        %v3393 = vor.u32 %v3390, %v3391
        %v3394 = vrot.slane %v3390, 4
        %v3396 = vshrl.u32 %v3167, 16
        %v3398 = vrot.slane %v3396, 7
        %v3399 = vshll.u32 %v3167, 16
        %v3401 = vor.u32 %v3398, %v3399
        %v3402 = vrot.slane %v3398, 4
        %v3404 = vshrl.u32 %v3168, 16
        %v3406 = vrot.slane %v3404, 7
        %v3407 = vshll.u32 %v3168, 16
        %v3409 = vor.u32 %v3406, %v3407
        %v3410 = vrot.slane %v3406, 4
        %v3412 = vshrl.u32 %v3169, 16
        %v3414 = vrot.slane %v3412, 7
        %v3415 = vshll.u32 %v3169, 16
        %v3417 = vor.u32 %v3414, %v3415
        %v3418 = vrot.slane %v3414, 4
        %v3420 = vshrl.u32 %v3170, 16
        %v3422 = vrot.slane %v3420, 7
        %v3423 = vshll.u32 %v3170, 16
        %v3425 = vor.u32 %v3422, %v3423
        %v3426 = vrot.slane %v3422, 4
        %s3491 = scalar_lea.vmem [#allocation3], 8
        %vm3492 = vcmask 257024
        %vm3493 = vmand %vm3492, %vm1041
        %v3494 = vld [vmem:[%s3491] sm:$0xf]
        %v3495 = vsel %vm3493, %v3177, %v3494
        %3496 = vst [vmem:[%s3491] sm:$0xf] %v3495
        %vm3497 = vcmask 253952
        %vm3498 = vmand %vm3497, %vm450
        %v3499 = vld [vmem:[%s3491 + $0x4] sm:$0x1]
        %v3500 = vsel %vm3498, %v3178, %v3499
        %3501 = vst [vmem:[%s3491 + $0x4] sm:$0x1] %v3500
        %v3502 = vld [vmem:[%s3491 + $0x8] sm:$0xf]
        %v3503 = vsel %vm3493, %v3185, %v3502
        %3504 = vst [vmem:[%s3491 + $0x8] sm:$0xf] %v3503
        %v3505 = vld [vmem:[%s3491 + $0xc] sm:$0x1]
        %v3506 = vsel %vm3498, %v3186, %v3505
        %3507 = vst [vmem:[%s3491 + $0xc] sm:$0x1] %v3506
        %v3508 = vld [vmem:[%s3491 + $0x10] sm:$0xf]
        %v3509 = vsel %vm3493, %v3193, %v3508
        %3510 = vst [vmem:[%s3491 + $0x10] sm:$0xf] %v3509
        %v3511 = vld [vmem:[%s3491 + $0x14] sm:$0x1]
        %v3512 = vsel %vm3498, %v3194, %v3511
        %3513 = vst [vmem:[%s3491 + $0x14] sm:$0x1] %v3512
        %v3514 = vld [vmem:[%s3491 + $0x18] sm:$0xf]
        %v3515 = vsel %vm3493, %v3201, %v3514
        %3516 = vst [vmem:[%s3491 + $0x18] sm:$0xf] %v3515
        %v3517 = vld [vmem:[%s3491 + $0x1c] sm:$0x1]
        %v3518 = vsel %vm3498, %v3202, %v3517
        %3519 = vst [vmem:[%s3491 + $0x1c] sm:$0x1] %v3518
        %v3520 = vld [vmem:[%s3491 + $0x20] sm:$0xf]
        %v3521 = vsel %vm3493, %v3209, %v3520
        %3522 = vst [vmem:[%s3491 + $0x20] sm:$0xf] %v3521
        %v3523 = vld [vmem:[%s3491 + $0x24] sm:$0x1]
        %v3524 = vsel %vm3498, %v3210, %v3523
        %3525 = vst [vmem:[%s3491 + $0x24] sm:$0x1] %v3524
        %v3526 = vld [vmem:[%s3491 + $0x28] sm:$0xf]
        %v3527 = vsel %vm3493, %v3217, %v3526
        %3528 = vst [vmem:[%s3491 + $0x28] sm:$0xf] %v3527
        %v3529 = vld [vmem:[%s3491 + $0x2c] sm:$0x1]
        %v3530 = vsel %vm3498, %v3218, %v3529
        %3531 = vst [vmem:[%s3491 + $0x2c] sm:$0x1] %v3530
        %v3532 = vld [vmem:[%s3491 + $0x30] sm:$0xf]
        %v3533 = vsel %vm3493, %v3225, %v3532
        %3534 = vst [vmem:[%s3491 + $0x30] sm:$0xf] %v3533
        %v3535 = vld [vmem:[%s3491 + $0x34] sm:$0x1]
        %v3536 = vsel %vm3498, %v3226, %v3535
        %3537 = vst [vmem:[%s3491 + $0x34] sm:$0x1] %v3536
        %v3538 = vld [vmem:[%s3491 + $0x38] sm:$0xf]
        %v3539 = vsel %vm3493, %v3233, %v3538
        %3540 = vst [vmem:[%s3491 + $0x38] sm:$0xf] %v3539
        %v3541 = vld [vmem:[%s3491 + $0x3c] sm:$0x1]
        %v3542 = vsel %vm3498, %v3234, %v3541
        %3543 = vst [vmem:[%s3491 + $0x3c] sm:$0x1] %v3542
        %v3544 = vld [vmem:[%s3491 + $0x50] sm:$0xf]
        %v3545 = vsel %vm3493, %v3241, %v3544
        %3546 = vst [vmem:[%s3491 + $0x50] sm:$0xf] %v3545
        %v3547 = vld [vmem:[%s3491 + $0x54] sm:$0x1]
        %v3548 = vsel %vm3498, %v3242, %v3547
        %3549 = vst [vmem:[%s3491 + $0x54] sm:$0x1] %v3548
        %v3550 = vld [vmem:[%s3491 + $0x58] sm:$0xf]
        %v3551 = vsel %vm3493, %v3249, %v3550
        %3552 = vst [vmem:[%s3491 + $0x58] sm:$0xf] %v3551
        %v3553 = vld [vmem:[%s3491 + $0x5c] sm:$0x1]
        %v3554 = vsel %vm3498, %v3250, %v3553
        %3555 = vst [vmem:[%s3491 + $0x5c] sm:$0x1] %v3554
        %v3556 = vld [vmem:[%s3491 + $0x60] sm:$0xf]
        %v3557 = vsel %vm3493, %v3257, %v3556
        %3558 = vst [vmem:[%s3491 + $0x60] sm:$0xf] %v3557
        %v3559 = vld [vmem:[%s3491 + $0x64] sm:$0x1]
        %v3560 = vsel %vm3498, %v3258, %v3559
        %3561 = vst [vmem:[%s3491 + $0x64] sm:$0x1] %v3560
        %v3562 = vld [vmem:[%s3491 + $0x68] sm:$0xf]
        %v3563 = vsel %vm3493, %v3265, %v3562
        %3564 = vst [vmem:[%s3491 + $0x68] sm:$0xf] %v3563
        %v3565 = vld [vmem:[%s3491 + $0x6c] sm:$0x1]
        %v3566 = vsel %vm3498, %v3266, %v3565
        %3567 = vst [vmem:[%s3491 + $0x6c] sm:$0x1] %v3566
        %v3568 = vld [vmem:[%s3491 + $0x70] sm:$0xf]
        %v3569 = vsel %vm3493, %v3273, %v3568
        %3570 = vst [vmem:[%s3491 + $0x70] sm:$0xf] %v3569
        %v3571 = vld [vmem:[%s3491 + $0x74] sm:$0x1]
        %v3572 = vsel %vm3498, %v3274, %v3571
        %3573 = vst [vmem:[%s3491 + $0x74] sm:$0x1] %v3572
        %v3574 = vld [vmem:[%s3491 + $0x78] sm:$0xf]
        %v3575 = vsel %vm3493, %v3281, %v3574
        %3576 = vst [vmem:[%s3491 + $0x78] sm:$0xf] %v3575
        %v3577 = vld [vmem:[%s3491 + $0x7c] sm:$0x1]
        %v3578 = vsel %vm3498, %v3282, %v3577
        %3579 = vst [vmem:[%s3491 + $0x7c] sm:$0x1] %v3578
        %v3580 = vld [vmem:[%s3491 + $0x80] sm:$0xf]
        %v3581 = vsel %vm3493, %v3289, %v3580
        %3582 = vst [vmem:[%s3491 + $0x80] sm:$0xf] %v3581
        %v3583 = vld [vmem:[%s3491 + $0x84] sm:$0x1]
        %v3584 = vsel %vm3498, %v3290, %v3583
        %3585 = vst [vmem:[%s3491 + $0x84] sm:$0x1] %v3584
        %v3586 = vld [vmem:[%s3491 + $0x88] sm:$0xf]
        %v3587 = vsel %vm3493, %v3297, %v3586
        %3588 = vst [vmem:[%s3491 + $0x88] sm:$0xf] %v3587
        %v3589 = vld [vmem:[%s3491 + $0x8c] sm:$0x1]
        %v3590 = vsel %vm3498, %v3298, %v3589
        %3591 = vst [vmem:[%s3491 + $0x8c] sm:$0x1] %v3590
        %v3592 = vld [vmem:[%s3491 + $0xa0] sm:$0xf]
        %v3593 = vsel %vm3493, %v3305, %v3592
        %3594 = vst [vmem:[%s3491 + $0xa0] sm:$0xf] %v3593
        %v3595 = vld [vmem:[%s3491 + $0xa4] sm:$0x1]
        %v3596 = vsel %vm3498, %v3306, %v3595
        %3597 = vst [vmem:[%s3491 + $0xa4] sm:$0x1] %v3596
        %v3598 = vld [vmem:[%s3491 + $0xa8] sm:$0xf]
        %v3599 = vsel %vm3493, %v3313, %v3598
        %3600 = vst [vmem:[%s3491 + $0xa8] sm:$0xf] %v3599
        %v3601 = vld [vmem:[%s3491 + $0xac] sm:$0x1]
        %v3602 = vsel %vm3498, %v3314, %v3601
        %3603 = vst [vmem:[%s3491 + $0xac] sm:$0x1] %v3602
        %v3604 = vld [vmem:[%s3491 + $0xb0] sm:$0xf]
        %v3605 = vsel %vm3493, %v3321, %v3604
        %3606 = vst [vmem:[%s3491 + $0xb0] sm:$0xf] %v3605
        %v3607 = vld [vmem:[%s3491 + $0xb4] sm:$0x1]
        %v3608 = vsel %vm3498, %v3322, %v3607
        %3609 = vst [vmem:[%s3491 + $0xb4] sm:$0x1] %v3608
        %v3610 = vld [vmem:[%s3491 + $0xb8] sm:$0xf]
        %v3611 = vsel %vm3493, %v3329, %v3610
        %3612 = vst [vmem:[%s3491 + $0xb8] sm:$0xf] %v3611
        %v3613 = vld [vmem:[%s3491 + $0xbc] sm:$0x1]
        %v3614 = vsel %vm3498, %v3330, %v3613
        %3615 = vst [vmem:[%s3491 + $0xbc] sm:$0x1] %v3614
        %v3616 = vld [vmem:[%s3491 + $0xc0] sm:$0xf]
        %v3617 = vsel %vm3493, %v3337, %v3616
        %3618 = vst [vmem:[%s3491 + $0xc0] sm:$0xf] %v3617
        %v3619 = vld [vmem:[%s3491 + $0xc4] sm:$0x1]
        %v3620 = vsel %vm3498, %v3338, %v3619
        %3621 = vst [vmem:[%s3491 + $0xc4] sm:$0x1] %v3620
        %v3622 = vld [vmem:[%s3491 + $0xc8] sm:$0xf]
        %v3623 = vsel %vm3493, %v3345, %v3622
        %3624 = vst [vmem:[%s3491 + $0xc8] sm:$0xf] %v3623
        %v3625 = vld [vmem:[%s3491 + $0xcc] sm:$0x1]
        %v3626 = vsel %vm3498, %v3346, %v3625
        %3627 = vst [vmem:[%s3491 + $0xcc] sm:$0x1] %v3626
        %v3628 = vld [vmem:[%s3491 + $0xd0] sm:$0xf]
        %v3629 = vsel %vm3493, %v3353, %v3628
        %3630 = vst [vmem:[%s3491 + $0xd0] sm:$0xf] %v3629
        %v3631 = vld [vmem:[%s3491 + $0xd4] sm:$0x1]
        %v3632 = vsel %vm3498, %v3354, %v3631
        %3633 = vst [vmem:[%s3491 + $0xd4] sm:$0x1] %v3632
        %v3634 = vld [vmem:[%s3491 + $0xd8] sm:$0xf]
        %v3635 = vsel %vm3493, %v3361, %v3634
        %3636 = vst [vmem:[%s3491 + $0xd8] sm:$0xf] %v3635
        %v3637 = vld [vmem:[%s3491 + $0xdc] sm:$0x1]
        %v3638 = vsel %vm3498, %v3362, %v3637
        %3639 = vst [vmem:[%s3491 + $0xdc] sm:$0x1] %v3638
        %v3640 = vld [vmem:[%s3491 + $0xf0] sm:$0xf]
        %v3641 = vsel %vm3493, %v3369, %v3640
        %3642 = vst [vmem:[%s3491 + $0xf0] sm:$0xf] %v3641
        %v3643 = vld [vmem:[%s3491 + $0xf4] sm:$0x1]
        %v3644 = vsel %vm3498, %v3370, %v3643
        %3645 = vst [vmem:[%s3491 + $0xf4] sm:$0x1] %v3644
        %v3646 = vld [vmem:[%s3491 + $0xf8] sm:$0xf]
        %v3647 = vsel %vm3493, %v3377, %v3646
        %3648 = vst [vmem:[%s3491 + $0xf8] sm:$0xf] %v3647
        %v3649 = vld [vmem:[%s3491 + $0xfc] sm:$0x1]
        %v3650 = vsel %vm3498, %v3378, %v3649
        %3651 = vst [vmem:[%s3491 + $0xfc] sm:$0x1] %v3650
        %v3652 = vld [vmem:[%s3491 + $0x100] sm:$0xf]
        %v3653 = vsel %vm3493, %v3385, %v3652
        %3654 = vst [vmem:[%s3491 + $0x100] sm:$0xf] %v3653
        %v3655 = vld [vmem:[%s3491 + $0x104] sm:$0x1]
        %v3656 = vsel %vm3498, %v3386, %v3655
        %3657 = vst [vmem:[%s3491 + $0x104] sm:$0x1] %v3656
        %v3658 = vld [vmem:[%s3491 + $0x108] sm:$0xf]
        %v3659 = vsel %vm3493, %v3393, %v3658
        %3660 = vst [vmem:[%s3491 + $0x108] sm:$0xf] %v3659
        %v3661 = vld [vmem:[%s3491 + $0x10c] sm:$0x1]
        %v3662 = vsel %vm3498, %v3394, %v3661
        %3663 = vst [vmem:[%s3491 + $0x10c] sm:$0x1] %v3662
        %v3664 = vld [vmem:[%s3491 + $0x110] sm:$0xf]
        %v3665 = vsel %vm3493, %v3401, %v3664
        %3666 = vst [vmem:[%s3491 + $0x110] sm:$0xf] %v3665
        %v3667 = vld [vmem:[%s3491 + $0x114] sm:$0x1]
        %v3668 = vsel %vm3498, %v3402, %v3667
        %3669 = vst [vmem:[%s3491 + $0x114] sm:$0x1] %v3668
        %v3670 = vld [vmem:[%s3491 + $0x118] sm:$0xf]
        %v3671 = vsel %vm3493, %v3409, %v3670
        %3672 = vst [vmem:[%s3491 + $0x118] sm:$0xf] %v3671
        %v3673 = vld [vmem:[%s3491 + $0x11c] sm:$0x1]
        %v3674 = vsel %vm3498, %v3410, %v3673
        %3675 = vst [vmem:[%s3491 + $0x11c] sm:$0x1] %v3674
        %v3676 = vld [vmem:[%s3491 + $0x120] sm:$0xf]
        %v3677 = vsel %vm3493, %v3417, %v3676
        %3678 = vst [vmem:[%s3491 + $0x120] sm:$0xf] %v3677
        %v3679 = vld [vmem:[%s3491 + $0x124] sm:$0x1]
        %v3680 = vsel %vm3498, %v3418, %v3679
        %3681 = vst [vmem:[%s3491 + $0x124] sm:$0x1] %v3680
        %v3682 = vld [vmem:[%s3491 + $0x128] sm:$0xf]
        %v3683 = vsel %vm3493, %v3425, %v3682
        %3684 = vst [vmem:[%s3491 + $0x128] sm:$0xf] %v3683
        %v3685 = vld [vmem:[%s3491 + $0x12c] sm:$0x1]
        %v3686 = vsel %vm3498, %v3426, %v3685
        %3687 = vst [vmem:[%s3491 + $0x12c] sm:$0x1] %v3686
        %v3688 = vld [vmem:[#allocation3] sm:$0xf]
        %v3689 = vld [vmem:[#allocation3 + $0x8] sm:$0xf]
        %v3690 = vld [vmem:[#allocation3 + $0x10] sm:$0xf]
        %v3691 = vld [vmem:[#allocation3 + $0x18] sm:$0xf]
        %v3692 = vld [vmem:[#allocation3 + $0x20] sm:$0xf]
        %v3693 = vld [vmem:[#allocation3 + $0x28] sm:$0xf]
        %v3694 = vld [vmem:[#allocation3 + $0x30] sm:$0xf]
        %v3695 = vld [vmem:[#allocation3 + $0x38] sm:$0xf]
        %v3696 = vld [vmem:[#allocation3 + $0x50] sm:$0xf]
        %v3697 = vld [vmem:[#allocation3 + $0x58] sm:$0xf]
        %v3698 = vld [vmem:[#allocation3 + $0x60] sm:$0xf]
        %v3699 = vld [vmem:[#allocation3 + $0x68] sm:$0xf]
        %v3700 = vld [vmem:[#allocation3 + $0x70] sm:$0xf]
        %v3701 = vld [vmem:[#allocation3 + $0x78] sm:$0xf]
        %v3702 = vld [vmem:[#allocation3 + $0x80] sm:$0xf]
        %v3703 = vld [vmem:[#allocation3 + $0x88] sm:$0xf]
        %v3704 = vld [vmem:[#allocation3 + $0xa0] sm:$0xf]
        %v3705 = vld [vmem:[#allocation3 + $0xa8] sm:$0xf]
        %v3706 = vld [vmem:[#allocation3 + $0xb0] sm:$0xf]
        %v3707 = vld [vmem:[#allocation3 + $0xb8] sm:$0xf]
        %v3708 = vld [vmem:[#allocation3 + $0xc0] sm:$0xf]
        %v3709 = vld [vmem:[#allocation3 + $0xc8] sm:$0xf]
        %v3710 = vld [vmem:[#allocation3 + $0xd0] sm:$0xf]
        %v3711 = vld [vmem:[#allocation3 + $0xd8] sm:$0xf]
        %v3712 = vld [vmem:[#allocation3 + $0xf0] sm:$0xf]
        %v3713 = vld [vmem:[#allocation3 + $0xf8] sm:$0xf]
        %v3714 = vld [vmem:[#allocation3 + $0x100] sm:$0xf]
        %v3715 = vld [vmem:[#allocation3 + $0x108] sm:$0xf]
        %v3716 = vld [vmem:[#allocation3 + $0x110] sm:$0xf]
        %v3717 = vld [vmem:[#allocation3 + $0x118] sm:$0xf]
        %v3718 = vld [vmem:[#allocation3 + $0x120] sm:$0xf]
        %v3719 = vld [vmem:[#allocation3 + $0x128] sm:$0xf]
        %v3720 = vld [vmem:[#allocation3 + $0x4] sm:$0x1]
        %v3721 = vld [vmem:[#allocation3 + $0xc] sm:$0x1]
        %v3722 = vld [vmem:[#allocation3 + $0x14] sm:$0x1]
        %v3723 = vld [vmem:[#allocation3 + $0x1c] sm:$0x1]
        %v3724 = vld [vmem:[#allocation3 + $0x24] sm:$0x1]
        %v3725 = vld [vmem:[#allocation3 + $0x2c] sm:$0x1]
        %v3726 = vld [vmem:[#allocation3 + $0x34] sm:$0x1]
        %v3727 = vld [vmem:[#allocation3 + $0x3c] sm:$0x1]
        %v3728 = vld [vmem:[#allocation3 + $0x54] sm:$0x1]
        %v3729 = vld [vmem:[#allocation3 + $0x5c] sm:$0x1]
        %v3730 = vld [vmem:[#allocation3 + $0x64] sm:$0x1]
        %v3731 = vld [vmem:[#allocation3 + $0x6c] sm:$0x1]
        %v3732 = vld [vmem:[#allocation3 + $0x74] sm:$0x1]
        %v3733 = vld [vmem:[#allocation3 + $0x7c] sm:$0x1]
        %v3734 = vld [vmem:[#allocation3 + $0x84] sm:$0x1]
        %v3735 = vld [vmem:[#allocation3 + $0x8c] sm:$0x1]
        %v3736 = vld [vmem:[#allocation3 + $0xa4] sm:$0x1]
        %v3737 = vld [vmem:[#allocation3 + $0xac] sm:$0x1]
        %v3738 = vld [vmem:[#allocation3 + $0xb4] sm:$0x1]
        %v3739 = vld [vmem:[#allocation3 + $0xbc] sm:$0x1]
        %v3740 = vld [vmem:[#allocation3 + $0xc4] sm:$0x1]
        %v3741 = vld [vmem:[#allocation3 + $0xcc] sm:$0x1]
        %v3742 = vld [vmem:[#allocation3 + $0xd4] sm:$0x1]
        %v3743 = vld [vmem:[#allocation3 + $0xdc] sm:$0x1]
        %v3744 = vld [vmem:[#allocation3 + $0xf4] sm:$0x1]
        %v3745 = vld [vmem:[#allocation3 + $0xfc] sm:$0x1]
        %v3746 = vld [vmem:[#allocation3 + $0x104] sm:$0x1]
        %v3747 = vld [vmem:[#allocation3 + $0x10c] sm:$0x1]
        %v3748 = vld [vmem:[#allocation3 + $0x114] sm:$0x1]
        %v3749 = vld [vmem:[#allocation3 + $0x11c] sm:$0x1]
        %v3750 = vld [vmem:[#allocation3 + $0x124] sm:$0x1]
        %v3751 = vld [vmem:[#allocation3 + $0x12c] sm:$0x1]
        %v3752 = vld [vmem:[#allocation3] sm:$0xe]
        %v3753 = vld [vmem:[#allocation3 + $0x8] sm:$0xe]
        %v3754 = vld [vmem:[#allocation3 + $0x10] sm:$0xe]
        %v3755 = vld [vmem:[#allocation3 + $0x18] sm:$0xe]
        %v3756 = vld [vmem:[#allocation3 + $0x20] sm:$0xe]
        %v3757 = vld [vmem:[#allocation3 + $0x28] sm:$0xe]
        %v3758 = vld [vmem:[#allocation3 + $0x30] sm:$0xe]
        %v3759 = vld [vmem:[#allocation3 + $0x38] sm:$0xe]
        %v3760 = vld [vmem:[#allocation3 + $0x50] sm:$0xe]
        %v3761 = vld [vmem:[#allocation3 + $0x58] sm:$0xe]
        %v3762 = vld [vmem:[#allocation3 + $0x60] sm:$0xe]
        %v3763 = vld [vmem:[#allocation3 + $0x68] sm:$0xe]
        %v3764 = vld [vmem:[#allocation3 + $0x70] sm:$0xe]
        %v3765 = vld [vmem:[#allocation3 + $0x78] sm:$0xe]
        %v3766 = vld [vmem:[#allocation3 + $0x80] sm:$0xe]
        %v3767 = vld [vmem:[#allocation3 + $0x88] sm:$0xe]
        %v3768 = vld [vmem:[#allocation3 + $0xa0] sm:$0xe]
        %v3769 = vld [vmem:[#allocation3 + $0xa8] sm:$0xe]
        %v3770 = vld [vmem:[#allocation3 + $0xb0] sm:$0xe]
        %v3771 = vld [vmem:[#allocation3 + $0xb8] sm:$0xe]
        %v3772 = vld [vmem:[#allocation3 + $0xc0] sm:$0xe]
        %v3773 = vld [vmem:[#allocation3 + $0xc8] sm:$0xe]
        %v3774 = vld [vmem:[#allocation3 + $0xd0] sm:$0xe]
        %v3775 = vld [vmem:[#allocation3 + $0xd8] sm:$0xe]
        %v3776 = vld [vmem:[#allocation3 + $0xf0] sm:$0xe]
        %v3777 = vld [vmem:[#allocation3 + $0xf8] sm:$0xe]
        %v3778 = vld [vmem:[#allocation3 + $0x100] sm:$0xe]
        %v3779 = vld [vmem:[#allocation3 + $0x108] sm:$0xe]
        %v3780 = vld [vmem:[#allocation3 + $0x110] sm:$0xe]
        %v3781 = vld [vmem:[#allocation3 + $0x118] sm:$0xe]
        %v3782 = vld [vmem:[#allocation3 + $0x120] sm:$0xe]
        %v3783 = vld [vmem:[#allocation3 + $0x128] sm:$0xe]
        %v3784 = vld [vmem:[%s3491] sm:$0xf]
        %v3785 = vld [vmem:[%s3491 + $0x8] sm:$0xf]
        %v3786 = vld [vmem:[%s3491 + $0x10] sm:$0xf]
        %v3787 = vld [vmem:[%s3491 + $0x18] sm:$0xf]
        %v3788 = vld [vmem:[%s3491 + $0x20] sm:$0xf]
        %v3789 = vld [vmem:[%s3491 + $0x28] sm:$0xf]
        %v3790 = vld [vmem:[%s3491 + $0x30] sm:$0xf]
        %v3791 = vld [vmem:[%s3491 + $0x38] sm:$0xf]
        %v3792 = vld [vmem:[%s3491 + $0x50] sm:$0xf]
        %v3793 = vld [vmem:[%s3491 + $0x58] sm:$0xf]
        %v3794 = vld [vmem:[%s3491 + $0x60] sm:$0xf]
        %v3795 = vld [vmem:[%s3491 + $0x68] sm:$0xf]
        %v3796 = vld [vmem:[%s3491 + $0x70] sm:$0xf]
        %v3797 = vld [vmem:[%s3491 + $0x78] sm:$0xf]
        %v3798 = vld [vmem:[%s3491 + $0x80] sm:$0xf]
        %v3799 = vld [vmem:[%s3491 + $0x88] sm:$0xf]
        %v3800 = vld [vmem:[%s3491 + $0xa0] sm:$0xf]
        %v3801 = vld [vmem:[%s3491 + $0xa8] sm:$0xf]
        %v3802 = vld [vmem:[%s3491 + $0xb0] sm:$0xf]
        %v3803 = vld [vmem:[%s3491 + $0xb8] sm:$0xf]
        %v3804 = vld [vmem:[%s3491 + $0xc0] sm:$0xf]
        %v3805 = vld [vmem:[%s3491 + $0xc8] sm:$0xf]
        %v3806 = vld [vmem:[%s3491 + $0xd0] sm:$0xf]
        %v3807 = vld [vmem:[%s3491 + $0xd8] sm:$0xf]
        %v3808 = vld [vmem:[%s3491 + $0xf0] sm:$0xf]
        %v3809 = vld [vmem:[%s3491 + $0xf8] sm:$0xf]
        %v3810 = vld [vmem:[%s3491 + $0x100] sm:$0xf]
        %v3811 = vld [vmem:[%s3491 + $0x108] sm:$0xf]
        %v3812 = vld [vmem:[%s3491 + $0x110] sm:$0xf]
        %v3813 = vld [vmem:[%s3491 + $0x118] sm:$0xf]
        %v3814 = vld [vmem:[%s3491 + $0x120] sm:$0xf]
        %v3815 = vld [vmem:[%s3491 + $0x128] sm:$0xf]
        %v3816 = vld [vmem:[%s3491 + $0x4] sm:$0x1]
        %v3817 = vld [vmem:[%s3491 + $0xc] sm:$0x1]
        %v3818 = vld [vmem:[%s3491 + $0x14] sm:$0x1]
        %v3819 = vld [vmem:[%s3491 + $0x1c] sm:$0x1]
        %v3820 = vld [vmem:[%s3491 + $0x24] sm:$0x1]
        %v3821 = vld [vmem:[%s3491 + $0x2c] sm:$0x1]
        %v3822 = vld [vmem:[%s3491 + $0x34] sm:$0x1]
        %v3823 = vld [vmem:[%s3491 + $0x3c] sm:$0x1]
        %v3824 = vld [vmem:[%s3491 + $0x54] sm:$0x1]
        %v3825 = vld [vmem:[%s3491 + $0x5c] sm:$0x1]
        %v3826 = vld [vmem:[%s3491 + $0x64] sm:$0x1]
        %v3827 = vld [vmem:[%s3491 + $0x6c] sm:$0x1]
        %v3828 = vld [vmem:[%s3491 + $0x74] sm:$0x1]
        %v3829 = vld [vmem:[%s3491 + $0x7c] sm:$0x1]
        %v3830 = vld [vmem:[%s3491 + $0x84] sm:$0x1]
        %v3831 = vld [vmem:[%s3491 + $0x8c] sm:$0x1]
        %v3832 = vld [vmem:[%s3491 + $0xa4] sm:$0x1]
        %v3833 = vld [vmem:[%s3491 + $0xac] sm:$0x1]
        %v3834 = vld [vmem:[%s3491 + $0xb4] sm:$0x1]
        %v3835 = vld [vmem:[%s3491 + $0xbc] sm:$0x1]
        %v3836 = vld [vmem:[%s3491 + $0xc4] sm:$0x1]
        %v3837 = vld [vmem:[%s3491 + $0xcc] sm:$0x1]
        %v3838 = vld [vmem:[%s3491 + $0xd4] sm:$0x1]
        %v3839 = vld [vmem:[%s3491 + $0xdc] sm:$0x1]
        %v3840 = vld [vmem:[%s3491 + $0xf4] sm:$0x1]
        %v3841 = vld [vmem:[%s3491 + $0xfc] sm:$0x1]
        %v3842 = vld [vmem:[%s3491 + $0x104] sm:$0x1]
        %v3843 = vld [vmem:[%s3491 + $0x10c] sm:$0x1]
        %v3844 = vld [vmem:[%s3491 + $0x114] sm:$0x1]
        %v3845 = vld [vmem:[%s3491 + $0x11c] sm:$0x1]
        %v3846 = vld [vmem:[%s3491 + $0x124] sm:$0x1]
        %v3847 = vld [vmem:[%s3491 + $0x12c] sm:$0x1]
        %v3848 = vld [vmem:[%s3491] sm:$0xe]
        %v3849 = vld [vmem:[%s3491 + $0x8] sm:$0xe]
        %v3850 = vld [vmem:[%s3491 + $0x10] sm:$0xe]
        %v3851 = vld [vmem:[%s3491 + $0x18] sm:$0xe]
        %v3852 = vld [vmem:[%s3491 + $0x20] sm:$0xe]
        %v3853 = vld [vmem:[%s3491 + $0x28] sm:$0xe]
        %v3854 = vld [vmem:[%s3491 + $0x30] sm:$0xe]
        %v3855 = vld [vmem:[%s3491 + $0x38] sm:$0xe]
        %v3856 = vld [vmem:[%s3491 + $0x50] sm:$0xe]
        %v3857 = vld [vmem:[%s3491 + $0x58] sm:$0xe]
        %v3858 = vld [vmem:[%s3491 + $0x60] sm:$0xe]
        %v3859 = vld [vmem:[%s3491 + $0x68] sm:$0xe]
        %v3860 = vld [vmem:[%s3491 + $0x70] sm:$0xe]
        %v3861 = vld [vmem:[%s3491 + $0x78] sm:$0xe]
        %v3862 = vld [vmem:[%s3491 + $0x80] sm:$0xe]
        %v3863 = vld [vmem:[%s3491 + $0x88] sm:$0xe]
        %v3864 = vld [vmem:[%s3491 + $0xa0] sm:$0xe]
        %v3865 = vld [vmem:[%s3491 + $0xa8] sm:$0xe]
        %v3866 = vld [vmem:[%s3491 + $0xb0] sm:$0xe]
        %v3867 = vld [vmem:[%s3491 + $0xb8] sm:$0xe]
        %v3868 = vld [vmem:[%s3491 + $0xc0] sm:$0xe]
        %v3869 = vld [vmem:[%s3491 + $0xc8] sm:$0xe]
        %v3870 = vld [vmem:[%s3491 + $0xd0] sm:$0xe]
        %v3871 = vld [vmem:[%s3491 + $0xd8] sm:$0xe]
        %v3872 = vld [vmem:[%s3491 + $0xf0] sm:$0xe]
        %v3873 = vld [vmem:[%s3491 + $0xf8] sm:$0xe]
        %v3874 = vld [vmem:[%s3491 + $0x100] sm:$0xe]
        %v3875 = vld [vmem:[%s3491 + $0x108] sm:$0xe]
        %v3876 = vld [vmem:[%s3491 + $0x110] sm:$0xe]
        %v3877 = vld [vmem:[%s3491 + $0x118] sm:$0xe]
        %v3878 = vld [vmem:[%s3491 + $0x120] sm:$0xe]
        %v3879 = vld [vmem:[%s3491 + $0x128] sm:$0xe]
        %s3880 = scalar_lea.vmem [#allocation3], 16
        %v3881 = vld [vmem:[%s3880] sm:$0xf]
        %v3882 = vld [vmem:[%s3880 + $0x8] sm:$0xf]
        %v3883 = vld [vmem:[%s3880 + $0x10] sm:$0xf]
        %v3884 = vld [vmem:[%s3880 + $0x18] sm:$0xf]
        %v3885 = vld [vmem:[%s3880 + $0x20] sm:$0xf]
        %v3886 = vld [vmem:[%s3880 + $0x28] sm:$0xf]
        %v3887 = vld [vmem:[%s3880 + $0x30] sm:$0xf]
        %v3888 = vld [vmem:[%s3880 + $0x38] sm:$0xf]
        %v3889 = vld [vmem:[%s3880 + $0x50] sm:$0xf]
        %v3890 = vld [vmem:[%s3880 + $0x58] sm:$0xf]
        %v3891 = vld [vmem:[%s3880 + $0x60] sm:$0xf]
        %v3892 = vld [vmem:[%s3880 + $0x68] sm:$0xf]
        %v3893 = vld [vmem:[%s3880 + $0x70] sm:$0xf]
        %v3894 = vld [vmem:[%s3880 + $0x78] sm:$0xf]
        %v3895 = vld [vmem:[%s3880 + $0x80] sm:$0xf]
        %v3896 = vld [vmem:[%s3880 + $0x88] sm:$0xf]
        %v3897 = vld [vmem:[%s3880 + $0xa0] sm:$0xf]
        %v3898 = vld [vmem:[%s3880 + $0xa8] sm:$0xf]
        %v3899 = vld [vmem:[%s3880 + $0xb0] sm:$0xf]
        %v3900 = vld [vmem:[%s3880 + $0xb8] sm:$0xf]
        %v3901 = vld [vmem:[%s3880 + $0xc0] sm:$0xf]
        %v3902 = vld [vmem:[%s3880 + $0xc8] sm:$0xf]
        %v3903 = vld [vmem:[%s3880 + $0xd0] sm:$0xf]
        %v3904 = vld [vmem:[%s3880 + $0xd8] sm:$0xf]
        %v3905 = vld [vmem:[%s3880 + $0xf0] sm:$0xf]
        %v3906 = vld [vmem:[%s3880 + $0xf8] sm:$0xf]
        %v3907 = vld [vmem:[%s3880 + $0x100] sm:$0xf]
        %v3908 = vld [vmem:[%s3880 + $0x108] sm:$0xf]
        %v3909 = vld [vmem:[%s3880 + $0x110] sm:$0xf]
        %v3910 = vld [vmem:[%s3880 + $0x118] sm:$0xf]
        %v3911 = vld [vmem:[%s3880 + $0x120] sm:$0xf]
        %v3912 = vld [vmem:[%s3880 + $0x128] sm:$0xf]
        %v3913 = vld [vmem:[%s3880 + $0x4] sm:$0x1]
        %v3914 = vld [vmem:[%s3880 + $0xc] sm:$0x1]
        %v3915 = vld [vmem:[%s3880 + $0x14] sm:$0x1]
        %v3916 = vld [vmem:[%s3880 + $0x1c] sm:$0x1]
        %v3917 = vld [vmem:[%s3880 + $0x24] sm:$0x1]
        %v3918 = vld [vmem:[%s3880 + $0x2c] sm:$0x1]
        %v3919 = vld [vmem:[%s3880 + $0x34] sm:$0x1]
        %v3920 = vld [vmem:[%s3880 + $0x3c] sm:$0x1]
        %v3921 = vld [vmem:[%s3880 + $0x54] sm:$0x1]
        %v3922 = vld [vmem:[%s3880 + $0x5c] sm:$0x1]
        %v3923 = vld [vmem:[%s3880 + $0x64] sm:$0x1]
        %v3924 = vld [vmem:[%s3880 + $0x6c] sm:$0x1]
        %v3925 = vld [vmem:[%s3880 + $0x74] sm:$0x1]
        %v3926 = vld [vmem:[%s3880 + $0x7c] sm:$0x1]
        %v3927 = vld [vmem:[%s3880 + $0x84] sm:$0x1]
        %v3928 = vld [vmem:[%s3880 + $0x8c] sm:$0x1]
        %v3929 = vld [vmem:[%s3880 + $0xa4] sm:$0x1]
        %v3930 = vld [vmem:[%s3880 + $0xac] sm:$0x1]
        %v3931 = vld [vmem:[%s3880 + $0xb4] sm:$0x1]
        %v3932 = vld [vmem:[%s3880 + $0xbc] sm:$0x1]
        %v3933 = vld [vmem:[%s3880 + $0xc4] sm:$0x1]
        %v3934 = vld [vmem:[%s3880 + $0xcc] sm:$0x1]
        %v3935 = vld [vmem:[%s3880 + $0xd4] sm:$0x1]
        %v3936 = vld [vmem:[%s3880 + $0xdc] sm:$0x1]
        %v3937 = vld [vmem:[%s3880 + $0xf4] sm:$0x1]
        %v3938 = vld [vmem:[%s3880 + $0xfc] sm:$0x1]
        %v3939 = vld [vmem:[%s3880 + $0x104] sm:$0x1]
        %v3940 = vld [vmem:[%s3880 + $0x10c] sm:$0x1]
        %v3941 = vld [vmem:[%s3880 + $0x114] sm:$0x1]
        %v3942 = vld [vmem:[%s3880 + $0x11c] sm:$0x1]
        %v3943 = vld [vmem:[%s3880 + $0x124] sm:$0x1]
        %v3944 = vld [vmem:[%s3880 + $0x12c] sm:$0x1]
        %v3945 = vld [vmem:[%s3880] sm:$0xe]
        %v3946 = vld [vmem:[%s3880 + $0x8] sm:$0xe]
        %v3947 = vld [vmem:[%s3880 + $0x10] sm:$0xe]
        %v3948 = vld [vmem:[%s3880 + $0x18] sm:$0xe]
        %v3949 = vld [vmem:[%s3880 + $0x20] sm:$0xe]
        %v3950 = vld [vmem:[%s3880 + $0x28] sm:$0xe]
        %v3951 = vld [vmem:[%s3880 + $0x30] sm:$0xe]
        %v3952 = vld [vmem:[%s3880 + $0x38] sm:$0xe]
        %v3953 = vld [vmem:[%s3880 + $0x50] sm:$0xe]
        %v3954 = vld [vmem:[%s3880 + $0x58] sm:$0xe]
        %v3955 = vld [vmem:[%s3880 + $0x60] sm:$0xe]
        %v3956 = vld [vmem:[%s3880 + $0x68] sm:$0xe]
        %v3957 = vld [vmem:[%s3880 + $0x70] sm:$0xe]
        %v3958 = vld [vmem:[%s3880 + $0x78] sm:$0xe]
        %v3959 = vld [vmem:[%s3880 + $0x80] sm:$0xe]
        %v3960 = vld [vmem:[%s3880 + $0x88] sm:$0xe]
        %v3961 = vld [vmem:[%s3880 + $0xa0] sm:$0xe]
        %v3962 = vld [vmem:[%s3880 + $0xa8] sm:$0xe]
        %v3963 = vld [vmem:[%s3880 + $0xb0] sm:$0xe]
        %v3964 = vld [vmem:[%s3880 + $0xb8] sm:$0xe]
        %v3965 = vld [vmem:[%s3880 + $0xc0] sm:$0xe]
        %v3966 = vld [vmem:[%s3880 + $0xc8] sm:$0xe]
        %v3967 = vld [vmem:[%s3880 + $0xd0] sm:$0xe]
        %v3968 = vld [vmem:[%s3880 + $0xd8] sm:$0xe]
        %v3969 = vld [vmem:[%s3880 + $0xf0] sm:$0xe]
        %v3970 = vld [vmem:[%s3880 + $0xf8] sm:$0xe]
        %v3971 = vld [vmem:[%s3880 + $0x100] sm:$0xe]
        %v3972 = vld [vmem:[%s3880 + $0x108] sm:$0xe]
        %v3973 = vld [vmem:[%s3880 + $0x110] sm:$0xe]
        %v3974 = vld [vmem:[%s3880 + $0x118] sm:$0xe]
        %v3975 = vld [vmem:[%s3880 + $0x120] sm:$0xe]
        %v3976 = vld [vmem:[%s3880 + $0x128] sm:$0xe]
        %v4041 = vunpack.c.l.b16 %v3688
        %v4042 = vunpack.c.l.b16 %v3720
        %v4043 = vunpack.c.l.b16 %v3689
        %v4044 = vunpack.c.l.b16 %v3721
        %v4045 = vunpack.c.l.b16 %v3690
        %v4046 = vunpack.c.l.b16 %v3722
        %v4047 = vunpack.c.l.b16 %v3691
        %v4048 = vunpack.c.l.b16 %v3723
        %v4049 = vunpack.c.l.b16 %v3692
        %v4050 = vunpack.c.l.b16 %v3724
        %v4051 = vunpack.c.l.b16 %v3693
        %v4052 = vunpack.c.l.b16 %v3725
        %v4053 = vunpack.c.l.b16 %v3694
        %v4054 = vunpack.c.l.b16 %v3726
        %v4055 = vunpack.c.l.b16 %v3695
        %v4056 = vunpack.c.l.b16 %v3727
        %v4057 = vunpack.c.l.b16 %v3696
        %v4058 = vunpack.c.l.b16 %v3728
        %v4059 = vunpack.c.l.b16 %v3697
        %v4060 = vunpack.c.l.b16 %v3729
        %v4061 = vunpack.c.l.b16 %v3698
        %v4062 = vunpack.c.l.b16 %v3730
        %v4063 = vunpack.c.l.b16 %v3699
        %v4064 = vunpack.c.l.b16 %v3731
        %v4065 = vunpack.c.l.b16 %v3700
        %v4066 = vunpack.c.l.b16 %v3732
        %v4067 = vunpack.c.l.b16 %v3701
        %v4068 = vunpack.c.l.b16 %v3733
        %v4069 = vunpack.c.l.b16 %v3702
        %v4070 = vunpack.c.l.b16 %v3734
        %v4071 = vunpack.c.l.b16 %v3703
        %v4072 = vunpack.c.l.b16 %v3735
        %v4073 = vunpack.c.l.b16 %v3704
        %v4074 = vunpack.c.l.b16 %v3736
        %v4075 = vunpack.c.l.b16 %v3705
        %v4076 = vunpack.c.l.b16 %v3737
        %v4077 = vunpack.c.l.b16 %v3706
        %v4078 = vunpack.c.l.b16 %v3738
        %v4079 = vunpack.c.l.b16 %v3707
        %v4080 = vunpack.c.l.b16 %v3739
        %v4081 = vunpack.c.l.b16 %v3708
        %v4082 = vunpack.c.l.b16 %v3740
        %v4083 = vunpack.c.l.b16 %v3709
        %v4084 = vunpack.c.l.b16 %v3741
        %v4085 = vunpack.c.l.b16 %v3710
        %v4086 = vunpack.c.l.b16 %v3742
        %v4087 = vunpack.c.l.b16 %v3711
        %v4088 = vunpack.c.l.b16 %v3743
        %v4089 = vunpack.c.l.b16 %v3712
        %v4090 = vunpack.c.l.b16 %v3744
        %v4091 = vunpack.c.l.b16 %v3713
        %v4092 = vunpack.c.l.b16 %v3745
        %v4093 = vunpack.c.l.b16 %v3714
        %v4094 = vunpack.c.l.b16 %v3746
        %v4095 = vunpack.c.l.b16 %v3715
        %v4096 = vunpack.c.l.b16 %v3747
        %v4097 = vunpack.c.l.b16 %v3716
        %v4098 = vunpack.c.l.b16 %v3748
        %v4099 = vunpack.c.l.b16 %v3717
        %v4100 = vunpack.c.l.b16 %v3749
        %v4101 = vunpack.c.l.b16 %v3718
        %v4102 = vunpack.c.l.b16 %v3750
        %v4103 = vunpack.c.l.b16 %v3719
        %v4104 = vunpack.c.l.b16 %v3751
        %v4105 = vpack.c.b16 %v4042, %v4041
        %v4106 = vpack.c.b16 %v4044, %v4043
        %v4107 = vpack.c.b16 %v4046, %v4045
        %v4108 = vpack.c.b16 %v4048, %v4047
        %v4109 = vpack.c.b16 %v4050, %v4049
        %v4110 = vpack.c.b16 %v4052, %v4051
        %v4111 = vpack.c.b16 %v4054, %v4053
        %v4112 = vpack.c.b16 %v4056, %v4055
        %v4113 = vpack.c.b16 %v4058, %v4057
        %v4114 = vpack.c.b16 %v4060, %v4059
        %v4115 = vpack.c.b16 %v4062, %v4061
        %v4116 = vpack.c.b16 %v4064, %v4063
        %v4117 = vpack.c.b16 %v4066, %v4065
        %v4118 = vpack.c.b16 %v4068, %v4067
        %v4119 = vpack.c.b16 %v4070, %v4069
        %v4120 = vpack.c.b16 %v4072, %v4071
        %v4121 = vpack.c.b16 %v4074, %v4073
        %v4122 = vpack.c.b16 %v4076, %v4075
        %v4123 = vpack.c.b16 %v4078, %v4077
        %v4124 = vpack.c.b16 %v4080, %v4079
        %v4125 = vpack.c.b16 %v4082, %v4081
        %v4126 = vpack.c.b16 %v4084, %v4083
        %v4127 = vpack.c.b16 %v4086, %v4085
        %v4128 = vpack.c.b16 %v4088, %v4087
        %v4129 = vpack.c.b16 %v4090, %v4089
        %v4130 = vpack.c.b16 %v4092, %v4091
        %v4131 = vpack.c.b16 %v4094, %v4093
        %v4132 = vpack.c.b16 %v4096, %v4095
        %v4133 = vpack.c.b16 %v4098, %v4097
        %v4134 = vpack.c.b16 %v4100, %v4099
        %v4135 = vpack.c.b16 %v4102, %v4101
        %v4136 = vpack.c.b16 %v4104, %v4103
        %v4138 = vshrl.u32 %v4105, 16
        %v4140 = vshll.u32 %v4105, 16
        %v4142 = vrot.slane %v4140, 1
        %v4143 = vor.u32 %v4138, %v4142
        %v4145 = vshrl.u32 %v4106, 16
        %v4147 = vshll.u32 %v4106, 16
        %v4149 = vrot.slane %v4147, 1
        %v4150 = vor.u32 %v4145, %v4149
        %v4152 = vshrl.u32 %v4107, 16
        %v4154 = vshll.u32 %v4107, 16
        %v4156 = vrot.slane %v4154, 1
        %v4157 = vor.u32 %v4152, %v4156
        %v4159 = vshrl.u32 %v4108, 16
        %v4161 = vshll.u32 %v4108, 16
        %v4163 = vrot.slane %v4161, 1
        %v4164 = vor.u32 %v4159, %v4163
        %v4166 = vshrl.u32 %v4109, 16
        %v4168 = vshll.u32 %v4109, 16
        %v4170 = vrot.slane %v4168, 1
        %v4171 = vor.u32 %v4166, %v4170
        %v4173 = vshrl.u32 %v4110, 16
        %v4175 = vshll.u32 %v4110, 16
        %v4177 = vrot.slane %v4175, 1
        %v4178 = vor.u32 %v4173, %v4177
        %v4180 = vshrl.u32 %v4111, 16
        %v4182 = vshll.u32 %v4111, 16
        %v4184 = vrot.slane %v4182, 1
        %v4185 = vor.u32 %v4180, %v4184
        %v4187 = vshrl.u32 %v4112, 16
        %v4189 = vshll.u32 %v4112, 16
        %v4191 = vrot.slane %v4189, 1
        %v4192 = vor.u32 %v4187, %v4191
        %v4194 = vshrl.u32 %v4113, 16
        %v4196 = vshll.u32 %v4113, 16
        %v4198 = vrot.slane %v4196, 1
        %v4199 = vor.u32 %v4194, %v4198
        %v4201 = vshrl.u32 %v4114, 16
        %v4203 = vshll.u32 %v4114, 16
        %v4205 = vrot.slane %v4203, 1
        %v4206 = vor.u32 %v4201, %v4205
        %v4208 = vshrl.u32 %v4115, 16
        %v4210 = vshll.u32 %v4115, 16
        %v4212 = vrot.slane %v4210, 1
        %v4213 = vor.u32 %v4208, %v4212
        %v4215 = vshrl.u32 %v4116, 16
        %v4217 = vshll.u32 %v4116, 16
        %v4219 = vrot.slane %v4217, 1
        %v4220 = vor.u32 %v4215, %v4219
        %v4222 = vshrl.u32 %v4117, 16
        %v4224 = vshll.u32 %v4117, 16
        %v4226 = vrot.slane %v4224, 1
        %v4227 = vor.u32 %v4222, %v4226
        %v4229 = vshrl.u32 %v4118, 16
        %v4231 = vshll.u32 %v4118, 16
        %v4233 = vrot.slane %v4231, 1
        %v4234 = vor.u32 %v4229, %v4233
        %v4236 = vshrl.u32 %v4119, 16
        %v4238 = vshll.u32 %v4119, 16
        %v4240 = vrot.slane %v4238, 1
        %v4241 = vor.u32 %v4236, %v4240
        %v4243 = vshrl.u32 %v4120, 16
        %v4245 = vshll.u32 %v4120, 16
        %v4247 = vrot.slane %v4245, 1
        %v4248 = vor.u32 %v4243, %v4247
        %v4250 = vshrl.u32 %v4121, 16
        %v4252 = vshll.u32 %v4121, 16
        %v4254 = vrot.slane %v4252, 1
        %v4255 = vor.u32 %v4250, %v4254
        %v4257 = vshrl.u32 %v4122, 16
        %v4259 = vshll.u32 %v4122, 16
        %v4261 = vrot.slane %v4259, 1
        %v4262 = vor.u32 %v4257, %v4261
        %v4264 = vshrl.u32 %v4123, 16
        %v4266 = vshll.u32 %v4123, 16
        %v4268 = vrot.slane %v4266, 1
        %v4269 = vor.u32 %v4264, %v4268
        %v4271 = vshrl.u32 %v4124, 16
        %v4273 = vshll.u32 %v4124, 16
        %v4275 = vrot.slane %v4273, 1
        %v4276 = vor.u32 %v4271, %v4275
        %v4278 = vshrl.u32 %v4125, 16
        %v4280 = vshll.u32 %v4125, 16
        %v4282 = vrot.slane %v4280, 1
        %v4283 = vor.u32 %v4278, %v4282
        %v4285 = vshrl.u32 %v4126, 16
        %v4287 = vshll.u32 %v4126, 16
        %v4289 = vrot.slane %v4287, 1
        %v4290 = vor.u32 %v4285, %v4289
        %v4292 = vshrl.u32 %v4127, 16
        %v4294 = vshll.u32 %v4127, 16
        %v4296 = vrot.slane %v4294, 1
        %v4297 = vor.u32 %v4292, %v4296
        %v4299 = vshrl.u32 %v4128, 16
        %v4301 = vshll.u32 %v4128, 16
        %v4303 = vrot.slane %v4301, 1
        %v4304 = vor.u32 %v4299, %v4303
        %v4306 = vshrl.u32 %v4129, 16
        %v4308 = vshll.u32 %v4129, 16
        %v4310 = vrot.slane %v4308, 1
        %v4311 = vor.u32 %v4306, %v4310
        %v4313 = vshrl.u32 %v4130, 16
        %v4315 = vshll.u32 %v4130, 16
        %v4317 = vrot.slane %v4315, 1
        %v4318 = vor.u32 %v4313, %v4317
        %v4320 = vshrl.u32 %v4131, 16
        %v4322 = vshll.u32 %v4131, 16
        %v4324 = vrot.slane %v4322, 1
        %v4325 = vor.u32 %v4320, %v4324
        %v4327 = vshrl.u32 %v4132, 16
        %v4329 = vshll.u32 %v4132, 16
        %v4331 = vrot.slane %v4329, 1
        %v4332 = vor.u32 %v4327, %v4331
        %v4334 = vshrl.u32 %v4133, 16
        %v4336 = vshll.u32 %v4133, 16
        %v4338 = vrot.slane %v4336, 1
        %v4339 = vor.u32 %v4334, %v4338
        %v4341 = vshrl.u32 %v4134, 16
        %v4343 = vshll.u32 %v4134, 16
        %v4345 = vrot.slane %v4343, 1
        %v4346 = vor.u32 %v4341, %v4345
        %v4348 = vshrl.u32 %v4135, 16
        %v4350 = vshll.u32 %v4135, 16
        %v4352 = vrot.slane %v4350, 1
        %v4353 = vor.u32 %v4348, %v4352
        %v4355 = vshrl.u32 %v4136, 16
        %v4357 = vshll.u32 %v4136, 16
        %v4359 = vrot.slane %v4357, 1
        %v4360 = vor.u32 %v4355, %v4359
        %4361 = vrot.lane.b32.xlu0 %v4143, 32
        %v4362 = vpop.permute.xlu0 %4361
        %4363 = vrot.lane.b32.xlu0 %v4150, 32
        %v4364 = vpop.permute.xlu0 %4363
        %4365 = vrot.lane.b32.xlu0 %v4157, 32
        %v4366 = vpop.permute.xlu0 %4365
        %4367 = vrot.lane.b32.xlu0 %v4164, 32
        %v4368 = vpop.permute.xlu0 %4367
        %4369 = vrot.lane.b32.xlu0 %v4171, 32
        %v4370 = vpop.permute.xlu0 %4369
        %4371 = vrot.lane.b32.xlu0 %v4178, 32
        %v4372 = vpop.permute.xlu0 %4371
        %4373 = vrot.lane.b32.xlu0 %v4185, 32
        %v4374 = vpop.permute.xlu0 %4373
        %4375 = vrot.lane.b32.xlu0 %v4192, 32
        %v4376 = vpop.permute.xlu0 %4375
        %4377 = vrot.lane.b32.xlu0 %v4199, 32
        %v4378 = vpop.permute.xlu0 %4377
        %4379 = vrot.lane.b32.xlu0 %v4206, 32
        %v4380 = vpop.permute.xlu0 %4379
        %4381 = vrot.lane.b32.xlu0 %v4213, 32
        %v4382 = vpop.permute.xlu0 %4381
        %4383 = vrot.lane.b32.xlu0 %v4220, 32
        %v4384 = vpop.permute.xlu0 %4383
        %4385 = vrot.lane.b32.xlu0 %v4227, 32
        %v4386 = vpop.permute.xlu0 %4385
        %4387 = vrot.lane.b32.xlu0 %v4234, 32
        %v4388 = vpop.permute.xlu0 %4387
        %4389 = vrot.lane.b32.xlu0 %v4241, 32
        %v4390 = vpop.permute.xlu0 %4389
        %4391 = vrot.lane.b32.xlu0 %v4248, 32
        %v4392 = vpop.permute.xlu0 %4391
        %4393 = vrot.lane.b32.xlu0 %v4255, 32
        %v4394 = vpop.permute.xlu0 %4393
        %4395 = vrot.lane.b32.xlu0 %v4262, 32
        %v4396 = vpop.permute.xlu0 %4395
        %4397 = vrot.lane.b32.xlu0 %v4269, 32
        %v4398 = vpop.permute.xlu0 %4397
        %4399 = vrot.lane.b32.xlu0 %v4276, 32
        %v4400 = vpop.permute.xlu0 %4399
        %4401 = vrot.lane.b32.xlu0 %v4283, 32
        %v4402 = vpop.permute.xlu0 %4401
        %4403 = vrot.lane.b32.xlu0 %v4290, 32
        %v4404 = vpop.permute.xlu0 %4403
        %4405 = vrot.lane.b32.xlu0 %v4297, 32
        %v4406 = vpop.permute.xlu0 %4405
        %4407 = vrot.lane.b32.xlu0 %v4304, 32
        %v4408 = vpop.permute.xlu0 %4407
        %4409 = vrot.lane.b32.xlu0 %v4311, 32
        %v4410 = vpop.permute.xlu0 %4409
        %4411 = vrot.lane.b32.xlu0 %v4318, 32
        %v4412 = vpop.permute.xlu0 %4411
        %4413 = vrot.lane.b32.xlu0 %v4325, 32
        %v4414 = vpop.permute.xlu0 %4413
        %4415 = vrot.lane.b32.xlu0 %v4332, 32
        %v4416 = vpop.permute.xlu0 %4415
        %4417 = vrot.lane.b32.xlu0 %v4339, 32
        %v4418 = vpop.permute.xlu0 %4417
        %4419 = vrot.lane.b32.xlu0 %v4346, 32
        %v4420 = vpop.permute.xlu0 %4419
        %4421 = vrot.lane.b32.xlu0 %v4353, 32
        %v4422 = vpop.permute.xlu0 %4421
        %4423 = vrot.lane.b32.xlu0 %v4360, 32
        %v4424 = vpop.permute.xlu0 %4423
        %v4457 = vunpack.c.l.b16 %v3752
        %v4458 = vunpack.c.l.b16 %v3753
        %v4459 = vunpack.c.l.b16 %v3754
        %v4460 = vunpack.c.l.b16 %v3755
        %v4461 = vunpack.c.l.b16 %v3756
        %v4462 = vunpack.c.l.b16 %v3757
        %v4463 = vunpack.c.l.b16 %v3758
        %v4464 = vunpack.c.l.b16 %v3759
        %v4465 = vunpack.c.l.b16 %v3760
        %v4466 = vunpack.c.l.b16 %v3761
        %v4467 = vunpack.c.l.b16 %v3762
        %v4468 = vunpack.c.l.b16 %v3763
        %v4469 = vunpack.c.l.b16 %v3764
        %v4470 = vunpack.c.l.b16 %v3765
        %v4471 = vunpack.c.l.b16 %v3766
        %v4472 = vunpack.c.l.b16 %v3767
        %v4473 = vunpack.c.l.b16 %v3768
        %v4474 = vunpack.c.l.b16 %v3769
        %v4475 = vunpack.c.l.b16 %v3770
        %v4476 = vunpack.c.l.b16 %v3771
        %v4477 = vunpack.c.l.b16 %v3772
        %v4478 = vunpack.c.l.b16 %v3773
        %v4479 = vunpack.c.l.b16 %v3774
        %v4480 = vunpack.c.l.b16 %v3775
        %v4481 = vunpack.c.l.b16 %v3776
        %v4482 = vunpack.c.l.b16 %v3777
        %v4483 = vunpack.c.l.b16 %v3778
        %v4484 = vunpack.c.l.b16 %v3779
        %v4485 = vunpack.c.l.b16 %v3780
        %v4486 = vunpack.c.l.b16 %v3781
        %v4487 = vunpack.c.l.b16 %v3782
        %v4488 = vunpack.c.l.b16 %v3783
        %v4489 = vpack.c.b16 %v4042, %v4457
        %v4490 = vpack.c.b16 %v4044, %v4458
        %v4491 = vpack.c.b16 %v4046, %v4459
        %v4492 = vpack.c.b16 %v4048, %v4460
        %v4493 = vpack.c.b16 %v4050, %v4461
        %v4494 = vpack.c.b16 %v4052, %v4462
        %v4495 = vpack.c.b16 %v4054, %v4463
        %v4496 = vpack.c.b16 %v4056, %v4464
        %v4497 = vpack.c.b16 %v4058, %v4465
        %v4498 = vpack.c.b16 %v4060, %v4466
        %v4499 = vpack.c.b16 %v4062, %v4467
        %v4500 = vpack.c.b16 %v4064, %v4468
        %v4501 = vpack.c.b16 %v4066, %v4469
        %v4502 = vpack.c.b16 %v4068, %v4470
        %v4503 = vpack.c.b16 %v4070, %v4471
        %v4504 = vpack.c.b16 %v4072, %v4472
        %v4505 = vpack.c.b16 %v4074, %v4473
        %v4506 = vpack.c.b16 %v4076, %v4474
        %v4507 = vpack.c.b16 %v4078, %v4475
        %v4508 = vpack.c.b16 %v4080, %v4476
        %v4509 = vpack.c.b16 %v4082, %v4477
        %v4510 = vpack.c.b16 %v4084, %v4478
        %v4511 = vpack.c.b16 %v4086, %v4479
        %v4512 = vpack.c.b16 %v4088, %v4480
        %v4513 = vpack.c.b16 %v4090, %v4481
        %v4514 = vpack.c.b16 %v4092, %v4482
        %v4515 = vpack.c.b16 %v4094, %v4483
        %v4516 = vpack.c.b16 %v4096, %v4484
        %v4517 = vpack.c.b16 %v4098, %v4485
        %v4518 = vpack.c.b16 %v4100, %v4486
        %v4519 = vpack.c.b16 %v4102, %v4487
        %v4520 = vpack.c.b16 %v4104, %v4488
        %v4521 = vrot.slane %v4489, 1
        %v4522 = vrot.slane %v4490, 1
        %v4523 = vrot.slane %v4491, 1
        %v4524 = vrot.slane %v4492, 1
        %v4525 = vrot.slane %v4493, 1
        %v4526 = vrot.slane %v4494, 1
        %v4527 = vrot.slane %v4495, 1
        %v4528 = vrot.slane %v4496, 1
        %v4529 = vrot.slane %v4497, 1
        %v4530 = vrot.slane %v4498, 1
        %v4531 = vrot.slane %v4499, 1
        %v4532 = vrot.slane %v4500, 1
        %v4533 = vrot.slane %v4501, 1
        %v4534 = vrot.slane %v4502, 1
        %v4535 = vrot.slane %v4503, 1
        %v4536 = vrot.slane %v4504, 1
        %v4537 = vrot.slane %v4505, 1
        %v4538 = vrot.slane %v4506, 1
        %v4539 = vrot.slane %v4507, 1
        %v4540 = vrot.slane %v4508, 1
        %v4541 = vrot.slane %v4509, 1
        %v4542 = vrot.slane %v4510, 1
        %v4543 = vrot.slane %v4511, 1
        %v4544 = vrot.slane %v4512, 1
        %v4545 = vrot.slane %v4513, 1
        %v4546 = vrot.slane %v4514, 1
        %v4547 = vrot.slane %v4515, 1
        %v4548 = vrot.slane %v4516, 1
        %v4549 = vrot.slane %v4517, 1
        %v4550 = vrot.slane %v4518, 1
        %v4551 = vrot.slane %v4519, 1
        %v4552 = vrot.slane %v4520, 1
        %4553 = vrot.lane.b32.xlu0 %v4521, 64
        %v4554 = vpop.permute.xlu0 %4553
        %4555 = vrot.lane.b32.xlu0 %v4522, 64
        %v4556 = vpop.permute.xlu0 %4555
        %4557 = vrot.lane.b32.xlu0 %v4523, 64
        %v4558 = vpop.permute.xlu0 %4557
        %4559 = vrot.lane.b32.xlu0 %v4524, 64
        %v4560 = vpop.permute.xlu0 %4559
        %4561 = vrot.lane.b32.xlu0 %v4525, 64
        %v4562 = vpop.permute.xlu0 %4561
        %4563 = vrot.lane.b32.xlu0 %v4526, 64
        %v4564 = vpop.permute.xlu0 %4563
        %4565 = vrot.lane.b32.xlu0 %v4527, 64
        %v4566 = vpop.permute.xlu0 %4565
        %4567 = vrot.lane.b32.xlu0 %v4528, 64
        %v4568 = vpop.permute.xlu0 %4567
        %4569 = vrot.lane.b32.xlu0 %v4529, 64
        %v4570 = vpop.permute.xlu0 %4569
        %4571 = vrot.lane.b32.xlu0 %v4530, 64
        %v4572 = vpop.permute.xlu0 %4571
        %4573 = vrot.lane.b32.xlu0 %v4531, 64
        %v4574 = vpop.permute.xlu0 %4573
        %4575 = vrot.lane.b32.xlu0 %v4532, 64
        %v4576 = vpop.permute.xlu0 %4575
        %4577 = vrot.lane.b32.xlu0 %v4533, 64
        %v4578 = vpop.permute.xlu0 %4577
        %4579 = vrot.lane.b32.xlu0 %v4534, 64
        %v4580 = vpop.permute.xlu0 %4579
        %4581 = vrot.lane.b32.xlu0 %v4535, 64
        %v4582 = vpop.permute.xlu0 %4581
        %4583 = vrot.lane.b32.xlu0 %v4536, 64
        %v4584 = vpop.permute.xlu0 %4583
        %4585 = vrot.lane.b32.xlu0 %v4537, 64
        %v4586 = vpop.permute.xlu0 %4585
        %4587 = vrot.lane.b32.xlu0 %v4538, 64
        %v4588 = vpop.permute.xlu0 %4587
        %4589 = vrot.lane.b32.xlu0 %v4539, 64
        %v4590 = vpop.permute.xlu0 %4589
        %4591 = vrot.lane.b32.xlu0 %v4540, 64
        %v4592 = vpop.permute.xlu0 %4591
        %4593 = vrot.lane.b32.xlu0 %v4541, 64
        %v4594 = vpop.permute.xlu0 %4593
        %4595 = vrot.lane.b32.xlu0 %v4542, 64
        %v4596 = vpop.permute.xlu0 %4595
        %4597 = vrot.lane.b32.xlu0 %v4543, 64
        %v4598 = vpop.permute.xlu0 %4597
        %4599 = vrot.lane.b32.xlu0 %v4544, 64
        %v4600 = vpop.permute.xlu0 %4599
        %4601 = vrot.lane.b32.xlu0 %v4545, 64
        %v4602 = vpop.permute.xlu0 %4601
        %4603 = vrot.lane.b32.xlu0 %v4546, 64
        %v4604 = vpop.permute.xlu0 %4603
        %4605 = vrot.lane.b32.xlu0 %v4547, 64
        %v4606 = vpop.permute.xlu0 %4605
        %4607 = vrot.lane.b32.xlu0 %v4548, 64
        %v4608 = vpop.permute.xlu0 %4607
        %4609 = vrot.lane.b32.xlu0 %v4549, 64
        %v4610 = vpop.permute.xlu0 %4609
        %4611 = vrot.lane.b32.xlu0 %v4550, 64
        %v4612 = vpop.permute.xlu0 %4611
        %4613 = vrot.lane.b32.xlu0 %v4551, 64
        %v4614 = vpop.permute.xlu0 %4613
        %4615 = vrot.lane.b32.xlu0 %v4552, 64
        %v4616 = vpop.permute.xlu0 %4615
        %v4649 = vunpack.c.l.b16 %v3784
        %v4650 = vunpack.c.l.b16 %v3785
        %v4651 = vunpack.c.l.b16 %v3786
        %v4652 = vunpack.c.l.b16 %v3787
        %v4653 = vunpack.c.l.b16 %v3788
        %v4654 = vunpack.c.l.b16 %v3789
        %v4655 = vunpack.c.l.b16 %v3790
        %v4656 = vunpack.c.l.b16 %v3791
        %v4657 = vunpack.c.l.b16 %v3792
        %v4658 = vunpack.c.l.b16 %v3793
        %v4659 = vunpack.c.l.b16 %v3794
        %v4660 = vunpack.c.l.b16 %v3795
        %v4661 = vunpack.c.l.b16 %v3796
        %v4662 = vunpack.c.l.b16 %v3797
        %v4663 = vunpack.c.l.b16 %v3798
        %v4664 = vunpack.c.l.b16 %v3799
        %v4665 = vunpack.c.l.b16 %v3800
        %v4666 = vunpack.c.l.b16 %v3801
        %v4667 = vunpack.c.l.b16 %v3802
        %v4668 = vunpack.c.l.b16 %v3803
        %v4669 = vunpack.c.l.b16 %v3804
        %v4670 = vunpack.c.l.b16 %v3805
        %v4671 = vunpack.c.l.b16 %v3806
        %v4672 = vunpack.c.l.b16 %v3807
        %v4673 = vunpack.c.l.b16 %v3808
        %v4674 = vunpack.c.l.b16 %v3809
        %v4675 = vunpack.c.l.b16 %v3810
        %v4676 = vunpack.c.l.b16 %v3811
        %v4677 = vunpack.c.l.b16 %v3812
        %v4678 = vunpack.c.l.b16 %v3813
        %v4679 = vunpack.c.l.b16 %v3814
        %v4680 = vunpack.c.l.b16 %v3815
        %v4681 = vpack.c.b16 %v4649, %v4649
        %v4682 = vpack.c.b16 %v4650, %v4650
        %v4683 = vpack.c.b16 %v4651, %v4651
        %v4684 = vpack.c.b16 %v4652, %v4652
        %v4685 = vpack.c.b16 %v4653, %v4653
        %v4686 = vpack.c.b16 %v4654, %v4654
        %v4687 = vpack.c.b16 %v4655, %v4655
        %v4688 = vpack.c.b16 %v4656, %v4656
        %v4689 = vpack.c.b16 %v4657, %v4657
        %v4690 = vpack.c.b16 %v4658, %v4658
        %v4691 = vpack.c.b16 %v4659, %v4659
        %v4692 = vpack.c.b16 %v4660, %v4660
        %v4693 = vpack.c.b16 %v4661, %v4661
        %v4694 = vpack.c.b16 %v4662, %v4662
        %v4695 = vpack.c.b16 %v4663, %v4663
        %v4696 = vpack.c.b16 %v4664, %v4664
        %v4697 = vpack.c.b16 %v4665, %v4665
        %v4698 = vpack.c.b16 %v4666, %v4666
        %v4699 = vpack.c.b16 %v4667, %v4667
        %v4700 = vpack.c.b16 %v4668, %v4668
        %v4701 = vpack.c.b16 %v4669, %v4669
        %v4702 = vpack.c.b16 %v4670, %v4670
        %v4703 = vpack.c.b16 %v4671, %v4671
        %v4704 = vpack.c.b16 %v4672, %v4672
        %v4705 = vpack.c.b16 %v4673, %v4673
        %v4706 = vpack.c.b16 %v4674, %v4674
        %v4707 = vpack.c.b16 %v4675, %v4675
        %v4708 = vpack.c.b16 %v4676, %v4676
        %v4709 = vpack.c.b16 %v4677, %v4677
        %v4710 = vpack.c.b16 %v4678, %v4678
        %v4711 = vpack.c.b16 %v4679, %v4679
        %v4712 = vpack.c.b16 %v4680, %v4680
        %4713 = vrot.lane.b32.xlu0 %v4681, 96
        %v4714 = vpop.permute.xlu0 %4713
        %4715 = vrot.lane.b32.xlu0 %v4682, 96
        %v4716 = vpop.permute.xlu0 %4715
        %4717 = vrot.lane.b32.xlu0 %v4683, 96
        %v4718 = vpop.permute.xlu0 %4717
        %4719 = vrot.lane.b32.xlu0 %v4684, 96
        %v4720 = vpop.permute.xlu0 %4719
        %4721 = vrot.lane.b32.xlu0 %v4685, 96
        %v4722 = vpop.permute.xlu0 %4721
        %4723 = vrot.lane.b32.xlu0 %v4686, 96
        %v4724 = vpop.permute.xlu0 %4723
        %4725 = vrot.lane.b32.xlu0 %v4687, 96
        %v4726 = vpop.permute.xlu0 %4725
        %4727 = vrot.lane.b32.xlu0 %v4688, 96
        %v4728 = vpop.permute.xlu0 %4727
        %4729 = vrot.lane.b32.xlu0 %v4689, 96
        %v4730 = vpop.permute.xlu0 %4729
        %4731 = vrot.lane.b32.xlu0 %v4690, 96
        %v4732 = vpop.permute.xlu0 %4731
        %4733 = vrot.lane.b32.xlu0 %v4691, 96
        %v4734 = vpop.permute.xlu0 %4733
        %4735 = vrot.lane.b32.xlu0 %v4692, 96
        %v4736 = vpop.permute.xlu0 %4735
        %4737 = vrot.lane.b32.xlu0 %v4693, 96
        %v4738 = vpop.permute.xlu0 %4737
        %4739 = vrot.lane.b32.xlu0 %v4694, 96
        %v4740 = vpop.permute.xlu0 %4739
        %4741 = vrot.lane.b32.xlu0 %v4695, 96
        %v4742 = vpop.permute.xlu0 %4741
        %4743 = vrot.lane.b32.xlu0 %v4696, 96
        %v4744 = vpop.permute.xlu0 %4743
        %4745 = vrot.lane.b32.xlu0 %v4697, 96
        %v4746 = vpop.permute.xlu0 %4745
        %4747 = vrot.lane.b32.xlu0 %v4698, 96
        %v4748 = vpop.permute.xlu0 %4747
        %4749 = vrot.lane.b32.xlu0 %v4699, 96
        %v4750 = vpop.permute.xlu0 %4749
        %4751 = vrot.lane.b32.xlu0 %v4700, 96
        %v4752 = vpop.permute.xlu0 %4751
        %4753 = vrot.lane.b32.xlu0 %v4701, 96
        %v4754 = vpop.permute.xlu0 %4753
        %4755 = vrot.lane.b32.xlu0 %v4702, 96
        %v4756 = vpop.permute.xlu0 %4755
        %4757 = vrot.lane.b32.xlu0 %v4703, 96
        %v4758 = vpop.permute.xlu0 %4757
        %4759 = vrot.lane.b32.xlu0 %v4704, 96
        %v4760 = vpop.permute.xlu0 %4759
        %4761 = vrot.lane.b32.xlu0 %v4705, 96
        %v4762 = vpop.permute.xlu0 %4761
        %4763 = vrot.lane.b32.xlu0 %v4706, 96
        %v4764 = vpop.permute.xlu0 %4763
        %4765 = vrot.lane.b32.xlu0 %v4707, 96
        %v4766 = vpop.permute.xlu0 %4765
        %4767 = vrot.lane.b32.xlu0 %v4708, 96
        %v4768 = vpop.permute.xlu0 %4767
        %4769 = vrot.lane.b32.xlu0 %v4709, 96
        %v4770 = vpop.permute.xlu0 %4769
        %4771 = vrot.lane.b32.xlu0 %v4710, 96
        %v4772 = vpop.permute.xlu0 %4771
        %4773 = vrot.lane.b32.xlu0 %v4711, 96
        %v4774 = vpop.permute.xlu0 %4773
        %4775 = vrot.lane.b32.xlu0 %v4712, 96
        %v4776 = vpop.permute.xlu0 %4775
        %v4809 = vunpack.c.l.b16 %v3816
        %v4810 = vunpack.c.l.b16 %v3817
        %v4811 = vunpack.c.l.b16 %v3818
        %v4812 = vunpack.c.l.b16 %v3819
        %v4813 = vunpack.c.l.b16 %v3820
        %v4814 = vunpack.c.l.b16 %v3821
        %v4815 = vunpack.c.l.b16 %v3822
        %v4816 = vunpack.c.l.b16 %v3823
        %v4817 = vunpack.c.l.b16 %v3824
        %v4818 = vunpack.c.l.b16 %v3825
        %v4819 = vunpack.c.l.b16 %v3826
        %v4820 = vunpack.c.l.b16 %v3827
        %v4821 = vunpack.c.l.b16 %v3828
        %v4822 = vunpack.c.l.b16 %v3829
        %v4823 = vunpack.c.l.b16 %v3830
        %v4824 = vunpack.c.l.b16 %v3831
        %v4825 = vunpack.c.l.b16 %v3832
        %v4826 = vunpack.c.l.b16 %v3833
        %v4827 = vunpack.c.l.b16 %v3834
        %v4828 = vunpack.c.l.b16 %v3835
        %v4829 = vunpack.c.l.b16 %v3836
        %v4830 = vunpack.c.l.b16 %v3837
        %v4831 = vunpack.c.l.b16 %v3838
        %v4832 = vunpack.c.l.b16 %v3839
        %v4833 = vunpack.c.l.b16 %v3840
        %v4834 = vunpack.c.l.b16 %v3841
        %v4835 = vunpack.c.l.b16 %v3842
        %v4836 = vunpack.c.l.b16 %v3843
        %v4837 = vunpack.c.l.b16 %v3844
        %v4838 = vunpack.c.l.b16 %v3845
        %v4839 = vunpack.c.l.b16 %v3846
        %v4840 = vunpack.c.l.b16 %v3847
        %v4841 = vpack.c.b16 %v4809, %v4649
        %v4842 = vpack.c.b16 %v4810, %v4650
        %v4843 = vpack.c.b16 %v4811, %v4651
        %v4844 = vpack.c.b16 %v4812, %v4652
        %v4845 = vpack.c.b16 %v4813, %v4653
        %v4846 = vpack.c.b16 %v4814, %v4654
        %v4847 = vpack.c.b16 %v4815, %v4655
        %v4848 = vpack.c.b16 %v4816, %v4656
        %v4849 = vpack.c.b16 %v4817, %v4657
        %v4850 = vpack.c.b16 %v4818, %v4658
        %v4851 = vpack.c.b16 %v4819, %v4659
        %v4852 = vpack.c.b16 %v4820, %v4660
        %v4853 = vpack.c.b16 %v4821, %v4661
        %v4854 = vpack.c.b16 %v4822, %v4662
        %v4855 = vpack.c.b16 %v4823, %v4663
        %v4856 = vpack.c.b16 %v4824, %v4664
        %v4857 = vpack.c.b16 %v4825, %v4665
        %v4858 = vpack.c.b16 %v4826, %v4666
        %v4859 = vpack.c.b16 %v4827, %v4667
        %v4860 = vpack.c.b16 %v4828, %v4668
        %v4861 = vpack.c.b16 %v4829, %v4669
        %v4862 = vpack.c.b16 %v4830, %v4670
        %v4863 = vpack.c.b16 %v4831, %v4671
        %v4864 = vpack.c.b16 %v4832, %v4672
        %v4865 = vpack.c.b16 %v4833, %v4673
        %v4866 = vpack.c.b16 %v4834, %v4674
        %v4867 = vpack.c.b16 %v4835, %v4675
        %v4868 = vpack.c.b16 %v4836, %v4676
        %v4869 = vpack.c.b16 %v4837, %v4677
        %v4870 = vpack.c.b16 %v4838, %v4678
        %v4871 = vpack.c.b16 %v4839, %v4679
        %v4872 = vpack.c.b16 %v4840, %v4680
        %v4874 = vshrl.u32 %v4841, 16
        %v4876 = vshll.u32 %v4841, 16
        %v4878 = vrot.slane %v4876, 1
        %v4879 = vor.u32 %v4874, %v4878
        %v4881 = vshrl.u32 %v4842, 16
        %v4883 = vshll.u32 %v4842, 16
        %v4885 = vrot.slane %v4883, 1
        %v4886 = vor.u32 %v4881, %v4885
        %v4888 = vshrl.u32 %v4843, 16
        %v4890 = vshll.u32 %v4843, 16
        %v4892 = vrot.slane %v4890, 1
        %v4893 = vor.u32 %v4888, %v4892
        %v4895 = vshrl.u32 %v4844, 16
        %v4897 = vshll.u32 %v4844, 16
        %v4899 = vrot.slane %v4897, 1
        %v4900 = vor.u32 %v4895, %v4899
        %v4902 = vshrl.u32 %v4845, 16
        %v4904 = vshll.u32 %v4845, 16
        %v4906 = vrot.slane %v4904, 1
        %v4907 = vor.u32 %v4902, %v4906
        %v4909 = vshrl.u32 %v4846, 16
        %v4911 = vshll.u32 %v4846, 16
        %v4913 = vrot.slane %v4911, 1
        %v4914 = vor.u32 %v4909, %v4913
        %v4916 = vshrl.u32 %v4847, 16
        %v4918 = vshll.u32 %v4847, 16
        %v4920 = vrot.slane %v4918, 1
        %v4921 = vor.u32 %v4916, %v4920
        %v4923 = vshrl.u32 %v4848, 16
        %v4925 = vshll.u32 %v4848, 16
        %v4927 = vrot.slane %v4925, 1
        %v4928 = vor.u32 %v4923, %v4927
        %v4930 = vshrl.u32 %v4849, 16
        %v4932 = vshll.u32 %v4849, 16
        %v4934 = vrot.slane %v4932, 1
        %v4935 = vor.u32 %v4930, %v4934
        %v4937 = vshrl.u32 %v4850, 16
        %v4939 = vshll.u32 %v4850, 16
        %v4941 = vrot.slane %v4939, 1
        %v4942 = vor.u32 %v4937, %v4941
        %v4944 = vshrl.u32 %v4851, 16
        %v4946 = vshll.u32 %v4851, 16
        %v4948 = vrot.slane %v4946, 1
        %v4949 = vor.u32 %v4944, %v4948
        %v4951 = vshrl.u32 %v4852, 16
        %v4953 = vshll.u32 %v4852, 16
        %v4955 = vrot.slane %v4953, 1
        %v4956 = vor.u32 %v4951, %v4955
        %v4958 = vshrl.u32 %v4853, 16
        %v4960 = vshll.u32 %v4853, 16
        %v4962 = vrot.slane %v4960, 1
        %v4963 = vor.u32 %v4958, %v4962
        %v4965 = vshrl.u32 %v4854, 16
        %v4967 = vshll.u32 %v4854, 16
        %v4969 = vrot.slane %v4967, 1
        %v4970 = vor.u32 %v4965, %v4969
        %v4972 = vshrl.u32 %v4855, 16
        %v4974 = vshll.u32 %v4855, 16
        %v4976 = vrot.slane %v4974, 1
        %v4977 = vor.u32 %v4972, %v4976
        %v4979 = vshrl.u32 %v4856, 16
        %v4981 = vshll.u32 %v4856, 16
        %v4983 = vrot.slane %v4981, 1
        %v4984 = vor.u32 %v4979, %v4983
        %v4986 = vshrl.u32 %v4857, 16
        %v4988 = vshll.u32 %v4857, 16
        %v4990 = vrot.slane %v4988, 1
        %v4991 = vor.u32 %v4986, %v4990
        %v4993 = vshrl.u32 %v4858, 16
        %v4995 = vshll.u32 %v4858, 16
        %v4997 = vrot.slane %v4995, 1
        %v4998 = vor.u32 %v4993, %v4997
        %v5000 = vshrl.u32 %v4859, 16
        %v5002 = vshll.u32 %v4859, 16
        %v5004 = vrot.slane %v5002, 1
        %v5005 = vor.u32 %v5000, %v5004
        %v5007 = vshrl.u32 %v4860, 16
        %v5009 = vshll.u32 %v4860, 16
        %v5011 = vrot.slane %v5009, 1
        %v5012 = vor.u32 %v5007, %v5011
        %v5014 = vshrl.u32 %v4861, 16
        %v5016 = vshll.u32 %v4861, 16
        %v5018 = vrot.slane %v5016, 1
        %v5019 = vor.u32 %v5014, %v5018
        %v5021 = vshrl.u32 %v4862, 16
        %v5023 = vshll.u32 %v4862, 16
        %v5025 = vrot.slane %v5023, 1
        %v5026 = vor.u32 %v5021, %v5025
        %v5028 = vshrl.u32 %v4863, 16
        %v5030 = vshll.u32 %v4863, 16
        %v5032 = vrot.slane %v5030, 1
        %v5033 = vor.u32 %v5028, %v5032
        %v5035 = vshrl.u32 %v4864, 16
        %v5037 = vshll.u32 %v4864, 16
        %v5039 = vrot.slane %v5037, 1
        %v5040 = vor.u32 %v5035, %v5039
        %v5042 = vshrl.u32 %v4865, 16
        %v5044 = vshll.u32 %v4865, 16
        %v5046 = vrot.slane %v5044, 1
        %v5047 = vor.u32 %v5042, %v5046
        %v5049 = vshrl.u32 %v4866, 16
        %v5051 = vshll.u32 %v4866, 16
        %v5053 = vrot.slane %v5051, 1
        %v5054 = vor.u32 %v5049, %v5053
        %v5056 = vshrl.u32 %v4867, 16
        %v5058 = vshll.u32 %v4867, 16
        %v5060 = vrot.slane %v5058, 1
        %v5061 = vor.u32 %v5056, %v5060
        %v5063 = vshrl.u32 %v4868, 16
        %v5065 = vshll.u32 %v4868, 16
        %v5067 = vrot.slane %v5065, 1
        %v5068 = vor.u32 %v5063, %v5067
        %v5070 = vshrl.u32 %v4869, 16
        %v5072 = vshll.u32 %v4869, 16
        %v5074 = vrot.slane %v5072, 1
        %v5075 = vor.u32 %v5070, %v5074
        %v5077 = vshrl.u32 %v4870, 16
        %v5079 = vshll.u32 %v4870, 16
        %v5081 = vrot.slane %v5079, 1
        %v5082 = vor.u32 %v5077, %v5081
        %v5084 = vshrl.u32 %v4871, 16
        %v5086 = vshll.u32 %v4871, 16
        %v5088 = vrot.slane %v5086, 1
        %v5089 = vor.u32 %v5084, %v5088
        %v5091 = vshrl.u32 %v4872, 16
        %v5093 = vshll.u32 %v4872, 16
        %v5095 = vrot.slane %v5093, 1
        %v5096 = vor.u32 %v5091, %v5095
        %v5129 = vunpack.c.l.b16 %v3848
        %v5130 = vunpack.c.l.b16 %v3849
        %v5131 = vunpack.c.l.b16 %v3850
        %v5132 = vunpack.c.l.b16 %v3851
        %v5133 = vunpack.c.l.b16 %v3852
        %v5134 = vunpack.c.l.b16 %v3853
        %v5135 = vunpack.c.l.b16 %v3854
        %v5136 = vunpack.c.l.b16 %v3855
        %v5137 = vunpack.c.l.b16 %v3856
        %v5138 = vunpack.c.l.b16 %v3857
        %v5139 = vunpack.c.l.b16 %v3858
        %v5140 = vunpack.c.l.b16 %v3859
        %v5141 = vunpack.c.l.b16 %v3860
        %v5142 = vunpack.c.l.b16 %v3861
        %v5143 = vunpack.c.l.b16 %v3862
        %v5144 = vunpack.c.l.b16 %v3863
        %v5145 = vunpack.c.l.b16 %v3864
        %v5146 = vunpack.c.l.b16 %v3865
        %v5147 = vunpack.c.l.b16 %v3866
        %v5148 = vunpack.c.l.b16 %v3867
        %v5149 = vunpack.c.l.b16 %v3868
        %v5150 = vunpack.c.l.b16 %v3869
        %v5151 = vunpack.c.l.b16 %v3870
        %v5152 = vunpack.c.l.b16 %v3871
        %v5153 = vunpack.c.l.b16 %v3872
        %v5154 = vunpack.c.l.b16 %v3873
        %v5155 = vunpack.c.l.b16 %v3874
        %v5156 = vunpack.c.l.b16 %v3875
        %v5157 = vunpack.c.l.b16 %v3876
        %v5158 = vunpack.c.l.b16 %v3877
        %v5159 = vunpack.c.l.b16 %v3878
        %v5160 = vunpack.c.l.b16 %v3879
        %v5161 = vpack.c.b16 %v4809, %v5129
        %v5162 = vpack.c.b16 %v4810, %v5130
        %v5163 = vpack.c.b16 %v4811, %v5131
        %v5164 = vpack.c.b16 %v4812, %v5132
        %v5165 = vpack.c.b16 %v4813, %v5133
        %v5166 = vpack.c.b16 %v4814, %v5134
        %v5167 = vpack.c.b16 %v4815, %v5135
        %v5168 = vpack.c.b16 %v4816, %v5136
        %v5169 = vpack.c.b16 %v4817, %v5137
        %v5170 = vpack.c.b16 %v4818, %v5138
        %v5171 = vpack.c.b16 %v4819, %v5139
        %v5172 = vpack.c.b16 %v4820, %v5140
        %v5173 = vpack.c.b16 %v4821, %v5141
        %v5174 = vpack.c.b16 %v4822, %v5142
        %v5175 = vpack.c.b16 %v4823, %v5143
        %v5176 = vpack.c.b16 %v4824, %v5144
        %v5177 = vpack.c.b16 %v4825, %v5145
        %v5178 = vpack.c.b16 %v4826, %v5146
        %v5179 = vpack.c.b16 %v4827, %v5147
        %v5180 = vpack.c.b16 %v4828, %v5148
        %v5181 = vpack.c.b16 %v4829, %v5149
        %v5182 = vpack.c.b16 %v4830, %v5150
        %v5183 = vpack.c.b16 %v4831, %v5151
        %v5184 = vpack.c.b16 %v4832, %v5152
        %v5185 = vpack.c.b16 %v4833, %v5153
        %v5186 = vpack.c.b16 %v4834, %v5154
        %v5187 = vpack.c.b16 %v4835, %v5155
        %v5188 = vpack.c.b16 %v4836, %v5156
        %v5189 = vpack.c.b16 %v4837, %v5157
        %v5190 = vpack.c.b16 %v4838, %v5158
        %v5191 = vpack.c.b16 %v4839, %v5159
        %v5192 = vpack.c.b16 %v4840, %v5160
        %v5193 = vrot.slane %v5161, 1
        %v5194 = vrot.slane %v5162, 1
        %v5195 = vrot.slane %v5163, 1
        %v5196 = vrot.slane %v5164, 1
        %v5197 = vrot.slane %v5165, 1
        %v5198 = vrot.slane %v5166, 1
        %v5199 = vrot.slane %v5167, 1
        %v5200 = vrot.slane %v5168, 1
        %v5201 = vrot.slane %v5169, 1
        %v5202 = vrot.slane %v5170, 1
        %v5203 = vrot.slane %v5171, 1
        %v5204 = vrot.slane %v5172, 1
        %v5205 = vrot.slane %v5173, 1
        %v5206 = vrot.slane %v5174, 1
        %v5207 = vrot.slane %v5175, 1
        %v5208 = vrot.slane %v5176, 1
        %v5209 = vrot.slane %v5177, 1
        %v5210 = vrot.slane %v5178, 1
        %v5211 = vrot.slane %v5179, 1
        %v5212 = vrot.slane %v5180, 1
        %v5213 = vrot.slane %v5181, 1
        %v5214 = vrot.slane %v5182, 1
        %v5215 = vrot.slane %v5183, 1
        %v5216 = vrot.slane %v5184, 1
        %v5217 = vrot.slane %v5185, 1
        %v5218 = vrot.slane %v5186, 1
        %v5219 = vrot.slane %v5187, 1
        %v5220 = vrot.slane %v5188, 1
        %v5221 = vrot.slane %v5189, 1
        %v5222 = vrot.slane %v5190, 1
        %v5223 = vrot.slane %v5191, 1
        %v5224 = vrot.slane %v5192, 1
        %5225 = vrot.lane.b32.xlu0 %v5193, 32
        %v5226 = vpop.permute.xlu0 %5225
        %5227 = vrot.lane.b32.xlu0 %v5194, 32
        %v5228 = vpop.permute.xlu0 %5227
        %5229 = vrot.lane.b32.xlu0 %v5195, 32
        %v5230 = vpop.permute.xlu0 %5229
        %5231 = vrot.lane.b32.xlu0 %v5196, 32
        %v5232 = vpop.permute.xlu0 %5231
        %5233 = vrot.lane.b32.xlu0 %v5197, 32
        %v5234 = vpop.permute.xlu0 %5233
        %5235 = vrot.lane.b32.xlu0 %v5198, 32
        %v5236 = vpop.permute.xlu0 %5235
        %5237 = vrot.lane.b32.xlu0 %v5199, 32
        %v5238 = vpop.permute.xlu0 %5237
        %5239 = vrot.lane.b32.xlu0 %v5200, 32
        %v5240 = vpop.permute.xlu0 %5239
        %5241 = vrot.lane.b32.xlu0 %v5201, 32
        %v5242 = vpop.permute.xlu0 %5241
        %5243 = vrot.lane.b32.xlu0 %v5202, 32
        %v5244 = vpop.permute.xlu0 %5243
        %5245 = vrot.lane.b32.xlu0 %v5203, 32
        %v5246 = vpop.permute.xlu0 %5245
        %5247 = vrot.lane.b32.xlu0 %v5204, 32
        %v5248 = vpop.permute.xlu0 %5247
        %5249 = vrot.lane.b32.xlu0 %v5205, 32
        %v5250 = vpop.permute.xlu0 %5249
        %5251 = vrot.lane.b32.xlu0 %v5206, 32
        %v5252 = vpop.permute.xlu0 %5251
        %5253 = vrot.lane.b32.xlu0 %v5207, 32
        %v5254 = vpop.permute.xlu0 %5253
        %5255 = vrot.lane.b32.xlu0 %v5208, 32
        %v5256 = vpop.permute.xlu0 %5255
        %5257 = vrot.lane.b32.xlu0 %v5209, 32
        %v5258 = vpop.permute.xlu0 %5257
        %5259 = vrot.lane.b32.xlu0 %v5210, 32
        %v5260 = vpop.permute.xlu0 %5259
        %5261 = vrot.lane.b32.xlu0 %v5211, 32
        %v5262 = vpop.permute.xlu0 %5261
        %5263 = vrot.lane.b32.xlu0 %v5212, 32
        %v5264 = vpop.permute.xlu0 %5263
        %5265 = vrot.lane.b32.xlu0 %v5213, 32
        %v5266 = vpop.permute.xlu0 %5265
        %5267 = vrot.lane.b32.xlu0 %v5214, 32
        %v5268 = vpop.permute.xlu0 %5267
        %5269 = vrot.lane.b32.xlu0 %v5215, 32
        %v5270 = vpop.permute.xlu0 %5269
        %5271 = vrot.lane.b32.xlu0 %v5216, 32
        %v5272 = vpop.permute.xlu0 %5271
        %5273 = vrot.lane.b32.xlu0 %v5217, 32
        %v5274 = vpop.permute.xlu0 %5273
        %5275 = vrot.lane.b32.xlu0 %v5218, 32
        %v5276 = vpop.permute.xlu0 %5275
        %5277 = vrot.lane.b32.xlu0 %v5219, 32
        %v5278 = vpop.permute.xlu0 %5277
        %5279 = vrot.lane.b32.xlu0 %v5220, 32
        %v5280 = vpop.permute.xlu0 %5279
        %5281 = vrot.lane.b32.xlu0 %v5221, 32
        %v5282 = vpop.permute.xlu0 %5281
        %5283 = vrot.lane.b32.xlu0 %v5222, 32
        %v5284 = vpop.permute.xlu0 %5283
        %5285 = vrot.lane.b32.xlu0 %v5223, 32
        %v5286 = vpop.permute.xlu0 %5285
        %5287 = vrot.lane.b32.xlu0 %v5224, 32
        %v5288 = vpop.permute.xlu0 %5287
        %v5321 = vunpack.c.l.b16 %v3881
        %v5322 = vunpack.c.l.b16 %v3882
        %v5323 = vunpack.c.l.b16 %v3883
        %v5324 = vunpack.c.l.b16 %v3884
        %v5325 = vunpack.c.l.b16 %v3885
        %v5326 = vunpack.c.l.b16 %v3886
        %v5327 = vunpack.c.l.b16 %v3887
        %v5328 = vunpack.c.l.b16 %v3888
        %v5329 = vunpack.c.l.b16 %v3889
        %v5330 = vunpack.c.l.b16 %v3890
        %v5331 = vunpack.c.l.b16 %v3891
        %v5332 = vunpack.c.l.b16 %v3892
        %v5333 = vunpack.c.l.b16 %v3893
        %v5334 = vunpack.c.l.b16 %v3894
        %v5335 = vunpack.c.l.b16 %v3895
        %v5336 = vunpack.c.l.b16 %v3896
        %v5337 = vunpack.c.l.b16 %v3897
        %v5338 = vunpack.c.l.b16 %v3898
        %v5339 = vunpack.c.l.b16 %v3899
        %v5340 = vunpack.c.l.b16 %v3900
        %v5341 = vunpack.c.l.b16 %v3901
        %v5342 = vunpack.c.l.b16 %v3902
        %v5343 = vunpack.c.l.b16 %v3903
        %v5344 = vunpack.c.l.b16 %v3904
        %v5345 = vunpack.c.l.b16 %v3905
        %v5346 = vunpack.c.l.b16 %v3906
        %v5347 = vunpack.c.l.b16 %v3907
        %v5348 = vunpack.c.l.b16 %v3908
        %v5349 = vunpack.c.l.b16 %v3909
        %v5350 = vunpack.c.l.b16 %v3910
        %v5351 = vunpack.c.l.b16 %v3911
        %v5352 = vunpack.c.l.b16 %v3912
        %v5353 = vpack.c.b16 %v5321, %v5321
        %v5354 = vpack.c.b16 %v5322, %v5322
        %v5355 = vpack.c.b16 %v5323, %v5323
        %v5356 = vpack.c.b16 %v5324, %v5324
        %v5357 = vpack.c.b16 %v5325, %v5325
        %v5358 = vpack.c.b16 %v5326, %v5326
        %v5359 = vpack.c.b16 %v5327, %v5327
        %v5360 = vpack.c.b16 %v5328, %v5328
        %v5361 = vpack.c.b16 %v5329, %v5329
        %v5362 = vpack.c.b16 %v5330, %v5330
        %v5363 = vpack.c.b16 %v5331, %v5331
        %v5364 = vpack.c.b16 %v5332, %v5332
        %v5365 = vpack.c.b16 %v5333, %v5333
        %v5366 = vpack.c.b16 %v5334, %v5334
        %v5367 = vpack.c.b16 %v5335, %v5335
        %v5368 = vpack.c.b16 %v5336, %v5336
        %v5369 = vpack.c.b16 %v5337, %v5337
        %v5370 = vpack.c.b16 %v5338, %v5338
        %v5371 = vpack.c.b16 %v5339, %v5339
        %v5372 = vpack.c.b16 %v5340, %v5340
        %v5373 = vpack.c.b16 %v5341, %v5341
        %v5374 = vpack.c.b16 %v5342, %v5342
        %v5375 = vpack.c.b16 %v5343, %v5343
        %v5376 = vpack.c.b16 %v5344, %v5344
        %v5377 = vpack.c.b16 %v5345, %v5345
        %v5378 = vpack.c.b16 %v5346, %v5346
        %v5379 = vpack.c.b16 %v5347, %v5347
        %v5380 = vpack.c.b16 %v5348, %v5348
        %v5381 = vpack.c.b16 %v5349, %v5349
        %v5382 = vpack.c.b16 %v5350, %v5350
        %v5383 = vpack.c.b16 %v5351, %v5351
        %v5384 = vpack.c.b16 %v5352, %v5352
        %5385 = vrot.lane.b32.xlu0 %v5353, 64
        %v5386 = vpop.permute.xlu0 %5385
        %5387 = vrot.lane.b32.xlu0 %v5354, 64
        %v5388 = vpop.permute.xlu0 %5387
        %5389 = vrot.lane.b32.xlu0 %v5355, 64
        %v5390 = vpop.permute.xlu0 %5389
        %5391 = vrot.lane.b32.xlu0 %v5356, 64
        %v5392 = vpop.permute.xlu0 %5391
        %5393 = vrot.lane.b32.xlu0 %v5357, 64
        %v5394 = vpop.permute.xlu0 %5393
        %5395 = vrot.lane.b32.xlu0 %v5358, 64
        %v5396 = vpop.permute.xlu0 %5395
        %5397 = vrot.lane.b32.xlu0 %v5359, 64
        %v5398 = vpop.permute.xlu0 %5397
        %5399 = vrot.lane.b32.xlu0 %v5360, 64
        %v5400 = vpop.permute.xlu0 %5399
        %5401 = vrot.lane.b32.xlu0 %v5361, 64
        %v5402 = vpop.permute.xlu0 %5401
        %5403 = vrot.lane.b32.xlu0 %v5362, 64
        %v5404 = vpop.permute.xlu0 %5403
        %5405 = vrot.lane.b32.xlu0 %v5363, 64
        %v5406 = vpop.permute.xlu0 %5405
        %5407 = vrot.lane.b32.xlu0 %v5364, 64
        %v5408 = vpop.permute.xlu0 %5407
        %5409 = vrot.lane.b32.xlu0 %v5365, 64
        %v5410 = vpop.permute.xlu0 %5409
        %5411 = vrot.lane.b32.xlu0 %v5366, 64
        %v5412 = vpop.permute.xlu0 %5411
        %5413 = vrot.lane.b32.xlu0 %v5367, 64
        %v5414 = vpop.permute.xlu0 %5413
        %5415 = vrot.lane.b32.xlu0 %v5368, 64
        %v5416 = vpop.permute.xlu0 %5415
        %5417 = vrot.lane.b32.xlu0 %v5369, 64
        %v5418 = vpop.permute.xlu0 %5417
        %5419 = vrot.lane.b32.xlu0 %v5370, 64
        %v5420 = vpop.permute.xlu0 %5419
        %5421 = vrot.lane.b32.xlu0 %v5371, 64
        %v5422 = vpop.permute.xlu0 %5421
        %5423 = vrot.lane.b32.xlu0 %v5372, 64
        %v5424 = vpop.permute.xlu0 %5423
        %5425 = vrot.lane.b32.xlu0 %v5373, 64
        %v5426 = vpop.permute.xlu0 %5425
        %5427 = vrot.lane.b32.xlu0 %v5374, 64
        %v5428 = vpop.permute.xlu0 %5427
        %5429 = vrot.lane.b32.xlu0 %v5375, 64
        %v5430 = vpop.permute.xlu0 %5429
        %5431 = vrot.lane.b32.xlu0 %v5376, 64
        %v5432 = vpop.permute.xlu0 %5431
        %5433 = vrot.lane.b32.xlu0 %v5377, 64
        %v5434 = vpop.permute.xlu0 %5433
        %5435 = vrot.lane.b32.xlu0 %v5378, 64
        %v5436 = vpop.permute.xlu0 %5435
        %5437 = vrot.lane.b32.xlu0 %v5379, 64
        %v5438 = vpop.permute.xlu0 %5437
        %5439 = vrot.lane.b32.xlu0 %v5380, 64
        %v5440 = vpop.permute.xlu0 %5439
        %5441 = vrot.lane.b32.xlu0 %v5381, 64
        %v5442 = vpop.permute.xlu0 %5441
        %5443 = vrot.lane.b32.xlu0 %v5382, 64
        %v5444 = vpop.permute.xlu0 %5443
        %5445 = vrot.lane.b32.xlu0 %v5383, 64
        %v5446 = vpop.permute.xlu0 %5445
        %5447 = vrot.lane.b32.xlu0 %v5384, 64
        %v5448 = vpop.permute.xlu0 %5447
        %v5481 = vunpack.c.l.b16 %v3913
        %v5482 = vunpack.c.l.b16 %v3914
        %v5483 = vunpack.c.l.b16 %v3915
        %v5484 = vunpack.c.l.b16 %v3916
        %v5485 = vunpack.c.l.b16 %v3917
        %v5486 = vunpack.c.l.b16 %v3918
        %v5487 = vunpack.c.l.b16 %v3919
        %v5488 = vunpack.c.l.b16 %v3920
        %v5489 = vunpack.c.l.b16 %v3921
        %v5490 = vunpack.c.l.b16 %v3922
        %v5491 = vunpack.c.l.b16 %v3923
        %v5492 = vunpack.c.l.b16 %v3924
        %v5493 = vunpack.c.l.b16 %v3925
        %v5494 = vunpack.c.l.b16 %v3926
        %v5495 = vunpack.c.l.b16 %v3927
        %v5496 = vunpack.c.l.b16 %v3928
        %v5497 = vunpack.c.l.b16 %v3929
        %v5498 = vunpack.c.l.b16 %v3930
        %v5499 = vunpack.c.l.b16 %v3931
        %v5500 = vunpack.c.l.b16 %v3932
        %v5501 = vunpack.c.l.b16 %v3933
        %v5502 = vunpack.c.l.b16 %v3934
        %v5503 = vunpack.c.l.b16 %v3935
        %v5504 = vunpack.c.l.b16 %v3936
        %v5505 = vunpack.c.l.b16 %v3937
        %v5506 = vunpack.c.l.b16 %v3938
        %v5507 = vunpack.c.l.b16 %v3939
        %v5508 = vunpack.c.l.b16 %v3940
        %v5509 = vunpack.c.l.b16 %v3941
        %v5510 = vunpack.c.l.b16 %v3942
        %v5511 = vunpack.c.l.b16 %v3943
        %v5512 = vunpack.c.l.b16 %v3944
        %v5513 = vpack.c.b16 %v5481, %v5321
        %v5514 = vpack.c.b16 %v5482, %v5322
        %v5515 = vpack.c.b16 %v5483, %v5323
        %v5516 = vpack.c.b16 %v5484, %v5324
        %v5517 = vpack.c.b16 %v5485, %v5325
        %v5518 = vpack.c.b16 %v5486, %v5326
        %v5519 = vpack.c.b16 %v5487, %v5327
        %v5520 = vpack.c.b16 %v5488, %v5328
        %v5521 = vpack.c.b16 %v5489, %v5329
        %v5522 = vpack.c.b16 %v5490, %v5330
        %v5523 = vpack.c.b16 %v5491, %v5331
        %v5524 = vpack.c.b16 %v5492, %v5332
        %v5525 = vpack.c.b16 %v5493, %v5333
        %v5526 = vpack.c.b16 %v5494, %v5334
        %v5527 = vpack.c.b16 %v5495, %v5335
        %v5528 = vpack.c.b16 %v5496, %v5336
        %v5529 = vpack.c.b16 %v5497, %v5337
        %v5530 = vpack.c.b16 %v5498, %v5338
        %v5531 = vpack.c.b16 %v5499, %v5339
        %v5532 = vpack.c.b16 %v5500, %v5340
        %v5533 = vpack.c.b16 %v5501, %v5341
        %v5534 = vpack.c.b16 %v5502, %v5342
        %v5535 = vpack.c.b16 %v5503, %v5343
        %v5536 = vpack.c.b16 %v5504, %v5344
        %v5537 = vpack.c.b16 %v5505, %v5345
        %v5538 = vpack.c.b16 %v5506, %v5346
        %v5539 = vpack.c.b16 %v5507, %v5347
        %v5540 = vpack.c.b16 %v5508, %v5348
        %v5541 = vpack.c.b16 %v5509, %v5349
        %v5542 = vpack.c.b16 %v5510, %v5350
        %v5543 = vpack.c.b16 %v5511, %v5351
        %v5544 = vpack.c.b16 %v5512, %v5352
        %v5546 = vshrl.u32 %v5513, 16
        %v5548 = vshll.u32 %v5513, 16
        %v5550 = vrot.slane %v5548, 1
        %v5551 = vor.u32 %v5546, %v5550
        %v5553 = vshrl.u32 %v5514, 16
        %v5555 = vshll.u32 %v5514, 16
        %v5557 = vrot.slane %v5555, 1
        %v5558 = vor.u32 %v5553, %v5557
        %v5560 = vshrl.u32 %v5515, 16
        %v5562 = vshll.u32 %v5515, 16
        %v5564 = vrot.slane %v5562, 1
        %v5565 = vor.u32 %v5560, %v5564
        %v5567 = vshrl.u32 %v5516, 16
        %v5569 = vshll.u32 %v5516, 16
        %v5571 = vrot.slane %v5569, 1
        %v5572 = vor.u32 %v5567, %v5571
        %v5574 = vshrl.u32 %v5517, 16
        %v5576 = vshll.u32 %v5517, 16
        %v5578 = vrot.slane %v5576, 1
        %v5579 = vor.u32 %v5574, %v5578
        %v5581 = vshrl.u32 %v5518, 16
        %v5583 = vshll.u32 %v5518, 16
        %v5585 = vrot.slane %v5583, 1
        %v5586 = vor.u32 %v5581, %v5585
        %v5588 = vshrl.u32 %v5519, 16
        %v5590 = vshll.u32 %v5519, 16
        %v5592 = vrot.slane %v5590, 1
        %v5593 = vor.u32 %v5588, %v5592
        %v5595 = vshrl.u32 %v5520, 16
        %v5597 = vshll.u32 %v5520, 16
        %v5599 = vrot.slane %v5597, 1
        %v5600 = vor.u32 %v5595, %v5599
        %v5602 = vshrl.u32 %v5521, 16
        %v5604 = vshll.u32 %v5521, 16
        %v5606 = vrot.slane %v5604, 1
        %v5607 = vor.u32 %v5602, %v5606
        %v5609 = vshrl.u32 %v5522, 16
        %v5611 = vshll.u32 %v5522, 16
        %v5613 = vrot.slane %v5611, 1
        %v5614 = vor.u32 %v5609, %v5613
        %v5616 = vshrl.u32 %v5523, 16
        %v5618 = vshll.u32 %v5523, 16
        %v5620 = vrot.slane %v5618, 1
        %v5621 = vor.u32 %v5616, %v5620
        %v5623 = vshrl.u32 %v5524, 16
        %v5625 = vshll.u32 %v5524, 16
        %v5627 = vrot.slane %v5625, 1
        %v5628 = vor.u32 %v5623, %v5627
        %v5630 = vshrl.u32 %v5525, 16
        %v5632 = vshll.u32 %v5525, 16
        %v5634 = vrot.slane %v5632, 1
        %v5635 = vor.u32 %v5630, %v5634
        %v5637 = vshrl.u32 %v5526, 16
        %v5639 = vshll.u32 %v5526, 16
        %v5641 = vrot.slane %v5639, 1
        %v5642 = vor.u32 %v5637, %v5641
        %v5644 = vshrl.u32 %v5527, 16
        %v5646 = vshll.u32 %v5527, 16
        %v5648 = vrot.slane %v5646, 1
        %v5649 = vor.u32 %v5644, %v5648
        %v5651 = vshrl.u32 %v5528, 16
        %v5653 = vshll.u32 %v5528, 16
        %v5655 = vrot.slane %v5653, 1
        %v5656 = vor.u32 %v5651, %v5655
        %v5658 = vshrl.u32 %v5529, 16
        %v5660 = vshll.u32 %v5529, 16
        %v5662 = vrot.slane %v5660, 1
        %v5663 = vor.u32 %v5658, %v5662
        %v5665 = vshrl.u32 %v5530, 16
        %v5667 = vshll.u32 %v5530, 16
        %v5669 = vrot.slane %v5667, 1
        %v5670 = vor.u32 %v5665, %v5669
        %v5672 = vshrl.u32 %v5531, 16
        %v5674 = vshll.u32 %v5531, 16
        %v5676 = vrot.slane %v5674, 1
        %v5677 = vor.u32 %v5672, %v5676
        %v5679 = vshrl.u32 %v5532, 16
        %v5681 = vshll.u32 %v5532, 16
        %v5683 = vrot.slane %v5681, 1
        %v5684 = vor.u32 %v5679, %v5683
        %v5686 = vshrl.u32 %v5533, 16
        %v5688 = vshll.u32 %v5533, 16
        %v5690 = vrot.slane %v5688, 1
        %v5691 = vor.u32 %v5686, %v5690
        %v5693 = vshrl.u32 %v5534, 16
        %v5695 = vshll.u32 %v5534, 16
        %v5697 = vrot.slane %v5695, 1
        %v5698 = vor.u32 %v5693, %v5697
        %v5700 = vshrl.u32 %v5535, 16
        %v5702 = vshll.u32 %v5535, 16
        %v5704 = vrot.slane %v5702, 1
        %v5705 = vor.u32 %v5700, %v5704
        %v5707 = vshrl.u32 %v5536, 16
        %v5709 = vshll.u32 %v5536, 16
        %v5711 = vrot.slane %v5709, 1
        %v5712 = vor.u32 %v5707, %v5711
        %v5714 = vshrl.u32 %v5537, 16
        %v5716 = vshll.u32 %v5537, 16
        %v5718 = vrot.slane %v5716, 1
        %v5719 = vor.u32 %v5714, %v5718
        %v5721 = vshrl.u32 %v5538, 16
        %v5723 = vshll.u32 %v5538, 16
        %v5725 = vrot.slane %v5723, 1
        %v5726 = vor.u32 %v5721, %v5725
        %v5728 = vshrl.u32 %v5539, 16
        %v5730 = vshll.u32 %v5539, 16
        %v5732 = vrot.slane %v5730, 1
        %v5733 = vor.u32 %v5728, %v5732
        %v5735 = vshrl.u32 %v5540, 16
        %v5737 = vshll.u32 %v5540, 16
        %v5739 = vrot.slane %v5737, 1
        %v5740 = vor.u32 %v5735, %v5739
        %v5742 = vshrl.u32 %v5541, 16
        %v5744 = vshll.u32 %v5541, 16
        %v5746 = vrot.slane %v5744, 1
        %v5747 = vor.u32 %v5742, %v5746
        %v5749 = vshrl.u32 %v5542, 16
        %v5751 = vshll.u32 %v5542, 16
        %v5753 = vrot.slane %v5751, 1
        %v5754 = vor.u32 %v5749, %v5753
        %v5756 = vshrl.u32 %v5543, 16
        %v5758 = vshll.u32 %v5543, 16
        %v5760 = vrot.slane %v5758, 1
        %v5761 = vor.u32 %v5756, %v5760
        %v5763 = vshrl.u32 %v5544, 16
        %v5765 = vshll.u32 %v5544, 16
        %v5767 = vrot.slane %v5765, 1
        %v5768 = vor.u32 %v5763, %v5767
        %5769 = vrot.lane.b32.xlu0 %v5551, 96
        %v5770 = vpop.permute.xlu0 %5769
        %5771 = vrot.lane.b32.xlu0 %v5558, 96
        %v5772 = vpop.permute.xlu0 %5771
        %5773 = vrot.lane.b32.xlu0 %v5565, 96
        %v5774 = vpop.permute.xlu0 %5773
        %5775 = vrot.lane.b32.xlu0 %v5572, 96
        %v5776 = vpop.permute.xlu0 %5775
        %5777 = vrot.lane.b32.xlu0 %v5579, 96
        %v5778 = vpop.permute.xlu0 %5777
        %5779 = vrot.lane.b32.xlu0 %v5586, 96
        %v5780 = vpop.permute.xlu0 %5779
        %5781 = vrot.lane.b32.xlu0 %v5593, 96
        %v5782 = vpop.permute.xlu0 %5781
        %5783 = vrot.lane.b32.xlu0 %v5600, 96
        %v5784 = vpop.permute.xlu0 %5783
        %5785 = vrot.lane.b32.xlu0 %v5607, 96
        %v5786 = vpop.permute.xlu0 %5785
        %5787 = vrot.lane.b32.xlu0 %v5614, 96
        %v5788 = vpop.permute.xlu0 %5787
        %5789 = vrot.lane.b32.xlu0 %v5621, 96
        %v5790 = vpop.permute.xlu0 %5789
        %5791 = vrot.lane.b32.xlu0 %v5628, 96
        %v5792 = vpop.permute.xlu0 %5791
        %5793 = vrot.lane.b32.xlu0 %v5635, 96
        %v5794 = vpop.permute.xlu0 %5793
        %5795 = vrot.lane.b32.xlu0 %v5642, 96
        %v5796 = vpop.permute.xlu0 %5795
        %5797 = vrot.lane.b32.xlu0 %v5649, 96
        %v5798 = vpop.permute.xlu0 %5797
        %5799 = vrot.lane.b32.xlu0 %v5656, 96
        %v5800 = vpop.permute.xlu0 %5799
        %5801 = vrot.lane.b32.xlu0 %v5663, 96
        %v5802 = vpop.permute.xlu0 %5801
        %5803 = vrot.lane.b32.xlu0 %v5670, 96
        %v5804 = vpop.permute.xlu0 %5803
        %5805 = vrot.lane.b32.xlu0 %v5677, 96
        %v5806 = vpop.permute.xlu0 %5805
        %5807 = vrot.lane.b32.xlu0 %v5684, 96
        %v5808 = vpop.permute.xlu0 %5807
        %5809 = vrot.lane.b32.xlu0 %v5691, 96
        %v5810 = vpop.permute.xlu0 %5809
        %5811 = vrot.lane.b32.xlu0 %v5698, 96
        %v5812 = vpop.permute.xlu0 %5811
        %5813 = vrot.lane.b32.xlu0 %v5705, 96
        %v5814 = vpop.permute.xlu0 %5813
        %5815 = vrot.lane.b32.xlu0 %v5712, 96
        %v5816 = vpop.permute.xlu0 %5815
        %5817 = vrot.lane.b32.xlu0 %v5719, 96
        %v5818 = vpop.permute.xlu0 %5817
        %5819 = vrot.lane.b32.xlu0 %v5726, 96
        %v5820 = vpop.permute.xlu0 %5819
        %5821 = vrot.lane.b32.xlu0 %v5733, 96
        %v5822 = vpop.permute.xlu0 %5821
        %5823 = vrot.lane.b32.xlu0 %v5740, 96
        %v5824 = vpop.permute.xlu0 %5823
        %5825 = vrot.lane.b32.xlu0 %v5747, 96
        %v5826 = vpop.permute.xlu0 %5825
        %5827 = vrot.lane.b32.xlu0 %v5754, 96
        %v5828 = vpop.permute.xlu0 %5827
        %5829 = vrot.lane.b32.xlu0 %v5761, 96
        %v5830 = vpop.permute.xlu0 %5829
        %5831 = vrot.lane.b32.xlu0 %v5768, 96
        %v5832 = vpop.permute.xlu0 %5831
        %v5865 = vunpack.c.l.b16 %v3945
        %v5866 = vunpack.c.l.b16 %v3946
        %v5867 = vunpack.c.l.b16 %v3947
        %v5868 = vunpack.c.l.b16 %v3948
        %v5869 = vunpack.c.l.b16 %v3949
        %v5870 = vunpack.c.l.b16 %v3950
        %v5871 = vunpack.c.l.b16 %v3951
        %v5872 = vunpack.c.l.b16 %v3952
        %v5873 = vunpack.c.l.b16 %v3953
        %v5874 = vunpack.c.l.b16 %v3954
        %v5875 = vunpack.c.l.b16 %v3955
        %v5876 = vunpack.c.l.b16 %v3956
        %v5877 = vunpack.c.l.b16 %v3957
        %v5878 = vunpack.c.l.b16 %v3958
        %v5879 = vunpack.c.l.b16 %v3959
        %v5880 = vunpack.c.l.b16 %v3960
        %v5881 = vunpack.c.l.b16 %v3961
        %v5882 = vunpack.c.l.b16 %v3962
        %v5883 = vunpack.c.l.b16 %v3963
        %v5884 = vunpack.c.l.b16 %v3964
        %v5885 = vunpack.c.l.b16 %v3965
        %v5886 = vunpack.c.l.b16 %v3966
        %v5887 = vunpack.c.l.b16 %v3967
        %v5888 = vunpack.c.l.b16 %v3968
        %v5889 = vunpack.c.l.b16 %v3969
        %v5890 = vunpack.c.l.b16 %v3970
        %v5891 = vunpack.c.l.b16 %v3971
        %v5892 = vunpack.c.l.b16 %v3972
        %v5893 = vunpack.c.l.b16 %v3973
        %v5894 = vunpack.c.l.b16 %v3974
        %v5895 = vunpack.c.l.b16 %v3975
        %v5896 = vunpack.c.l.b16 %v3976
        %v5897 = vpack.c.b16 %v5481, %v5865
        %v5898 = vpack.c.b16 %v5482, %v5866
        %v5899 = vpack.c.b16 %v5483, %v5867
        %v5900 = vpack.c.b16 %v5484, %v5868
        %v5901 = vpack.c.b16 %v5485, %v5869
        %v5902 = vpack.c.b16 %v5486, %v5870
        %v5903 = vpack.c.b16 %v5487, %v5871
        %v5904 = vpack.c.b16 %v5488, %v5872
        %v5905 = vpack.c.b16 %v5489, %v5873
        %v5906 = vpack.c.b16 %v5490, %v5874
        %v5907 = vpack.c.b16 %v5491, %v5875
        %v5908 = vpack.c.b16 %v5492, %v5876
        %v5909 = vpack.c.b16 %v5493, %v5877
        %v5910 = vpack.c.b16 %v5494, %v5878
        %v5911 = vpack.c.b16 %v5495, %v5879
        %v5912 = vpack.c.b16 %v5496, %v5880
        %v5913 = vpack.c.b16 %v5497, %v5881
        %v5914 = vpack.c.b16 %v5498, %v5882
        %v5915 = vpack.c.b16 %v5499, %v5883
        %v5916 = vpack.c.b16 %v5500, %v5884
        %v5917 = vpack.c.b16 %v5501, %v5885
        %v5918 = vpack.c.b16 %v5502, %v5886
        %v5919 = vpack.c.b16 %v5503, %v5887
        %v5920 = vpack.c.b16 %v5504, %v5888
        %v5921 = vpack.c.b16 %v5505, %v5889
        %v5922 = vpack.c.b16 %v5506, %v5890
        %v5923 = vpack.c.b16 %v5507, %v5891
        %v5924 = vpack.c.b16 %v5508, %v5892
        %v5925 = vpack.c.b16 %v5509, %v5893
        %v5926 = vpack.c.b16 %v5510, %v5894
        %v5927 = vpack.c.b16 %v5511, %v5895
        %v5928 = vpack.c.b16 %v5512, %v5896
        %v5929 = vrot.slane %v5897, 1
        %v5930 = vrot.slane %v5898, 1
        %v5931 = vrot.slane %v5899, 1
        %v5932 = vrot.slane %v5900, 1
        %v5933 = vrot.slane %v5901, 1
        %v5934 = vrot.slane %v5902, 1
        %v5935 = vrot.slane %v5903, 1
        %v5936 = vrot.slane %v5904, 1
        %v5937 = vrot.slane %v5905, 1
        %v5938 = vrot.slane %v5906, 1
        %v5939 = vrot.slane %v5907, 1
        %v5940 = vrot.slane %v5908, 1
        %v5941 = vrot.slane %v5909, 1
        %v5942 = vrot.slane %v5910, 1
        %v5943 = vrot.slane %v5911, 1
        %v5944 = vrot.slane %v5912, 1
        %v5945 = vrot.slane %v5913, 1
        %v5946 = vrot.slane %v5914, 1
        %v5947 = vrot.slane %v5915, 1
        %v5948 = vrot.slane %v5916, 1
        %v5949 = vrot.slane %v5917, 1
        %v5950 = vrot.slane %v5918, 1
        %v5951 = vrot.slane %v5919, 1
        %v5952 = vrot.slane %v5920, 1
        %v5953 = vrot.slane %v5921, 1
        %v5954 = vrot.slane %v5922, 1
        %v5955 = vrot.slane %v5923, 1
        %v5956 = vrot.slane %v5924, 1
        %v5957 = vrot.slane %v5925, 1
        %v5958 = vrot.slane %v5926, 1
        %v5959 = vrot.slane %v5927, 1
        %v5960 = vrot.slane %v5928, 1
        %vm5961 = vcmask 261120
        %v5964 = vsel %vm5961, %v3688, %v4362
        %v5967 = vsel %vm5961, %v3689, %v4364
        %v5970 = vsel %vm5961, %v3690, %v4366
        %v5973 = vsel %vm5961, %v3691, %v4368
        %v5976 = vsel %vm5961, %v3692, %v4370
        %v5979 = vsel %vm5961, %v3693, %v4372
        %v5982 = vsel %vm5961, %v3694, %v4374
        %v5985 = vsel %vm5961, %v3695, %v4376
        %v5988 = vsel %vm5961, %v3696, %v4378
        %v5991 = vsel %vm5961, %v3697, %v4380
        %v5994 = vsel %vm5961, %v3698, %v4382
        %v5997 = vsel %vm5961, %v3699, %v4384
        %v6000 = vsel %vm5961, %v3700, %v4386
        %v6003 = vsel %vm5961, %v3701, %v4388
        %v6006 = vsel %vm5961, %v3702, %v4390
        %v6009 = vsel %vm5961, %v3703, %v4392
        %v6012 = vsel %vm5961, %v3704, %v4394
        %v6015 = vsel %vm5961, %v3705, %v4396
        %v6018 = vsel %vm5961, %v3706, %v4398
        %v6021 = vsel %vm5961, %v3707, %v4400
        %v6024 = vsel %vm5961, %v3708, %v4402
        %v6027 = vsel %vm5961, %v3709, %v4404
        %v6030 = vsel %vm5961, %v3710, %v4406
        %v6033 = vsel %vm5961, %v3711, %v4408
        %v6036 = vsel %vm5961, %v3712, %v4410
        %v6039 = vsel %vm5961, %v3713, %v4412
        %v6042 = vsel %vm5961, %v3714, %v4414
        %v6045 = vsel %vm5961, %v3715, %v4416
        %v6048 = vsel %vm5961, %v3716, %v4418
        %v6051 = vsel %vm5961, %v3717, %v4420
        %v6054 = vsel %vm5961, %v3718, %v4422
        %v6057 = vsel %vm5961, %v3719, %v4424
        %v6059 = vsel %vm2259, %v5964, %v4554
        %v6061 = vsel %vm2259, %v5967, %v4556
        %v6063 = vsel %vm2259, %v5970, %v4558
        %v6065 = vsel %vm2259, %v5973, %v4560
        %v6067 = vsel %vm2259, %v5976, %v4562
        %v6069 = vsel %vm2259, %v5979, %v4564
        %v6071 = vsel %vm2259, %v5982, %v4566
        %v6073 = vsel %vm2259, %v5985, %v4568
        %v6075 = vsel %vm2259, %v5988, %v4570
        %v6077 = vsel %vm2259, %v5991, %v4572
        %v6079 = vsel %vm2259, %v5994, %v4574
        %v6081 = vsel %vm2259, %v5997, %v4576
        %v6083 = vsel %vm2259, %v6000, %v4578
        %v6085 = vsel %vm2259, %v6003, %v4580
        %v6087 = vsel %vm2259, %v6006, %v4582
        %v6089 = vsel %vm2259, %v6009, %v4584
        %v6091 = vsel %vm2259, %v6012, %v4586
        %v6093 = vsel %vm2259, %v6015, %v4588
        %v6095 = vsel %vm2259, %v6018, %v4590
        %v6097 = vsel %vm2259, %v6021, %v4592
        %v6099 = vsel %vm2259, %v6024, %v4594
        %v6101 = vsel %vm2259, %v6027, %v4596
        %v6103 = vsel %vm2259, %v6030, %v4598
        %v6105 = vsel %vm2259, %v6033, %v4600
        %v6107 = vsel %vm2259, %v6036, %v4602
        %v6109 = vsel %vm2259, %v6039, %v4604
        %v6111 = vsel %vm2259, %v6042, %v4606
        %v6113 = vsel %vm2259, %v6045, %v4608
        %v6115 = vsel %vm2259, %v6048, %v4610
        %v6117 = vsel %vm2259, %v6051, %v4612
        %v6119 = vsel %vm2259, %v6054, %v4614
        %v6121 = vsel %vm2259, %v6057, %v4616
        %vm6122 = vcmask 785408
        %v6124 = vsel %vm6122, %v6059, %v4714
        %v6126 = vsel %vm6122, %v6061, %v4716
        %v6128 = vsel %vm6122, %v6063, %v4718
        %v6130 = vsel %vm6122, %v6065, %v4720
        %v6132 = vsel %vm6122, %v6067, %v4722
        %v6134 = vsel %vm6122, %v6069, %v4724
        %v6136 = vsel %vm6122, %v6071, %v4726
        %v6138 = vsel %vm6122, %v6073, %v4728
        %v6140 = vsel %vm6122, %v6075, %v4730
        %v6142 = vsel %vm6122, %v6077, %v4732
        %v6144 = vsel %vm6122, %v6079, %v4734
        %v6146 = vsel %vm6122, %v6081, %v4736
        %v6148 = vsel %vm6122, %v6083, %v4738
        %v6150 = vsel %vm6122, %v6085, %v4740
        %v6152 = vsel %vm6122, %v6087, %v4742
        %v6154 = vsel %vm6122, %v6089, %v4744
        %v6156 = vsel %vm6122, %v6091, %v4746
        %v6158 = vsel %vm6122, %v6093, %v4748
        %v6160 = vsel %vm6122, %v6095, %v4750
        %v6162 = vsel %vm6122, %v6097, %v4752
        %v6164 = vsel %vm6122, %v6099, %v4754
        %v6166 = vsel %vm6122, %v6101, %v4756
        %v6168 = vsel %vm6122, %v6103, %v4758
        %v6170 = vsel %vm6122, %v6105, %v4760
        %v6172 = vsel %vm6122, %v6107, %v4762
        %v6174 = vsel %vm6122, %v6109, %v4764
        %v6176 = vsel %vm6122, %v6111, %v4766
        %v6178 = vsel %vm6122, %v6113, %v4768
        %v6180 = vsel %vm6122, %v6115, %v4770
        %v6182 = vsel %vm6122, %v6117, %v4772
        %v6184 = vsel %vm6122, %v6119, %v4774
        %v6186 = vsel %vm6122, %v6121, %v4776
        %v6189 = vsel %vm5961, %v4879, %v5226
        %v6192 = vsel %vm5961, %v4886, %v5228
        %v6195 = vsel %vm5961, %v4893, %v5230
        %v6198 = vsel %vm5961, %v4900, %v5232
        %v6201 = vsel %vm5961, %v4907, %v5234
        %v6204 = vsel %vm5961, %v4914, %v5236
        %v6207 = vsel %vm5961, %v4921, %v5238
        %v6210 = vsel %vm5961, %v4928, %v5240
        %v6213 = vsel %vm5961, %v4935, %v5242
        %v6216 = vsel %vm5961, %v4942, %v5244
        %v6219 = vsel %vm5961, %v4949, %v5246
        %v6222 = vsel %vm5961, %v4956, %v5248
        %v6225 = vsel %vm5961, %v4963, %v5250
        %v6228 = vsel %vm5961, %v4970, %v5252
        %v6231 = vsel %vm5961, %v4977, %v5254
        %v6234 = vsel %vm5961, %v4984, %v5256
        %v6237 = vsel %vm5961, %v4991, %v5258
        %v6240 = vsel %vm5961, %v4998, %v5260
        %v6243 = vsel %vm5961, %v5005, %v5262
        %v6246 = vsel %vm5961, %v5012, %v5264
        %v6249 = vsel %vm5961, %v5019, %v5266
        %v6252 = vsel %vm5961, %v5026, %v5268
        %v6255 = vsel %vm5961, %v5033, %v5270
        %v6258 = vsel %vm5961, %v5040, %v5272
        %v6261 = vsel %vm5961, %v5047, %v5274
        %v6264 = vsel %vm5961, %v5054, %v5276
        %v6267 = vsel %vm5961, %v5061, %v5278
        %v6270 = vsel %vm5961, %v5068, %v5280
        %v6273 = vsel %vm5961, %v5075, %v5282
        %v6276 = vsel %vm5961, %v5082, %v5284
        %v6279 = vsel %vm5961, %v5089, %v5286
        %v6282 = vsel %vm5961, %v5096, %v5288
        %v6284 = vsel %vm2259, %v6189, %v5386
        %v6286 = vsel %vm2259, %v6192, %v5388
        %v6288 = vsel %vm2259, %v6195, %v5390
        %v6290 = vsel %vm2259, %v6198, %v5392
        %v6292 = vsel %vm2259, %v6201, %v5394
        %v6294 = vsel %vm2259, %v6204, %v5396
        %v6296 = vsel %vm2259, %v6207, %v5398
        %v6298 = vsel %vm2259, %v6210, %v5400
        %v6300 = vsel %vm2259, %v6213, %v5402
        %v6302 = vsel %vm2259, %v6216, %v5404
        %v6304 = vsel %vm2259, %v6219, %v5406
        %v6306 = vsel %vm2259, %v6222, %v5408
        %v6308 = vsel %vm2259, %v6225, %v5410
        %v6310 = vsel %vm2259, %v6228, %v5412
        %v6312 = vsel %vm2259, %v6231, %v5414
        %v6314 = vsel %vm2259, %v6234, %v5416
        %v6316 = vsel %vm2259, %v6237, %v5418
        %v6318 = vsel %vm2259, %v6240, %v5420
        %v6320 = vsel %vm2259, %v6243, %v5422
        %v6322 = vsel %vm2259, %v6246, %v5424
        %v6324 = vsel %vm2259, %v6249, %v5426
        %v6326 = vsel %vm2259, %v6252, %v5428
        %v6328 = vsel %vm2259, %v6255, %v5430
        %v6330 = vsel %vm2259, %v6258, %v5432
        %v6332 = vsel %vm2259, %v6261, %v5434
        %v6334 = vsel %vm2259, %v6264, %v5436
        %v6336 = vsel %vm2259, %v6267, %v5438
        %v6338 = vsel %vm2259, %v6270, %v5440
        %v6340 = vsel %vm2259, %v6273, %v5442
        %v6342 = vsel %vm2259, %v6276, %v5444
        %v6344 = vsel %vm2259, %v6279, %v5446
        %v6346 = vsel %vm2259, %v6282, %v5448
        %v6348 = vsel %vm6122, %v6284, %v5770
        %v6350 = vsel %vm6122, %v6286, %v5772
        %v6352 = vsel %vm6122, %v6288, %v5774
        %v6354 = vsel %vm6122, %v6290, %v5776
        %v6356 = vsel %vm6122, %v6292, %v5778
        %v6358 = vsel %vm6122, %v6294, %v5780
        %v6360 = vsel %vm6122, %v6296, %v5782
        %v6362 = vsel %vm6122, %v6298, %v5784
        %v6364 = vsel %vm6122, %v6300, %v5786
        %v6366 = vsel %vm6122, %v6302, %v5788
        %v6368 = vsel %vm6122, %v6304, %v5790
        %v6370 = vsel %vm6122, %v6306, %v5792
        %v6372 = vsel %vm6122, %v6308, %v5794
        %v6374 = vsel %vm6122, %v6310, %v5796
        %v6376 = vsel %vm6122, %v6312, %v5798
        %v6378 = vsel %vm6122, %v6314, %v5800
        %v6380 = vsel %vm6122, %v6316, %v5802
        %v6382 = vsel %vm6122, %v6318, %v5804
        %v6384 = vsel %vm6122, %v6320, %v5806
        %v6386 = vsel %vm6122, %v6322, %v5808
        %v6388 = vsel %vm6122, %v6324, %v5810
        %v6390 = vsel %vm6122, %v6326, %v5812
        %v6392 = vsel %vm6122, %v6328, %v5814
        %v6394 = vsel %vm6122, %v6330, %v5816
        %v6396 = vsel %vm6122, %v6332, %v5818
        %v6398 = vsel %vm6122, %v6334, %v5820
        %v6400 = vsel %vm6122, %v6336, %v5822
        %v6402 = vsel %vm6122, %v6338, %v5824
        %v6404 = vsel %vm6122, %v6340, %v5826
        %v6406 = vsel %vm6122, %v6342, %v5828
        %v6408 = vsel %vm6122, %v6344, %v5830
        %v6410 = vsel %vm6122, %v6346, %v5832
        %v6475 = vunpack.c.l.b16 %v6124
        %v6476 = vunpack.c.l.b16 %v6348
        %v6477 = vunpack.c.l.b16 %v5929
        %v6478 = vunpack.c.l.b16 %v6126
        %v6479 = vunpack.c.l.b16 %v6350
        %v6480 = vunpack.c.l.b16 %v5930
        %v6481 = vunpack.c.l.b16 %v6128
        %v6482 = vunpack.c.l.b16 %v6352
        %v6483 = vunpack.c.l.b16 %v5931
        %v6484 = vunpack.c.l.b16 %v6130
        %v6485 = vunpack.c.l.b16 %v6354
        %v6486 = vunpack.c.l.b16 %v5932
        %v6487 = vunpack.c.l.b16 %v6132
        %v6488 = vunpack.c.l.b16 %v6356
        %v6489 = vunpack.c.l.b16 %v5933
        %v6490 = vunpack.c.l.b16 %v6134
        %v6491 = vunpack.c.l.b16 %v6358
        %v6492 = vunpack.c.l.b16 %v5934
        %v6493 = vunpack.c.l.b16 %v6136
        %v6494 = vunpack.c.l.b16 %v6360
        %v6495 = vunpack.c.l.b16 %v5935
        %v6496 = vunpack.c.l.b16 %v6138
        %v6497 = vunpack.c.l.b16 %v6362
        %v6498 = vunpack.c.l.b16 %v5936
        %v6499 = vunpack.c.l.b16 %v6140
        %v6500 = vunpack.c.l.b16 %v6364
        %v6501 = vunpack.c.l.b16 %v5937
        %v6502 = vunpack.c.l.b16 %v6142
        %v6503 = vunpack.c.l.b16 %v6366
        %v6504 = vunpack.c.l.b16 %v5938
        %v6505 = vunpack.c.l.b16 %v6144
        %v6506 = vunpack.c.l.b16 %v6368
        %v6507 = vunpack.c.l.b16 %v5939
        %v6508 = vunpack.c.l.b16 %v6146
        %v6509 = vunpack.c.l.b16 %v6370
        %v6510 = vunpack.c.l.b16 %v5940
        %v6511 = vunpack.c.l.b16 %v6148
        %v6512 = vunpack.c.l.b16 %v6372
        %v6513 = vunpack.c.l.b16 %v5941
        %v6514 = vunpack.c.l.b16 %v6150
        %v6515 = vunpack.c.l.b16 %v6374
        %v6516 = vunpack.c.l.b16 %v5942
        %v6517 = vunpack.c.l.b16 %v6152
        %v6518 = vunpack.c.l.b16 %v6376
        %v6519 = vunpack.c.l.b16 %v5943
        %v6520 = vunpack.c.l.b16 %v6154
        %v6521 = vunpack.c.l.b16 %v6378
        %v6522 = vunpack.c.l.b16 %v5944
        %v6523 = vunpack.c.l.b16 %v6156
        %v6524 = vunpack.c.l.b16 %v6380
        %v6525 = vunpack.c.l.b16 %v5945
        %v6526 = vunpack.c.l.b16 %v6158
        %v6527 = vunpack.c.l.b16 %v6382
        %v6528 = vunpack.c.l.b16 %v5946
        %v6529 = vunpack.c.l.b16 %v6160
        %v6530 = vunpack.c.l.b16 %v6384
        %v6531 = vunpack.c.l.b16 %v5947
        %v6532 = vunpack.c.l.b16 %v6162
        %v6533 = vunpack.c.l.b16 %v6386
        %v6534 = vunpack.c.l.b16 %v5948
        %v6535 = vunpack.c.l.b16 %v6164
        %v6536 = vunpack.c.l.b16 %v6388
        %v6537 = vunpack.c.l.b16 %v5949
        %v6538 = vunpack.c.l.b16 %v6166
        %v6539 = vunpack.c.l.b16 %v6390
        %v6540 = vunpack.c.l.b16 %v5950
        %v6541 = vunpack.c.l.b16 %v6168
        %v6542 = vunpack.c.l.b16 %v6392
        %v6543 = vunpack.c.l.b16 %v5951
        %v6544 = vunpack.c.l.b16 %v6170
        %v6545 = vunpack.c.l.b16 %v6394
        %v6546 = vunpack.c.l.b16 %v5952
        %v6547 = vunpack.c.l.b16 %v6172
        %v6548 = vunpack.c.l.b16 %v6396
        %v6549 = vunpack.c.l.b16 %v5953
        %v6550 = vunpack.c.l.b16 %v6174
        %v6551 = vunpack.c.l.b16 %v6398
        %v6552 = vunpack.c.l.b16 %v5954
        %v6553 = vunpack.c.l.b16 %v6176
        %v6554 = vunpack.c.l.b16 %v6400
        %v6555 = vunpack.c.l.b16 %v5955
        %v6556 = vunpack.c.l.b16 %v6178
        %v6557 = vunpack.c.l.b16 %v6402
        %v6558 = vunpack.c.l.b16 %v5956
        %v6559 = vunpack.c.l.b16 %v6180
        %v6560 = vunpack.c.l.b16 %v6404
        %v6561 = vunpack.c.l.b16 %v5957
        %v6562 = vunpack.c.l.b16 %v6182
        %v6563 = vunpack.c.l.b16 %v6406
        %v6564 = vunpack.c.l.b16 %v5958
        %v6565 = vunpack.c.l.b16 %v6184
        %v6566 = vunpack.c.l.b16 %v6408
        %v6567 = vunpack.c.l.b16 %v5959
        %v6568 = vunpack.c.l.b16 %v6186
        %v6569 = vunpack.c.l.b16 %v6410
        %v6570 = vunpack.c.l.b16 %v5960
        %v6571 = vld [vmem:[%s4] sm:$0xf]
        %v6572 = vld [vmem:[%s4 + $0x4] sm:$0xf]
        %v6573 = vld [vmem:[%s4 + $0x8] sm:$0xf]
        %v6574 = vld [vmem:[%s4 + $0xc] sm:$0xf]
        %v6575 = vld [vmem:[%s4 + $0x10] sm:$0xf]
        %v6576 = vld [vmem:[%s4 + $0x14] sm:$0xf]
        %v6577 = vld [vmem:[%s4 + $0x18] sm:$0xf]
        %v6578 = vld [vmem:[%s4 + $0x1c] sm:$0xf]
        %v6579 = vld [vmem:[%s4 + $0x20] sm:$0xf]
        %v6580 = vld [vmem:[%s4 + $0x24] sm:$0xf]
        %v6581 = vld [vmem:[%s4 + $0x28] sm:$0xf]
        %v6582 = vld [vmem:[%s4 + $0x2c] sm:$0xf]
        %v6583 = vld [vmem:[%s4 + $0x30] sm:$0xf]
        %v6584 = vld [vmem:[%s4 + $0x34] sm:$0xf]
        %v6585 = vld [vmem:[%s4 + $0x38] sm:$0xf]
        %v6586 = vld [vmem:[%s4 + $0x3c] sm:$0xf]
        %v6587 = vld [vmem:[%s4 + $0x40] sm:$0xf]
        %v6588 = vld [vmem:[%s4 + $0x44] sm:$0xf]
        %v6589 = vld [vmem:[%s4 + $0x48] sm:$0xf]
        %v6590 = vld [vmem:[%s4 + $0x4c] sm:$0xf]
        %v6591 = vld [vmem:[%s4 + $0x50] sm:$0xf]
        %v6592 = vld [vmem:[%s4 + $0x54] sm:$0xf]
        %v6593 = vld [vmem:[%s4 + $0x58] sm:$0xf]
        %v6594 = vld [vmem:[%s4 + $0x5c] sm:$0xf]
        %v6595 = vld [vmem:[%s4 + $0x60] sm:$0xf]
        %v6596 = vld [vmem:[%s4 + $0x64] sm:$0xf]
        %v6597 = vld [vmem:[%s4 + $0x68] sm:$0xf]
        %v6598 = vld [vmem:[%s4 + $0x6c] sm:$0xf]
        %v6599 = vld [vmem:[%s4 + $0x70] sm:$0xf]
        %v6600 = vld [vmem:[%s4 + $0x74] sm:$0xf]
        %v6601 = vld [vmem:[%s4 + $0x78] sm:$0xf]
        %v6602 = vld [vmem:[%s4 + $0x7c] sm:$0xf]
        %v6603 = vld [vmem:[%s4 + $0x80] sm:$0xf]
        %v6604 = vld [vmem:[%s4 + $0x84] sm:$0xf]
        %v6605 = vld [vmem:[%s4 + $0x88] sm:$0xf]
        %v6606 = vld [vmem:[%s4 + $0x8c] sm:$0xf]
        %v6607 = vpack.c.b16 %v6478, %v6475
        %v6608 = vpack.c.b16 %v6479, %v6476
        %v6609 = vpack.c.b16 %v6480, %v6477
        %v6610 = vpack.c.b16 %v6484, %v6481
        %v6611 = vpack.c.b16 %v6485, %v6482
        %v6612 = vpack.c.b16 %v6486, %v6483
        %v6613 = vpack.c.b16 %v6490, %v6487
        %v6614 = vpack.c.b16 %v6491, %v6488
        %v6615 = vpack.c.b16 %v6492, %v6489
        %v6616 = vpack.c.b16 %v6496, %v6493
        %v6617 = vpack.c.b16 %v6497, %v6494
        %v6618 = vpack.c.b16 %v6498, %v6495
        %v6619 = vpack.c.b16 %v6502, %v6499
        %v6620 = vpack.c.b16 %v6503, %v6500
        %v6621 = vpack.c.b16 %v6504, %v6501
        %v6622 = vpack.c.b16 %v6508, %v6505
        %v6623 = vpack.c.b16 %v6509, %v6506
        %v6624 = vpack.c.b16 %v6510, %v6507
        %v6625 = vpack.c.b16 %v6514, %v6511
        %v6626 = vpack.c.b16 %v6515, %v6512
        %v6627 = vpack.c.b16 %v6516, %v6513
        %v6628 = vpack.c.b16 %v6520, %v6517
        %v6629 = vpack.c.b16 %v6521, %v6518
        %v6630 = vpack.c.b16 %v6522, %v6519
        %v6631 = vpack.c.b16 %v6526, %v6523
        %v6632 = vpack.c.b16 %v6527, %v6524
        %v6633 = vpack.c.b16 %v6528, %v6525
        %v6634 = vpack.c.b16 %v6532, %v6529
        %v6635 = vpack.c.b16 %v6533, %v6530
        %v6636 = vpack.c.b16 %v6534, %v6531
        %v6637 = vpack.c.b16 %v6538, %v6535
        %v6638 = vpack.c.b16 %v6539, %v6536
        %v6639 = vpack.c.b16 %v6540, %v6537
        %v6640 = vpack.c.b16 %v6544, %v6541
        %v6641 = vpack.c.b16 %v6545, %v6542
        %v6642 = vpack.c.b16 %v6546, %v6543
        %v6643 = vpack.c.b16 %v6550, %v6547
        %v6644 = vpack.c.b16 %v6551, %v6548
        %v6645 = vpack.c.b16 %v6552, %v6549
        %v6646 = vpack.c.b16 %v6556, %v6553
        %v6647 = vpack.c.b16 %v6557, %v6554
        %v6648 = vpack.c.b16 %v6558, %v6555
        %v6649 = vpack.c.b16 %v6562, %v6559
        %v6650 = vpack.c.b16 %v6563, %v6560
        %v6651 = vpack.c.b16 %v6564, %v6561
        %v6652 = vpack.c.b16 %v6568, %v6565
        %v6653 = vpack.c.b16 %v6569, %v6566
        %v6654 = vpack.c.b16 %v6570, %v6567
        %v6723 = vunpack.c.l.b16 %v6571
        %v6724 = vunpack.c.l.b16 %v6572
        %v6725 = vunpack.c.l.b16 %v6573
        %v6726 = vunpack.c.l.b16 %v6574
        %v6727 = vunpack.c.l.b16 %v6575
        %v6728 = vunpack.c.l.b16 %v6576
        %v6729 = vunpack.c.l.b16 %v6577
        %v6730 = vunpack.c.l.b16 %v6578
        %v6731 = vunpack.c.l.b16 %v6579
        %v6732 = vunpack.c.l.b16 %v6580
        %v6733 = vunpack.c.l.b16 %v6581
        %v6734 = vunpack.c.l.b16 %v6582
        %v6735 = vunpack.c.l.b16 %v6583
        %v6736 = vunpack.c.l.b16 %v6584
        %v6737 = vunpack.c.l.b16 %v6585
        %v6738 = vunpack.c.l.b16 %v6586
        %v6739 = vunpack.c.l.b16 %v6587
        %v6740 = vunpack.c.l.b16 %v6588
        %v6741 = vunpack.c.l.b16 %v6589
        %v6742 = vunpack.c.l.b16 %v6590
        %v6743 = vunpack.c.l.b16 %v6591
        %v6744 = vunpack.c.l.b16 %v6592
        %v6745 = vunpack.c.l.b16 %v6593
        %v6746 = vunpack.c.l.b16 %v6594
        %v6747 = vunpack.c.l.b16 %v6595
        %v6748 = vunpack.c.l.b16 %v6596
        %v6749 = vunpack.c.l.b16 %v6597
        %v6750 = vunpack.c.l.b16 %v6598
        %v6751 = vunpack.c.l.b16 %v6599
        %v6752 = vunpack.c.l.b16 %v6600
        %v6753 = vunpack.c.l.b16 %v6601
        %v6754 = vunpack.c.l.b16 %v6602
        %v6755 = vunpack.c.l.b16 %v6603
        %v6756 = vunpack.c.l.b16 %v6604
        %v6757 = vunpack.c.l.b16 %v6605
        %v6758 = vunpack.c.l.b16 %v6606
        %v6759 = vpack.c.b16 %v6724, %v6723
        %v6760 = vpack.c.b16 %v6726, %v6725
        %v6761 = vpack.c.b16 %v6728, %v6727
        %v6762 = vpack.c.b16 %v6730, %v6729
        %v6763 = vpack.c.b16 %v6732, %v6731
        %v6764 = vpack.c.b16 %v6734, %v6733
        %v6765 = vpack.c.b16 %v6736, %v6735
        %v6766 = vpack.c.b16 %v6738, %v6737
        %v6767 = vpack.c.b16 %v6740, %v6739
        %v6768 = vpack.c.b16 %v6742, %v6741
        %v6769 = vpack.c.b16 %v6744, %v6743
        %v6770 = vpack.c.b16 %v6746, %v6745
        %v6771 = vpack.c.b16 %v6748, %v6747
        %v6772 = vpack.c.b16 %v6750, %v6749
        %v6773 = vpack.c.b16 %v6752, %v6751
        %v6774 = vpack.c.b16 %v6754, %v6753
        %v6775 = vpack.c.b16 %v6756, %v6755
        %v6776 = vpack.c.b16 %v6758, %v6757
        %v6796 = vsel %vm5961, %v6609, 0
        %v6799 = vsel %vm5961, %v6612, 0
        %v6802 = vsel %vm5961, %v6615, 0
        %v6805 = vsel %vm5961, %v6618, 0
        %v6808 = vsel %vm5961, %v6621, 0
        %v6811 = vsel %vm5961, %v6624, 0
        %v6814 = vsel %vm5961, %v6627, 0
        %v6817 = vsel %vm5961, %v6630, 0
        %v6820 = vsel %vm5961, %v6633, 0
        %v6823 = vsel %vm5961, %v6636, 0
        %v6826 = vsel %vm5961, %v6639, 0
        %v6829 = vsel %vm5961, %v6642, 0
        %v6832 = vsel %vm5961, %v6645, 0
        %v6835 = vsel %vm5961, %v6648, 0
        %v6838 = vsel %vm5961, %v6651, 0
        %v6841 = vsel %vm5961, %v6654, 0
        %6843 = vmatprep.subr.bf16.mxu0 0
        %6844 = vmatpush1.bf16.msra.mxu0 %v6759
        %6845 = vmatprep.subr.bf16.mxu0 0
        %6846 = vmatpush1.bf16.msra.mxu0 %v6760
        %6847 = vmatprep.subr.bf16.mxu0 0
        %6848 = vmatpush1.bf16.msra.mxu0 %v6761
        %6849 = vmatprep.subr.bf16.mxu0 0
        %6850 = vmatpush1.bf16.msra.mxu0 %v6762
        %6851 = vmatprep.subr.bf16.mxu0 0
        %6852 = vmatpush1.bf16.msra.mxu0 %v6763
        %6853 = vmatprep.subr.bf16.mxu0 0
        %6854 = vmatpush1.bf16.msra.mxu0 %v6764
        %6855 = vmatprep.subr.bf16.mxu0 0
        %6856 = vmatpush1.bf16.msra.mxu0 %v6765
        %6857 = vmatprep.subr.bf16.mxu0 0
        %6858 = vmatpush1.bf16.msra.mxu0 %v6766
        %6859 = vmatprep.subr.bf16.mxu0 0
        %6860 = vmatpush1.bf16.msra.mxu0 %v6767
        %6861 = vmatprep.subr.bf16.mxu0 0
        %6862 = vmatpush1.bf16.msra.mxu0 %v6768
        %6863 = vmatprep.subr.bf16.mxu0 0
        %6864 = vmatpush1.bf16.msra.mxu0 %v6769
        %6865 = vmatprep.subr.bf16.mxu0 0
        %6866 = vmatpush1.bf16.msra.mxu0 %v6770
        %6867 = vmatprep.subr.bf16.mxu0 0
        %6868 = vmatpush1.bf16.msra.mxu0 %v6771
        %6869 = vmatprep.subr.bf16.mxu0 0
        %6870 = vmatpush1.bf16.msra.mxu0 %v6772
        %6871 = vmatprep.subr.bf16.mxu0 0
        %6872 = vmatpush1.bf16.msra.mxu0 %v6773
        %6873 = vmatprep.subr.bf16.mxu0 0
        %6874 = vmatpush1.bf16.msra.mxu0 %v6774
        %6875 = vmatprep.mubr.bf16.mxu0 %v6608
        %6876 = vmatmul.mubr.bf16.gmra.mrb[0].mxu0 %v6607
        %v6877 = vpop.f32.mrb[0].mxu0
        %v6878 = vadd.f32 0.0, %v6877
        %v6879 = vpop.f32.mrb[0].mxu0
        %v6880 = vpop.f32.mrb[0].mxu0
        %v6881 = vadd.f32 0.0, %v6880
        %v6882 = vpop.f32.mrb[0].mxu0
        %6883 = vmatprep.mubr.bf16.mxu0 %v6611
        %6884 = vmatmul.mubr.bf16.gmra.mrb[0].mxu0 %v6610
        %v6885 = vpop.f32.mrb[0].mxu0
        %v6886 = vadd.f32 0.0, %v6885
        %v6887 = vpop.f32.mrb[0].mxu0
        %v6888 = vpop.f32.mrb[0].mxu0
        %v6889 = vadd.f32 0.0, %v6888
        %v6890 = vpop.f32.mrb[0].mxu0
        %6891 = vmatprep.mubr.bf16.mxu0 %v6614
        %6892 = vmatmul.mubr.bf16.gmra.mrb[0].mxu0 %v6613
        %v6893 = vpop.f32.mrb[0].mxu0
        %v6894 = vadd.f32 0.0, %v6893
        %v6895 = vpop.f32.mrb[0].mxu0
        %v6896 = vpop.f32.mrb[0].mxu0
        %v6897 = vadd.f32 0.0, %v6896
        %v6898 = vpop.f32.mrb[0].mxu0
        %6899 = vmatprep.mubr.bf16.mxu0 %v6617
        %6900 = vmatmul.mubr.bf16.gmra.mrb[0].mxu0 %v6616
        %v6901 = vpop.f32.mrb[0].mxu0
        %v6902 = vadd.f32 0.0, %v6901
        %v6903 = vpop.f32.mrb[0].mxu0
        %v6904 = vpop.f32.mrb[0].mxu0
        %v6905 = vadd.f32 0.0, %v6904
        %v6906 = vpop.f32.mrb[0].mxu0
        %6907 = vmatprep.mubr.bf16.mxu0 %v6620
        %6908 = vmatmul.mubr.bf16.gmra.mrb[0].mxu0 %v6619
        %v6909 = vpop.f32.mrb[0].mxu0
        %v6910 = vadd.f32 0.0, %v6909
        %v6911 = vpop.f32.mrb[0].mxu0
        %v6912 = vpop.f32.mrb[0].mxu0
        %v6913 = vadd.f32 0.0, %v6912
        %v6914 = vpop.f32.mrb[0].mxu0
        %6915 = vmatprep.mubr.bf16.mxu0 %v6623
        %6916 = vmatmul.mubr.bf16.gmra.mrb[0].mxu0 %v6622
        %v6917 = vpop.f32.mrb[0].mxu0
        %v6918 = vadd.f32 0.0, %v6917
        %v6919 = vpop.f32.mrb[0].mxu0
        %v6920 = vpop.f32.mrb[0].mxu0
        %v6921 = vadd.f32 0.0, %v6920
        %v6922 = vpop.f32.mrb[0].mxu0
        %6923 = vmatprep.mubr.bf16.mxu0 %v6626
        %6924 = vmatmul.mubr.bf16.gmra.mrb[0].mxu0 %v6625
        %v6925 = vpop.f32.mrb[0].mxu0
        %v6926 = vadd.f32 0.0, %v6925
        %v6927 = vpop.f32.mrb[0].mxu0
        %v6928 = vpop.f32.mrb[0].mxu0
        %v6929 = vadd.f32 0.0, %v6928
        %v6930 = vpop.f32.mrb[0].mxu0
        %6931 = vmatprep.mubr.bf16.mxu0 %v6629
        %6932 = vmatmul.mubr.bf16.gmra.mrb[0].mxu0 %v6628
        %v6933 = vpop.f32.mrb[0].mxu0
        %v6934 = vadd.f32 0.0, %v6933
        %v6935 = vpop.f32.mrb[0].mxu0
        %v6936 = vpop.f32.mrb[0].mxu0
        %v6937 = vadd.f32 0.0, %v6936
        %v6938 = vpop.f32.mrb[0].mxu0
        %6939 = vmatprep.mubr.bf16.mxu0 %v6632
        %6940 = vmatmul.mubr.bf16.gmra.mrb[0].mxu0 %v6631
        %v6941 = vpop.f32.mrb[0].mxu0
        %v6942 = vadd.f32 0.0, %v6941
        %v6943 = vpop.f32.mrb[0].mxu0
        %v6944 = vpop.f32.mrb[0].mxu0
        %v6945 = vadd.f32 0.0, %v6944
        %v6946 = vpop.f32.mrb[0].mxu0
        %6947 = vmatprep.mubr.bf16.mxu0 %v6635
        %6948 = vmatmul.mubr.bf16.gmra.mrb[0].mxu0 %v6634
        %v6949 = vpop.f32.mrb[0].mxu0
        %v6950 = vadd.f32 0.0, %v6949
        %v6951 = vpop.f32.mrb[0].mxu0
        %v6952 = vpop.f32.mrb[0].mxu0
        %v6953 = vadd.f32 0.0, %v6952
        %v6954 = vpop.f32.mrb[0].mxu0
        %6955 = vmatprep.mubr.bf16.mxu0 %v6638
        %6956 = vmatmul.mubr.bf16.gmra.mrb[0].mxu0 %v6637
        %v6957 = vpop.f32.mrb[0].mxu0
        %v6958 = vadd.f32 0.0, %v6957
        %v6959 = vpop.f32.mrb[0].mxu0
        %v6960 = vpop.f32.mrb[0].mxu0
        %v6961 = vadd.f32 0.0, %v6960
        %v6962 = vpop.f32.mrb[0].mxu0
        %6963 = vmatprep.mubr.bf16.mxu0 %v6641
        %6964 = vmatmul.mubr.bf16.gmra.mrb[0].mxu0 %v6640
        %v6965 = vpop.f32.mrb[0].mxu0
        %v6966 = vadd.f32 0.0, %v6965
        %v6967 = vpop.f32.mrb[0].mxu0
        %v6968 = vpop.f32.mrb[0].mxu0
        %v6969 = vadd.f32 0.0, %v6968
        %v6970 = vpop.f32.mrb[0].mxu0
        %6971 = vmatprep.mubr.bf16.mxu0 %v6644
        %6972 = vmatmul.mubr.bf16.gmra.mrb[0].mxu0 %v6643
        %v6973 = vpop.f32.mrb[0].mxu0
        %v6974 = vadd.f32 0.0, %v6973
        %v6975 = vpop.f32.mrb[0].mxu0
        %v6976 = vpop.f32.mrb[0].mxu0
        %v6977 = vadd.f32 0.0, %v6976
        %v6978 = vpop.f32.mrb[0].mxu0
        %6979 = vmatprep.mubr.bf16.mxu0 %v6647
        %6980 = vmatmul.mubr.bf16.gmra.mrb[0].mxu0 %v6646
        %v6981 = vpop.f32.mrb[0].mxu0
        %v6982 = vadd.f32 0.0, %v6981
        %v6983 = vpop.f32.mrb[0].mxu0
        %v6984 = vpop.f32.mrb[0].mxu0
        %v6985 = vadd.f32 0.0, %v6984
        %v6986 = vpop.f32.mrb[0].mxu0
        %6987 = vmatprep.mubr.bf16.mxu0 %v6650
        %6988 = vmatmul.mubr.bf16.gmra.mrb[0].mxu0 %v6649
        %v6989 = vpop.f32.mrb[0].mxu0
        %v6990 = vadd.f32 0.0, %v6989
        %v6991 = vpop.f32.mrb[0].mxu0
        %v6992 = vpop.f32.mrb[0].mxu0
        %v6993 = vadd.f32 0.0, %v6992
        %v6994 = vpop.f32.mrb[0].mxu0
        %6995 = vmatprep.mubr.bf16.mxu0 %v6653
        %6996 = vmatmul.mubr.bf16.gmra.mrb[0].mxu0 %v6652
        %v6997 = vpop.f32.mrb[0].mxu0
        %v6998 = vadd.f32 0.0, %v6997
        %v6999 = vpop.f32.mrb[0].mxu0
        %v7000 = vpop.f32.mrb[0].mxu0
        %v7001 = vadd.f32 0.0, %v7000
        %v7002 = vpop.f32.mrb[0].mxu0
        %7003 = vdwg.mxu0
        %7004 = vmatprep.subr.bf16.mxu0 0
        %7005 = vmatpush1.bf16.msra.mxu0 %v6775
        %7006 = vmatprep.subr.bf16.mxu0 0
        %7007 = vmatpush1.bf16.msra.mxu0 %v6776
        %7008 = vmatprep.subr.bf16.mxu0 0
        %7009 = vmatpush1.bf16.msra.mxu0 0
        %7010 = vmatprep.subr.bf16.mxu0 0
        %7011 = vmatpush1.bf16.msra.mxu0 0
        %7012 = vmatprep.subr.bf16.mxu0 0
        %7013 = vmatpush1.bf16.msra.mxu0 0
        %7014 = vmatprep.subr.bf16.mxu0 0
        %7015 = vmatpush1.bf16.msra.mxu0 0
        %7016 = vmatprep.subr.bf16.mxu0 0
        %7017 = vmatpush1.bf16.msra.mxu0 0
        %7018 = vmatprep.subr.bf16.mxu0 0
        %7019 = vmatpush1.bf16.msra.mxu0 0
        %7020 = vmatprep.subr.bf16.mxu0 0
        %7021 = vmatpush1.bf16.msra.mxu0 0
        %7022 = vmatprep.subr.bf16.mxu0 0
        %7023 = vmatpush1.bf16.msra.mxu0 0
        %7024 = vmatprep.subr.bf16.mxu0 0
        %7025 = vmatpush1.bf16.msra.mxu0 0
        %7026 = vmatprep.subr.bf16.mxu0 0
        %7027 = vmatpush1.bf16.msra.mxu0 0
        %7028 = vmatprep.subr.bf16.mxu0 0
        %7029 = vmatpush1.bf16.msra.mxu0 0
        %7030 = vmatprep.subr.bf16.mxu0 0
        %7031 = vmatpush1.bf16.msra.mxu0 0
        %7032 = vmatprep.subr.bf16.mxu0 0
        %7033 = vmatpush1.bf16.msra.mxu0 0
        %7034 = vmatprep.subr.bf16.mxu0 0
        %7035 = vmatpush1.bf16.msra.mxu0 0
        %7036 = vmatprep.mubr.bf16.mxu0 0
        %7037 = vmatmul.mubr.bf16.gmra.mrb[0].mxu0 %v6796
        %v7038 = vpop.f32.mrb[0].mxu0
        %v7039 = vadd.f32 %v6878, %v7038
        %v7040 = vpop.f32.mrb[0].mxu0
        %v7041 = vpop.f32.mrb[0].mxu0
        %v7042 = vadd.f32 %v6881, %v7041
        %v7043 = vpop.f32.mrb[0].mxu0
        %7044 = vmatprep.mubr.bf16.mxu0 0
        %7045 = vmatmul.mubr.bf16.gmra.mrb[0].mxu0 %v6799
        %v7046 = vpop.f32.mrb[0].mxu0
        %v7047 = vadd.f32 %v6886, %v7046
        %v7048 = vpop.f32.mrb[0].mxu0
        %v7049 = vpop.f32.mrb[0].mxu0
        %v7050 = vadd.f32 %v6889, %v7049
        %v7051 = vpop.f32.mrb[0].mxu0
        %7052 = vmatprep.mubr.bf16.mxu0 0
        %7053 = vmatmul.mubr.bf16.gmra.mrb[0].mxu0 %v6802
        %v7054 = vpop.f32.mrb[0].mxu0
        %v7055 = vadd.f32 %v6894, %v7054
        %v7056 = vpop.f32.mrb[0].mxu0
        %v7057 = vpop.f32.mrb[0].mxu0
        %v7058 = vadd.f32 %v6897, %v7057
        %v7059 = vpop.f32.mrb[0].mxu0
        %7060 = vmatprep.mubr.bf16.mxu0 0
        %7061 = vmatmul.mubr.bf16.gmra.mrb[0].mxu0 %v6805
        %v7062 = vpop.f32.mrb[0].mxu0
        %v7063 = vadd.f32 %v6902, %v7062
        %v7064 = vpop.f32.mrb[0].mxu0
        %v7065 = vpop.f32.mrb[0].mxu0
        %v7066 = vadd.f32 %v6905, %v7065
        %v7067 = vpop.f32.mrb[0].mxu0
        %7068 = vmatprep.mubr.bf16.mxu0 0
        %7069 = vmatmul.mubr.bf16.gmra.mrb[0].mxu0 %v6808
        %v7070 = vpop.f32.mrb[0].mxu0
        %v7071 = vadd.f32 %v6910, %v7070
        %v7072 = vpop.f32.mrb[0].mxu0
        %v7073 = vpop.f32.mrb[0].mxu0
        %v7074 = vadd.f32 %v6913, %v7073
        %v7075 = vpop.f32.mrb[0].mxu0
        %7076 = vmatprep.mubr.bf16.mxu0 0
        %7077 = vmatmul.mubr.bf16.gmra.mrb[0].mxu0 %v6811
        %v7078 = vpop.f32.mrb[0].mxu0
        %v7079 = vadd.f32 %v6918, %v7078
        %v7080 = vpop.f32.mrb[0].mxu0
        %v7081 = vpop.f32.mrb[0].mxu0
        %v7082 = vadd.f32 %v6921, %v7081
        %v7083 = vpop.f32.mrb[0].mxu0
        %7084 = vmatprep.mubr.bf16.mxu0 0
        %7085 = vmatmul.mubr.bf16.gmra.mrb[0].mxu0 %v6814
        %v7086 = vpop.f32.mrb[0].mxu0
        %v7087 = vadd.f32 %v6926, %v7086
        %v7088 = vpop.f32.mrb[0].mxu0
        %v7089 = vpop.f32.mrb[0].mxu0
        %v7090 = vadd.f32 %v6929, %v7089
        %v7091 = vpop.f32.mrb[0].mxu0
        %7092 = vmatprep.mubr.bf16.mxu0 0
        %7093 = vmatmul.mubr.bf16.gmra.mrb[0].mxu0 %v6817
        %v7094 = vpop.f32.mrb[0].mxu0
        %v7095 = vadd.f32 %v6934, %v7094
        %v7096 = vpop.f32.mrb[0].mxu0
        %v7097 = vpop.f32.mrb[0].mxu0
        %v7098 = vadd.f32 %v6937, %v7097
        %v7099 = vpop.f32.mrb[0].mxu0
        %7100 = vmatprep.mubr.bf16.mxu0 0
        %7101 = vmatmul.mubr.bf16.gmra.mrb[0].mxu0 %v6820
        %v7102 = vpop.f32.mrb[0].mxu0
        %v7103 = vadd.f32 %v6942, %v7102
        %v7104 = vpop.f32.mrb[0].mxu0
        %v7105 = vpop.f32.mrb[0].mxu0
        %v7106 = vadd.f32 %v6945, %v7105
        %v7107 = vpop.f32.mrb[0].mxu0
        %7108 = vmatprep.mubr.bf16.mxu0 0
        %7109 = vmatmul.mubr.bf16.gmra.mrb[0].mxu0 %v6823
        %v7110 = vpop.f32.mrb[0].mxu0
        %v7111 = vadd.f32 %v6950, %v7110
        %v7112 = vpop.f32.mrb[0].mxu0
        %v7113 = vpop.f32.mrb[0].mxu0
        %v7114 = vadd.f32 %v6953, %v7113
        %v7115 = vpop.f32.mrb[0].mxu0
        %7116 = vmatprep.mubr.bf16.mxu0 0
        %7117 = vmatmul.mubr.bf16.gmra.mrb[0].mxu0 %v6826
        %v7118 = vpop.f32.mrb[0].mxu0
        %v7119 = vadd.f32 %v6958, %v7118
        %v7120 = vpop.f32.mrb[0].mxu0
        %v7121 = vpop.f32.mrb[0].mxu0
        %v7122 = vadd.f32 %v6961, %v7121
        %v7123 = vpop.f32.mrb[0].mxu0
        %7124 = vmatprep.mubr.bf16.mxu0 0
        %7125 = vmatmul.mubr.bf16.gmra.mrb[0].mxu0 %v6829
        %v7126 = vpop.f32.mrb[0].mxu0
        %v7127 = vadd.f32 %v6966, %v7126
        %v7128 = vpop.f32.mrb[0].mxu0
        %v7129 = vpop.f32.mrb[0].mxu0
        %v7130 = vadd.f32 %v6969, %v7129
        %v7131 = vpop.f32.mrb[0].mxu0
        %7132 = vmatprep.mubr.bf16.mxu0 0
        %7133 = vmatmul.mubr.bf16.gmra.mrb[0].mxu0 %v6832
        %v7134 = vpop.f32.mrb[0].mxu0
        %v7135 = vadd.f32 %v6974, %v7134
        %v7136 = vpop.f32.mrb[0].mxu0
        %v7137 = vpop.f32.mrb[0].mxu0
        %v7138 = vadd.f32 %v6977, %v7137
        %v7139 = vpop.f32.mrb[0].mxu0
        %7140 = vmatprep.mubr.bf16.mxu0 0
        %7141 = vmatmul.mubr.bf16.gmra.mrb[0].mxu0 %v6835
        %v7142 = vpop.f32.mrb[0].mxu0
        %v7143 = vadd.f32 %v6982, %v7142
        %v7144 = vpop.f32.mrb[0].mxu0
        %v7145 = vpop.f32.mrb[0].mxu0
        %v7146 = vadd.f32 %v6985, %v7145
        %v7147 = vpop.f32.mrb[0].mxu0
        %7148 = vmatprep.mubr.bf16.mxu0 0
        %7149 = vmatmul.mubr.bf16.gmra.mrb[0].mxu0 %v6838
        %v7150 = vpop.f32.mrb[0].mxu0
        %v7151 = vadd.f32 %v6990, %v7150
        %v7152 = vpop.f32.mrb[0].mxu0
        %v7153 = vpop.f32.mrb[0].mxu0
        %v7154 = vadd.f32 %v6993, %v7153
        %v7155 = vpop.f32.mrb[0].mxu0
        %7156 = vmatprep.mubr.bf16.mxu0 0
        %7157 = vmatmul.mubr.bf16.gmra.mrb[0].mxu0 %v6841
        %v7158 = vpop.f32.mrb[0].mxu0
        %v7159 = vadd.f32 %v6998, %v7158
        %v7160 = vpop.f32.mrb[0].mxu0
        %v7161 = vpop.f32.mrb[0].mxu0
        %v7162 = vadd.f32 %v7001, %v7161
        %v7163 = vpop.f32.mrb[0].mxu0
        %7164 = vdwg.mxu0
        %v7165 = vld [vmem:[%s5] sm:$0x1]
        %v7167 = vlaneseq
        %v7168 = vshrl.u32 %v7167, 7
        %v7169 = vsub.s32 0, %v7168
        %v7170 = vrot.slane %v7165, %v7169
        %v7172 = vmul.f32 %v7039, %v7170
        %v7173 = vmul.f32 %v7042, %v7170
        %v7174 = vmul.f32 %v7047, %v7170
        %v7175 = vmul.f32 %v7050, %v7170
        %v7176 = vmul.f32 %v7055, %v7170
        %v7177 = vmul.f32 %v7058, %v7170
        %v7178 = vmul.f32 %v7063, %v7170
        %v7179 = vmul.f32 %v7066, %v7170
        %v7180 = vmul.f32 %v7071, %v7170
        %v7181 = vmul.f32 %v7074, %v7170
        %v7182 = vmul.f32 %v7079, %v7170
        %v7183 = vmul.f32 %v7082, %v7170
        %v7184 = vmul.f32 %v7087, %v7170
        %v7185 = vmul.f32 %v7090, %v7170
        %v7186 = vmul.f32 %v7095, %v7170
        %v7187 = vmul.f32 %v7098, %v7170
        %v7188 = vmul.f32 %v7103, %v7170
        %v7189 = vmul.f32 %v7106, %v7170
        %v7190 = vmul.f32 %v7111, %v7170
        %v7191 = vmul.f32 %v7114, %v7170
        %v7192 = vmul.f32 %v7119, %v7170
        %v7193 = vmul.f32 %v7122, %v7170
        %v7194 = vmul.f32 %v7127, %v7170
        %v7195 = vmul.f32 %v7130, %v7170
        %v7196 = vmul.f32 %v7135, %v7170
        %v7197 = vmul.f32 %v7138, %v7170
        %v7198 = vmul.f32 %v7143, %v7170
        %v7199 = vmul.f32 %v7146, %v7170
        %v7200 = vmul.f32 %v7151, %v7170
        %v7201 = vmul.f32 %v7154, %v7170
        %v7202 = vmul.f32 %v7159, %v7170
        %v7203 = vmul.f32 %v7162, %v7170
        %v7204 = vld [vmem:[%s6] sm:$0x1]
        %v7206 = vlaneseq
        %v7207 = vshrl.u32 %v7206, 7
        %v7208 = vsub.s32 0, %v7207
        %v7209 = vrot.slane %v7204, %v7208
        %v7211 = vadd.f32 %v7172, %v7209
        %v7212 = vadd.f32 %v7173, %v7209
        %v7213 = vadd.f32 %v7174, %v7209
        %v7214 = vadd.f32 %v7175, %v7209
        %v7215 = vadd.f32 %v7176, %v7209
        %v7216 = vadd.f32 %v7177, %v7209
        %v7217 = vadd.f32 %v7178, %v7209
        %v7218 = vadd.f32 %v7179, %v7209
        %v7219 = vadd.f32 %v7180, %v7209
        %v7220 = vadd.f32 %v7181, %v7209
        %v7221 = vadd.f32 %v7182, %v7209
        %v7222 = vadd.f32 %v7183, %v7209
        %v7223 = vadd.f32 %v7184, %v7209
        %v7224 = vadd.f32 %v7185, %v7209
        %v7225 = vadd.f32 %v7186, %v7209
        %v7226 = vadd.f32 %v7187, %v7209
        %v7227 = vadd.f32 %v7188, %v7209
        %v7228 = vadd.f32 %v7189, %v7209
        %v7229 = vadd.f32 %v7190, %v7209
        %v7230 = vadd.f32 %v7191, %v7209
        %v7231 = vadd.f32 %v7192, %v7209
        %v7232 = vadd.f32 %v7193, %v7209
        %v7233 = vadd.f32 %v7194, %v7209
        %v7234 = vadd.f32 %v7195, %v7209
        %v7235 = vadd.f32 %v7196, %v7209
        %v7236 = vadd.f32 %v7197, %v7209
        %v7237 = vadd.f32 %v7198, %v7209
        %v7238 = vadd.f32 %v7199, %v7209
        %v7239 = vadd.f32 %v7200, %v7209
        %v7240 = vadd.f32 %v7201, %v7209
        %v7241 = vadd.f32 %v7202, %v7209
        %v7242 = vadd.f32 %v7203, %v7209
        %v7243 = vsel %vm5961, %v7211, -inf
        %v7244 = vsel %vm5961, %v7212, -inf
        %v7245 = vmax.f32 %v7243, %v7244
        %v7246 = vsel %vm5961, %v7213, -inf
        %v7247 = vmax.f32 %v7245, %v7246
        %v7248 = vsel %vm5961, %v7214, -inf
        %v7249 = vmax.f32 %v7247, %v7248
        %v7250 = vsel %vm5961, %v7215, -inf
        %v7251 = vmax.f32 %v7249, %v7250
        %v7252 = vsel %vm5961, %v7216, -inf
        %v7253 = vmax.f32 %v7251, %v7252
        %v7254 = vsel %vm5961, %v7217, -inf
        %v7255 = vmax.f32 %v7253, %v7254
        %v7256 = vsel %vm5961, %v7218, -inf
        %v7257 = vmax.f32 %v7255, %v7256
        %v7258 = vrot.slane %v7257, 4
        %v7259 = vmax.f32 %v7257, %v7258
        %v7260 = vrot.slane %v7259, 2
        %v7261 = vmax.f32 %v7259, %v7260
        %v7262 = vrot.slane %v7261, 1
        %v7263 = vmax.f32 %v7261, %v7262
        %v7264 = vsel %vm5961, %v7219, -inf
        %v7265 = vsel %vm5961, %v7220, -inf
        %v7266 = vmax.f32 %v7264, %v7265
        %v7267 = vsel %vm5961, %v7221, -inf
        %v7268 = vmax.f32 %v7266, %v7267
        %v7269 = vsel %vm5961, %v7222, -inf
        %v7270 = vmax.f32 %v7268, %v7269
        %v7271 = vsel %vm5961, %v7223, -inf
        %v7272 = vmax.f32 %v7270, %v7271
        %v7273 = vsel %vm5961, %v7224, -inf
        %v7274 = vmax.f32 %v7272, %v7273
        %v7275 = vsel %vm5961, %v7225, -inf
        %v7276 = vmax.f32 %v7274, %v7275
        %v7277 = vsel %vm5961, %v7226, -inf
        %v7278 = vmax.f32 %v7276, %v7277
        %v7279 = vrot.slane %v7278, 4
        %v7280 = vmax.f32 %v7278, %v7279
        %v7281 = vrot.slane %v7280, 2
        %v7282 = vmax.f32 %v7280, %v7281
        %v7283 = vrot.slane %v7282, 1
        %v7284 = vmax.f32 %v7282, %v7283
        %v7285 = vsel %vm5961, %v7227, -inf
        %v7286 = vsel %vm5961, %v7228, -inf
        %v7287 = vmax.f32 %v7285, %v7286
        %v7288 = vsel %vm5961, %v7229, -inf
        %v7289 = vmax.f32 %v7287, %v7288
        %v7290 = vsel %vm5961, %v7230, -inf
        %v7291 = vmax.f32 %v7289, %v7290
        %v7292 = vsel %vm5961, %v7231, -inf
        %v7293 = vmax.f32 %v7291, %v7292
        %v7294 = vsel %vm5961, %v7232, -inf
        %v7295 = vmax.f32 %v7293, %v7294
        %v7296 = vsel %vm5961, %v7233, -inf
        %v7297 = vmax.f32 %v7295, %v7296
        %v7298 = vsel %vm5961, %v7234, -inf
        %v7299 = vmax.f32 %v7297, %v7298
        %v7300 = vrot.slane %v7299, 4
        %v7301 = vmax.f32 %v7299, %v7300
        %v7302 = vrot.slane %v7301, 2
        %v7303 = vmax.f32 %v7301, %v7302
        %v7304 = vrot.slane %v7303, 1
        %v7305 = vmax.f32 %v7303, %v7304
        %v7306 = vsel %vm5961, %v7235, -inf
        %v7307 = vsel %vm5961, %v7236, -inf
        %v7308 = vmax.f32 %v7306, %v7307
        %v7309 = vsel %vm5961, %v7237, -inf
        %v7310 = vmax.f32 %v7308, %v7309
        %v7311 = vsel %vm5961, %v7238, -inf
        %v7312 = vmax.f32 %v7310, %v7311
        %v7313 = vsel %vm5961, %v7239, -inf
        %v7314 = vmax.f32 %v7312, %v7313
        %v7315 = vsel %vm5961, %v7240, -inf
        %v7316 = vmax.f32 %v7314, %v7315
        %v7317 = vsel %vm5961, %v7241, -inf
        %v7318 = vmax.f32 %v7316, %v7317
        %v7319 = vsel %vm5961, %v7242, -inf
        %v7320 = vmax.f32 %v7318, %v7319
        %v7321 = vrot.slane %v7320, 4
        %v7322 = vmax.f32 %v7320, %v7321
        %v7323 = vrot.slane %v7322, 2
        %v7324 = vmax.f32 %v7322, %v7323
        %v7325 = vrot.slane %v7324, 1
        %v7326 = vmax.f32 %v7324, %v7325
        %v7327 = vsel %vm5961, %v7211, 0.0
        %v7328 = vsel %vm5961, %v7212, 0.0
        %v7329 = vadd.f32 %v7327, %v7328
        %v7330 = vsel %vm5961, %v7213, 0.0
        %v7331 = vadd.f32 %v7329, %v7330
        %v7332 = vsel %vm5961, %v7214, 0.0
        %v7333 = vadd.f32 %v7331, %v7332
        %v7334 = vsel %vm5961, %v7215, 0.0
        %v7335 = vadd.f32 %v7333, %v7334
        %v7336 = vsel %vm5961, %v7216, 0.0
        %v7337 = vadd.f32 %v7335, %v7336
        %v7338 = vsel %vm5961, %v7217, 0.0
        %v7339 = vadd.f32 %v7337, %v7338
        %v7340 = vsel %vm5961, %v7218, 0.0
        %v7341 = vadd.f32 %v7339, %v7340
        %v7342 = vrot.slane %v7341, 4
        %v7343 = vadd.f32 %v7341, %v7342
        %v7344 = vrot.slane %v7343, 2
        %v7345 = vadd.f32 %v7343, %v7344
        %v7346 = vrot.slane %v7345, 1
        %v7347 = vadd.f32 %v7345, %v7346
        %v7348 = vsel %vm5961, %v7219, 0.0
        %v7349 = vsel %vm5961, %v7220, 0.0
        %v7350 = vadd.f32 %v7348, %v7349
        %v7351 = vsel %vm5961, %v7221, 0.0
        %v7352 = vadd.f32 %v7350, %v7351
        %v7353 = vsel %vm5961, %v7222, 0.0
        %v7354 = vadd.f32 %v7352, %v7353
        %v7355 = vsel %vm5961, %v7223, 0.0
        %v7356 = vadd.f32 %v7354, %v7355
        %v7357 = vsel %vm5961, %v7224, 0.0
        %v7358 = vadd.f32 %v7356, %v7357
        %v7359 = vsel %vm5961, %v7225, 0.0
        %v7360 = vadd.f32 %v7358, %v7359
        %v7361 = vsel %vm5961, %v7226, 0.0
        %v7362 = vadd.f32 %v7360, %v7361
        %v7363 = vrot.slane %v7362, 4
        %v7364 = vadd.f32 %v7362, %v7363
        %v7365 = vrot.slane %v7364, 2
        %v7366 = vadd.f32 %v7364, %v7365
        %v7367 = vrot.slane %v7366, 1
        %v7368 = vadd.f32 %v7366, %v7367
        %v7369 = vsel %vm5961, %v7227, 0.0
        %v7370 = vsel %vm5961, %v7228, 0.0
        %v7371 = vadd.f32 %v7369, %v7370
        %v7372 = vsel %vm5961, %v7229, 0.0
        %v7373 = vadd.f32 %v7371, %v7372
        %v7374 = vsel %vm5961, %v7230, 0.0
        %v7375 = vadd.f32 %v7373, %v7374
        %v7376 = vsel %vm5961, %v7231, 0.0
        %v7377 = vadd.f32 %v7375, %v7376
        %v7378 = vsel %vm5961, %v7232, 0.0
        %v7379 = vadd.f32 %v7377, %v7378
        %v7380 = vsel %vm5961, %v7233, 0.0
        %v7381 = vadd.f32 %v7379, %v7380
        %v7382 = vsel %vm5961, %v7234, 0.0
        %v7383 = vadd.f32 %v7381, %v7382
        %v7384 = vrot.slane %v7383, 4
        %v7385 = vadd.f32 %v7383, %v7384
        %v7386 = vrot.slane %v7385, 2
        %v7387 = vadd.f32 %v7385, %v7386
        %v7388 = vrot.slane %v7387, 1
        %v7389 = vadd.f32 %v7387, %v7388
        %v7390 = vsel %vm5961, %v7235, 0.0
        %v7391 = vsel %vm5961, %v7236, 0.0
        %v7392 = vadd.f32 %v7390, %v7391
        %v7393 = vsel %vm5961, %v7237, 0.0
        %v7394 = vadd.f32 %v7392, %v7393
        %v7395 = vsel %vm5961, %v7238, 0.0
        %v7396 = vadd.f32 %v7394, %v7395
        %v7397 = vsel %vm5961, %v7239, 0.0
        %v7398 = vadd.f32 %v7396, %v7397
        %v7399 = vsel %vm5961, %v7240, 0.0
        %v7400 = vadd.f32 %v7398, %v7399
        %v7401 = vsel %vm5961, %v7241, 0.0
        %v7402 = vadd.f32 %v7400, %v7401
        %v7403 = vsel %vm5961, %v7242, 0.0
        %v7404 = vadd.f32 %v7402, %v7403
        %v7405 = vrot.slane %v7404, 4
        %v7406 = vadd.f32 %v7404, %v7405
        %v7407 = vrot.slane %v7406, 2
        %v7408 = vadd.f32 %v7406, %v7407
        %v7409 = vrot.slane %v7408, 1
        %v7410 = vadd.f32 %v7408, %v7409
        %v7411 = vrcp.pop 64.0
        %v7412 = vmul.f32 %v7347, %v7411
        %v7413 = vmul.f32 %v7368, %v7411
        %v7414 = vmul.f32 %v7389, %v7411
        %v7415 = vmul.f32 %v7410, %v7411
        %7417 = vbcast.lane.b32.xlu0 %v7263, 256
        %v7418 = vpop.permute.xlu0 %7417
        %s7420 = sor.u32 256, 8
        %7421 = vbcast.lane.b32.xlu0 %v7263, %s7420
        %v7422 = vpop.permute.xlu0 %7421
        %s7424 = sor.u32 256, 16
        %7425 = vbcast.lane.b32.xlu0 %v7263, %s7424
        %v7426 = vpop.permute.xlu0 %7425
        %s7428 = sor.u32 256, 24
        %7429 = vbcast.lane.b32.xlu0 %v7263, %s7428
        %v7430 = vpop.permute.xlu0 %7429
        %7432 = vbcast.lane.b32.xlu0 %v7284, 256
        %v7433 = vpop.permute.xlu0 %7432
        %s7435 = sor.u32 256, 8
        %7436 = vbcast.lane.b32.xlu0 %v7284, %s7435
        %v7437 = vpop.permute.xlu0 %7436
        %s7439 = sor.u32 256, 16
        %7440 = vbcast.lane.b32.xlu0 %v7284, %s7439
        %v7441 = vpop.permute.xlu0 %7440
        %s7443 = sor.u32 256, 24
        %7444 = vbcast.lane.b32.xlu0 %v7284, %s7443
        %v7445 = vpop.permute.xlu0 %7444
        %7447 = vbcast.lane.b32.xlu0 %v7305, 256
        %v7448 = vpop.permute.xlu0 %7447
        %s7450 = sor.u32 256, 8
        %7451 = vbcast.lane.b32.xlu0 %v7305, %s7450
        %v7452 = vpop.permute.xlu0 %7451
        %s7454 = sor.u32 256, 16
        %7455 = vbcast.lane.b32.xlu0 %v7305, %s7454
        %v7456 = vpop.permute.xlu0 %7455
        %s7458 = sor.u32 256, 24
        %7459 = vbcast.lane.b32.xlu0 %v7305, %s7458
        %v7460 = vpop.permute.xlu0 %7459
        %7462 = vbcast.lane.b32.xlu0 %v7326, 256
        %v7463 = vpop.permute.xlu0 %7462
        %s7465 = sor.u32 256, 8
        %7466 = vbcast.lane.b32.xlu0 %v7326, %s7465
        %v7467 = vpop.permute.xlu0 %7466
        %s7469 = sor.u32 256, 16
        %7470 = vbcast.lane.b32.xlu0 %v7326, %s7469
        %v7471 = vpop.permute.xlu0 %7470
        %s7473 = sor.u32 256, 24
        %7474 = vbcast.lane.b32.xlu0 %v7326, %s7473
        %v7475 = vpop.permute.xlu0 %7474
        %v7476 = vld [vmem:[%s7] sm:$0xff]
        %v7477 = vld [vmem:[%s7 + $0x8] sm:$0xff]
        %v7478 = vld [vmem:[%s7 + $0x10] sm:$0xff]
        %v7479 = vld [vmem:[%s7 + $0x18] sm:$0xff]
        %v7480 = vmul.f32 %v7418, %v7476
        %v7481 = vmul.f32 %v7422, %v7477
        %v7482 = vmul.f32 %v7426, %v7478
        %v7483 = vmul.f32 %v7430, %v7479
        %v7484 = vmul.f32 %v7433, %v7476
        %v7485 = vmul.f32 %v7437, %v7477
        %v7486 = vmul.f32 %v7441, %v7478
        %v7487 = vmul.f32 %v7445, %v7479
        %v7488 = vmul.f32 %v7448, %v7476
        %v7489 = vmul.f32 %v7452, %v7477
        %v7490 = vmul.f32 %v7456, %v7478
        %v7491 = vmul.f32 %v7460, %v7479
        %v7492 = vmul.f32 %v7463, %v7476
        %v7493 = vmul.f32 %v7467, %v7477
        %v7494 = vmul.f32 %v7471, %v7478
        %v7495 = vmul.f32 %v7475, %v7479
        %vm7496 = vcmask 15360
        %v7497 = vsel %vm7496, %v7480, 0.0
        %v7498 = vsel %vm7496, %v7481, 0.0
        %v7499 = vadd.f32 %v7497, %v7498
        %v7500 = vsel %vm7496, %v7482, 0.0
        %v7501 = vadd.f32 %v7499, %v7500
        %v7502 = vsel %vm7496, %v7483, 0.0
        %v7503 = vadd.f32 %v7501, %v7502
        %v7504 = vrot.slane %v7503, 4
        %v7505 = vadd.f32 %v7503, %v7504
        %v7506 = vrot.slane %v7505, 2
        %v7507 = vadd.f32 %v7505, %v7506
        %v7508 = vrot.slane %v7507, 1
        %v7509 = vadd.f32 %v7507, %v7508
        %v7510 = vsel %vm7496, %v7484, 0.0
        %v7511 = vsel %vm7496, %v7485, 0.0
        %v7512 = vadd.f32 %v7510, %v7511
        %v7513 = vsel %vm7496, %v7486, 0.0
        %v7514 = vadd.f32 %v7512, %v7513
        %v7515 = vsel %vm7496, %v7487, 0.0
        %v7516 = vadd.f32 %v7514, %v7515
        %v7517 = vrot.slane %v7516, 4
        %v7518 = vadd.f32 %v7516, %v7517
        %v7519 = vrot.slane %v7518, 2
        %v7520 = vadd.f32 %v7518, %v7519
        %v7521 = vrot.slane %v7520, 1
        %v7522 = vadd.f32 %v7520, %v7521
        %v7523 = vsel %vm7496, %v7488, 0.0
        %v7524 = vsel %vm7496, %v7489, 0.0
        %v7525 = vadd.f32 %v7523, %v7524
        %v7526 = vsel %vm7496, %v7490, 0.0
        %v7527 = vadd.f32 %v7525, %v7526
        %v7528 = vsel %vm7496, %v7491, 0.0
        %v7529 = vadd.f32 %v7527, %v7528
        %v7530 = vrot.slane %v7529, 4
        %v7531 = vadd.f32 %v7529, %v7530
        %v7532 = vrot.slane %v7531, 2
        %v7533 = vadd.f32 %v7531, %v7532
        %v7534 = vrot.slane %v7533, 1
        %v7535 = vadd.f32 %v7533, %v7534
        %v7536 = vsel %vm7496, %v7492, 0.0
        %v7537 = vsel %vm7496, %v7493, 0.0
        %v7538 = vadd.f32 %v7536, %v7537
        %v7539 = vsel %vm7496, %v7494, 0.0
        %v7540 = vadd.f32 %v7538, %v7539
        %v7541 = vsel %vm7496, %v7495, 0.0
        %v7542 = vadd.f32 %v7540, %v7541
        %v7543 = vrot.slane %v7542, 4
        %v7544 = vadd.f32 %v7542, %v7543
        %v7545 = vrot.slane %v7544, 2
        %v7546 = vadd.f32 %v7544, %v7545
        %v7547 = vrot.slane %v7546, 1
        %v7548 = vadd.f32 %v7546, %v7547
        %v7549 = vld [vmem:[%s8] sm:$0x1]
        %v7551 = vlaneseq
        %v7552 = vshrl.u32 %v7551, 7
        %v7553 = vsub.s32 0, %v7552
        %v7554 = vrot.slane %v7549, %v7553
        %v7556 = vadd.f32 %v7509, %v7554
        %v7557 = vadd.f32 %v7522, %v7554
        %v7558 = vadd.f32 %v7535, %v7554
        %v7559 = vadd.f32 %v7548, %v7554
        %v7560 = vmax.f32 %v7556, 0.0
        %v7561 = vmax.f32 %v7557, 0.0
        %v7562 = vmax.f32 %v7558, 0.0
        %v7563 = vmax.f32 %v7559, 0.0
        %v7564 = vlaneseq
        %v7565 = vshrl.u32 %v7564, 7
        %v7566 = vsub.s32 0, %v7565
        %v7567 = vrot.slane %v7560, %v7566
        %7569 = vbcast.lane.b32.xlu0 %v7567, 256
        %v7570 = vpop.permute.xlu0 %7569
        %v7571 = vlaneseq
        %v7572 = vshrl.u32 %v7571, 7
        %v7573 = vsub.s32 0, %v7572
        %v7574 = vrot.slane %v7561, %v7573
        %7576 = vbcast.lane.b32.xlu0 %v7574, 256
        %v7577 = vpop.permute.xlu0 %7576
        %v7578 = vlaneseq
        %v7579 = vshrl.u32 %v7578, 7
        %v7580 = vsub.s32 0, %v7579
        %v7581 = vrot.slane %v7562, %v7580
        %7583 = vbcast.lane.b32.xlu0 %v7581, 256
        %v7584 = vpop.permute.xlu0 %7583
        %v7585 = vlaneseq
        %v7586 = vshrl.u32 %v7585, 7
        %v7587 = vsub.s32 0, %v7586
        %v7588 = vrot.slane %v7563, %v7587
        %7590 = vbcast.lane.b32.xlu0 %v7588, 256
        %v7591 = vpop.permute.xlu0 %7590
        %v7592 = vld [vmem:[%s9] sm:$0x3]
        %v7593 = vmul.f32 %v7570, %v7592
        %v7594 = vmul.f32 %v7577, %v7592
        %v7595 = vmul.f32 %v7584, %v7592
        %v7596 = vmul.f32 %v7591, %v7592
        %vm7597 = vcmask 254976
        %v7598 = vsel %vm7597, %v7593, 0.0
        %v7599 = vrot.slane %v7598, 4
        %v7600 = vadd.f32 %v7598, %v7599
        %v7601 = vrot.slane %v7600, 2
        %v7602 = vadd.f32 %v7600, %v7601
        %v7603 = vrot.slane %v7602, 1
        %v7604 = vadd.f32 %v7602, %v7603
        %v7605 = vsel %vm7597, %v7594, 0.0
        %v7606 = vrot.slane %v7605, 4
        %v7607 = vadd.f32 %v7605, %v7606
        %v7608 = vrot.slane %v7607, 2
        %v7609 = vadd.f32 %v7607, %v7608
        %v7610 = vrot.slane %v7609, 1
        %v7611 = vadd.f32 %v7609, %v7610
        %v7612 = vsel %vm7597, %v7595, 0.0
        %v7613 = vrot.slane %v7612, 4
        %v7614 = vadd.f32 %v7612, %v7613
        %v7615 = vrot.slane %v7614, 2
        %v7616 = vadd.f32 %v7614, %v7615
        %v7617 = vrot.slane %v7616, 1
        %v7618 = vadd.f32 %v7616, %v7617
        %v7619 = vsel %vm7597, %v7596, 0.0
        %v7620 = vrot.slane %v7619, 4
        %v7621 = vadd.f32 %v7619, %v7620
        %v7622 = vrot.slane %v7621, 2
        %v7623 = vadd.f32 %v7621, %v7622
        %v7624 = vrot.slane %v7623, 1
        %v7625 = vadd.f32 %v7623, %v7624
        %v7626 = vld [vmem:[%s10] sm:$0x1]
        %v7628 = vlaneseq
        %v7629 = vshrl.u32 %v7628, 7
        %v7630 = vsub.s32 0, %v7629
        %v7631 = vrot.slane %v7626, %v7630
        %v7633 = vadd.f32 %v7604, %v7631
        %v7634 = vadd.f32 %v7611, %v7631
        %v7635 = vadd.f32 %v7618, %v7631
        %v7636 = vadd.f32 %v7625, %v7631
        %7638 = vbcast.lane.b32.xlu0 %v7412, 256
        %v7639 = vpop.permute.xlu0 %7638
        %s7641 = sor.u32 256, 8
        %7642 = vbcast.lane.b32.xlu0 %v7412, %s7641
        %v7643 = vpop.permute.xlu0 %7642
        %s7645 = sor.u32 256, 16
        %7646 = vbcast.lane.b32.xlu0 %v7412, %s7645
        %v7647 = vpop.permute.xlu0 %7646
        %s7649 = sor.u32 256, 24
        %7650 = vbcast.lane.b32.xlu0 %v7412, %s7649
        %v7651 = vpop.permute.xlu0 %7650
        %7653 = vbcast.lane.b32.xlu0 %v7413, 256
        %v7654 = vpop.permute.xlu0 %7653
        %s7656 = sor.u32 256, 8
        %7657 = vbcast.lane.b32.xlu0 %v7413, %s7656
        %v7658 = vpop.permute.xlu0 %7657
        %s7660 = sor.u32 256, 16
        %7661 = vbcast.lane.b32.xlu0 %v7413, %s7660
        %v7662 = vpop.permute.xlu0 %7661
        %s7664 = sor.u32 256, 24
        %7665 = vbcast.lane.b32.xlu0 %v7413, %s7664
        %v7666 = vpop.permute.xlu0 %7665
        %7668 = vbcast.lane.b32.xlu0 %v7414, 256
        %v7669 = vpop.permute.xlu0 %7668
        %s7671 = sor.u32 256, 8
        %7672 = vbcast.lane.b32.xlu0 %v7414, %s7671
        %v7673 = vpop.permute.xlu0 %7672
        %s7675 = sor.u32 256, 16
        %7676 = vbcast.lane.b32.xlu0 %v7414, %s7675
        %v7677 = vpop.permute.xlu0 %7676
        %s7679 = sor.u32 256, 24
        %7680 = vbcast.lane.b32.xlu0 %v7414, %s7679
        %v7681 = vpop.permute.xlu0 %7680
        %7683 = vbcast.lane.b32.xlu0 %v7415, 256
        %v7684 = vpop.permute.xlu0 %7683
        %s7686 = sor.u32 256, 8
        %7687 = vbcast.lane.b32.xlu0 %v7415, %s7686
        %v7688 = vpop.permute.xlu0 %7687
        %s7690 = sor.u32 256, 16
        %7691 = vbcast.lane.b32.xlu0 %v7415, %s7690
        %v7692 = vpop.permute.xlu0 %7691
        %s7694 = sor.u32 256, 24
        %7695 = vbcast.lane.b32.xlu0 %v7415, %s7694
        %v7696 = vpop.permute.xlu0 %7695
        %v7697 = vmul.f32 %v7639, %v7476
        %v7698 = vmul.f32 %v7643, %v7477
        %v7699 = vmul.f32 %v7647, %v7478
        %v7700 = vmul.f32 %v7651, %v7479
        %v7701 = vmul.f32 %v7654, %v7476
        %v7702 = vmul.f32 %v7658, %v7477
        %v7703 = vmul.f32 %v7662, %v7478
        %v7704 = vmul.f32 %v7666, %v7479
        %v7705 = vmul.f32 %v7669, %v7476
        %v7706 = vmul.f32 %v7673, %v7477
        %v7707 = vmul.f32 %v7677, %v7478
        %v7708 = vmul.f32 %v7681, %v7479
        %v7709 = vmul.f32 %v7684, %v7476
        %v7710 = vmul.f32 %v7688, %v7477
        %v7711 = vmul.f32 %v7692, %v7478
        %v7712 = vmul.f32 %v7696, %v7479
        %v7713 = vsel %vm7496, %v7697, 0.0
        %v7714 = vsel %vm7496, %v7698, 0.0
        %v7715 = vadd.f32 %v7713, %v7714
        %v7716 = vsel %vm7496, %v7699, 0.0
        %v7717 = vadd.f32 %v7715, %v7716
        %v7718 = vsel %vm7496, %v7700, 0.0
        %v7719 = vadd.f32 %v7717, %v7718
        %v7720 = vrot.slane %v7719, 4
        %v7721 = vadd.f32 %v7719, %v7720
        %v7722 = vrot.slane %v7721, 2
        %v7723 = vadd.f32 %v7721, %v7722
        %v7724 = vrot.slane %v7723, 1
        %v7725 = vadd.f32 %v7723, %v7724
        %v7726 = vsel %vm7496, %v7701, 0.0
        %v7727 = vsel %vm7496, %v7702, 0.0
        %v7728 = vadd.f32 %v7726, %v7727
        %v7729 = vsel %vm7496, %v7703, 0.0
        %v7730 = vadd.f32 %v7728, %v7729
        %v7731 = vsel %vm7496, %v7704, 0.0
        %v7732 = vadd.f32 %v7730, %v7731
        %v7733 = vrot.slane %v7732, 4
        %v7734 = vadd.f32 %v7732, %v7733
        %v7735 = vrot.slane %v7734, 2
        %v7736 = vadd.f32 %v7734, %v7735
        %v7737 = vrot.slane %v7736, 1
        %v7738 = vadd.f32 %v7736, %v7737
        %v7739 = vsel %vm7496, %v7705, 0.0
        %v7740 = vsel %vm7496, %v7706, 0.0
        %v7741 = vadd.f32 %v7739, %v7740
        %v7742 = vsel %vm7496, %v7707, 0.0
        %v7743 = vadd.f32 %v7741, %v7742
        %v7744 = vsel %vm7496, %v7708, 0.0
        %v7745 = vadd.f32 %v7743, %v7744
        %v7746 = vrot.slane %v7745, 4
        %v7747 = vadd.f32 %v7745, %v7746
        %v7748 = vrot.slane %v7747, 2
        %v7749 = vadd.f32 %v7747, %v7748
        %v7750 = vrot.slane %v7749, 1
        %v7751 = vadd.f32 %v7749, %v7750
        %v7752 = vsel %vm7496, %v7709, 0.0
        %v7753 = vsel %vm7496, %v7710, 0.0
        %v7754 = vadd.f32 %v7752, %v7753
        %v7755 = vsel %vm7496, %v7711, 0.0
        %v7756 = vadd.f32 %v7754, %v7755
        %v7757 = vsel %vm7496, %v7712, 0.0
        %v7758 = vadd.f32 %v7756, %v7757
        %v7759 = vrot.slane %v7758, 4
        %v7760 = vadd.f32 %v7758, %v7759
        %v7761 = vrot.slane %v7760, 2
        %v7762 = vadd.f32 %v7760, %v7761
        %v7763 = vrot.slane %v7762, 1
        %v7764 = vadd.f32 %v7762, %v7763
        %v7765 = vadd.f32 %v7725, %v7554
        %v7766 = vadd.f32 %v7738, %v7554
        %v7767 = vadd.f32 %v7751, %v7554
        %v7768 = vadd.f32 %v7764, %v7554
        %v7769 = vmax.f32 %v7765, 0.0
        %v7770 = vmax.f32 %v7766, 0.0
        %v7771 = vmax.f32 %v7767, 0.0
        %v7772 = vmax.f32 %v7768, 0.0
        %v7773 = vlaneseq
        %v7774 = vshrl.u32 %v7773, 7
        %v7775 = vsub.s32 0, %v7774
        %v7776 = vrot.slane %v7769, %v7775
        %7778 = vbcast.lane.b32.xlu0 %v7776, 256
        %v7779 = vpop.permute.xlu0 %7778
        %v7780 = vlaneseq
        %v7781 = vshrl.u32 %v7780, 7
        %v7782 = vsub.s32 0, %v7781
        %v7783 = vrot.slane %v7770, %v7782
        %7785 = vbcast.lane.b32.xlu0 %v7783, 256
        %v7786 = vpop.permute.xlu0 %7785
        %v7787 = vlaneseq
        %v7788 = vshrl.u32 %v7787, 7
        %v7789 = vsub.s32 0, %v7788
        %v7790 = vrot.slane %v7771, %v7789
        %7792 = vbcast.lane.b32.xlu0 %v7790, 256
        %v7793 = vpop.permute.xlu0 %7792
        %v7794 = vlaneseq
        %v7795 = vshrl.u32 %v7794, 7
        %v7796 = vsub.s32 0, %v7795
        %v7797 = vrot.slane %v7772, %v7796
        %7799 = vbcast.lane.b32.xlu0 %v7797, 256
        %v7800 = vpop.permute.xlu0 %7799
        %v7801 = vmul.f32 %v7779, %v7592
        %v7802 = vmul.f32 %v7786, %v7592
        %v7803 = vmul.f32 %v7793, %v7592
        %v7804 = vmul.f32 %v7800, %v7592
        %v7805 = vsel %vm7597, %v7801, 0.0
        %v7806 = vrot.slane %v7805, 4
        %v7807 = vadd.f32 %v7805, %v7806
        %v7808 = vrot.slane %v7807, 2
        %v7809 = vadd.f32 %v7807, %v7808
        %v7810 = vrot.slane %v7809, 1
        %v7811 = vadd.f32 %v7809, %v7810
        %v7812 = vsel %vm7597, %v7802, 0.0
        %v7813 = vrot.slane %v7812, 4
        %v7814 = vadd.f32 %v7812, %v7813
        %v7815 = vrot.slane %v7814, 2
        %v7816 = vadd.f32 %v7814, %v7815
        %v7817 = vrot.slane %v7816, 1
        %v7818 = vadd.f32 %v7816, %v7817
        %v7819 = vsel %vm7597, %v7803, 0.0
        %v7820 = vrot.slane %v7819, 4
        %v7821 = vadd.f32 %v7819, %v7820
        %v7822 = vrot.slane %v7821, 2
        %v7823 = vadd.f32 %v7821, %v7822
        %v7824 = vrot.slane %v7823, 1
        %v7825 = vadd.f32 %v7823, %v7824
        %v7826 = vsel %vm7597, %v7804, 0.0
        %v7827 = vrot.slane %v7826, 4
        %v7828 = vadd.f32 %v7826, %v7827
        %v7829 = vrot.slane %v7828, 2
        %v7830 = vadd.f32 %v7828, %v7829
        %v7831 = vrot.slane %v7830, 1
        %v7832 = vadd.f32 %v7830, %v7831
        %v7833 = vadd.f32 %v7811, %v7631
        %v7834 = vadd.f32 %v7818, %v7631
        %v7835 = vadd.f32 %v7825, %v7631
        %v7836 = vadd.f32 %v7832, %v7631
        %v7837 = vadd.f32 %v7633, %v7833
        %v7838 = vadd.f32 %v7634, %v7834
        %v7839 = vadd.f32 %v7635, %v7835
        %v7840 = vadd.f32 %v7636, %v7836
        %v7841 = vxor.u32 %v7837, 2147483648
        %v7842 = vxor.u32 %v7838, 2147483648
        %v7843 = vxor.u32 %v7839, 2147483648
        %v7844 = vxor.u32 %v7840, 2147483648
        %v7845 = vmul.f32 %v7841, 1.442695
        %v7846 = vpow.pop %v7845
        %v7847 = vmul.f32 %v7842, 1.442695
        %v7848 = vpow.pop %v7847
        %v7849 = vmul.f32 %v7843, 1.442695
        %v7850 = vpow.pop %v7849
        %v7851 = vmul.f32 %v7844, 1.442695
        %v7852 = vpow.pop %v7851
        %v7853 = vadd.f32 %v7846, 1.0
        %v7854 = vadd.f32 %v7848, 1.0
        %v7855 = vadd.f32 %v7850, 1.0
        %v7856 = vadd.f32 %v7852, 1.0
        %v7857 = vrcp.pop %v7853
        %v7858 = vmul.f32 1.0, %v7857
        %v7859 = vrcp.pop %v7854
        %v7860 = vmul.f32 1.0, %v7859
        %v7861 = vrcp.pop %v7855
        %v7862 = vmul.f32 1.0, %v7861
        %v7863 = vrcp.pop %v7856
        %v7864 = vmul.f32 1.0, %v7863
        %v7865 = vlaneseq
        %v7866 = vshrl.u32 %v7865, 7
        %v7867 = vsub.s32 0, %v7866
        %v7868 = vrot.slane %v7858, %v7867
        %v7869 = vlaneseq
        %v7870 = vshrl.u32 %v7869, 7
        %v7871 = vsub.s32 0, %v7870
        %v7872 = vrot.slane %v7860, %v7871
        %v7873 = vlaneseq
        %v7874 = vshrl.u32 %v7873, 7
        %v7875 = vsub.s32 0, %v7874
        %v7876 = vrot.slane %v7862, %v7875
        %v7877 = vlaneseq
        %v7878 = vshrl.u32 %v7877, 7
        %v7879 = vsub.s32 0, %v7878
        %v7880 = vrot.slane %v7864, %v7879
        %v7881 = vmul.f32 %v7211, %v7868
        %v7882 = vmul.f32 %v7212, %v7868
        %v7883 = vmul.f32 %v7213, %v7868
        %v7884 = vmul.f32 %v7214, %v7868
        %v7885 = vmul.f32 %v7215, %v7868
        %v7886 = vmul.f32 %v7216, %v7868
        %v7887 = vmul.f32 %v7217, %v7868
        %v7888 = vmul.f32 %v7218, %v7868
        %v7889 = vmul.f32 %v7219, %v7872
        %v7890 = vmul.f32 %v7220, %v7872
        %v7891 = vmul.f32 %v7221, %v7872
        %v7892 = vmul.f32 %v7222, %v7872
        %v7893 = vmul.f32 %v7223, %v7872
        %v7894 = vmul.f32 %v7224, %v7872
        %v7895 = vmul.f32 %v7225, %v7872
        %v7896 = vmul.f32 %v7226, %v7872
        %v7897 = vmul.f32 %v7227, %v7876
        %v7898 = vmul.f32 %v7228, %v7876
        %v7899 = vmul.f32 %v7229, %v7876
        %v7900 = vmul.f32 %v7230, %v7876
        %v7901 = vmul.f32 %v7231, %v7876
        %v7902 = vmul.f32 %v7232, %v7876
        %v7903 = vmul.f32 %v7233, %v7876
        %v7904 = vmul.f32 %v7234, %v7876
        %v7905 = vmul.f32 %v7235, %v7880
        %v7906 = vmul.f32 %v7236, %v7880
        %v7907 = vmul.f32 %v7237, %v7880
        %v7908 = vmul.f32 %v7238, %v7880
        %v7909 = vmul.f32 %v7239, %v7880
        %v7910 = vmul.f32 %v7240, %v7880
        %v7911 = vmul.f32 %v7241, %v7880
        %v7912 = vmul.f32 %v7242, %v7880
        %v7913 = vsel %vm5961, %v7881, -inf
        %7914 = vmax.xlane.f32.xlu0 %v7913
        %v7915 = vpop.xlane.xlu0 %7914
        %v7916 = vsel %vm5961, %v7882, -inf
        %7917 = vmax.xlane.f32.xlu0 %v7916
        %v7918 = vpop.xlane.xlu0 %7917
        %v7919 = vsel %vm5961, %v7883, -inf
        %7920 = vmax.xlane.f32.xlu0 %v7919
        %v7921 = vpop.xlane.xlu0 %7920
        %v7922 = vsel %vm5961, %v7884, -inf
        %7923 = vmax.xlane.f32.xlu0 %v7922
        %v7924 = vpop.xlane.xlu0 %7923
        %v7925 = vsel %vm5961, %v7885, -inf
        %7926 = vmax.xlane.f32.xlu0 %v7925
        %v7927 = vpop.xlane.xlu0 %7926
        %v7928 = vsel %vm5961, %v7886, -inf
        %7929 = vmax.xlane.f32.xlu0 %v7928
        %v7930 = vpop.xlane.xlu0 %7929
        %v7931 = vsel %vm5961, %v7887, -inf
        %7932 = vmax.xlane.f32.xlu0 %v7931
        %v7933 = vpop.xlane.xlu0 %7932
        %v7934 = vsel %vm5961, %v7888, -inf
        %7935 = vmax.xlane.f32.xlu0 %v7934
        %v7936 = vpop.xlane.xlu0 %7935
        %v7937 = vsel %vm5961, %v7889, -inf
        %7938 = vmax.xlane.f32.xlu0 %v7937
        %v7939 = vpop.xlane.xlu0 %7938
        %v7940 = vsel %vm5961, %v7890, -inf
        %7941 = vmax.xlane.f32.xlu0 %v7940
        %v7942 = vpop.xlane.xlu0 %7941
        %v7943 = vsel %vm5961, %v7891, -inf
        %7944 = vmax.xlane.f32.xlu0 %v7943
        %v7945 = vpop.xlane.xlu0 %7944
        %v7946 = vsel %vm5961, %v7892, -inf
        %7947 = vmax.xlane.f32.xlu0 %v7946
        %v7948 = vpop.xlane.xlu0 %7947
        %v7949 = vsel %vm5961, %v7893, -inf
        %7950 = vmax.xlane.f32.xlu0 %v7949
        %v7951 = vpop.xlane.xlu0 %7950
        %v7952 = vsel %vm5961, %v7894, -inf
        %7953 = vmax.xlane.f32.xlu0 %v7952
        %v7954 = vpop.xlane.xlu0 %7953
        %v7955 = vsel %vm5961, %v7895, -inf
        %7956 = vmax.xlane.f32.xlu0 %v7955
        %v7957 = vpop.xlane.xlu0 %7956
        %v7958 = vsel %vm5961, %v7896, -inf
        %7959 = vmax.xlane.f32.xlu0 %v7958
        %v7960 = vpop.xlane.xlu0 %7959
        %v7961 = vsel %vm5961, %v7897, -inf
        %7962 = vmax.xlane.f32.xlu0 %v7961
        %v7963 = vpop.xlane.xlu0 %7962
        %v7964 = vsel %vm5961, %v7898, -inf
        %7965 = vmax.xlane.f32.xlu0 %v7964
        %v7966 = vpop.xlane.xlu0 %7965
        %v7967 = vsel %vm5961, %v7899, -inf
        %7968 = vmax.xlane.f32.xlu0 %v7967
        %v7969 = vpop.xlane.xlu0 %7968
        %v7970 = vsel %vm5961, %v7900, -inf
        %7971 = vmax.xlane.f32.xlu0 %v7970
        %v7972 = vpop.xlane.xlu0 %7971
        %v7973 = vsel %vm5961, %v7901, -inf
        %7974 = vmax.xlane.f32.xlu0 %v7973
        %v7975 = vpop.xlane.xlu0 %7974
        %v7976 = vsel %vm5961, %v7902, -inf
        %7977 = vmax.xlane.f32.xlu0 %v7976
        %v7978 = vpop.xlane.xlu0 %7977
        %v7979 = vsel %vm5961, %v7903, -inf
        %7980 = vmax.xlane.f32.xlu0 %v7979
        %v7981 = vpop.xlane.xlu0 %7980
        %v7982 = vsel %vm5961, %v7904, -inf
        %7983 = vmax.xlane.f32.xlu0 %v7982
        %v7984 = vpop.xlane.xlu0 %7983
        %v7985 = vsel %vm5961, %v7905, -inf
        %7986 = vmax.xlane.f32.xlu0 %v7985
        %v7987 = vpop.xlane.xlu0 %7986
        %v7988 = vsel %vm5961, %v7906, -inf
        %7989 = vmax.xlane.f32.xlu0 %v7988
        %v7990 = vpop.xlane.xlu0 %7989
        %v7991 = vsel %vm5961, %v7907, -inf
        %7992 = vmax.xlane.f32.xlu0 %v7991
        %v7993 = vpop.xlane.xlu0 %7992
        %v7994 = vsel %vm5961, %v7908, -inf
        %7995 = vmax.xlane.f32.xlu0 %v7994
        %v7996 = vpop.xlane.xlu0 %7995
        %v7997 = vsel %vm5961, %v7909, -inf
        %7998 = vmax.xlane.f32.xlu0 %v7997
        %v7999 = vpop.xlane.xlu0 %7998
        %v8000 = vsel %vm5961, %v7910, -inf
        %8001 = vmax.xlane.f32.xlu0 %v8000
        %v8002 = vpop.xlane.xlu0 %8001
        %v8003 = vsel %vm5961, %v7911, -inf
        %8004 = vmax.xlane.f32.xlu0 %v8003
        %v8005 = vpop.xlane.xlu0 %8004
        %v8006 = vsel %vm5961, %v7912, -inf
        %8007 = vmax.xlane.f32.xlu0 %v8006
        %v8008 = vpop.xlane.xlu0 %8007
        %v8041 = vlaneseq
        %v8042 = vand.u32 %v8041, 127
        %v8043 = vadd.s32 %v8042, 4294967293
        %v8044 = vlaneseq
        %v8045 = vshrl.u32 %v8044, 7
        %v8046 = vsub.s32 %v8043, %v8045
        %v8047 = vrot.slane %v7915, %v8046
        %v8048 = vlaneseq
        %v8049 = vshrl.u32 %v8048, 7
        %v8050 = vsub.s32 %v8043, %v8049
        %v8051 = vrot.slane %v7918, %v8050
        %v8052 = vlaneseq
        %v8053 = vshrl.u32 %v8052, 7
        %v8054 = vsub.s32 %v8043, %v8053
        %v8055 = vrot.slane %v7921, %v8054
        %v8056 = vlaneseq
        %v8057 = vshrl.u32 %v8056, 7
        %v8058 = vsub.s32 %v8043, %v8057
        %v8059 = vrot.slane %v7924, %v8058
        %v8060 = vlaneseq
        %v8061 = vshrl.u32 %v8060, 7
        %v8062 = vsub.s32 %v8043, %v8061
        %v8063 = vrot.slane %v7927, %v8062
        %v8064 = vlaneseq
        %v8065 = vshrl.u32 %v8064, 7
        %v8066 = vsub.s32 %v8043, %v8065
        %v8067 = vrot.slane %v7930, %v8066
        %v8068 = vlaneseq
        %v8069 = vshrl.u32 %v8068, 7
        %v8070 = vsub.s32 %v8043, %v8069
        %v8071 = vrot.slane %v7933, %v8070
        %v8072 = vlaneseq
        %v8073 = vshrl.u32 %v8072, 7
        %v8074 = vsub.s32 %v8043, %v8073
        %v8075 = vrot.slane %v7936, %v8074
        %v8076 = vlaneseq
        %v8077 = vshrl.u32 %v8076, 7
        %v8078 = vsub.s32 %v8043, %v8077
        %v8079 = vrot.slane %v7939, %v8078
        %v8080 = vlaneseq
        %v8081 = vshrl.u32 %v8080, 7
        %v8082 = vsub.s32 %v8043, %v8081
        %v8083 = vrot.slane %v7942, %v8082
        %v8084 = vlaneseq
        %v8085 = vshrl.u32 %v8084, 7
        %v8086 = vsub.s32 %v8043, %v8085
        %v8087 = vrot.slane %v7945, %v8086
        %v8088 = vlaneseq
        %v8089 = vshrl.u32 %v8088, 7
        %v8090 = vsub.s32 %v8043, %v8089
        %v8091 = vrot.slane %v7948, %v8090
        %v8092 = vlaneseq
        %v8093 = vshrl.u32 %v8092, 7
        %v8094 = vsub.s32 %v8043, %v8093
        %v8095 = vrot.slane %v7951, %v8094
        %v8096 = vlaneseq
        %v8097 = vshrl.u32 %v8096, 7
        %v8098 = vsub.s32 %v8043, %v8097
        %v8099 = vrot.slane %v7954, %v8098
        %v8100 = vlaneseq
        %v8101 = vshrl.u32 %v8100, 7
        %v8102 = vsub.s32 %v8043, %v8101
        %v8103 = vrot.slane %v7957, %v8102
        %v8104 = vlaneseq
        %v8105 = vshrl.u32 %v8104, 7
        %v8106 = vsub.s32 %v8043, %v8105
        %v8107 = vrot.slane %v7960, %v8106
        %v8108 = vlaneseq
        %v8109 = vshrl.u32 %v8108, 7
        %v8110 = vsub.s32 %v8043, %v8109
        %v8111 = vrot.slane %v7963, %v8110
        %v8112 = vlaneseq
        %v8113 = vshrl.u32 %v8112, 7
        %v8114 = vsub.s32 %v8043, %v8113
        %v8115 = vrot.slane %v7966, %v8114
        %v8116 = vlaneseq
        %v8117 = vshrl.u32 %v8116, 7
        %v8118 = vsub.s32 %v8043, %v8117
        %v8119 = vrot.slane %v7969, %v8118
        %v8120 = vlaneseq
        %v8121 = vshrl.u32 %v8120, 7
        %v8122 = vsub.s32 %v8043, %v8121
        %v8123 = vrot.slane %v7972, %v8122
        %v8124 = vlaneseq
        %v8125 = vshrl.u32 %v8124, 7
        %v8126 = vsub.s32 %v8043, %v8125
        %v8127 = vrot.slane %v7975, %v8126
        %v8128 = vlaneseq
        %v8129 = vshrl.u32 %v8128, 7
        %v8130 = vsub.s32 %v8043, %v8129
        %v8131 = vrot.slane %v7978, %v8130
        %v8132 = vlaneseq
        %v8133 = vshrl.u32 %v8132, 7
        %v8134 = vsub.s32 %v8043, %v8133
        %v8135 = vrot.slane %v7981, %v8134
        %v8136 = vlaneseq
        %v8137 = vshrl.u32 %v8136, 7
        %v8138 = vsub.s32 %v8043, %v8137
        %v8139 = vrot.slane %v7984, %v8138
        %v8140 = vlaneseq
        %v8141 = vshrl.u32 %v8140, 7
        %v8142 = vsub.s32 %v8043, %v8141
        %v8143 = vrot.slane %v7987, %v8142
        %v8144 = vlaneseq
        %v8145 = vshrl.u32 %v8144, 7
        %v8146 = vsub.s32 %v8043, %v8145
        %v8147 = vrot.slane %v7990, %v8146
        %v8148 = vlaneseq
        %v8149 = vshrl.u32 %v8148, 7
        %v8150 = vsub.s32 %v8043, %v8149
        %v8151 = vrot.slane %v7993, %v8150
        %v8152 = vlaneseq
        %v8153 = vshrl.u32 %v8152, 7
        %v8154 = vsub.s32 %v8043, %v8153
        %v8155 = vrot.slane %v7996, %v8154
        %v8156 = vlaneseq
        %v8157 = vshrl.u32 %v8156, 7
        %v8158 = vsub.s32 %v8043, %v8157
        %v8159 = vrot.slane %v7999, %v8158
        %v8160 = vlaneseq
        %v8161 = vshrl.u32 %v8160, 7
        %v8162 = vsub.s32 %v8043, %v8161
        %v8163 = vrot.slane %v8002, %v8162
        %v8164 = vlaneseq
        %v8165 = vshrl.u32 %v8164, 7
        %v8166 = vsub.s32 %v8043, %v8165
        %v8167 = vrot.slane %v8005, %v8166
        %v8168 = vlaneseq
        %v8169 = vshrl.u32 %v8168, 7
        %v8170 = vsub.s32 %v8043, %v8169
        %v8171 = vrot.slane %v8008, %v8170
        %vm8172 = vcmask 1041409
        %v8173 = vsel %vm8172, %v8051, %v8047
        %vm8174 = vcmask 1042434
        %v8175 = vsel %vm8174, %v8055, %v8173
        %vm8176 = vcmask 1043459
        %v8177 = vsel %vm8176, %v8059, %v8175
        %vm8178 = vcmask 1044484
        %v8179 = vsel %vm8178, %v8063, %v8177
        %vm8180 = vcmask 1045509
        %v8181 = vsel %vm8180, %v8067, %v8179
        %vm8182 = vcmask 1046534
        %v8183 = vsel %vm8182, %v8071, %v8181
        %vm8184 = vcmask 1047559
        %v8185 = vsel %vm8184, %v8075, %v8183
        %v8186 = vsel %vm8172, %v8083, %v8079
        %v8187 = vsel %vm8174, %v8087, %v8186
        %v8188 = vsel %vm8176, %v8091, %v8187
        %v8189 = vsel %vm8178, %v8095, %v8188
        %v8190 = vsel %vm8180, %v8099, %v8189
        %v8191 = vsel %vm8182, %v8103, %v8190
        %v8192 = vsel %vm8184, %v8107, %v8191
        %v8193 = vsel %vm8172, %v8115, %v8111
        %v8194 = vsel %vm8174, %v8119, %v8193
        %v8195 = vsel %vm8176, %v8123, %v8194
        %v8196 = vsel %vm8178, %v8127, %v8195
        %v8197 = vsel %vm8180, %v8131, %v8196
        %v8198 = vsel %vm8182, %v8135, %v8197
        %v8199 = vsel %vm8184, %v8139, %v8198
        %v8200 = vsel %vm8172, %v8147, %v8143
        %v8201 = vsel %vm8174, %v8151, %v8200
        %v8202 = vsel %vm8176, %v8155, %v8201
        %v8203 = vsel %vm8178, %v8159, %v8202
        %v8204 = vsel %vm8180, %v8163, %v8203
        %v8205 = vsel %vm8182, %v8167, %v8204
        %v8206 = vsel %vm8184, %v8171, %v8205
        %vm8211 = vcmask 89112
        %8212 = vst.msk [vmem:[#allocation4 + $0x3] sm:$0xff] %vm8211, %v8185
        %8213 = vst.msk [vmem:[#allocation4 + $0x13] sm:$0xff] %vm8211, %v8192
        %8214 = vst.msk [vmem:[#allocation4 + $0x23] sm:$0xff] %vm8211, %v8199
        %8215 = vst.msk [vmem:[#allocation4 + $0x33] sm:$0xff] %vm8211, %v8206
        %v8216 = vsel %vm5961, %v7881, 0.0
        %8217 = vadd.xlane.f32.xlu0 %v8216
        %v8218 = vpop.xlane.xlu0 %8217
        %v8219 = vsel %vm5961, %v7882, 0.0
        %8220 = vadd.xlane.f32.xlu0 %v8219
        %v8221 = vpop.xlane.xlu0 %8220
        %v8222 = vsel %vm5961, %v7883, 0.0
        %8223 = vadd.xlane.f32.xlu0 %v8222
        %v8224 = vpop.xlane.xlu0 %8223
        %v8225 = vsel %vm5961, %v7884, 0.0
        %8226 = vadd.xlane.f32.xlu0 %v8225
        %v8227 = vpop.xlane.xlu0 %8226
        %v8228 = vsel %vm5961, %v7885, 0.0
        %8229 = vadd.xlane.f32.xlu0 %v8228
        %v8230 = vpop.xlane.xlu0 %8229
        %v8231 = vsel %vm5961, %v7886, 0.0
        %8232 = vadd.xlane.f32.xlu0 %v8231
        %v8233 = vpop.xlane.xlu0 %8232
        %v8234 = vsel %vm5961, %v7887, 0.0
        %8235 = vadd.xlane.f32.xlu0 %v8234
        %v8236 = vpop.xlane.xlu0 %8235
        %v8237 = vsel %vm5961, %v7888, 0.0
        %8238 = vadd.xlane.f32.xlu0 %v8237
        %v8239 = vpop.xlane.xlu0 %8238
        %v8240 = vsel %vm5961, %v7889, 0.0
        %8241 = vadd.xlane.f32.xlu0 %v8240
        %v8242 = vpop.xlane.xlu0 %8241
        %v8243 = vsel %vm5961, %v7890, 0.0
        %8244 = vadd.xlane.f32.xlu0 %v8243
        %v8245 = vpop.xlane.xlu0 %8244
        %v8246 = vsel %vm5961, %v7891, 0.0
        %8247 = vadd.xlane.f32.xlu0 %v8246
        %v8248 = vpop.xlane.xlu0 %8247
        %v8249 = vsel %vm5961, %v7892, 0.0
        %8250 = vadd.xlane.f32.xlu0 %v8249
        %v8251 = vpop.xlane.xlu0 %8250
        %v8252 = vsel %vm5961, %v7893, 0.0
        %8253 = vadd.xlane.f32.xlu0 %v8252
        %v8254 = vpop.xlane.xlu0 %8253
        %v8255 = vsel %vm5961, %v7894, 0.0
        %8256 = vadd.xlane.f32.xlu0 %v8255
        %v8257 = vpop.xlane.xlu0 %8256
        %v8258 = vsel %vm5961, %v7895, 0.0
        %8259 = vadd.xlane.f32.xlu0 %v8258
        %v8260 = vpop.xlane.xlu0 %8259
        %v8261 = vsel %vm5961, %v7896, 0.0
        %8262 = vadd.xlane.f32.xlu0 %v8261
        %v8263 = vpop.xlane.xlu0 %8262
        %v8264 = vsel %vm5961, %v7897, 0.0
        %8265 = vadd.xlane.f32.xlu0 %v8264
        %v8266 = vpop.xlane.xlu0 %8265
        %v8267 = vsel %vm5961, %v7898, 0.0
        %8268 = vadd.xlane.f32.xlu0 %v8267
        %v8269 = vpop.xlane.xlu0 %8268
        %v8270 = vsel %vm5961, %v7899, 0.0
        %8271 = vadd.xlane.f32.xlu0 %v8270
        %v8272 = vpop.xlane.xlu0 %8271
        %v8273 = vsel %vm5961, %v7900, 0.0
        %8274 = vadd.xlane.f32.xlu0 %v8273
        %v8275 = vpop.xlane.xlu0 %8274
        %v8276 = vsel %vm5961, %v7901, 0.0
        %8277 = vadd.xlane.f32.xlu0 %v8276
        %v8278 = vpop.xlane.xlu0 %8277
        %v8279 = vsel %vm5961, %v7902, 0.0
        %8280 = vadd.xlane.f32.xlu0 %v8279
        %v8281 = vpop.xlane.xlu0 %8280
        %v8282 = vsel %vm5961, %v7903, 0.0
        %8283 = vadd.xlane.f32.xlu0 %v8282
        %v8284 = vpop.xlane.xlu0 %8283
        %v8285 = vsel %vm5961, %v7904, 0.0
        %8286 = vadd.xlane.f32.xlu0 %v8285
        %v8287 = vpop.xlane.xlu0 %8286
        %v8288 = vsel %vm5961, %v7905, 0.0
        %8289 = vadd.xlane.f32.xlu0 %v8288
        %v8290 = vpop.xlane.xlu0 %8289
        %v8291 = vsel %vm5961, %v7906, 0.0
        %8292 = vadd.xlane.f32.xlu0 %v8291
        %v8293 = vpop.xlane.xlu0 %8292
        %v8294 = vsel %vm5961, %v7907, 0.0
        %8295 = vadd.xlane.f32.xlu0 %v8294
        %v8296 = vpop.xlane.xlu0 %8295
        %v8297 = vsel %vm5961, %v7908, 0.0
        %8298 = vadd.xlane.f32.xlu0 %v8297
        %v8299 = vpop.xlane.xlu0 %8298
        %v8300 = vsel %vm5961, %v7909, 0.0
        %8301 = vadd.xlane.f32.xlu0 %v8300
        %v8302 = vpop.xlane.xlu0 %8301
        %v8303 = vsel %vm5961, %v7910, 0.0
        %8304 = vadd.xlane.f32.xlu0 %v8303
        %v8305 = vpop.xlane.xlu0 %8304
        %v8306 = vsel %vm5961, %v7911, 0.0
        %8307 = vadd.xlane.f32.xlu0 %v8306
        %v8308 = vpop.xlane.xlu0 %8307
        %v8309 = vsel %vm5961, %v7912, 0.0
        %8310 = vadd.xlane.f32.xlu0 %v8309
        %v8311 = vpop.xlane.xlu0 %8310
        %v8312 = vrcp.pop 32.0
        %v8313 = vmul.f32 %v8218, %v8312
        %v8314 = vmul.f32 %v8221, %v8312
        %v8315 = vmul.f32 %v8224, %v8312
        %v8316 = vmul.f32 %v8227, %v8312
        %v8317 = vmul.f32 %v8230, %v8312
        %v8318 = vmul.f32 %v8233, %v8312
        %v8319 = vmul.f32 %v8236, %v8312
        %v8320 = vmul.f32 %v8239, %v8312
        %v8321 = vmul.f32 %v8242, %v8312
        %v8322 = vmul.f32 %v8245, %v8312
        %v8323 = vmul.f32 %v8248, %v8312
        %v8324 = vmul.f32 %v8251, %v8312
        %v8325 = vmul.f32 %v8254, %v8312
        %v8326 = vmul.f32 %v8257, %v8312
        %v8327 = vmul.f32 %v8260, %v8312
        %v8328 = vmul.f32 %v8263, %v8312
        %v8329 = vmul.f32 %v8266, %v8312
        %v8330 = vmul.f32 %v8269, %v8312
        %v8331 = vmul.f32 %v8272, %v8312
        %v8332 = vmul.f32 %v8275, %v8312
        %v8333 = vmul.f32 %v8278, %v8312
        %v8334 = vmul.f32 %v8281, %v8312
        %v8335 = vmul.f32 %v8284, %v8312
        %v8336 = vmul.f32 %v8287, %v8312
        %v8337 = vmul.f32 %v8290, %v8312
        %v8338 = vmul.f32 %v8293, %v8312
        %v8339 = vmul.f32 %v8296, %v8312
        %v8340 = vmul.f32 %v8299, %v8312
        %v8341 = vmul.f32 %v8302, %v8312
        %v8342 = vmul.f32 %v8305, %v8312
        %v8343 = vmul.f32 %v8308, %v8312
        %v8344 = vmul.f32 %v8311, %v8312
        %v8377 = vadd.s32 %v8042, 4294967279
        %v8378 = vlaneseq
        %v8379 = vshrl.u32 %v8378, 7
        %v8380 = vsub.s32 %v8377, %v8379
        %v8381 = vrot.slane %v8313, %v8380
        %v8382 = vlaneseq
        %v8383 = vshrl.u32 %v8382, 7
        %v8384 = vsub.s32 %v8377, %v8383
        %v8385 = vrot.slane %v8314, %v8384
        %v8386 = vlaneseq
        %v8387 = vshrl.u32 %v8386, 7
        %v8388 = vsub.s32 %v8377, %v8387
        %v8389 = vrot.slane %v8315, %v8388
        %v8390 = vlaneseq
        %v8391 = vshrl.u32 %v8390, 7
        %v8392 = vsub.s32 %v8377, %v8391
        %v8393 = vrot.slane %v8316, %v8392
        %v8394 = vlaneseq
        %v8395 = vshrl.u32 %v8394, 7
        %v8396 = vsub.s32 %v8377, %v8395
        %v8397 = vrot.slane %v8317, %v8396
        %v8398 = vlaneseq
        %v8399 = vshrl.u32 %v8398, 7
        %v8400 = vsub.s32 %v8377, %v8399
        %v8401 = vrot.slane %v8318, %v8400
        %v8402 = vlaneseq
        %v8403 = vshrl.u32 %v8402, 7
        %v8404 = vsub.s32 %v8377, %v8403
        %v8405 = vrot.slane %v8319, %v8404
        %v8406 = vlaneseq
        %v8407 = vshrl.u32 %v8406, 7
        %v8408 = vsub.s32 %v8377, %v8407
        %v8409 = vrot.slane %v8320, %v8408
        %v8410 = vlaneseq
        %v8411 = vshrl.u32 %v8410, 7
        %v8412 = vsub.s32 %v8377, %v8411
        %v8413 = vrot.slane %v8321, %v8412
        %v8414 = vlaneseq
        %v8415 = vshrl.u32 %v8414, 7
        %v8416 = vsub.s32 %v8377, %v8415
        %v8417 = vrot.slane %v8322, %v8416
        %v8418 = vlaneseq
        %v8419 = vshrl.u32 %v8418, 7
        %v8420 = vsub.s32 %v8377, %v8419
        %v8421 = vrot.slane %v8323, %v8420
        %v8422 = vlaneseq
        %v8423 = vshrl.u32 %v8422, 7
        %v8424 = vsub.s32 %v8377, %v8423
        %v8425 = vrot.slane %v8324, %v8424
        %v8426 = vlaneseq
        %v8427 = vshrl.u32 %v8426, 7
        %v8428 = vsub.s32 %v8377, %v8427
        %v8429 = vrot.slane %v8325, %v8428
        %v8430 = vlaneseq
        %v8431 = vshrl.u32 %v8430, 7
        %v8432 = vsub.s32 %v8377, %v8431
        %v8433 = vrot.slane %v8326, %v8432
        %v8434 = vlaneseq
        %v8435 = vshrl.u32 %v8434, 7
        %v8436 = vsub.s32 %v8377, %v8435
        %v8437 = vrot.slane %v8327, %v8436
        %v8438 = vlaneseq
        %v8439 = vshrl.u32 %v8438, 7
        %v8440 = vsub.s32 %v8377, %v8439
        %v8441 = vrot.slane %v8328, %v8440
        %v8442 = vlaneseq
        %v8443 = vshrl.u32 %v8442, 7
        %v8444 = vsub.s32 %v8377, %v8443
        %v8445 = vrot.slane %v8329, %v8444
        %v8446 = vlaneseq
        %v8447 = vshrl.u32 %v8446, 7
        %v8448 = vsub.s32 %v8377, %v8447
        %v8449 = vrot.slane %v8330, %v8448
        %v8450 = vlaneseq
        %v8451 = vshrl.u32 %v8450, 7
        %v8452 = vsub.s32 %v8377, %v8451
        %v8453 = vrot.slane %v8331, %v8452
        %v8454 = vlaneseq
        %v8455 = vshrl.u32 %v8454, 7
        %v8456 = vsub.s32 %v8377, %v8455
        %v8457 = vrot.slane %v8332, %v8456
        %v8458 = vlaneseq
        %v8459 = vshrl.u32 %v8458, 7
        %v8460 = vsub.s32 %v8377, %v8459
        %v8461 = vrot.slane %v8333, %v8460
        %v8462 = vlaneseq
        %v8463 = vshrl.u32 %v8462, 7
        %v8464 = vsub.s32 %v8377, %v8463
        %v8465 = vrot.slane %v8334, %v8464
        %v8466 = vlaneseq
        %v8467 = vshrl.u32 %v8466, 7
        %v8468 = vsub.s32 %v8377, %v8467
        %v8469 = vrot.slane %v8335, %v8468
        %v8470 = vlaneseq
        %v8471 = vshrl.u32 %v8470, 7
        %v8472 = vsub.s32 %v8377, %v8471
        %v8473 = vrot.slane %v8336, %v8472
        %v8474 = vlaneseq
        %v8475 = vshrl.u32 %v8474, 7
        %v8476 = vsub.s32 %v8377, %v8475
        %v8477 = vrot.slane %v8337, %v8476
        %v8478 = vlaneseq
        %v8479 = vshrl.u32 %v8478, 7
        %v8480 = vsub.s32 %v8377, %v8479
        %v8481 = vrot.slane %v8338, %v8480
        %v8482 = vlaneseq
        %v8483 = vshrl.u32 %v8482, 7
        %v8484 = vsub.s32 %v8377, %v8483
        %v8485 = vrot.slane %v8339, %v8484
        %v8486 = vlaneseq
        %v8487 = vshrl.u32 %v8486, 7
        %v8488 = vsub.s32 %v8377, %v8487
        %v8489 = vrot.slane %v8340, %v8488
        %v8490 = vlaneseq
        %v8491 = vshrl.u32 %v8490, 7
        %v8492 = vsub.s32 %v8377, %v8491
        %v8493 = vrot.slane %v8341, %v8492
        %v8494 = vlaneseq
        %v8495 = vshrl.u32 %v8494, 7
        %v8496 = vsub.s32 %v8377, %v8495
        %v8497 = vrot.slane %v8342, %v8496
        %v8498 = vlaneseq
        %v8499 = vshrl.u32 %v8498, 7
        %v8500 = vsub.s32 %v8377, %v8499
        %v8501 = vrot.slane %v8343, %v8500
        %v8502 = vlaneseq
        %v8503 = vshrl.u32 %v8502, 7
        %v8504 = vsub.s32 %v8377, %v8503
        %v8505 = vrot.slane %v8344, %v8504
        %v8506 = vsel %vm8172, %v8385, %v8381
        %v8507 = vsel %vm8174, %v8389, %v8506
        %v8508 = vsel %vm8176, %v8393, %v8507
        %v8509 = vsel %vm8178, %v8397, %v8508
        %v8510 = vsel %vm8180, %v8401, %v8509
        %v8511 = vsel %vm8182, %v8405, %v8510
        %v8512 = vsel %vm8184, %v8409, %v8511
        %v8513 = vsel %vm8172, %v8417, %v8413
        %v8514 = vsel %vm8174, %v8421, %v8513
        %v8515 = vsel %vm8176, %v8425, %v8514
        %v8516 = vsel %vm8178, %v8429, %v8515
        %v8517 = vsel %vm8180, %v8433, %v8516
        %v8518 = vsel %vm8182, %v8437, %v8517
        %v8519 = vsel %vm8184, %v8441, %v8518
        %v8520 = vsel %vm8172, %v8449, %v8445
        %v8521 = vsel %vm8174, %v8453, %v8520
        %v8522 = vsel %vm8176, %v8457, %v8521
        %v8523 = vsel %vm8178, %v8461, %v8522
        %v8524 = vsel %vm8180, %v8465, %v8523
        %v8525 = vsel %vm8182, %v8469, %v8524
        %v8526 = vsel %vm8184, %v8473, %v8525
        %v8527 = vsel %vm8172, %v8481, %v8477
        %v8528 = vsel %vm8174, %v8485, %v8527
        %v8529 = vsel %vm8176, %v8489, %v8528
        %v8530 = vsel %vm8178, %v8493, %v8529
        %v8531 = vsel %vm8180, %v8497, %v8530
        %v8532 = vsel %vm8182, %v8501, %v8531
        %v8533 = vsel %vm8184, %v8505, %v8532
        %vm8538 = vcmask 203912
        %8539 = vst.msk [vmem:[#allocation4 + $0x3] sm:$0xff] %vm8538, %v8512
        %8540 = vst.msk [vmem:[#allocation4 + $0x13] sm:$0xff] %vm8538, %v8519
        %8541 = vst.msk [vmem:[#allocation4 + $0x23] sm:$0xff] %vm8538, %v8526
        %8542 = vst.msk [vmem:[#allocation4 + $0x33] sm:$0xff] %vm8538, %v8533
        %v8543 = vld [vmem:[#allocation4] sm:$0xff]
        %v8544 = vld [vmem:[#allocation4 + $0x10] sm:$0xff]
        %v8545 = vld [vmem:[#allocation4 + $0x20] sm:$0xff]
        %v8546 = vld [vmem:[#allocation4 + $0x30] sm:$0xff]
        %v8547 = vld [vmem:[#allocation4 + $0x1] sm:$0xff]
        %v8548 = vld [vmem:[#allocation4 + $0x11] sm:$0xff]
        %v8549 = vld [vmem:[#allocation4 + $0x21] sm:$0xff]
        %v8550 = vld [vmem:[#allocation4 + $0x31] sm:$0xff]
        %v8551 = vld [vmem:[#allocation4 + $0x2] sm:$0xff]
        %v8552 = vld [vmem:[#allocation4 + $0x12] sm:$0xff]
        %v8553 = vld [vmem:[#allocation4 + $0x22] sm:$0xff]
        %v8554 = vld [vmem:[#allocation4 + $0x32] sm:$0xff]
        %v8555 = vld [vmem:[#allocation4 + $0x3] sm:$0xff]
        %v8556 = vld [vmem:[#allocation4 + $0x13] sm:$0xff]
        %v8557 = vld [vmem:[#allocation4 + $0x23] sm:$0xff]
        %v8558 = vld [vmem:[#allocation4 + $0x33] sm:$0xff]
        %v8559 = vld [vmem:[#allocation4 + $0x4] sm:$0xff]
        %v8560 = vld [vmem:[#allocation4 + $0x14] sm:$0xff]
        %v8561 = vld [vmem:[#allocation4 + $0x24] sm:$0xff]
        %v8562 = vld [vmem:[#allocation4 + $0x34] sm:$0xff]
        %v8563 = vld [vmem:[#allocation4 + $0x5] sm:$0xff]
        %v8564 = vld [vmem:[#allocation4 + $0x15] sm:$0xff]
        %v8565 = vld [vmem:[#allocation4 + $0x25] sm:$0xff]
        %v8566 = vld [vmem:[#allocation4 + $0x35] sm:$0xff]
        %v8567 = vld [vmem:[#allocation4 + $0x6] sm:$0xff]
        %v8568 = vld [vmem:[#allocation4 + $0x16] sm:$0xff]
        %v8569 = vld [vmem:[#allocation4 + $0x26] sm:$0xff]
        %v8570 = vld [vmem:[#allocation4 + $0x36] sm:$0xff]
        %8575 = vrot.lane.b32.xlu0 %v8547, 28
        %v8576 = vpop.permute.xlu0 %8575
        %8577 = vrot.lane.b32.xlu0 %v8548, 28
        %v8578 = vpop.permute.xlu0 %8577
        %8579 = vrot.lane.b32.xlu0 %v8549, 28
        %v8580 = vpop.permute.xlu0 %8579
        %8581 = vrot.lane.b32.xlu0 %v8550, 28
        %v8582 = vpop.permute.xlu0 %8581
        %8591 = vrot.lane.b32.xlu0 %v8551, 56
        %v8592 = vpop.permute.xlu0 %8591
        %8593 = vrot.lane.b32.xlu0 %v8552, 56
        %v8594 = vpop.permute.xlu0 %8593
        %8595 = vrot.lane.b32.xlu0 %v8553, 56
        %v8596 = vpop.permute.xlu0 %8595
        %8597 = vrot.lane.b32.xlu0 %v8554, 56
        %v8598 = vpop.permute.xlu0 %8597
        %8607 = vrot.lane.b32.xlu0 %v8555, 84
        %v8608 = vpop.permute.xlu0 %8607
        %8609 = vrot.lane.b32.xlu0 %v8556, 84
        %v8610 = vpop.permute.xlu0 %8609
        %8611 = vrot.lane.b32.xlu0 %v8557, 84
        %v8612 = vpop.permute.xlu0 %8611
        %8613 = vrot.lane.b32.xlu0 %v8558, 84
        %v8614 = vpop.permute.xlu0 %8613
        %8623 = vrot.lane.b32.xlu0 %v8559, 112
        %v8624 = vpop.permute.xlu0 %8623
        %8625 = vrot.lane.b32.xlu0 %v8560, 112
        %v8626 = vpop.permute.xlu0 %8625
        %8627 = vrot.lane.b32.xlu0 %v8561, 112
        %v8628 = vpop.permute.xlu0 %8627
        %8629 = vrot.lane.b32.xlu0 %v8562, 112
        %v8630 = vpop.permute.xlu0 %8629
        %8639 = vrot.lane.b32.xlu0 %v8563, 12
        %v8640 = vpop.permute.xlu0 %8639
        %8641 = vrot.lane.b32.xlu0 %v8564, 12
        %v8642 = vpop.permute.xlu0 %8641
        %8643 = vrot.lane.b32.xlu0 %v8565, 12
        %v8644 = vpop.permute.xlu0 %8643
        %8645 = vrot.lane.b32.xlu0 %v8566, 12
        %v8646 = vpop.permute.xlu0 %8645
        %8655 = vrot.lane.b32.xlu0 %v8567, 40
        %v8656 = vpop.permute.xlu0 %8655
        %8657 = vrot.lane.b32.xlu0 %v8568, 40
        %v8658 = vpop.permute.xlu0 %8657
        %8659 = vrot.lane.b32.xlu0 %v8569, 40
        %v8660 = vpop.permute.xlu0 %8659
        %8661 = vrot.lane.b32.xlu0 %v8570, 40
        %v8662 = vpop.permute.xlu0 %8661
        %v8667 = vsel %vm677, %v8543, %v8576
        %v8668 = vsel %vm677, %v8544, %v8578
        %v8669 = vsel %vm677, %v8545, %v8580
        %v8670 = vsel %vm677, %v8546, %v8582
        %vm8671 = vcmask 457728
        %v8672 = vsel %vm8671, %v8667, %v8592
        %v8673 = vsel %vm8671, %v8668, %v8594
        %v8674 = vsel %vm8671, %v8669, %v8596
        %v8675 = vsel %vm8671, %v8670, %v8598
        %vm8676 = vcmask 687104
        %v8677 = vsel %vm8676, %v8672, %v8608
        %v8678 = vsel %vm8676, %v8673, %v8610
        %v8679 = vsel %vm8676, %v8674, %v8612
        %v8680 = vsel %vm8676, %v8675, %v8614
        %vm8681 = vcmask 916480
        %v8682 = vsel %vm8681, %v8677, %v8624
        %v8683 = vsel %vm8681, %v8678, %v8626
        %v8684 = vsel %vm8681, %v8679, %v8628
        %v8685 = vsel %vm8681, %v8680, %v8630
        %vm8686 = vcmask 97280
        %v8687 = vsel %vm8686, %v8624, %v8640
        %v8688 = vsel %vm8686, %v8626, %v8642
        %v8689 = vsel %vm8686, %v8628, %v8644
        %v8690 = vsel %vm8686, %v8630, %v8646
        %vm8691 = vcmask 326656
        %v8692 = vsel %vm8691, %v8687, %v8656
        %v8693 = vsel %vm8691, %v8688, %v8658
        %v8694 = vsel %vm8691, %v8689, %v8660
        %v8695 = vsel %vm8691, %v8690, %v8662
        %v8696 = vld [vmem:[%s11] sm:$0xff]
        %v8697 = vld [vmem:[%s11 + $0x8] sm:$0xff]
        %v8698 = vld [vmem:[%s11 + $0x10] sm:$0xff]
        %v8699 = vld [vmem:[%s11 + $0x18] sm:$0xff]
        %v8700 = vld [vmem:[%s11 + $0x20] sm:$0xff]
        %v8701 = vld [vmem:[%s11 + $0x28] sm:$0xff]
        %v8702 = vld [vmem:[%s11 + $0x30] sm:$0xff]
        %v8703 = vld [vmem:[%s11 + $0x38] sm:$0xff]
        %v8704 = vld [vmem:[%s11 + $0x40] sm:$0xff]
        %v8705 = vld [vmem:[%s11 + $0x48] sm:$0xff]
        %v8706 = vld [vmem:[%s11 + $0x50] sm:$0xff]
        %v8707 = vld [vmem:[%s11 + $0x58] sm:$0xff]
        %v8708 = vld [vmem:[%s11 + $0x60] sm:$0xff]
        %v8709 = vld [vmem:[%s11 + $0x68] sm:$0xff]
        %v8710 = vld [vmem:[%s11 + $0x70] sm:$0xff]
        %v8711 = vld [vmem:[%s11 + $0x78] sm:$0xff]
        %v8712 = vld [vmem:[%s11 + $0x80] sm:$0xff]
        %v8713 = vld [vmem:[%s11 + $0x88] sm:$0xff]
        %v8714 = vld [vmem:[%s11 + $0x90] sm:$0xff]
        %v8715 = vld [vmem:[%s11 + $0x98] sm:$0xff]
        %v8716 = vld [vmem:[%s11 + $0xa0] sm:$0xff]
        %v8717 = vld [vmem:[%s11 + $0xa8] sm:$0xff]
        %v8718 = vld [vmem:[%s11 + $0xb0] sm:$0xff]
        %v8719 = vld [vmem:[%s11 + $0xb8] sm:$0xff]
        %v8720 = vld [vmem:[%s11 + $0xc0] sm:$0xf]
        %s8721 = sld [smem:[#allocation5]]
        %v8722 = vstv %s8721
        %vm8723 = vcmask 556032
        %v8725 = vsel %vm8723, %v8692, 0
        %v8728 = vsel %vm8723, %v8693, 0
        %v8731 = vsel %vm8723, %v8694, 0
        %v8734 = vsel %vm8723, %v8695, 0
        %vm8736 = vcmask 1043456
        %v8738 = vsel %vm8736, %v8720, 0
        %8740 = vmatprep.subr.mxu0 0.0
        %8741 = vmatpush1.msra.mxu0 %v8696
        %8742 = vmatprep.subr.mxu0 0.0
        %8743 = vmatpush1.msra.mxu0 %v8697
        %8744 = vmatprep.subr.mxu0 0.0
        %8745 = vmatpush1.msra.mxu0 %v8698
        %8746 = vmatprep.subr.mxu0 0.0
        %8747 = vmatpush1.msra.mxu0 %v8699
        %8748 = vmatprep.subr.mxu0 0.0
        %8749 = vmatpush1.msra.mxu0 %v8700
        %8750 = vmatprep.subr.mxu0 0.0
        %8751 = vmatpush1.msra.mxu0 %v8701
        %8752 = vmatprep.subr.mxu0 0.0
        %8753 = vmatpush1.msra.mxu0 %v8702
        %8754 = vmatprep.subr.mxu0 0.0
        %8755 = vmatpush1.msra.mxu0 %v8703
        %8756 = vmatprep.subr.mxu0 0.0
        %8757 = vmatpush1.msra.mxu0 %v8704
        %8758 = vmatprep.subr.mxu0 0.0
        %8759 = vmatpush1.msra.mxu0 %v8705
        %8760 = vmatprep.subr.mxu0 0.0
        %8761 = vmatpush1.msra.mxu0 %v8706
        %8762 = vmatprep.subr.mxu0 0.0
        %8763 = vmatpush1.msra.mxu0 %v8707
        %8764 = vmatprep.subr.mxu0 0.0
        %8765 = vmatpush1.msra.mxu0 %v8708
        %8766 = vmatprep.subr.mxu0 0.0
        %8767 = vmatpush1.msra.mxu0 %v8709
        %8768 = vmatprep.subr.mxu0 0.0
        %8769 = vmatpush1.msra.mxu0 %v8710
        %8770 = vmatprep.subr.mxu0 0.0
        %8771 = vmatpush1.msra.mxu0 %v8711
        %8772 = vmatprep.subr.mxu0 0.0
        %8773 = vmatpush1.msra.mxu0 %v8712
        %8774 = vmatprep.subr.mxu0 0.0
        %8775 = vmatpush1.msra.mxu0 %v8713
        %8776 = vmatprep.subr.mxu0 0.0
        %8777 = vmatpush1.msra.mxu0 %v8714
        %8778 = vmatprep.subr.mxu0 0.0
        %8779 = vmatpush1.msra.mxu0 %v8715
        %8780 = vmatprep.subr.mxu0 0.0
        %8781 = vmatpush1.msra.mxu0 %v8716
        %8782 = vmatprep.subr.mxu0 0.0
        %8783 = vmatpush1.msra.mxu0 %v8717
        %8784 = vmatprep.subr.mxu0 0.0
        %8785 = vmatpush1.msra.mxu0 %v8718
        %8786 = vmatprep.subr.mxu0 0.0
        %8787 = vmatpush1.msra.mxu0 %v8719
        %8788 = vmatprep.subr.mxu0 0.0
        %8789 = vmatpush1.msra.mxu0 %v8738
        %8790 = vmatprep.subr.mxu0 0.0
        %8791 = vmatpush1.msra.mxu0 0.0
        %8792 = vmatprep.subr.mxu0 0.0
        %8793 = vmatpush1.msra.mxu0 0.0
        %8794 = vmatprep.subr.mxu0 0.0
        %8795 = vmatpush1.msra.mxu0 0.0
        %8796 = vmatprep.subr.mxu0 0.0
        %8797 = vmatpush1.msra.mxu0 0.0
        %8798 = vmatprep.subr.mxu0 0.0
        %8799 = vmatpush1.msra.mxu0 0.0
        %8800 = vmatprep.subr.mxu0 0.0
        %8801 = vmatpush1.msra.mxu0 0.0
        %8802 = vmatprep.subr.mxu0 0.0
        %8803 = vmatpush1.msra.mxu0 0.0
        %8804 = vmatprep.mubr.f32.mxu0 %v8725
        %8805 = vmatmul.mubr.f32.gmra.mrb[0].mxu0 %v8682
        %v8806 = vpop.f32.mrb[0].mxu0
        %v8807 = vadd.f32 %v8722, %v8806
        %v8808 = vpop.f32.mrb[0].mxu0
        %8809 = vmatprep.mubr.f32.mxu0 %v8728
        %8810 = vmatmul.mubr.f32.gmra.mrb[0].mxu0 %v8683
        %v8811 = vpop.f32.mrb[0].mxu0
        %v8812 = vadd.f32 %v8722, %v8811
        %v8813 = vpop.f32.mrb[0].mxu0
        %8814 = vmatprep.mubr.f32.mxu0 %v8731
        %8815 = vmatmul.mubr.f32.gmra.mrb[0].mxu0 %v8684
        %v8816 = vpop.f32.mrb[0].mxu0
        %v8817 = vadd.f32 %v8722, %v8816
        %v8818 = vpop.f32.mrb[0].mxu0
        %8819 = vmatprep.mubr.f32.mxu0 %v8734
        %8820 = vmatmul.mubr.f32.gmra.mrb[0].mxu0 %v8685
        %v8821 = vpop.f32.mrb[0].mxu0
        %v8822 = vadd.f32 %v8722, %v8821
        %v8823 = vpop.f32.mrb[0].mxu0
        %8824 = vdwg.mxu0
        %v8825 = vxor.u32 %v8807, 2147483648
        %v8826 = vxor.u32 %v8812, 2147483648
        %v8827 = vxor.u32 %v8817, 2147483648
        %v8828 = vxor.u32 %v8822, 2147483648
        %v8829 = vmul.f32 %v8825, 1.442695
        %v8830 = vpow.pop %v8829
        %v8831 = vmul.f32 %v8826, 1.442695
        %v8832 = vpow.pop %v8831
        %v8833 = vmul.f32 %v8827, 1.442695
        %v8834 = vpow.pop %v8833
        %v8835 = vmul.f32 %v8828, 1.442695
        %v8836 = vpow.pop %v8835
        %v8837 = vadd.f32 %v8830, 1.0
        %v8838 = vadd.f32 %v8832, 1.0
        %v8839 = vadd.f32 %v8834, 1.0
        %v8840 = vadd.f32 %v8836, 1.0
        %v8841 = vrcp.pop %v8837
        %v8842 = vmul.f32 1.0, %v8841
        %v8843 = vrcp.pop %v8838
        %v8844 = vmul.f32 1.0, %v8843
        %v8845 = vrcp.pop %v8839
        %v8846 = vmul.f32 1.0, %v8845
        %v8847 = vrcp.pop %v8840
        %v8848 = vmul.f32 1.0, %v8847
        %v8849 = vlaneseq
        %v8850 = vshrl.u32 %v8849, 7
        %v8851 = vsub.s32 0, %v8850
        %v8852 = vrot.slane %v8842, %v8851
        %8854 = vbcast.lane.b32.xlu0 %v8852, 256
        %v8855 = vpop.permute.xlu0 %8854
        %v8856 = vlaneseq
        %v8857 = vshrl.u32 %v8856, 7
        %v8858 = vsub.s32 1, %v8857
        %v8859 = vrot.slane %v8842, %v8858
        %8861 = vbcast.lane.b32.xlu0 %v8859, 256
        %v8862 = vpop.permute.xlu0 %8861
        %v8863 = vlaneseq
        %v8864 = vshrl.u32 %v8863, 7
        %v8865 = vsub.s32 2, %v8864
        %v8866 = vrot.slane %v8842, %v8865
        %8868 = vbcast.lane.b32.xlu0 %v8866, 256
        %v8869 = vpop.permute.xlu0 %8868
        %v8870 = vlaneseq
        %v8871 = vshrl.u32 %v8870, 7
        %v8872 = vsub.s32 3, %v8871
        %v8873 = vrot.slane %v8842, %v8872
        %8875 = vbcast.lane.b32.xlu0 %v8873, 256
        %v8876 = vpop.permute.xlu0 %8875
        %v8877 = vlaneseq
        %v8878 = vshrl.u32 %v8877, 7
        %v8879 = vsub.s32 4, %v8878
        %v8880 = vrot.slane %v8842, %v8879
        %8882 = vbcast.lane.b32.xlu0 %v8880, 256
        %v8883 = vpop.permute.xlu0 %8882
        %v8884 = vlaneseq
        %v8885 = vshrl.u32 %v8884, 7
        %v8886 = vsub.s32 5, %v8885
        %v8887 = vrot.slane %v8842, %v8886
        %8889 = vbcast.lane.b32.xlu0 %v8887, 256
        %v8890 = vpop.permute.xlu0 %8889
        %v8891 = vlaneseq
        %v8892 = vshrl.u32 %v8891, 7
        %v8893 = vsub.s32 6, %v8892
        %v8894 = vrot.slane %v8842, %v8893
        %8896 = vbcast.lane.b32.xlu0 %v8894, 256
        %v8897 = vpop.permute.xlu0 %8896
        %v8898 = vlaneseq
        %v8899 = vshrl.u32 %v8898, 7
        %v8900 = vsub.s32 7, %v8899
        %v8901 = vrot.slane %v8842, %v8900
        %8903 = vbcast.lane.b32.xlu0 %v8901, 256
        %v8904 = vpop.permute.xlu0 %8903
        %v8905 = vlaneseq
        %v8906 = vshrl.u32 %v8905, 7
        %v8907 = vsub.s32 0, %v8906
        %v8908 = vrot.slane %v8844, %v8907
        %8910 = vbcast.lane.b32.xlu0 %v8908, 256
        %v8911 = vpop.permute.xlu0 %8910
        %v8912 = vlaneseq
        %v8913 = vshrl.u32 %v8912, 7
        %v8914 = vsub.s32 1, %v8913
        %v8915 = vrot.slane %v8844, %v8914
        %8917 = vbcast.lane.b32.xlu0 %v8915, 256
        %v8918 = vpop.permute.xlu0 %8917
        %v8919 = vlaneseq
        %v8920 = vshrl.u32 %v8919, 7
        %v8921 = vsub.s32 2, %v8920
        %v8922 = vrot.slane %v8844, %v8921
        %8924 = vbcast.lane.b32.xlu0 %v8922, 256
        %v8925 = vpop.permute.xlu0 %8924
        %v8926 = vlaneseq
        %v8927 = vshrl.u32 %v8926, 7
        %v8928 = vsub.s32 3, %v8927
        %v8929 = vrot.slane %v8844, %v8928
        %8931 = vbcast.lane.b32.xlu0 %v8929, 256
        %v8932 = vpop.permute.xlu0 %8931
        %v8933 = vlaneseq
        %v8934 = vshrl.u32 %v8933, 7
        %v8935 = vsub.s32 4, %v8934
        %v8936 = vrot.slane %v8844, %v8935
        %8938 = vbcast.lane.b32.xlu0 %v8936, 256
        %v8939 = vpop.permute.xlu0 %8938
        %v8940 = vlaneseq
        %v8941 = vshrl.u32 %v8940, 7
        %v8942 = vsub.s32 5, %v8941
        %v8943 = vrot.slane %v8844, %v8942
        %8945 = vbcast.lane.b32.xlu0 %v8943, 256
        %v8946 = vpop.permute.xlu0 %8945
        %v8947 = vlaneseq
        %v8948 = vshrl.u32 %v8947, 7
        %v8949 = vsub.s32 6, %v8948
        %v8950 = vrot.slane %v8844, %v8949
        %8952 = vbcast.lane.b32.xlu0 %v8950, 256
        %v8953 = vpop.permute.xlu0 %8952
        %v8954 = vlaneseq
        %v8955 = vshrl.u32 %v8954, 7
        %v8956 = vsub.s32 7, %v8955
        %v8957 = vrot.slane %v8844, %v8956
        %8959 = vbcast.lane.b32.xlu0 %v8957, 256
        %v8960 = vpop.permute.xlu0 %8959
        %v8961 = vlaneseq
        %v8962 = vshrl.u32 %v8961, 7
        %v8963 = vsub.s32 0, %v8962
        %v8964 = vrot.slane %v8846, %v8963
        %8966 = vbcast.lane.b32.xlu0 %v8964, 256
        %v8967 = vpop.permute.xlu0 %8966
        %v8968 = vlaneseq
        %v8969 = vshrl.u32 %v8968, 7
        %v8970 = vsub.s32 1, %v8969
        %v8971 = vrot.slane %v8846, %v8970
        %8973 = vbcast.lane.b32.xlu0 %v8971, 256
        %v8974 = vpop.permute.xlu0 %8973
        %v8975 = vlaneseq
        %v8976 = vshrl.u32 %v8975, 7
        %v8977 = vsub.s32 2, %v8976
        %v8978 = vrot.slane %v8846, %v8977
        %8980 = vbcast.lane.b32.xlu0 %v8978, 256
        %v8981 = vpop.permute.xlu0 %8980
        %v8982 = vlaneseq
        %v8983 = vshrl.u32 %v8982, 7
        %v8984 = vsub.s32 3, %v8983
        %v8985 = vrot.slane %v8846, %v8984
        %8987 = vbcast.lane.b32.xlu0 %v8985, 256
        %v8988 = vpop.permute.xlu0 %8987
        %v8989 = vlaneseq
        %v8990 = vshrl.u32 %v8989, 7
        %v8991 = vsub.s32 4, %v8990
        %v8992 = vrot.slane %v8846, %v8991
        %8994 = vbcast.lane.b32.xlu0 %v8992, 256
        %v8995 = vpop.permute.xlu0 %8994
        %v8996 = vlaneseq
        %v8997 = vshrl.u32 %v8996, 7
        %v8998 = vsub.s32 5, %v8997
        %v8999 = vrot.slane %v8846, %v8998
        %9001 = vbcast.lane.b32.xlu0 %v8999, 256
        %v9002 = vpop.permute.xlu0 %9001
        %v9003 = vlaneseq
        %v9004 = vshrl.u32 %v9003, 7
        %v9005 = vsub.s32 6, %v9004
        %v9006 = vrot.slane %v8846, %v9005
        %9008 = vbcast.lane.b32.xlu0 %v9006, 256
        %v9009 = vpop.permute.xlu0 %9008
        %v9010 = vlaneseq
        %v9011 = vshrl.u32 %v9010, 7
        %v9012 = vsub.s32 7, %v9011
        %v9013 = vrot.slane %v8846, %v9012
        %9015 = vbcast.lane.b32.xlu0 %v9013, 256
        %v9016 = vpop.permute.xlu0 %9015
        %v9017 = vlaneseq
        %v9018 = vshrl.u32 %v9017, 7
        %v9019 = vsub.s32 0, %v9018
        %v9020 = vrot.slane %v8848, %v9019
        %9022 = vbcast.lane.b32.xlu0 %v9020, 256
        %v9023 = vpop.permute.xlu0 %9022
        %v9024 = vlaneseq
        %v9025 = vshrl.u32 %v9024, 7
        %v9026 = vsub.s32 1, %v9025
        %v9027 = vrot.slane %v8848, %v9026
        %9029 = vbcast.lane.b32.xlu0 %v9027, 256
        %v9030 = vpop.permute.xlu0 %9029
        %v9031 = vlaneseq
        %v9032 = vshrl.u32 %v9031, 7
        %v9033 = vsub.s32 2, %v9032
        %v9034 = vrot.slane %v8848, %v9033
        %9036 = vbcast.lane.b32.xlu0 %v9034, 256
        %v9037 = vpop.permute.xlu0 %9036
        %v9038 = vlaneseq
        %v9039 = vshrl.u32 %v9038, 7
        %v9040 = vsub.s32 3, %v9039
        %v9041 = vrot.slane %v8848, %v9040
        %9043 = vbcast.lane.b32.xlu0 %v9041, 256
        %v9044 = vpop.permute.xlu0 %9043
        %v9045 = vlaneseq
        %v9046 = vshrl.u32 %v9045, 7
        %v9047 = vsub.s32 4, %v9046
        %v9048 = vrot.slane %v8848, %v9047
        %9050 = vbcast.lane.b32.xlu0 %v9048, 256
        %v9051 = vpop.permute.xlu0 %9050
        %v9052 = vlaneseq
        %v9053 = vshrl.u32 %v9052, 7
        %v9054 = vsub.s32 5, %v9053
        %v9055 = vrot.slane %v8848, %v9054
        %9057 = vbcast.lane.b32.xlu0 %v9055, 256
        %v9058 = vpop.permute.xlu0 %9057
        %v9059 = vlaneseq
        %v9060 = vshrl.u32 %v9059, 7
        %v9061 = vsub.s32 6, %v9060
        %v9062 = vrot.slane %v8848, %v9061
        %9064 = vbcast.lane.b32.xlu0 %v9062, 256
        %v9065 = vpop.permute.xlu0 %9064
        %v9066 = vlaneseq
        %v9067 = vshrl.u32 %v9066, 7
        %v9068 = vsub.s32 7, %v9067
        %v9069 = vrot.slane %v8848, %v9068
        %9071 = vbcast.lane.b32.xlu0 %v9069, 256
        %v9072 = vpop.permute.xlu0 %9071
        %v9073 = vmul.f32 %v7881, %v8855
        %v9074 = vmul.f32 %v7882, %v8862
        %v9075 = vmul.f32 %v7883, %v8869
        %v9076 = vmul.f32 %v7884, %v8876
        %v9077 = vmul.f32 %v7885, %v8883
        %v9078 = vmul.f32 %v7886, %v8890
        %v9079 = vmul.f32 %v7887, %v8897
        %v9080 = vmul.f32 %v7888, %v8904
        %v9081 = vmul.f32 %v7889, %v8911
        %v9082 = vmul.f32 %v7890, %v8918
        %v9083 = vmul.f32 %v7891, %v8925
        %v9084 = vmul.f32 %v7892, %v8932
        %v9085 = vmul.f32 %v7893, %v8939
        %v9086 = vmul.f32 %v7894, %v8946
        %v9087 = vmul.f32 %v7895, %v8953
        %v9088 = vmul.f32 %v7896, %v8960
        %v9089 = vmul.f32 %v7897, %v8967
        %v9090 = vmul.f32 %v7898, %v8974
        %v9091 = vmul.f32 %v7899, %v8981
        %v9092 = vmul.f32 %v7900, %v8988
        %v9093 = vmul.f32 %v7901, %v8995
        %v9094 = vmul.f32 %v7902, %v9002
        %v9095 = vmul.f32 %v7903, %v9009
        %v9096 = vmul.f32 %v7904, %v9016
        %v9097 = vmul.f32 %v7905, %v9023
        %v9098 = vmul.f32 %v7906, %v9030
        %v9099 = vmul.f32 %v7907, %v9037
        %v9100 = vmul.f32 %v7908, %v9044
        %v9101 = vmul.f32 %v7909, %v9051
        %v9102 = vmul.f32 %v7910, %v9058
        %v9103 = vmul.f32 %v7911, %v9065
        %v9104 = vmul.f32 %v7912, %v9072
        %9137 = vrot.lane.b32.xlu0 %v2979, 96
        %v9138 = vpop.permute.xlu0 %9137
        %9139 = vrot.lane.b32.xlu0 %v2980, 96
        %v9140 = vpop.permute.xlu0 %9139
        %9141 = vrot.lane.b32.xlu0 %v2981, 96
        %v9142 = vpop.permute.xlu0 %9141
        %9143 = vrot.lane.b32.xlu0 %v2982, 96
        %v9144 = vpop.permute.xlu0 %9143
        %9145 = vrot.lane.b32.xlu0 %v2983, 96
        %v9146 = vpop.permute.xlu0 %9145
        %9147 = vrot.lane.b32.xlu0 %v2984, 96
        %v9148 = vpop.permute.xlu0 %9147
        %9149 = vrot.lane.b32.xlu0 %v2985, 96
        %v9150 = vpop.permute.xlu0 %9149
        %9151 = vrot.lane.b32.xlu0 %v2986, 96
        %v9152 = vpop.permute.xlu0 %9151
        %9153 = vrot.lane.b32.xlu0 %v2987, 96
        %v9154 = vpop.permute.xlu0 %9153
        %9155 = vrot.lane.b32.xlu0 %v2988, 96
        %v9156 = vpop.permute.xlu0 %9155
        %9157 = vrot.lane.b32.xlu0 %v2989, 96
        %v9158 = vpop.permute.xlu0 %9157
        %9159 = vrot.lane.b32.xlu0 %v2990, 96
        %v9160 = vpop.permute.xlu0 %9159
        %9161 = vrot.lane.b32.xlu0 %v2991, 96
        %v9162 = vpop.permute.xlu0 %9161
        %9163 = vrot.lane.b32.xlu0 %v2992, 96
        %v9164 = vpop.permute.xlu0 %9163
        %9165 = vrot.lane.b32.xlu0 %v2993, 96
        %v9166 = vpop.permute.xlu0 %9165
        %9167 = vrot.lane.b32.xlu0 %v2994, 96
        %v9168 = vpop.permute.xlu0 %9167
        %9169 = vrot.lane.b32.xlu0 %v2995, 96
        %v9170 = vpop.permute.xlu0 %9169
        %9171 = vrot.lane.b32.xlu0 %v2996, 96
        %v9172 = vpop.permute.xlu0 %9171
        %9173 = vrot.lane.b32.xlu0 %v2997, 96
        %v9174 = vpop.permute.xlu0 %9173
        %9175 = vrot.lane.b32.xlu0 %v2998, 96
        %v9176 = vpop.permute.xlu0 %9175
        %9177 = vrot.lane.b32.xlu0 %v2999, 96
        %v9178 = vpop.permute.xlu0 %9177
        %9179 = vrot.lane.b32.xlu0 %v3000, 96
        %v9180 = vpop.permute.xlu0 %9179
        %9181 = vrot.lane.b32.xlu0 %v3001, 96
        %v9182 = vpop.permute.xlu0 %9181
        %9183 = vrot.lane.b32.xlu0 %v3002, 96
        %v9184 = vpop.permute.xlu0 %9183
        %9185 = vrot.lane.b32.xlu0 %v3003, 96
        %v9186 = vpop.permute.xlu0 %9185
        %9187 = vrot.lane.b32.xlu0 %v3004, 96
        %v9188 = vpop.permute.xlu0 %9187
        %9189 = vrot.lane.b32.xlu0 %v3005, 96
        %v9190 = vpop.permute.xlu0 %9189
        %9191 = vrot.lane.b32.xlu0 %v3006, 96
        %v9192 = vpop.permute.xlu0 %9191
        %9193 = vrot.lane.b32.xlu0 %v3007, 96
        %v9194 = vpop.permute.xlu0 %9193
        %9195 = vrot.lane.b32.xlu0 %v3008, 96
        %v9196 = vpop.permute.xlu0 %9195
        %9197 = vrot.lane.b32.xlu0 %v3009, 96
        %v9198 = vpop.permute.xlu0 %9197
        %9199 = vrot.lane.b32.xlu0 %v3010, 96
        %v9200 = vpop.permute.xlu0 %9199
        %v9233 = vadd.f32 %v9073, %v9138
        %v9234 = vadd.f32 %v9074, %v9140
        %v9235 = vadd.f32 %v9075, %v9142
        %v9236 = vadd.f32 %v9076, %v9144
        %v9237 = vadd.f32 %v9077, %v9146
        %v9238 = vadd.f32 %v9078, %v9148
        %v9239 = vadd.f32 %v9079, %v9150
        %v9240 = vadd.f32 %v9080, %v9152
        %v9241 = vadd.f32 %v9081, %v9154
        %v9242 = vadd.f32 %v9082, %v9156
        %v9243 = vadd.f32 %v9083, %v9158
        %v9244 = vadd.f32 %v9084, %v9160
        %v9245 = vadd.f32 %v9085, %v9162
        %v9246 = vadd.f32 %v9086, %v9164
        %v9247 = vadd.f32 %v9087, %v9166
        %v9248 = vadd.f32 %v9088, %v9168
        %v9249 = vadd.f32 %v9089, %v9170
        %v9250 = vadd.f32 %v9090, %v9172
        %v9251 = vadd.f32 %v9091, %v9174
        %v9252 = vadd.f32 %v9092, %v9176
        %v9253 = vadd.f32 %v9093, %v9178
        %v9254 = vadd.f32 %v9094, %v9180
        %v9255 = vadd.f32 %v9095, %v9182
        %v9256 = vadd.f32 %v9096, %v9184
        %v9257 = vadd.f32 %v9097, %v9186
        %v9258 = vadd.f32 %v9098, %v9188
        %v9259 = vadd.f32 %v9099, %v9190
        %v9260 = vadd.f32 %v9100, %v9192
        %v9261 = vadd.f32 %v9101, %v9194
        %v9262 = vadd.f32 %v9102, %v9196
        %v9263 = vadd.f32 %v9103, %v9198
        %v9264 = vadd.f32 %v9104, %v9200
        %v9265 = vmax.f32 %v9233, 0.0
        %v9266 = vmax.f32 %v9234, 0.0
        %v9267 = vmax.f32 %v9235, 0.0
        %v9268 = vmax.f32 %v9236, 0.0
        %v9269 = vmax.f32 %v9237, 0.0
        %v9270 = vmax.f32 %v9238, 0.0
        %v9271 = vmax.f32 %v9239, 0.0
        %v9272 = vmax.f32 %v9240, 0.0
        %v9273 = vmax.f32 %v9241, 0.0
        %v9274 = vmax.f32 %v9242, 0.0
        %v9275 = vmax.f32 %v9243, 0.0
        %v9276 = vmax.f32 %v9244, 0.0
        %v9277 = vmax.f32 %v9245, 0.0
        %v9278 = vmax.f32 %v9246, 0.0
        %v9279 = vmax.f32 %v9247, 0.0
        %v9280 = vmax.f32 %v9248, 0.0
        %v9281 = vmax.f32 %v9249, 0.0
        %v9282 = vmax.f32 %v9250, 0.0
        %v9283 = vmax.f32 %v9251, 0.0
        %v9284 = vmax.f32 %v9252, 0.0
        %v9285 = vmax.f32 %v9253, 0.0
        %v9286 = vmax.f32 %v9254, 0.0
        %v9287 = vmax.f32 %v9255, 0.0
        %v9288 = vmax.f32 %v9256, 0.0
        %v9289 = vmax.f32 %v9257, 0.0
        %v9290 = vmax.f32 %v9258, 0.0
        %v9291 = vmax.f32 %v9259, 0.0
        %v9292 = vmax.f32 %v9260, 0.0
        %v9293 = vmax.f32 %v9261, 0.0
        %v9294 = vmax.f32 %v9262, 0.0
        %v9295 = vmax.f32 %v9263, 0.0
        %v9296 = vmax.f32 %v9264, 0.0
        %v9297 = vcombine.low %v9265, %v9267
        %v9298 = vcombine.high %v9265, %v9267
        %v9300 = vunpack.c.l.s4 1983009808
        %v9301 = vunpack.c.0.s8 %v9300
        %v9302 = vlaneseq
        %v9303 = vshrl.u32 %v9302, 7
        %v9304 = vsub.s32 %v9301, %v9303
        %v9305 = vrot.slane %v9297, %v9304
        %v9307 = vunpack.c.l.s4 1983009808
        %v9308 = vunpack.c.0.s8 %v9307
        %v9309 = vlaneseq
        %v9310 = vshrl.u32 %v9309, 7
        %v9311 = vsub.s32 %v9308, %v9310
        %v9312 = vrot.slane %v9298, %v9311
        %v9313 = vcombine.low %v9266, %v9268
        %v9314 = vcombine.high %v9266, %v9268
        %v9316 = vunpack.c.l.s4 1983009808
        %v9317 = vunpack.c.0.s8 %v9316
        %v9318 = vlaneseq
        %v9319 = vshrl.u32 %v9318, 7
        %v9320 = vsub.s32 %v9317, %v9319
        %v9321 = vrot.slane %v9313, %v9320
        %v9323 = vunpack.c.l.s4 1983009808
        %v9324 = vunpack.c.0.s8 %v9323
        %v9325 = vlaneseq
        %v9326 = vshrl.u32 %v9325, 7
        %v9327 = vsub.s32 %v9324, %v9326
        %v9328 = vrot.slane %v9314, %v9327
        %v9329 = vcombine.low %v9269, %v9271
        %v9330 = vcombine.high %v9269, %v9271
        %v9332 = vunpack.c.l.s4 1983009808
        %v9333 = vunpack.c.0.s8 %v9332
        %v9334 = vlaneseq
        %v9335 = vshrl.u32 %v9334, 7
        %v9336 = vsub.s32 %v9333, %v9335
        %v9337 = vrot.slane %v9329, %v9336
        %v9339 = vunpack.c.l.s4 1983009808
        %v9340 = vunpack.c.0.s8 %v9339
        %v9341 = vlaneseq
        %v9342 = vshrl.u32 %v9341, 7
        %v9343 = vsub.s32 %v9340, %v9342
        %v9344 = vrot.slane %v9330, %v9343
        %v9345 = vcombine.low %v9270, %v9272
        %v9346 = vcombine.high %v9270, %v9272
        %v9348 = vunpack.c.l.s4 1983009808
        %v9349 = vunpack.c.0.s8 %v9348
        %v9350 = vlaneseq
        %v9351 = vshrl.u32 %v9350, 7
        %v9352 = vsub.s32 %v9349, %v9351
        %v9353 = vrot.slane %v9345, %v9352
        %v9355 = vunpack.c.l.s4 1983009808
        %v9356 = vunpack.c.0.s8 %v9355
        %v9357 = vlaneseq
        %v9358 = vshrl.u32 %v9357, 7
        %v9359 = vsub.s32 %v9356, %v9358
        %v9360 = vrot.slane %v9346, %v9359
        %v9361 = vcombine.low %v9305, %v9321
        %v9362 = vcombine.high %v9305, %v9321
        %v9364 = vunpack.c.l.s4 1934713408
        %v9365 = vunpack.c.0.s8 %v9364
        %v9366 = vlaneseq
        %v9367 = vshrl.u32 %v9366, 7
        %v9368 = vsub.s32 %v9365, %v9367
        %v9369 = vrot.slane %v9361, %v9368
        %v9371 = vunpack.c.l.s4 1934713408
        %v9372 = vunpack.c.0.s8 %v9371
        %v9373 = vlaneseq
        %v9374 = vshrl.u32 %v9373, 7
        %v9375 = vsub.s32 %v9372, %v9374
        %v9376 = vrot.slane %v9362, %v9375
        %v9377 = vcombine.low %v9312, %v9328
        %v9378 = vcombine.high %v9312, %v9328
        %v9380 = vunpack.c.l.s4 1934713408
        %v9381 = vunpack.c.0.s8 %v9380
        %v9382 = vlaneseq
        %v9383 = vshrl.u32 %v9382, 7
        %v9384 = vsub.s32 %v9381, %v9383
        %v9385 = vrot.slane %v9377, %v9384
        %v9387 = vunpack.c.l.s4 1934713408
        %v9388 = vunpack.c.0.s8 %v9387
        %v9389 = vlaneseq
        %v9390 = vshrl.u32 %v9389, 7
        %v9391 = vsub.s32 %v9388, %v9390
        %v9392 = vrot.slane %v9378, %v9391
        %v9393 = vcombine.low %v9337, %v9353
        %v9394 = vcombine.high %v9337, %v9353
        %v9396 = vunpack.c.l.s4 1934713408
        %v9397 = vunpack.c.0.s8 %v9396
        %v9398 = vlaneseq
        %v9399 = vshrl.u32 %v9398, 7
        %v9400 = vsub.s32 %v9397, %v9399
        %v9401 = vrot.slane %v9393, %v9400
        %v9403 = vunpack.c.l.s4 1934713408
        %v9404 = vunpack.c.0.s8 %v9403
        %v9405 = vlaneseq
        %v9406 = vshrl.u32 %v9405, 7
        %v9407 = vsub.s32 %v9404, %v9406
        %v9408 = vrot.slane %v9394, %v9407
        %v9409 = vcombine.low %v9344, %v9360
        %v9410 = vcombine.high %v9344, %v9360
        %v9412 = vunpack.c.l.s4 1934713408
        %v9413 = vunpack.c.0.s8 %v9412
        %v9414 = vlaneseq
        %v9415 = vshrl.u32 %v9414, 7
        %v9416 = vsub.s32 %v9413, %v9415
        %v9417 = vrot.slane %v9409, %v9416
        %v9419 = vunpack.c.l.s4 1934713408
        %v9420 = vunpack.c.0.s8 %v9419
        %v9421 = vlaneseq
        %v9422 = vshrl.u32 %v9421, 7
        %v9423 = vsub.s32 %v9420, %v9422
        %v9424 = vrot.slane %v9410, %v9423
        %v9425 = vcombine.low %v9369, %v9401
        %v9426 = vcombine.high %v9369, %v9401
        %v9427 = vcombine.low %v9376, %v9408
        %v9428 = vcombine.high %v9376, %v9408
        %v9429 = vcombine.low %v9385, %v9417
        %v9430 = vcombine.high %v9385, %v9417
        %v9431 = vcombine.low %v9392, %v9424
        %v9432 = vcombine.high %v9392, %v9424
        %v9433 = vcombine.low %v9273, %v9275
        %v9434 = vcombine.high %v9273, %v9275
        %v9436 = vunpack.c.l.s4 1983009808
        %v9437 = vunpack.c.0.s8 %v9436
        %v9438 = vlaneseq
        %v9439 = vshrl.u32 %v9438, 7
        %v9440 = vsub.s32 %v9437, %v9439
        %v9441 = vrot.slane %v9433, %v9440
        %v9443 = vunpack.c.l.s4 1983009808
        %v9444 = vunpack.c.0.s8 %v9443
        %v9445 = vlaneseq
        %v9446 = vshrl.u32 %v9445, 7
        %v9447 = vsub.s32 %v9444, %v9446
        %v9448 = vrot.slane %v9434, %v9447
        %v9449 = vcombine.low %v9274, %v9276
        %v9450 = vcombine.high %v9274, %v9276
        %v9452 = vunpack.c.l.s4 1983009808
        %v9453 = vunpack.c.0.s8 %v9452
        %v9454 = vlaneseq
        %v9455 = vshrl.u32 %v9454, 7
        %v9456 = vsub.s32 %v9453, %v9455
        %v9457 = vrot.slane %v9449, %v9456
        %v9459 = vunpack.c.l.s4 1983009808
        %v9460 = vunpack.c.0.s8 %v9459
        %v9461 = vlaneseq
        %v9462 = vshrl.u32 %v9461, 7
        %v9463 = vsub.s32 %v9460, %v9462
        %v9464 = vrot.slane %v9450, %v9463
        %v9465 = vcombine.low %v9277, %v9279
        %v9466 = vcombine.high %v9277, %v9279
        %v9468 = vunpack.c.l.s4 1983009808
        %v9469 = vunpack.c.0.s8 %v9468
        %v9470 = vlaneseq
        %v9471 = vshrl.u32 %v9470, 7
        %v9472 = vsub.s32 %v9469, %v9471
        %v9473 = vrot.slane %v9465, %v9472
        %v9475 = vunpack.c.l.s4 1983009808
        %v9476 = vunpack.c.0.s8 %v9475
        %v9477 = vlaneseq
        %v9478 = vshrl.u32 %v9477, 7
        %v9479 = vsub.s32 %v9476, %v9478
        %v9480 = vrot.slane %v9466, %v9479
        %v9481 = vcombine.low %v9278, %v9280
        %v9482 = vcombine.high %v9278, %v9280
        %v9484 = vunpack.c.l.s4 1983009808
        %v9485 = vunpack.c.0.s8 %v9484
        %v9486 = vlaneseq
        %v9487 = vshrl.u32 %v9486, 7
        %v9488 = vsub.s32 %v9485, %v9487
        %v9489 = vrot.slane %v9481, %v9488
        %v9491 = vunpack.c.l.s4 1983009808
        %v9492 = vunpack.c.0.s8 %v9491
        %v9493 = vlaneseq
        %v9494 = vshrl.u32 %v9493, 7
        %v9495 = vsub.s32 %v9492, %v9494
        %v9496 = vrot.slane %v9482, %v9495
        %v9497 = vcombine.low %v9441, %v9457
        %v9498 = vcombine.high %v9441, %v9457
        %v9500 = vunpack.c.l.s4 1934713408
        %v9501 = vunpack.c.0.s8 %v9500
        %v9502 = vlaneseq
        %v9503 = vshrl.u32 %v9502, 7
        %v9504 = vsub.s32 %v9501, %v9503
        %v9505 = vrot.slane %v9497, %v9504
        %v9507 = vunpack.c.l.s4 1934713408
        %v9508 = vunpack.c.0.s8 %v9507
        %v9509 = vlaneseq
        %v9510 = vshrl.u32 %v9509, 7
        %v9511 = vsub.s32 %v9508, %v9510
        %v9512 = vrot.slane %v9498, %v9511
        %v9513 = vcombine.low %v9448, %v9464
        %v9514 = vcombine.high %v9448, %v9464
        %v9516 = vunpack.c.l.s4 1934713408
        %v9517 = vunpack.c.0.s8 %v9516
        %v9518 = vlaneseq
        %v9519 = vshrl.u32 %v9518, 7
        %v9520 = vsub.s32 %v9517, %v9519
        %v9521 = vrot.slane %v9513, %v9520
        %v9523 = vunpack.c.l.s4 1934713408
        %v9524 = vunpack.c.0.s8 %v9523
        %v9525 = vlaneseq
        %v9526 = vshrl.u32 %v9525, 7
        %v9527 = vsub.s32 %v9524, %v9526
        %v9528 = vrot.slane %v9514, %v9527
        %v9529 = vcombine.low %v9473, %v9489
        %v9530 = vcombine.high %v9473, %v9489
        %v9532 = vunpack.c.l.s4 1934713408
        %v9533 = vunpack.c.0.s8 %v9532
        %v9534 = vlaneseq
        %v9535 = vshrl.u32 %v9534, 7
        %v9536 = vsub.s32 %v9533, %v9535
        %v9537 = vrot.slane %v9529, %v9536
        %v9539 = vunpack.c.l.s4 1934713408
        %v9540 = vunpack.c.0.s8 %v9539
        %v9541 = vlaneseq
        %v9542 = vshrl.u32 %v9541, 7
        %v9543 = vsub.s32 %v9540, %v9542
        %v9544 = vrot.slane %v9530, %v9543
        %v9545 = vcombine.low %v9480, %v9496
        %v9546 = vcombine.high %v9480, %v9496
        %v9548 = vunpack.c.l.s4 1934713408
        %v9549 = vunpack.c.0.s8 %v9548
        %v9550 = vlaneseq
        %v9551 = vshrl.u32 %v9550, 7
        %v9552 = vsub.s32 %v9549, %v9551
        %v9553 = vrot.slane %v9545, %v9552
        %v9555 = vunpack.c.l.s4 1934713408
        %v9556 = vunpack.c.0.s8 %v9555
        %v9557 = vlaneseq
        %v9558 = vshrl.u32 %v9557, 7
        %v9559 = vsub.s32 %v9556, %v9558
        %v9560 = vrot.slane %v9546, %v9559
        %v9561 = vcombine.low %v9505, %v9537
        %v9562 = vcombine.high %v9505, %v9537
        %v9563 = vcombine.low %v9512, %v9544
        %v9564 = vcombine.high %v9512, %v9544
        %v9565 = vcombine.low %v9521, %v9553
        %v9566 = vcombine.high %v9521, %v9553
        %v9567 = vcombine.low %v9528, %v9560
        %v9568 = vcombine.high %v9528, %v9560
        %v9569 = vcombine.low %v9281, %v9283
        %v9570 = vcombine.high %v9281, %v9283
        %v9572 = vunpack.c.l.s4 1983009808
        %v9573 = vunpack.c.0.s8 %v9572
        %v9574 = vlaneseq
        %v9575 = vshrl.u32 %v9574, 7
        %v9576 = vsub.s32 %v9573, %v9575
        %v9577 = vrot.slane %v9569, %v9576
        %v9579 = vunpack.c.l.s4 1983009808
        %v9580 = vunpack.c.0.s8 %v9579
        %v9581 = vlaneseq
        %v9582 = vshrl.u32 %v9581, 7
        %v9583 = vsub.s32 %v9580, %v9582
        %v9584 = vrot.slane %v9570, %v9583
        %v9585 = vcombine.low %v9282, %v9284
        %v9586 = vcombine.high %v9282, %v9284
        %v9588 = vunpack.c.l.s4 1983009808
        %v9589 = vunpack.c.0.s8 %v9588
        %v9590 = vlaneseq
        %v9591 = vshrl.u32 %v9590, 7
        %v9592 = vsub.s32 %v9589, %v9591
        %v9593 = vrot.slane %v9585, %v9592
        %v9595 = vunpack.c.l.s4 1983009808
        %v9596 = vunpack.c.0.s8 %v9595
        %v9597 = vlaneseq
        %v9598 = vshrl.u32 %v9597, 7
        %v9599 = vsub.s32 %v9596, %v9598
        %v9600 = vrot.slane %v9586, %v9599
        %v9601 = vcombine.low %v9285, %v9287
        %v9602 = vcombine.high %v9285, %v9287
        %v9604 = vunpack.c.l.s4 1983009808
        %v9605 = vunpack.c.0.s8 %v9604
        %v9606 = vlaneseq
        %v9607 = vshrl.u32 %v9606, 7
        %v9608 = vsub.s32 %v9605, %v9607
        %v9609 = vrot.slane %v9601, %v9608
        %v9611 = vunpack.c.l.s4 1983009808
        %v9612 = vunpack.c.0.s8 %v9611
        %v9613 = vlaneseq
        %v9614 = vshrl.u32 %v9613, 7
        %v9615 = vsub.s32 %v9612, %v9614
        %v9616 = vrot.slane %v9602, %v9615
        %v9617 = vcombine.low %v9286, %v9288
        %v9618 = vcombine.high %v9286, %v9288
        %v9620 = vunpack.c.l.s4 1983009808
        %v9621 = vunpack.c.0.s8 %v9620
        %v9622 = vlaneseq
        %v9623 = vshrl.u32 %v9622, 7
        %v9624 = vsub.s32 %v9621, %v9623
        %v9625 = vrot.slane %v9617, %v9624
        %v9627 = vunpack.c.l.s4 1983009808
        %v9628 = vunpack.c.0.s8 %v9627
        %v9629 = vlaneseq
        %v9630 = vshrl.u32 %v9629, 7
        %v9631 = vsub.s32 %v9628, %v9630
        %v9632 = vrot.slane %v9618, %v9631
        %v9633 = vcombine.low %v9577, %v9593
        %v9634 = vcombine.high %v9577, %v9593
        %v9636 = vunpack.c.l.s4 1934713408
        %v9637 = vunpack.c.0.s8 %v9636
        %v9638 = vlaneseq
        %v9639 = vshrl.u32 %v9638, 7
        %v9640 = vsub.s32 %v9637, %v9639
        %v9641 = vrot.slane %v9633, %v9640
        %v9643 = vunpack.c.l.s4 1934713408
        %v9644 = vunpack.c.0.s8 %v9643
        %v9645 = vlaneseq
        %v9646 = vshrl.u32 %v9645, 7
        %v9647 = vsub.s32 %v9644, %v9646
        %v9648 = vrot.slane %v9634, %v9647
        %v9649 = vcombine.low %v9584, %v9600
        %v9650 = vcombine.high %v9584, %v9600
        %v9652 = vunpack.c.l.s4 1934713408
        %v9653 = vunpack.c.0.s8 %v9652
        %v9654 = vlaneseq
        %v9655 = vshrl.u32 %v9654, 7
        %v9656 = vsub.s32 %v9653, %v9655
        %v9657 = vrot.slane %v9649, %v9656
        %v9659 = vunpack.c.l.s4 1934713408
        %v9660 = vunpack.c.0.s8 %v9659
        %v9661 = vlaneseq
        %v9662 = vshrl.u32 %v9661, 7
        %v9663 = vsub.s32 %v9660, %v9662
        %v9664 = vrot.slane %v9650, %v9663
        %v9665 = vcombine.low %v9609, %v9625
        %v9666 = vcombine.high %v9609, %v9625
        %v9668 = vunpack.c.l.s4 1934713408
        %v9669 = vunpack.c.0.s8 %v9668
        %v9670 = vlaneseq
        %v9671 = vshrl.u32 %v9670, 7
        %v9672 = vsub.s32 %v9669, %v9671
        %v9673 = vrot.slane %v9665, %v9672
        %v9675 = vunpack.c.l.s4 1934713408
        %v9676 = vunpack.c.0.s8 %v9675
        %v9677 = vlaneseq
        %v9678 = vshrl.u32 %v9677, 7
        %v9679 = vsub.s32 %v9676, %v9678
        %v9680 = vrot.slane %v9666, %v9679
        %v9681 = vcombine.low %v9616, %v9632
        %v9682 = vcombine.high %v9616, %v9632
        %v9684 = vunpack.c.l.s4 1934713408
        %v9685 = vunpack.c.0.s8 %v9684
        %v9686 = vlaneseq
        %v9687 = vshrl.u32 %v9686, 7
        %v9688 = vsub.s32 %v9685, %v9687
        %v9689 = vrot.slane %v9681, %v9688
        %v9691 = vunpack.c.l.s4 1934713408
        %v9692 = vunpack.c.0.s8 %v9691
        %v9693 = vlaneseq
        %v9694 = vshrl.u32 %v9693, 7
        %v9695 = vsub.s32 %v9692, %v9694
        %v9696 = vrot.slane %v9682, %v9695
        %v9697 = vcombine.low %v9641, %v9673
        %v9698 = vcombine.high %v9641, %v9673
        %v9699 = vcombine.low %v9648, %v9680
        %v9700 = vcombine.high %v9648, %v9680
        %v9701 = vcombine.low %v9657, %v9689
        %v9702 = vcombine.high %v9657, %v9689
        %v9703 = vcombine.low %v9664, %v9696
        %v9704 = vcombine.high %v9664, %v9696
        %v9705 = vcombine.low %v9289, %v9291
        %v9706 = vcombine.high %v9289, %v9291
        %v9708 = vunpack.c.l.s4 1983009808
        %v9709 = vunpack.c.0.s8 %v9708
        %v9710 = vlaneseq
        %v9711 = vshrl.u32 %v9710, 7
        %v9712 = vsub.s32 %v9709, %v9711
        %v9713 = vrot.slane %v9705, %v9712
        %v9715 = vunpack.c.l.s4 1983009808
        %v9716 = vunpack.c.0.s8 %v9715
        %v9717 = vlaneseq
        %v9718 = vshrl.u32 %v9717, 7
        %v9719 = vsub.s32 %v9716, %v9718
        %v9720 = vrot.slane %v9706, %v9719
        %v9721 = vcombine.low %v9290, %v9292
        %v9722 = vcombine.high %v9290, %v9292
        %v9724 = vunpack.c.l.s4 1983009808
        %v9725 = vunpack.c.0.s8 %v9724
        %v9726 = vlaneseq
        %v9727 = vshrl.u32 %v9726, 7
        %v9728 = vsub.s32 %v9725, %v9727
        %v9729 = vrot.slane %v9721, %v9728
        %v9731 = vunpack.c.l.s4 1983009808
        %v9732 = vunpack.c.0.s8 %v9731
        %v9733 = vlaneseq
        %v9734 = vshrl.u32 %v9733, 7
        %v9735 = vsub.s32 %v9732, %v9734
        %v9736 = vrot.slane %v9722, %v9735
        %v9737 = vcombine.low %v9293, %v9295
        %v9738 = vcombine.high %v9293, %v9295
        %v9740 = vunpack.c.l.s4 1983009808
        %v9741 = vunpack.c.0.s8 %v9740
        %v9742 = vlaneseq
        %v9743 = vshrl.u32 %v9742, 7
        %v9744 = vsub.s32 %v9741, %v9743
        %v9745 = vrot.slane %v9737, %v9744
        %v9747 = vunpack.c.l.s4 1983009808
        %v9748 = vunpack.c.0.s8 %v9747
        %v9749 = vlaneseq
        %v9750 = vshrl.u32 %v9749, 7
        %v9751 = vsub.s32 %v9748, %v9750
        %v9752 = vrot.slane %v9738, %v9751
        %v9753 = vcombine.low %v9294, %v9296
        %v9754 = vcombine.high %v9294, %v9296
        %v9756 = vunpack.c.l.s4 1983009808
        %v9757 = vunpack.c.0.s8 %v9756
        %v9758 = vlaneseq
        %v9759 = vshrl.u32 %v9758, 7
        %v9760 = vsub.s32 %v9757, %v9759
        %v9761 = vrot.slane %v9753, %v9760
        %v9763 = vunpack.c.l.s4 1983009808
        %v9764 = vunpack.c.0.s8 %v9763
        %v9765 = vlaneseq
        %v9766 = vshrl.u32 %v9765, 7
        %v9767 = vsub.s32 %v9764, %v9766
        %v9768 = vrot.slane %v9754, %v9767
        %v9769 = vcombine.low %v9713, %v9729
        %v9770 = vcombine.high %v9713, %v9729
        %v9772 = vunpack.c.l.s4 1934713408
        %v9773 = vunpack.c.0.s8 %v9772
        %v9774 = vlaneseq
        %v9775 = vshrl.u32 %v9774, 7
        %v9776 = vsub.s32 %v9773, %v9775
        %v9777 = vrot.slane %v9769, %v9776
        %v9779 = vunpack.c.l.s4 1934713408
        %v9780 = vunpack.c.0.s8 %v9779
        %v9781 = vlaneseq
        %v9782 = vshrl.u32 %v9781, 7
        %v9783 = vsub.s32 %v9780, %v9782
        %v9784 = vrot.slane %v9770, %v9783
        %v9785 = vcombine.low %v9720, %v9736
        %v9786 = vcombine.high %v9720, %v9736
        %v9788 = vunpack.c.l.s4 1934713408
        %v9789 = vunpack.c.0.s8 %v9788
        %v9790 = vlaneseq
        %v9791 = vshrl.u32 %v9790, 7
        %v9792 = vsub.s32 %v9789, %v9791
        %v9793 = vrot.slane %v9785, %v9792
        %v9795 = vunpack.c.l.s4 1934713408
        %v9796 = vunpack.c.0.s8 %v9795
        %v9797 = vlaneseq
        %v9798 = vshrl.u32 %v9797, 7
        %v9799 = vsub.s32 %v9796, %v9798
        %v9800 = vrot.slane %v9786, %v9799
        %v9801 = vcombine.low %v9745, %v9761
        %v9802 = vcombine.high %v9745, %v9761
        %v9804 = vunpack.c.l.s4 1934713408
        %v9805 = vunpack.c.0.s8 %v9804
        %v9806 = vlaneseq
        %v9807 = vshrl.u32 %v9806, 7
        %v9808 = vsub.s32 %v9805, %v9807
        %v9809 = vrot.slane %v9801, %v9808
        %v9811 = vunpack.c.l.s4 1934713408
        %v9812 = vunpack.c.0.s8 %v9811
        %v9813 = vlaneseq
        %v9814 = vshrl.u32 %v9813, 7
        %v9815 = vsub.s32 %v9812, %v9814
        %v9816 = vrot.slane %v9802, %v9815
        %v9817 = vcombine.low %v9752, %v9768
        %v9818 = vcombine.high %v9752, %v9768
        %v9820 = vunpack.c.l.s4 1934713408
        %v9821 = vunpack.c.0.s8 %v9820
        %v9822 = vlaneseq
        %v9823 = vshrl.u32 %v9822, 7
        %v9824 = vsub.s32 %v9821, %v9823
        %v9825 = vrot.slane %v9817, %v9824
        %v9827 = vunpack.c.l.s4 1934713408
        %v9828 = vunpack.c.0.s8 %v9827
        %v9829 = vlaneseq
        %v9830 = vshrl.u32 %v9829, 7
        %v9831 = vsub.s32 %v9828, %v9830
        %v9832 = vrot.slane %v9818, %v9831
        %v9833 = vcombine.low %v9777, %v9809
        %v9834 = vcombine.high %v9777, %v9809
        %v9835 = vcombine.low %v9784, %v9816
        %v9836 = vcombine.high %v9784, %v9816
        %v9837 = vcombine.low %v9793, %v9825
        %v9838 = vcombine.high %v9793, %v9825
        %v9839 = vcombine.low %v9800, %v9832
        %v9840 = vcombine.high %v9800, %v9832
        %9845 = vrot.lane.b32.xlu0 %v9426, 32
        %v9846 = vpop.permute.xlu0 %9845
        %9847 = vrot.lane.b32.xlu0 %v9562, 32
        %v9848 = vpop.permute.xlu0 %9847
        %9849 = vrot.lane.b32.xlu0 %v9698, 32
        %v9850 = vpop.permute.xlu0 %9849
        %9851 = vrot.lane.b32.xlu0 %v9834, 32
        %v9852 = vpop.permute.xlu0 %9851
        %9861 = vrot.lane.b32.xlu0 %v9427, 64
        %v9862 = vpop.permute.xlu0 %9861
        %9863 = vrot.lane.b32.xlu0 %v9563, 64
        %v9864 = vpop.permute.xlu0 %9863
        %9865 = vrot.lane.b32.xlu0 %v9699, 64
        %v9866 = vpop.permute.xlu0 %9865
        %9867 = vrot.lane.b32.xlu0 %v9835, 64
        %v9868 = vpop.permute.xlu0 %9867
        %9877 = vrot.lane.b32.xlu0 %v9428, 96
        %v9878 = vpop.permute.xlu0 %9877
        %9879 = vrot.lane.b32.xlu0 %v9564, 96
        %v9880 = vpop.permute.xlu0 %9879
        %9881 = vrot.lane.b32.xlu0 %v9700, 96
        %v9882 = vpop.permute.xlu0 %9881
        %9883 = vrot.lane.b32.xlu0 %v9836, 96
        %v9884 = vpop.permute.xlu0 %9883
        %9893 = vrot.lane.b32.xlu0 %v9430, 32
        %v9894 = vpop.permute.xlu0 %9893
        %9895 = vrot.lane.b32.xlu0 %v9566, 32
        %v9896 = vpop.permute.xlu0 %9895
        %9897 = vrot.lane.b32.xlu0 %v9702, 32
        %v9898 = vpop.permute.xlu0 %9897
        %9899 = vrot.lane.b32.xlu0 %v9838, 32
        %v9900 = vpop.permute.xlu0 %9899
        %9909 = vrot.lane.b32.xlu0 %v9431, 64
        %v9910 = vpop.permute.xlu0 %9909
        %9911 = vrot.lane.b32.xlu0 %v9567, 64
        %v9912 = vpop.permute.xlu0 %9911
        %9913 = vrot.lane.b32.xlu0 %v9703, 64
        %v9914 = vpop.permute.xlu0 %9913
        %9915 = vrot.lane.b32.xlu0 %v9839, 64
        %v9916 = vpop.permute.xlu0 %9915
        %9925 = vrot.lane.b32.xlu0 %v9432, 96
        %v9926 = vpop.permute.xlu0 %9925
        %9927 = vrot.lane.b32.xlu0 %v9568, 96
        %v9928 = vpop.permute.xlu0 %9927
        %9929 = vrot.lane.b32.xlu0 %v9704, 96
        %v9930 = vpop.permute.xlu0 %9929
        %9931 = vrot.lane.b32.xlu0 %v9840, 96
        %v9932 = vpop.permute.xlu0 %9931
        %v9937 = vsel %vm5961, %v9425, %v9846
        %v9938 = vsel %vm5961, %v9561, %v9848
        %v9939 = vsel %vm5961, %v9697, %v9850
        %v9940 = vsel %vm5961, %v9833, %v9852
        %v9941 = vsel %vm2259, %v9937, %v9862
        %v9942 = vsel %vm2259, %v9938, %v9864
        %v9943 = vsel %vm2259, %v9939, %v9866
        %v9944 = vsel %vm2259, %v9940, %v9868
        %v9945 = vsel %vm6122, %v9941, %v9878
        %v9946 = vsel %vm6122, %v9942, %v9880
        %v9947 = vsel %vm6122, %v9943, %v9882
        %v9948 = vsel %vm6122, %v9944, %v9884
        %v9949 = vsel %vm5961, %v9429, %v9894
        %v9950 = vsel %vm5961, %v9565, %v9896
        %v9951 = vsel %vm5961, %v9701, %v9898
        %v9952 = vsel %vm5961, %v9837, %v9900
        %v9953 = vsel %vm2259, %v9949, %v9910
        %v9954 = vsel %vm2259, %v9950, %v9912
        %v9955 = vsel %vm2259, %v9951, %v9914
        %v9956 = vsel %vm2259, %v9952, %v9916
        %v9957 = vsel %vm6122, %v9953, %v9926
        %v9958 = vsel %vm6122, %v9954, %v9928
        %v9959 = vsel %vm6122, %v9955, %v9930
        %v9960 = vsel %vm6122, %v9956, %v9932
        %9961 = vst [vmem:[%s437] sm:$0xff] %v9945
        %9962 = vst [vmem:[%s437 + $0x8] sm:$0xff] %v9957
        %9963 = vst [vmem:[%s437 + $0x10] sm:$0xff] %v9946
        %9964 = vst [vmem:[%s437 + $0x18] sm:$0xff] %v9958
        %9965 = vst [vmem:[%s437 + $0x20] sm:$0xff] %v9947
        %9966 = vst [vmem:[%s437 + $0x28] sm:$0xff] %v9959
        %9967 = vst [vmem:[%s437 + $0x30] sm:$0xff] %v9948
        %9968 = vst [vmem:[%s437 + $0x38] sm:$0xff] %v9960
        %s9969 = sand.u32 %s314, 1
        %s9970 = scalar_lea.sflag [#allocation7], %s9969
        %s9971 = sand.u32 %s314, 1
        %s9972 = smul.addr %s9971, 64
        %s9973 = scalar_lea.vmem [#allocation6], %s9972
        // Predicated region
        $region73: #{tpu_custom_call.1} parent=71 // pred_check
          %p9974 = pneg %p324
        $region74: #{tpu_custom_call.1} parent=71 // pred_check_branch
          %9976 = sbr.rel (%p9974) target = $region76
        $region75: #{tpu_custom_call.1} parent=71 // pred_region
          %s9977 = smul.u32 4, %s28
          %s9979 = ssub.s32 1024, 1024
          %9980 = vsyncadd %s9970, %s9979
          %s9981 = smul.addr %s9977, 2
          %s9982 = smul.addr %s9981, 128
          %s9983 = scalar_lea.hbm %s13, %s9982
          %s9984 = sshll.u32 %s9973, 4
          %s9985 = int_to_ptr.vmem [resolvable:$true] %s9984
          %9990 = dma.vmem_to_hbm [thread:$0]  %s9985, 1024, %s9983, %s9970, 256, 256, 16
        $region76: #{tpu_custom_call.1} parent=71 // pred_fallthru
          _
      $region72: #{tpu_custom_call.1} parent=5 // pred_fallthru
        _
      %p9991 = scmp.le.s32.totalorder 2, %s23
      // Predicated region
      $region77: #{tpu_custom_call.1} parent=5 // pred_check
        %p9992 = pneg %p9991
      $region78: #{tpu_custom_call.1} parent=5 // pred_check_branch
        %9994 = sbr.rel (%p9992) target = $region80
      $region79: #{tpu_custom_call.1} parent=5 // pred_region
        %s9995 = ssub.s32 %s23, 2
        // Predicated region
        $region81: #{tpu_custom_call.1} parent=79 // pred_check
          %p9996 = pneg %p330
        $region82: #{tpu_custom_call.1} parent=79 // pred_check_branch
          %9998 = sbr.rel (%p9996) target = $region84
        $region83: #{tpu_custom_call.1} parent=79 // pred_region
          %s9999 = sand.u32 %s315, 1
          %s10000 = scalar_lea.sflag [#allocation7], %s9999
          %s10001 = sand.u32 %s315, 1
          %s10002 = smul.addr %s10001, 64
          %s10003 = scalar_lea.vmem [#allocation6], %s10002
          %10004 = dma.done %s10000, 1024
        $region84: #{tpu_custom_call.1} parent=79 // pred_fallthru
          _
      $region80: #{tpu_custom_call.1} parent=5 // pred_fallthru
        _
    $region6: #{tpu_custom_call.1} parent=1 // loop_footer
      %s27 = sadd.s32 1, %s23
    $region7: #{tpu_custom_call.1} parent=1 // loop_footer_branch
      %22 = sbr.rel target = $region3
    $region8: #{tpu_custom_call.1} parent=1 // loop_exit
      _
    %10005 = vsyncpa [#allocation7], 1
    %s10006 = scalar_lea.sflag [#allocation7], 1
    %10007 = vsyncpa %s10006, 1

</llo_original>
